<compile_context>
chip_gen: v6e
topology: v6e:2x2x1
jax: 0.10.0
libtpu: 0.0.40
codegen_flags: <defaults>
</compile_context>

<pallas_src>
import functools

import numpy as np
import jax
import jax.numpy as jnp
from jax.experimental import pallas as pl
from jax.experimental.pallas import tpu as pltpu


# ----------------------------------------------------------------------------
# Fused whole-model kernel
# ----------------------------------------------------------------------------
def _conv_model_kernel(x_ref,
                       w1a_ref, b1a_ref, w2a_ref, b2a_ref, g1_ref, bt1_ref,
                       inm1_ref, sel1_ref, m12_ref,
                       w1b_ref, b1b_ref, w2b_ref, b2b_ref, g2_ref, bt2_ref,
                       sel2_ref,
                       o_ref,
                       buf1a_ref, buf1b_ref, slab2_ref, buf2a_ref, buf2b_ref,
                       *, wp1, nhw1, pad1, count1, wp2, nhw2, pad2, count2, eps):

    def conv3x3(src_ref, w_ref, b_ref, wp, nhw, pad):
        # 9 shifted-slice matmuls on the MXU (tap index t = ky*3 + kx), + bias, LeakyReLU(0.01)
        cout = w_ref.shape[1]
        acc = jnp.zeros((cout, nhw), jnp.float32)
        for t in range(9):
            s = pad + (t // 3 - 1) * wp + (t % 3 - 1)
            acc = acc + jnp.dot(w_ref[t], src_ref[:, s:s + nhw],
                                preferred_element_type=jnp.float32)
        h = acc + b_ref[...]
        return jnp.maximum(h, 0.01 * h)                    # LeakyReLU, slope 0.01

    def stage(buf_ref, interior, pad, nhw):
        # write into a flat zero-side-padded VMEM slab so later taps are static slices
        cc = buf_ref.shape[0]
        buf_ref[:, :pad] = jnp.zeros((cc, pad), jnp.float32)
        buf_ref[:, pad + nhw:pad + nhw + pad] = jnp.zeros((cc, pad), jnp.float32)
        buf_ref[:, pad:pad + nhw] = interior

    def block(src_ref, w1_ref, b1_ref, w2_ref, b2_ref, g_ref, bt_ref,
              inmask, sel_ref, outmask, bufa_ref, bufb_ref,
              wp, nhw, pad, count, apply_sigmoid):
        # conv1 + LeakyReLU; re-zero the per-image ring so conv2 sees exact padding=1
        h1 = conv3x3(src_ref, w1_ref, b1_ref, wp, nhw, pad) * inmask
        stage(bufa_ref, h1, pad, nhw)
        # conv2 + LeakyReLU
        h2 = conv3x3(bufa_ref, w2_ref, b2_ref, wp, nhw, pad)
        stage(bufb_ref, h2, pad, nhw)
        # MaxPool2d(3), stride 3 (floor): VPU max over the 9 window taps, then gather the
        # valid window origins (and optionally re-pad) via a 0/1 select matmul on the MXU.
        pooled_full = h2
        for ry in range(3):
            for rx in range(3):
                if ry == 0 and rx == 0:
                    continue
                s = pad + ry * wp + rx
                pooled_full = jnp.maximum(pooled_full, bufb_ref[:, s:s + nhw])
        pooled = jnp.dot(pooled_full, sel_ref[...], preferred_element_type=jnp.float32)
        # BatchNorm2d (training-mode batch stats, biased variance) + optional Sigmoid.
        # TODO(synk): running-stats (eval-mode) BN buffers are not modeled; this matches a
        # fresh torch module run in train() mode.
        inv_n = 1.0 / count
        mean = jnp.sum(pooled, axis=1, keepdims=True) * inv_n
        centered = pooled - mean
        if outmask is not None:
            centered = centered * outmask                  # exclude padding ring from stats
        var = jnp.sum(centered * centered, axis=1, keepdims=True) * inv_n
        y = centered * (g_ref[...] * jax.lax.rsqrt(var + eps)) + bt_ref[...]
        if apply_sigmoid:
            y = jax.nn.sigmoid(y)
        if outmask is not None:
            y = y * outmask                                # keep the padding ring at exactly 0
        return y

    # ---- block1 (no sigmoid); its masked output is already block2's padded input grid ----
    y1 = block(x_ref, w1a_ref, b1a_ref, w2a_ref, b2a_ref, g1_ref, bt1_ref,
               inm1_ref[...], sel1_ref, m12_ref[...], buf1a_ref, buf1b_ref,
               wp1, nhw1, pad1, count1, apply_sigmoid=False)
    stage(slab2_ref, y1, pad2, nhw2)

    # ---- block2 with the final torch Sigmoid fused in; compact (no ring) output ----
    y2 = block(slab2_ref, w1b_ref, b1b_ref, w2b_ref, b2b_ref, g2_ref, bt2_ref,
               m12_ref[...], sel2_ref, None, buf2a_ref, buf2b_ref,
               wp2, nhw2, pad2, count2, apply_sigmoid=True)
    o_ref[...] = y2


# ----------------------------------------------------------------------------
# Host-side constants (numpy -> baked into the jitted program)
# ----------------------------------------------------------------------------
def _interior_mask(n, hp, wp):
    h, w = hp - 2, wp - 2
    q = np.arange(n * hp * wp)
    r = q % (hp * wp)
    i = r // wp
    j = r % wp
    m = (i >= 1) & (i <= h) & (j >= 1) & (j <= w)
    return m.astype(np.float32).reshape(1, n * hp * wp)


def _pool_select(n, hp, wp, ho, wo, pad_output):
    """0/1 matrix mapping flat padded-grid columns -> pooled window-origin columns."""
    hop, wop = ho + 2, wo + 2
    mcols = n * (hop * wop if pad_output else ho * wo)
    sel = np.zeros((n * hp * wp, mcols), np.float32)
    ni, yo, xo = np.meshgrid(np.arange(n), np.arange(ho), np.arange(wo), indexing="ij")
    q_src = (ni * hp * wp + (1 + 3 * yo) * wp + (1 + 3 * xo)).ravel()
    if pad_output:
        q_dst = (ni * hop * wop + (1 + yo) * wop + (1 + xo)).ravel()
    else:
        q_dst = (ni * ho * wo + yo * wo + xo).ravel()
    sel[q_src, q_dst] = 1.0
    return sel


def _flatten_pad_input(x_nchw):
    """NCHW -> (C, N*Hp*Wp + 2*PAD) flat layout: per-image zero ring + flat side pad."""
    n, c, h, w = x_nchw.shape
    hp, wp = h + 2, w + 2
    pad = 2 * wp + 2
    xp = jnp.pad(x_nchw, ((0, 0), (0, 0), (1, 1), (1, 1)))
    xf = jnp.transpose(xp, (1, 0, 2, 3)).reshape(c, n * hp * wp)
    return jnp.pad(xf, ((0, 0), (pad, pad)))


def _taps(w):   # (Cout, Cin, 3, 3) -> (9, Cout, Cin), tap index t = ky*3 + kx
    return jnp.transpose(w, (2, 3, 0, 1)).reshape(9, w.shape[0], w.shape[1])


@jax.jit
def conv_model(x, params):
    n, cin, h, w = x.shape
    p1, p2 = params["block1"], params["block2"]
    cmid1, cout1 = p1["w1"].shape[0], p1["w2"].shape[0]
    cmid2, cout2 = p2["w1"].shape[0], p2["w2"].shape[0]

    # block1 geometry
    hp1, wp1 = h + 2, w + 2
    nhw1 = n * hp1 * wp1
    pad1 = 2 * wp1 + 2
    ho1, wo1 = h // 3, w // 3
    # block2 geometry (block1's padded pooled grid == block2's padded input grid)
    hp2, wp2 = ho1 + 2, wo1 + 2
    nhw2 = n * hp2 * wp2
    pad2 = 2 * wp2 + 2
    ho2, wo2 = ho1 // 3, wo1 // 3
    mout2 = n * ho2 * wo2

    # compile-time constant selection / masking matrices
    inm1 = jnp.asarray(_interior_mask(n, hp1, wp1))
    m12 = jnp.asarray(_interior_mask(n, hp2, wp2))   # block1 out-mask == block2 in-mask
    sel1 = jnp.asarray(_pool_select(n, hp1, wp1, ho1, wo1, pad_output=True))
    sel2 = jnp.asarray(_pool_select(n, hp2, wp2, ho2, wo2, pad_output=False))

    x_flat = _flatten_pad_input(x)

    kernel = functools.partial(
        _conv_model_kernel,
        wp1=wp1, nhw1=nhw1, pad1=pad1, count1=float(n * ho1 * wo1),
        wp2=wp2, nhw2=nhw2, pad2=pad2, count2=float(mout2), eps=1e-5)

    out_flat = pl.pallas_call(
        kernel,
        out_shape=jax.ShapeDtypeStruct((cout2, mout2), jnp.float32),
        scratch_shapes=[
            pltpu.VMEM((cmid1, nhw1 + 2 * pad1), jnp.float32),
            pltpu.VMEM((cout1, nhw1 + 2 * pad1), jnp.float32),
            pltpu.VMEM((cout1, nhw2 + 2 * pad2), jnp.float32),
            pltpu.VMEM((cmid2, nhw2 + 2 * pad2), jnp.float32),
            pltpu.VMEM((cout2, nhw2 + 2 * pad2), jnp.float32),
        ],
    )(x_flat,
      _taps(p1["w1"]), p1["b1"].reshape(cmid1, 1),
      _taps(p1["w2"]), p1["b2"].reshape(cout1, 1),
      p1["gamma"].reshape(cout1, 1), p1["beta"].reshape(cout1, 1),
      inm1, sel1, m12,
      _taps(p2["w1"]), p2["b1"].reshape(cmid2, 1),
      _taps(p2["w2"]), p2["b2"].reshape(cout2, 1),
      p2["gamma"].reshape(cout2, 1), p2["beta"].reshape(cout2, 1),
      sel2)

    # compact (Cout, N*Ho*Wo) -> NCHW
    y = out_flat.reshape(cout2, n, ho2, wo2)
    return jnp.transpose(y, (1, 0, 2, 3))


# ----------------------------------------------------------------------------
# Pure-JAX reference (in-script correctness check)
# ----------------------------------------------------------------------------
def _ref_block(x, p, apply_sigmoid):
    dn = ("NCHW", "OIHW", "NCHW")
    y = jax.lax.conv_general_dilated(x, p["w1"], (1, 1), ((1, 1), (1, 1)), dimension_numbers=dn)
    y = y + p["b1"][None, :, None, None]
    y = jnp.where(y > 0, y, 0.01 * y)
    y = jax.lax.conv_general_dilated(y, p["w2"], (1, 1), ((1, 1), (1, 1)), dimension_numbers=dn)
    y = y + p["b2"][None, :, None, None]
    y = jnp.where(y > 0, y, 0.01 * y)
    n, c, h, w = y.shape
    ho, wo = h // 3, w // 3
    y = y[:, :, :ho * 3, :wo * 3].reshape(n, c, ho, 3, wo, 3).max(axis=(3, 5))
    mean = y.mean(axis=(0, 2, 3), keepdims=True)
    var = y.var(axis=(0, 2, 3), keepdims=True)
    y = (y - mean) / jnp.sqrt(var + 1e-5) * p["gamma"][None, :, None, None] + p["beta"][None, :, None, None]
    if apply_sigmoid:
        y = jax.nn.sigmoid(y)
    return y


def _ref_model(x, params):
    return _ref_block(_ref_block(x, params["block1"], False), params["block2"], True)


# ----------------------------------------------------------------------------
# Deterministic parameter initialization (same shapes as the torch module)
# ----------------------------------------------------------------------------
def init_conv(key, cin, cout):
    k1, k2 = jax.random.split(key)
    bound = 1.0 / (cin * 9) ** 0.5
    w = jax.random.uniform(k1, (cout, cin, 3, 3), jnp.float32, -bound, bound)
    b = jax.random.uniform(k2, (cout,), jnp.float32, -bound, bound)
    return w, b


def init_block(key, in_size, mid_size, out_size=None):
    if out_size is None:
        out_size = mid_size
    k1, k2 = jax.random.split(key)
    w1, b1 = init_conv(k1, in_size, mid_size)
    w2, b2 = init_conv(k2, mid_size, out_size)
    return {
        "w1": w1, "b1": b1, "w2": w2, "b2": b2,
        "gamma": jnp.ones((out_size,), jnp.float32),
        "beta": jnp.zeros((out_size,), jnp.float32),
    }


if __name__ == "__main__":
    in_size, mid_size, out_size = 4, 8, 16
    N, H, W = 2, 18, 18

    key = jax.random.PRNGKey(0)
    kx, kb1, kb2 = jax.random.split(key, 3)
    x = jax.random.normal(kx, (N, in_size, H, W), jnp.float32)
    params = {
        "block1": init_block(kb1, in_size, mid_size),
        "block2": init_block(kb2, mid_size, out_size),
    }

    out = conv_model(x, params)
    out = jax.block_until_ready(out)

    # block1: 18x18 -> pool -> 6x6 ; block2: 6x6 -> pool -> 2x2
    assert out.shape == (N, out_size, 2, 2), out.shape
    assert bool(jnp.all(jnp.isfinite(out)))
    assert bool(jnp.all((out >= 0.0) & (out <= 1.0)))      # sigmoid output range

    ref = _ref_model(x, params)
    max_err = float(jnp.max(jnp.abs(out - ref)))
    assert max_err < 1e-4, f"mismatch vs reference: {max_err}"

    print("KERNEL_OK")
</pallas_src>

<mosaic_0001>
module attributes {stable_mosaic.version = 11 : i64} {
  func.func @_conv_model_kernel(%arg0: memref<4x884xf32, #tpu.memory_space<vmem>>, %arg1: memref<9x8x4xf32, #tpu.memory_space<vmem>>, %arg2: memref<8x1xf32, #tpu.memory_space<vmem>>, %arg3: memref<9x8x8xf32, #tpu.memory_space<vmem>>, %arg4: memref<8x1xf32, #tpu.memory_space<vmem>>, %arg5: memref<8x1xf32, #tpu.memory_space<vmem>>, %arg6: memref<8x1xf32, #tpu.memory_space<vmem>>, %arg7: memref<1x800xf32, #tpu.memory_space<vmem>>, %arg8: memref<800x128xf32, #tpu.memory_space<vmem>>, %arg9: memref<1x128xf32, #tpu.memory_space<vmem>>, %arg10: memref<9x16x8xf32, #tpu.memory_space<vmem>>, %arg11: memref<16x1xf32, #tpu.memory_space<vmem>>, %arg12: memref<9x16x16xf32, #tpu.memory_space<vmem>>, %arg13: memref<16x1xf32, #tpu.memory_space<vmem>>, %arg14: memref<16x1xf32, #tpu.memory_space<vmem>>, %arg15: memref<16x1xf32, #tpu.memory_space<vmem>>, %arg16: memref<128x8xf32, #tpu.memory_space<vmem>>, %arg17: memref<16x8xf32, #tpu.memory_space<vmem>>, %arg18: memref<8x884xf32, #tpu.memory_space<vmem>>, %arg19: memref<8x884xf32, #tpu.memory_space<vmem>>, %arg20: memref<8x164xf32, #tpu.memory_space<vmem>>, %arg21: memref<16x164xf32, #tpu.memory_space<vmem>>, %arg22: memref<16x164xf32, #tpu.memory_space<vmem>>) attributes {dimension_semantics = [], scalar_prefetch = 0 : i64, scratch_operands = 5 : i64, tpu.core_type = #tpu.core_type<tc>} {
    %c0 = arith.constant 0 : index
    %c0_0 = arith.constant 0 : index
    %0 = vector.load %arg7[%c0, %c0_0] : memref<1x800xf32, #tpu.memory_space<vmem>>, vector<1x800xf32>
    %c0_1 = arith.constant 0 : index
    %c0_2 = arith.constant 0 : index
    %1 = vector.load %arg9[%c0_1, %c0_2] : memref<1x128xf32, #tpu.memory_space<vmem>>, vector<1x128xf32>
    %cst = arith.constant 0.000000e+00 : f32
    %2 = vector.broadcast %cst : f32 to vector<8x800xf32>
    %c0_3 = arith.constant 0 : index
    %c0_4 = arith.constant 0 : index
    %c0_5 = arith.constant 0 : index
    %3 = vector.load %arg1[%c0_3, %c0_4, %c0_5] : memref<9x8x4xf32, #tpu.memory_space<vmem>>, vector<1x8x4xf32>
    %4 = vector.shape_cast %3 : vector<1x8x4xf32> to vector<8x4xf32>
    %c0_6 = arith.constant 0 : index
    %c21 = arith.constant 21 : index
    %5 = vector.load %arg0[%c0_6, %c21] : memref<4x884xf32, #tpu.memory_space<vmem>>, vector<4x800xf32>
    %cst_7 = arith.constant dense<0.000000e+00> : vector<8x800xf32>
    %6 = tpu.matmul %4, %5, %cst_7 {dimension_numbers = #tpu.dot_dimension_numbers<[1], [0], [0], [1], [0, 0, 1, 1], [], []>} : vector<8x4xf32>, vector<4x800xf32>, vector<8x800xf32> -> vector<8x800xf32>
    %7 = arith.addf %2, %6 : vector<8x800xf32>
    %c1 = arith.constant 1 : index
    %c0_8 = arith.constant 0 : index
    %c0_9 = arith.constant 0 : index
    %8 = vector.load %arg1[%c1, %c0_8, %c0_9] : memref<9x8x4xf32, #tpu.memory_space<vmem>>, vector<1x8x4xf32>
    %9 = vector.shape_cast %8 : vector<1x8x4xf32> to vector<8x4xf32>
    %c0_10 = arith.constant 0 : index
    %c22 = arith.constant 22 : index
    %10 = vector.load %arg0[%c0_10, %c22] : memref<4x884xf32, #tpu.memory_space<vmem>>, vector<4x800xf32>
    %cst_11 = arith.constant dense<0.000000e+00> : vector<8x800xf32>
    %11 = tpu.matmul %9, %10, %cst_11 {dimension_numbers = #tpu.dot_dimension_numbers<[1], [0], [0], [1], [0, 0, 1, 1], [], []>} : vector<8x4xf32>, vector<4x800xf32>, vector<8x800xf32> -> vector<8x800xf32>
    %12 = arith.addf %7, %11 : vector<8x800xf32>
    %c2 = arith.constant 2 : index
    %c0_12 = arith.constant 0 : index
    %c0_13 = arith.constant 0 : index
    %13 = vector.load %arg1[%c2, %c0_12, %c0_13] : memref<9x8x4xf32, #tpu.memory_space<vmem>>, vector<1x8x4xf32>
    %14 = vector.shape_cast %13 : vector<1x8x4xf32> to vector<8x4xf32>
    %c0_14 = arith.constant 0 : index
    %c23 = arith.constant 23 : index
    %15 = vector.load %arg0[%c0_14, %c23] : memref<4x884xf32, #tpu.memory_space<vmem>>, vector<4x800xf32>
    %cst_15 = arith.constant dense<0.000000e+00> : vector<8x800xf32>
    %16 = tpu.matmul %14, %15, %cst_15 {dimension_numbers = #tpu.dot_dimension_numbers<[1], [0], [0], [1], [0, 0, 1, 1], [], []>} : vector<8x4xf32>, vector<4x800xf32>, vector<8x800xf32> -> vector<8x800xf32>
    %17 = arith.addf %12, %16 : vector<8x800xf32>
    %c3 = arith.constant 3 : index
    %c0_16 = arith.constant 0 : index
    %c0_17 = arith.constant 0 : index
    %18 = vector.load %arg1[%c3, %c0_16, %c0_17] : memref<9x8x4xf32, #tpu.memory_space<vmem>>, vector<1x8x4xf32>
    %19 = vector.shape_cast %18 : vector<1x8x4xf32> to vector<8x4xf32>
    %c0_18 = arith.constant 0 : index
    %c41 = arith.constant 41 : index
    %20 = vector.load %arg0[%c0_18, %c41] : memref<4x884xf32, #tpu.memory_space<vmem>>, vector<4x800xf32>
    %cst_19 = arith.constant dense<0.000000e+00> : vector<8x800xf32>
    %21 = tpu.matmul %19, %20, %cst_19 {dimension_numbers = #tpu.dot_dimension_numbers<[1], [0], [0], [1], [0, 0, 1, 1], [], []>} : vector<8x4xf32>, vector<4x800xf32>, vector<8x800xf32> -> vector<8x800xf32>
    %22 = arith.addf %17, %21 : vector<8x800xf32>
    %c4 = arith.constant 4 : index
    %c0_20 = arith.constant 0 : index
    %c0_21 = arith.constant 0 : index
    %23 = vector.load %arg1[%c4, %c0_20, %c0_21] : memref<9x8x4xf32, #tpu.memory_space<vmem>>, vector<1x8x4xf32>
    %24 = vector.shape_cast %23 : vector<1x8x4xf32> to vector<8x4xf32>
    %c0_22 = arith.constant 0 : index
    %c42 = arith.constant 42 : index
    %25 = vector.load %arg0[%c0_22, %c42] : memref<4x884xf32, #tpu.memory_space<vmem>>, vector<4x800xf32>
    %cst_23 = arith.constant dense<0.000000e+00> : vector<8x800xf32>
    %26 = tpu.matmul %24, %25, %cst_23 {dimension_numbers = #tpu.dot_dimension_numbers<[1], [0], [0], [1], [0, 0, 1, 1], [], []>} : vector<8x4xf32>, vector<4x800xf32>, vector<8x800xf32> -> vector<8x800xf32>
    %27 = arith.addf %22, %26 : vector<8x800xf32>
    %c5 = arith.constant 5 : index
    %c0_24 = arith.constant 0 : index
    %c0_25 = arith.constant 0 : index
    %28 = vector.load %arg1[%c5, %c0_24, %c0_25] : memref<9x8x4xf32, #tpu.memory_space<vmem>>, vector<1x8x4xf32>
    %29 = vector.shape_cast %28 : vector<1x8x4xf32> to vector<8x4xf32>
    %c0_26 = arith.constant 0 : index
    %c43 = arith.constant 43 : index
    %30 = vector.load %arg0[%c0_26, %c43] : memref<4x884xf32, #tpu.memory_space<vmem>>, vector<4x800xf32>
    %cst_27 = arith.constant dense<0.000000e+00> : vector<8x800xf32>
    %31 = tpu.matmul %29, %30, %cst_27 {dimension_numbers = #tpu.dot_dimension_numbers<[1], [0], [0], [1], [0, 0, 1, 1], [], []>} : vector<8x4xf32>, vector<4x800xf32>, vector<8x800xf32> -> vector<8x800xf32>
    %32 = arith.addf %27, %31 : vector<8x800xf32>
    %c6 = arith.constant 6 : index
    %c0_28 = arith.constant 0 : index
    %c0_29 = arith.constant 0 : index
    %33 = vector.load %arg1[%c6, %c0_28, %c0_29] : memref<9x8x4xf32, #tpu.memory_space<vmem>>, vector<1x8x4xf32>
    %34 = vector.shape_cast %33 : vector<1x8x4xf32> to vector<8x4xf32>
    %c0_30 = arith.constant 0 : index
    %c61 = arith.constant 61 : index
    %35 = vector.load %arg0[%c0_30, %c61] : memref<4x884xf32, #tpu.memory_space<vmem>>, vector<4x800xf32>
    %cst_31 = arith.constant dense<0.000000e+00> : vector<8x800xf32>
    %36 = tpu.matmul %34, %35, %cst_31 {dimension_numbers = #tpu.dot_dimension_numbers<[1], [0], [0], [1], [0, 0, 1, 1], [], []>} : vector<8x4xf32>, vector<4x800xf32>, vector<8x800xf32> -> vector<8x800xf32>
    %37 = arith.addf %32, %36 : vector<8x800xf32>
    %c7 = arith.constant 7 : index
    %c0_32 = arith.constant 0 : index
    %c0_33 = arith.constant 0 : index
    %38 = vector.load %arg1[%c7, %c0_32, %c0_33] : memref<9x8x4xf32, #tpu.memory_space<vmem>>, vector<1x8x4xf32>
    %39 = vector.shape_cast %38 : vector<1x8x4xf32> to vector<8x4xf32>
    %c0_34 = arith.constant 0 : index
    %c62 = arith.constant 62 : index
    %40 = vector.load %arg0[%c0_34, %c62] : memref<4x884xf32, #tpu.memory_space<vmem>>, vector<4x800xf32>
    %cst_35 = arith.constant dense<0.000000e+00> : vector<8x800xf32>
    %41 = tpu.matmul %39, %40, %cst_35 {dimension_numbers = #tpu.dot_dimension_numbers<[1], [0], [0], [1], [0, 0, 1, 1], [], []>} : vector<8x4xf32>, vector<4x800xf32>, vector<8x800xf32> -> vector<8x800xf32>
    %42 = arith.addf %37, %41 : vector<8x800xf32>
    %c8 = arith.constant 8 : index
    %c0_36 = arith.constant 0 : index
    %c0_37 = arith.constant 0 : index
    %43 = vector.load %arg1[%c8, %c0_36, %c0_37] : memref<9x8x4xf32, #tpu.memory_space<vmem>>, vector<1x8x4xf32>
    %44 = vector.shape_cast %43 : vector<1x8x4xf32> to vector<8x4xf32>
    %c0_38 = arith.constant 0 : index
    %c63 = arith.constant 63 : index
    %45 = vector.load %arg0[%c0_38, %c63] : memref<4x884xf32, #tpu.memory_space<vmem>>, vector<4x800xf32>
    %cst_39 = arith.constant dense<0.000000e+00> : vector<8x800xf32>
    %46 = tpu.matmul %44, %45, %cst_39 {dimension_numbers = #tpu.dot_dimension_numbers<[1], [0], [0], [1], [0, 0, 1, 1], [], []>} : vector<8x4xf32>, vector<4x800xf32>, vector<8x800xf32> -> vector<8x800xf32>
    %47 = arith.addf %42, %46 : vector<8x800xf32>
    %c0_40 = arith.constant 0 : index
    %c0_41 = arith.constant 0 : index
    %48 = vector.load %arg2[%c0_40, %c0_41] : memref<8x1xf32, #tpu.memory_space<vmem>>, vector<8x1xf32>
    %49 = vector.broadcast %48 : vector<8x1xf32> to vector<8x800xf32>
    %50 = arith.addf %47, %49 : vector<8x800xf32>
    %cst_42 = arith.constant 0.00999999977 : f32
    %51 = vector.broadcast %cst_42 : f32 to vector<8x800xf32>
    %52 = arith.mulf %51, %50 : vector<8x800xf32>
    %53 = arith.maximumf %50, %52 : vector<8x800xf32>
    %54 = vector.broadcast %0 : vector<1x800xf32> to vector<8x800xf32>
    %55 = arith.mulf %53, %54 : vector<8x800xf32>
    %cst_43 = arith.constant 0.000000e+00 : f32
    %56 = vector.broadcast %cst_43 : f32 to vector<8x42xf32>
    %c0_44 = arith.constant 0 : index
    %c0_45 = arith.constant 0 : index
    %57 = vector.load %arg18[%c0_44, %c0_45] : memref<8x884xf32, #tpu.memory_space<vmem>>, vector<8x42xf32>
    tpu.vector_store %arg18[%c0_44, %c0_45], %56 {strides = array<i32>} : memref<8x884xf32, #tpu.memory_space<vmem>>, vector<8x42xf32>,
    %cst_46 = arith.constant 0.000000e+00 : f32
    %58 = vector.broadcast %cst_46 : f32 to vector<8x42xf32>
    %c0_47 = arith.constant 0 : index
    %c842 = arith.constant 842 : index
    %59 = vector.load %arg18[%c0_47, %c842] : memref<8x884xf32, #tpu.memory_space<vmem>>, vector<8x42xf32>
    tpu.vector_store %arg18[%c0_47, %c842], %58 {strides = array<i32>} : memref<8x884xf32, #tpu.memory_space<vmem>>, vector<8x42xf32>,
    %c0_48 = arith.constant 0 : index
    %c42_49 = arith.constant 42 : index
    %60 = vector.load %arg18[%c0_48, %c42_49] : memref<8x884xf32, #tpu.memory_space<vmem>>, vector<8x800xf32>
    tpu.vector_store %arg18[%c0_48, %c42_49], %55 {strides = array<i32>} : memref<8x884xf32, #tpu.memory_space<vmem>>, vector<8x800xf32>,
    %cst_50 = arith.constant 0.000000e+00 : f32
    %61 = vector.broadcast %cst_50 : f32 to vector<8x800xf32>
    %c0_51 = arith.constant 0 : index
    %c0_52 = arith.constant 0 : index
    %c0_53 = arith.constant 0 : index
    %62 = vector.load %arg3[%c0_51, %c0_52, %c0_53] : memref<9x8x8xf32, #tpu.memory_space<vmem>>, vector<1x8x8xf32>
    %63 = vector.shape_cast %62 : vector<1x8x8xf32> to vector<8x8xf32>
    %c0_54 = arith.constant 0 : index
    %c21_55 = arith.constant 21 : index
    %64 = vector.load %arg18[%c0_54, %c21_55] : memref<8x884xf32, #tpu.memory_space<vmem>>, vector<8x800xf32>
    %cst_56 = arith.constant dense<0.000000e+00> : vector<8x800xf32>
    %65 = tpu.matmul %63, %64, %cst_56 {dimension_numbers = #tpu.dot_dimension_numbers<[1], [0], [0], [1], [0, 0, 1, 1], [], []>} : vector<8x8xf32>, vector<8x800xf32>, vector<8x800xf32> -> vector<8x800xf32>
    %66 = arith.addf %61, %65 : vector<8x800xf32>
    %c1_57 = arith.constant 1 : index
    %c0_58 = arith.constant 0 : index
    %c0_59 = arith.constant 0 : index
    %67 = vector.load %arg3[%c1_57, %c0_58, %c0_59] : memref<9x8x8xf32, #tpu.memory_space<vmem>>, vector<1x8x8xf32>
    %68 = vector.shape_cast %67 : vector<1x8x8xf32> to vector<8x8xf32>
    %c0_60 = arith.constant 0 : index
    %c22_61 = arith.constant 22 : index
    %69 = vector.load %arg18[%c0_60, %c22_61] : memref<8x884xf32, #tpu.memory_space<vmem>>, vector<8x800xf32>
    %cst_62 = arith.constant dense<0.000000e+00> : vector<8x800xf32>
    %70 = tpu.matmul %68, %69, %cst_62 {dimension_numbers = #tpu.dot_dimension_numbers<[1], [0], [0], [1], [0, 0, 1, 1], [], []>} : vector<8x8xf32>, vector<8x800xf32>, vector<8x800xf32> -> vector<8x800xf32>
    %71 = arith.addf %66, %70 : vector<8x800xf32>
    %c2_63 = arith.constant 2 : index
    %c0_64 = arith.constant 0 : index
    %c0_65 = arith.constant 0 : index
    %72 = vector.load %arg3[%c2_63, %c0_64, %c0_65] : memref<9x8x8xf32, #tpu.memory_space<vmem>>, vector<1x8x8xf32>
    %73 = vector.shape_cast %72 : vector<1x8x8xf32> to vector<8x8xf32>
    %c0_66 = arith.constant 0 : index
    %c23_67 = arith.constant 23 : index
    %74 = vector.load %arg18[%c0_66, %c23_67] : memref<8x884xf32, #tpu.memory_space<vmem>>, vector<8x800xf32>
    %cst_68 = arith.constant dense<0.000000e+00> : vector<8x800xf32>
    %75 = tpu.matmul %73, %74, %cst_68 {dimension_numbers = #tpu.dot_dimension_numbers<[1], [0], [0], [1], [0, 0, 1, 1], [], []>} : vector<8x8xf32>, vector<8x800xf32>, vector<8x800xf32> -> vector<8x800xf32>
    %76 = arith.addf %71, %75 : vector<8x800xf32>
    %c3_69 = arith.constant 3 : index
    %c0_70 = arith.constant 0 : index
    %c0_71 = arith.constant 0 : index
    %77 = vector.load %arg3[%c3_69, %c0_70, %c0_71] : memref<9x8x8xf32, #tpu.memory_space<vmem>>, vector<1x8x8xf32>
    %78 = vector.shape_cast %77 : vector<1x8x8xf32> to vector<8x8xf32>
    %c0_72 = arith.constant 0 : index
    %c41_73 = arith.constant 41 : index
    %79 = vector.load %arg18[%c0_72, %c41_73] : memref<8x884xf32, #tpu.memory_space<vmem>>, vector<8x800xf32>
    %cst_74 = arith.constant dense<0.000000e+00> : vector<8x800xf32>
    %80 = tpu.matmul %78, %79, %cst_74 {dimension_numbers = #tpu.dot_dimension_numbers<[1], [0], [0], [1], [0, 0, 1, 1], [], []>} : vector<8x8xf32>, vector<8x800xf32>, vector<8x800xf32> -> vector<8x800xf32>
    %81 = arith.addf %76, %80 : vector<8x800xf32>
    %c4_75 = arith.constant 4 : index
    %c0_76 = arith.constant 0 : index
    %c0_77 = arith.constant 0 : index
    %82 = vector.load %arg3[%c4_75, %c0_76, %c0_77] : memref<9x8x8xf32, #tpu.memory_space<vmem>>, vector<1x8x8xf32>
    %83 = vector.shape_cast %82 : vector<1x8x8xf32> to vector<8x8xf32>
    %c0_78 = arith.constant 0 : index
    %c42_79 = arith.constant 42 : index
    %84 = vector.load %arg18[%c0_78, %c42_79] : memref<8x884xf32, #tpu.memory_space<vmem>>, vector<8x800xf32>
    %cst_80 = arith.constant dense<0.000000e+00> : vector<8x800xf32>
    %85 = tpu.matmul %83, %84, %cst_80 {dimension_numbers = #tpu.dot_dimension_numbers<[1], [0], [0], [1], [0, 0, 1, 1], [], []>} : vector<8x8xf32>, vector<8x800xf32>, vector<8x800xf32> -> vector<8x800xf32>
    %86 = arith.addf %81, %85 : vector<8x800xf32>
    %c5_81 = arith.constant 5 : index
    %c0_82 = arith.constant 0 : index
    %c0_83 = arith.constant 0 : index
    %87 = vector.load %arg3[%c5_81, %c0_82, %c0_83] : memref<9x8x8xf32, #tpu.memory_space<vmem>>, vector<1x8x8xf32>
    %88 = vector.shape_cast %87 : vector<1x8x8xf32> to vector<8x8xf32>
    %c0_84 = arith.constant 0 : index
    %c43_85 = arith.constant 43 : index
    %89 = vector.load %arg18[%c0_84, %c43_85] : memref<8x884xf32, #tpu.memory_space<vmem>>, vector<8x800xf32>
    %cst_86 = arith.constant dense<0.000000e+00> : vector<8x800xf32>
    %90 = tpu.matmul %88, %89, %cst_86 {dimension_numbers = #tpu.dot_dimension_numbers<[1], [0], [0], [1], [0, 0, 1, 1], [], []>} : vector<8x8xf32>, vector<8x800xf32>, vector<8x800xf32> -> vector<8x800xf32>
    %91 = arith.addf %86, %90 : vector<8x800xf32>
    %c6_87 = arith.constant 6 : index
    %c0_88 = arith.constant 0 : index
    %c0_89 = arith.constant 0 : index
    %92 = vector.load %arg3[%c6_87, %c0_88, %c0_89] : memref<9x8x8xf32, #tpu.memory_space<vmem>>, vector<1x8x8xf32>
    %93 = vector.shape_cast %92 : vector<1x8x8xf32> to vector<8x8xf32>
    %c0_90 = arith.constant 0 : index
    %c61_91 = arith.constant 61 : index
    %94 = vector.load %arg18[%c0_90, %c61_91] : memref<8x884xf32, #tpu.memory_space<vmem>>, vector<8x800xf32>
    %cst_92 = arith.constant dense<0.000000e+00> : vector<8x800xf32>
    %95 = tpu.matmul %93, %94, %cst_92 {dimension_numbers = #tpu.dot_dimension_numbers<[1], [0], [0], [1], [0, 0, 1, 1], [], []>} : vector<8x8xf32>, vector<8x800xf32>, vector<8x800xf32> -> vector<8x800xf32>
    %96 = arith.addf %91, %95 : vector<8x800xf32>
    %c7_93 = arith.constant 7 : index
    %c0_94 = arith.constant 0 : index
    %c0_95 = arith.constant 0 : index
    %97 = vector.load %arg3[%c7_93, %c0_94, %c0_95] : memref<9x8x8xf32, #tpu.memory_space<vmem>>, vector<1x8x8xf32>
    %98 = vector.shape_cast %97 : vector<1x8x8xf32> to vector<8x8xf32>
    %c0_96 = arith.constant 0 : index
    %c62_97 = arith.constant 62 : index
    %99 = vector.load %arg18[%c0_96, %c62_97] : memref<8x884xf32, #tpu.memory_space<vmem>>, vector<8x800xf32>
    %cst_98 = arith.constant dense<0.000000e+00> : vector<8x800xf32>
    %100 = tpu.matmul %98, %99, %cst_98 {dimension_numbers = #tpu.dot_dimension_numbers<[1], [0], [0], [1], [0, 0, 1, 1], [], []>} : vector<8x8xf32>, vector<8x800xf32>, vector<8x800xf32> -> vector<8x800xf32>
    %101 = arith.addf %96, %100 : vector<8x800xf32>
    %c8_99 = arith.constant 8 : index
    %c0_100 = arith.constant 0 : index
    %c0_101 = arith.constant 0 : index
    %102 = vector.load %arg3[%c8_99, %c0_100, %c0_101] : memref<9x8x8xf32, #tpu.memory_space<vmem>>, vector<1x8x8xf32>
    %103 = vector.shape_cast %102 : vector<1x8x8xf32> to vector<8x8xf32>
    %c0_102 = arith.constant 0 : index
    %c63_103 = arith.constant 63 : index
    %104 = vector.load %arg18[%c0_102, %c63_103] : memref<8x884xf32, #tpu.memory_space<vmem>>, vector<8x800xf32>
    %cst_104 = arith.constant dense<0.000000e+00> : vector<8x800xf32>
    %105 = tpu.matmul %103, %104, %cst_104 {dimension_numbers = #tpu.dot_dimension_numbers<[1], [0], [0], [1], [0, 0, 1, 1], [], []>} : vector<8x8xf32>, vector<8x800xf32>, vector<8x800xf32> -> vector<8x800xf32>
    %106 = arith.addf %101, %105 : vector<8x800xf32>
    %c0_105 = arith.constant 0 : index
    %c0_106 = arith.constant 0 : index
    %107 = vector.load %arg4[%c0_105, %c0_106] : memref<8x1xf32, #tpu.memory_space<vmem>>, vector<8x1xf32>
    %108 = vector.broadcast %107 : vector<8x1xf32> to vector<8x800xf32>
    %109 = arith.addf %106, %108 : vector<8x800xf32>
    %cst_107 = arith.constant 0.00999999977 : f32
    %110 = vector.broadcast %cst_107 : f32 to vector<8x800xf32>
    %111 = arith.mulf %110, %109 : vector<8x800xf32>
    %112 = arith.maximumf %109, %111 : vector<8x800xf32>
    %cst_108 = arith.constant 0.000000e+00 : f32
    %113 = vector.broadcast %cst_108 : f32 to vector<8x42xf32>
    %c0_109 = arith.constant 0 : index
    %c0_110 = arith.constant 0 : index
    %114 = vector.load %arg19[%c0_109, %c0_110] : memref<8x884xf32, #tpu.memory_space<vmem>>, vector<8x42xf32>
    tpu.vector_store %arg19[%c0_109, %c0_110], %113 {strides = array<i32>} : memref<8x884xf32, #tpu.memory_space<vmem>>, vector<8x42xf32>,
    %cst_111 = arith.constant 0.000000e+00 : f32
    %115 = vector.broadcast %cst_111 : f32 to vector<8x42xf32>
    %c0_112 = arith.constant 0 : index
    %c842_113 = arith.constant 842 : index
    %116 = vector.load %arg19[%c0_112, %c842_113] : memref<8x884xf32, #tpu.memory_space<vmem>>, vector<8x42xf32>
    tpu.vector_store %arg19[%c0_112, %c842_113], %115 {strides = array<i32>} : memref<8x884xf32, #tpu.memory_space<vmem>>, vector<8x42xf32>,
    %c0_114 = arith.constant 0 : index
    %c42_115 = arith.constant 42 : index
    %117 = vector.load %arg19[%c0_114, %c42_115] : memref<8x884xf32, #tpu.memory_space<vmem>>, vector<8x800xf32>
    tpu.vector_store %arg19[%c0_114, %c42_115], %112 {strides = array<i32>} : memref<8x884xf32, #tpu.memory_space<vmem>>, vector<8x800xf32>,
    %c0_116 = arith.constant 0 : index
    %c43_117 = arith.constant 43 : index
    %118 = vector.load %arg19[%c0_116, %c43_117] : memref<8x884xf32, #tpu.memory_space<vmem>>, vector<8x800xf32>
    %119 = arith.maximumf %112, %118 : vector<8x800xf32>
    %c0_118 = arith.constant 0 : index
    %c44 = arith.constant 44 : index
    %120 = vector.load %arg19[%c0_118, %c44] : memref<8x884xf32, #tpu.memory_space<vmem>>, vector<8x800xf32>
    %121 = arith.maximumf %119, %120 : vector<8x800xf32>
    %c0_119 = arith.constant 0 : index
    %c62_120 = arith.constant 62 : index
    %122 = vector.load %arg19[%c0_119, %c62_120] : memref<8x884xf32, #tpu.memory_space<vmem>>, vector<8x800xf32>
    %123 = arith.maximumf %121, %122 : vector<8x800xf32>
    %c0_121 = arith.constant 0 : index
    %c63_122 = arith.constant 63 : index
    %124 = vector.load %arg19[%c0_121, %c63_122] : memref<8x884xf32, #tpu.memory_space<vmem>>, vector<8x800xf32>
    %125 = arith.maximumf %123, %124 : vector<8x800xf32>
    %c0_123 = arith.constant 0 : index
    %c64 = arith.constant 64 : index
    %126 = vector.load %arg19[%c0_123, %c64] : memref<8x884xf32, #tpu.memory_space<vmem>>, vector<8x800xf32>
    %127 = arith.maximumf %125, %126 : vector<8x800xf32>
    %c0_124 = arith.constant 0 : index
    %c82 = arith.constant 82 : index
    %128 = vector.load %arg19[%c0_124, %c82] : memref<8x884xf32, #tpu.memory_space<vmem>>, vector<8x800xf32>
    %129 = arith.maximumf %127, %128 : vector<8x800xf32>
    %c0_125 = arith.constant 0 : index
    %c83 = arith.constant 83 : index
    %130 = vector.load %arg19[%c0_125, %c83] : memref<8x884xf32, #tpu.memory_space<vmem>>, vector<8x800xf32>
    %131 = arith.maximumf %129, %130 : vector<8x800xf32>
    %c0_126 = arith.constant 0 : index
    %c84 = arith.constant 84 : index
    %132 = vector.load %arg19[%c0_126, %c84] : memref<8x884xf32, #tpu.memory_space<vmem>>, vector<8x800xf32>
    %133 = arith.maximumf %131, %132 : vector<8x800xf32>
    %c0_127 = arith.constant 0 : index
    %c0_128 = arith.constant 0 : index
    %134 = vector.load %arg8[%c0_127, %c0_128] : memref<800x128xf32, #tpu.memory_space<vmem>>, vector<800x128xf32>
    %cst_129 = arith.constant dense<0.000000e+00> : vector<8x128xf32>
    %135 = tpu.matmul %133, %134, %cst_129 {dimension_numbers = #tpu.dot_dimension_numbers<[1], [0], [0], [1], [0, 0, 1, 1], [], []>} : vector<8x800xf32>, vector<800x128xf32>, vector<8x128xf32> -> vector<8x128xf32>
    %cst_130 = arith.constant dense<0.000000e+00> : vector<8xf32>
    %136 = vector.multi_reduction <add>, %135, %cst_130 [1] : vector<8x128xf32> to vector<8xf32>
    %137 = vector.shape_cast %136 : vector<8xf32> to vector<8x1xf32>
    %cst_131 = arith.constant 0.013888889 : f32
    %138 = vector.broadcast %cst_131 : f32 to vector<8x1xf32>
    %139 = arith.mulf %137, %138 : vector<8x1xf32>
    %140 = vector.broadcast %139 : vector<8x1xf32> to vector<8x128xf32>
    %141 = arith.subf %135, %140 : vector<8x128xf32>
    %142 = vector.broadcast %1 : vector<1x128xf32> to vector<8x128xf32>
    %143 = arith.mulf %141, %142 : vector<8x128xf32>
    %144 = arith.mulf %143, %143 : vector<8x128xf32>
    %cst_132 = arith.constant dense<0.000000e+00> : vector<8xf32>
    %145 = vector.multi_reduction <add>, %144, %cst_132 [1] : vector<8x128xf32> to vector<8xf32>
    %146 = vector.shape_cast %145 : vector<8xf32> to vector<8x1xf32>
    %cst_133 = arith.constant 0.013888889 : f32
    %147 = vector.broadcast %cst_133 : f32 to vector<8x1xf32>
    %148 = arith.mulf %146, %147 : vector<8x1xf32>
    %c0_134 = arith.constant 0 : index
    %c0_135 = arith.constant 0 : index
    %149 = vector.load %arg5[%c0_134, %c0_135] : memref<8x1xf32, #tpu.memory_space<vmem>>, vector<8x1xf32>
    %cst_136 = arith.constant 9.99999974E-6 : f32
    %150 = vector.broadcast %cst_136 : f32 to vector<8x1xf32>
    %151 = arith.addf %148, %150 : vector<8x1xf32>
    %152 = math.rsqrt %151 : vector<8x1xf32>
    %153 = arith.mulf %149, %152 : vector<8x1xf32>
    %154 = vector.broadcast %153 : vector<8x1xf32> to vector<8x128xf32>
    %155 = arith.mulf %143, %154 : vector<8x128xf32>
    %c0_137 = arith.constant 0 : index
    %c0_138 = arith.constant 0 : index
    %156 = vector.load %arg6[%c0_137, %c0_138] : memref<8x1xf32, #tpu.memory_space<vmem>>, vector<8x1xf32>
    %157 = vector.broadcast %156 : vector<8x1xf32> to vector<8x128xf32>
    %158 = arith.addf %155, %157 : vector<8x128xf32>
    %159 = vector.broadcast %1 : vector<1x128xf32> to vector<8x128xf32>
    %160 = arith.mulf %158, %159 : vector<8x128xf32>
    %cst_139 = arith.constant 0.000000e+00 : f32
    %161 = vector.broadcast %cst_139 : f32 to vector<8x18xf32>
    %c0_140 = arith.constant 0 : index
    %c0_141 = arith.constant 0 : index
    %162 = vector.load %arg20[%c0_140, %c0_141] : memref<8x164xf32, #tpu.memory_space<vmem>>, vector<8x18xf32>
    tpu.vector_store %arg20[%c0_140, %c0_141], %161 {strides = array<i32>} : memref<8x164xf32, #tpu.memory_space<vmem>>, vector<8x18xf32>,
    %cst_142 = arith.constant 0.000000e+00 : f32
    %163 = vector.broadcast %cst_142 : f32 to vector<8x18xf32>
    %c0_143 = arith.constant 0 : index
    %c146 = arith.constant 146 : index
    %164 = vector.load %arg20[%c0_143, %c146] : memref<8x164xf32, #tpu.memory_space<vmem>>, vector<8x18xf32>
    tpu.vector_store %arg20[%c0_143, %c146], %163 {strides = array<i32>} : memref<8x164xf32, #tpu.memory_space<vmem>>, vector<8x18xf32>,
    %c0_144 = arith.constant 0 : index
    %c18 = arith.constant 18 : index
    %165 = vector.load %arg20[%c0_144, %c18] : memref<8x164xf32, #tpu.memory_space<vmem>>, vector<8x128xf32>
    tpu.vector_store %arg20[%c0_144, %c18], %160 {strides = array<i32>} : memref<8x164xf32, #tpu.memory_space<vmem>>, vector<8x128xf32>,
    %c0_145 = arith.constant 0 : index
    %c0_146 = arith.constant 0 : index
    %166 = vector.load %arg9[%c0_145, %c0_146] : memref<1x128xf32, #tpu.memory_space<vmem>>, vector<1x128xf32>
    %cst_147 = arith.constant 0.000000e+00 : f32
    %167 = vector.broadcast %cst_147 : f32 to vector<16x128xf32>
    %c0_148 = arith.constant 0 : index
    %c0_149 = arith.constant 0 : index
    %c0_150 = arith.constant 0 : index
    %168 = vector.load %arg10[%c0_148, %c0_149, %c0_150] : memref<9x16x8xf32, #tpu.memory_space<vmem>>, vector<1x16x8xf32>
    %169 = vector.shape_cast %168 : vector<1x16x8xf32> to vector<16x8xf32>
    %c0_151 = arith.constant 0 : index
    %c9 = arith.constant 9 : index
    %170 = vector.load %arg20[%c0_151, %c9] : memref<8x164xf32, #tpu.memory_space<vmem>>, vector<8x128xf32>
    %cst_152 = arith.constant dense<0.000000e+00> : vector<16x128xf32>
    %171 = tpu.matmul %169, %170, %cst_152 {dimension_numbers = #tpu.dot_dimension_numbers<[1], [0], [0], [1], [0, 0, 1, 1], [], []>} : vector<16x8xf32>, vector<8x128xf32>, vector<16x128xf32> -> vector<16x128xf32>
    %172 = arith.addf %167, %171 : vector<16x128xf32>
    %c1_153 = arith.constant 1 : index
    %c0_154 = arith.constant 0 : index
    %c0_155 = arith.constant 0 : index
    %173 = vector.load %arg10[%c1_153, %c0_154, %c0_155] : memref<9x16x8xf32, #tpu.memory_space<vmem>>, vector<1x16x8xf32>
    %174 = vector.shape_cast %173 : vector<1x16x8xf32> to vector<16x8xf32>
    %c0_156 = arith.constant 0 : index
    %c10 = arith.constant 10 : index
    %175 = vector.load %arg20[%c0_156, %c10] : memref<8x164xf32, #tpu.memory_space<vmem>>, vector<8x128xf32>
    %cst_157 = arith.constant dense<0.000000e+00> : vector<16x128xf32>
    %176 = tpu.matmul %174, %175, %cst_157 {dimension_numbers = #tpu.dot_dimension_numbers<[1], [0], [0], [1], [0, 0, 1, 1], [], []>} : vector<16x8xf32>, vector<8x128xf32>, vector<16x128xf32> -> vector<16x128xf32>
    %177 = arith.addf %172, %176 : vector<16x128xf32>
    %c2_158 = arith.constant 2 : index
    %c0_159 = arith.constant 0 : index
    %c0_160 = arith.constant 0 : index
    %178 = vector.load %arg10[%c2_158, %c0_159, %c0_160] : memref<9x16x8xf32, #tpu.memory_space<vmem>>, vector<1x16x8xf32>
    %179 = vector.shape_cast %178 : vector<1x16x8xf32> to vector<16x8xf32>
    %c0_161 = arith.constant 0 : index
    %c11 = arith.constant 11 : index
    %180 = vector.load %arg20[%c0_161, %c11] : memref<8x164xf32, #tpu.memory_space<vmem>>, vector<8x128xf32>
    %cst_162 = arith.constant dense<0.000000e+00> : vector<16x128xf32>
    %181 = tpu.matmul %179, %180, %cst_162 {dimension_numbers = #tpu.dot_dimension_numbers<[1], [0], [0], [1], [0, 0, 1, 1], [], []>} : vector<16x8xf32>, vector<8x128xf32>, vector<16x128xf32> -> vector<16x128xf32>
    %182 = arith.addf %177, %181 : vector<16x128xf32>
    %c3_163 = arith.constant 3 : index
    %c0_164 = arith.constant 0 : index
    %c0_165 = arith.constant 0 : index
    %183 = vector.load %arg10[%c3_163, %c0_164, %c0_165] : memref<9x16x8xf32, #tpu.memory_space<vmem>>, vector<1x16x8xf32>
    %184 = vector.shape_cast %183 : vector<1x16x8xf32> to vector<16x8xf32>
    %c0_166 = arith.constant 0 : index
    %c17 = arith.constant 17 : index
    %185 = vector.load %arg20[%c0_166, %c17] : memref<8x164xf32, #tpu.memory_space<vmem>>, vector<8x128xf32>
    %cst_167 = arith.constant dense<0.000000e+00> : vector<16x128xf32>
    %186 = tpu.matmul %184, %185, %cst_167 {dimension_numbers = #tpu.dot_dimension_numbers<[1], [0], [0], [1], [0, 0, 1, 1], [], []>} : vector<16x8xf32>, vector<8x128xf32>, vector<16x128xf32> -> vector<16x128xf32>
    %187 = arith.addf %182, %186 : vector<16x128xf32>
    %c4_168 = arith.constant 4 : index
    %c0_169 = arith.constant 0 : index
    %c0_170 = arith.constant 0 : index
    %188 = vector.load %arg10[%c4_168, %c0_169, %c0_170] : memref<9x16x8xf32, #tpu.memory_space<vmem>>, vector<1x16x8xf32>
    %189 = vector.shape_cast %188 : vector<1x16x8xf32> to vector<16x8xf32>
    %c0_171 = arith.constant 0 : index
    %c18_172 = arith.constant 18 : index
    %190 = vector.load %arg20[%c0_171, %c18_172] : memref<8x164xf32, #tpu.memory_space<vmem>>, vector<8x128xf32>
    %cst_173 = arith.constant dense<0.000000e+00> : vector<16x128xf32>
    %191 = tpu.matmul %189, %190, %cst_173 {dimension_numbers = #tpu.dot_dimension_numbers<[1], [0], [0], [1], [0, 0, 1, 1], [], []>} : vector<16x8xf32>, vector<8x128xf32>, vector<16x128xf32> -> vector<16x128xf32>
    %192 = arith.addf %187, %191 : vector<16x128xf32>
    %c5_174 = arith.constant 5 : index
    %c0_175 = arith.constant 0 : index
    %c0_176 = arith.constant 0 : index
    %193 = vector.load %arg10[%c5_174, %c0_175, %c0_176] : memref<9x16x8xf32, #tpu.memory_space<vmem>>, vector<1x16x8xf32>
    %194 = vector.shape_cast %193 : vector<1x16x8xf32> to vector<16x8xf32>
    %c0_177 = arith.constant 0 : index
    %c19 = arith.constant 19 : index
    %195 = vector.load %arg20[%c0_177, %c19] : memref<8x164xf32, #tpu.memory_space<vmem>>, vector<8x128xf32>
    %cst_178 = arith.constant dense<0.000000e+00> : vector<16x128xf32>
    %196 = tpu.matmul %194, %195, %cst_178 {dimension_numbers = #tpu.dot_dimension_numbers<[1], [0], [0], [1], [0, 0, 1, 1], [], []>} : vector<16x8xf32>, vector<8x128xf32>, vector<16x128xf32> -> vector<16x128xf32>
    %197 = arith.addf %192, %196 : vector<16x128xf32>
    %c6_179 = arith.constant 6 : index
    %c0_180 = arith.constant 0 : index
    %c0_181 = arith.constant 0 : index
    %198 = vector.load %arg10[%c6_179, %c0_180, %c0_181] : memref<9x16x8xf32, #tpu.memory_space<vmem>>, vector<1x16x8xf32>
    %199 = vector.shape_cast %198 : vector<1x16x8xf32> to vector<16x8xf32>
    %c0_182 = arith.constant 0 : index
    %c25 = arith.constant 25 : index
    %200 = vector.load %arg20[%c0_182, %c25] : memref<8x164xf32, #tpu.memory_space<vmem>>, vector<8x128xf32>
    %cst_183 = arith.constant dense<0.000000e+00> : vector<16x128xf32>
    %201 = tpu.matmul %199, %200, %cst_183 {dimension_numbers = #tpu.dot_dimension_numbers<[1], [0], [0], [1], [0, 0, 1, 1], [], []>} : vector<16x8xf32>, vector<8x128xf32>, vector<16x128xf32> -> vector<16x128xf32>
    %202 = arith.addf %197, %201 : vector<16x128xf32>
    %c7_184 = arith.constant 7 : index
    %c0_185 = arith.constant 0 : index
    %c0_186 = arith.constant 0 : index
    %203 = vector.load %arg10[%c7_184, %c0_185, %c0_186] : memref<9x16x8xf32, #tpu.memory_space<vmem>>, vector<1x16x8xf32>
    %204 = vector.shape_cast %203 : vector<1x16x8xf32> to vector<16x8xf32>
    %c0_187 = arith.constant 0 : index
    %c26 = arith.constant 26 : index
    %205 = vector.load %arg20[%c0_187, %c26] : memref<8x164xf32, #tpu.memory_space<vmem>>, vector<8x128xf32>
    %cst_188 = arith.constant dense<0.000000e+00> : vector<16x128xf32>
    %206 = tpu.matmul %204, %205, %cst_188 {dimension_numbers = #tpu.dot_dimension_numbers<[1], [0], [0], [1], [0, 0, 1, 1], [], []>} : vector<16x8xf32>, vector<8x128xf32>, vector<16x128xf32> -> vector<16x128xf32>
    %207 = arith.addf %202, %206 : vector<16x128xf32>
    %c8_189 = arith.constant 8 : index
    %c0_190 = arith.constant 0 : index
    %c0_191 = arith.constant 0 : index
    %208 = vector.load %arg10[%c8_189, %c0_190, %c0_191] : memref<9x16x8xf32, #tpu.memory_space<vmem>>, vector<1x16x8xf32>
    %209 = vector.shape_cast %208 : vector<1x16x8xf32> to vector<16x8xf32>
    %c0_192 = arith.constant 0 : index
    %c27 = arith.constant 27 : index
    %210 = vector.load %arg20[%c0_192, %c27] : memref<8x164xf32, #tpu.memory_space<vmem>>, vector<8x128xf32>
    %cst_193 = arith.constant dense<0.000000e+00> : vector<16x128xf32>
    %211 = tpu.matmul %209, %210, %cst_193 {dimension_numbers = #tpu.dot_dimension_numbers<[1], [0], [0], [1], [0, 0, 1, 1], [], []>} : vector<16x8xf32>, vector<8x128xf32>, vector<16x128xf32> -> vector<16x128xf32>
    %212 = arith.addf %207, %211 : vector<16x128xf32>
    %c0_194 = arith.constant 0 : index
    %c0_195 = arith.constant 0 : index
    %213 = vector.load %arg11[%c0_194, %c0_195] : memref<16x1xf32, #tpu.memory_space<vmem>>, vector<16x1xf32>
    %214 = vector.broadcast %213 : vector<16x1xf32> to vector<16x128xf32>
    %215 = arith.addf %212, %214 : vector<16x128xf32>
    %cst_196 = arith.constant 0.00999999977 : f32
    %216 = vector.broadcast %cst_196 : f32 to vector<16x128xf32>
    %217 = arith.mulf %216, %215 : vector<16x128xf32>
    %218 = arith.maximumf %215, %217 : vector<16x128xf32>
    %219 = vector.broadcast %166 : vector<1x128xf32> to vector<16x128xf32>
    %220 = arith.mulf %218, %219 : vector<16x128xf32>
    %cst_197 = arith.constant 0.000000e+00 : f32
    %221 = vector.broadcast %cst_197 : f32 to vector<16x18xf32>
    %c0_198 = arith.constant 0 : index
    %c0_199 = arith.constant 0 : index
    %222 = vector.load %arg21[%c0_198, %c0_199] : memref<16x164xf32, #tpu.memory_space<vmem>>, vector<16x18xf32>
    tpu.vector_store %arg21[%c0_198, %c0_199], %221 {strides = array<i32>} : memref<16x164xf32, #tpu.memory_space<vmem>>, vector<16x18xf32>,
    %cst_200 = arith.constant 0.000000e+00 : f32
    %223 = vector.broadcast %cst_200 : f32 to vector<16x18xf32>
    %c0_201 = arith.constant 0 : index
    %c146_202 = arith.constant 146 : index
    %224 = vector.load %arg21[%c0_201, %c146_202] : memref<16x164xf32, #tpu.memory_space<vmem>>, vector<16x18xf32>
    tpu.vector_store %arg21[%c0_201, %c146_202], %223 {strides = array<i32>} : memref<16x164xf32, #tpu.memory_space<vmem>>, vector<16x18xf32>,
    %c0_203 = arith.constant 0 : index
    %c18_204 = arith.constant 18 : index
    %225 = vector.load %arg21[%c0_203, %c18_204] : memref<16x164xf32, #tpu.memory_space<vmem>>, vector<16x128xf32>
    tpu.vector_store %arg21[%c0_203, %c18_204], %220 {strides = array<i32>} : memref<16x164xf32, #tpu.memory_space<vmem>>, vector<16x128xf32>,
    %cst_205 = arith.constant 0.000000e+00 : f32
    %226 = vector.broadcast %cst_205 : f32 to vector<16x128xf32>
    %c0_206 = arith.constant 0 : index
    %c0_207 = arith.constant 0 : index
    %c0_208 = arith.constant 0 : index
    %227 = vector.load %arg12[%c0_206, %c0_207, %c0_208] : memref<9x16x16xf32, #tpu.memory_space<vmem>>, vector<1x16x16xf32>
    %228 = vector.shape_cast %227 : vector<1x16x16xf32> to vector<16x16xf32>
    %c0_209 = arith.constant 0 : index
    %c9_210 = arith.constant 9 : index
    %229 = vector.load %arg21[%c0_209, %c9_210] : memref<16x164xf32, #tpu.memory_space<vmem>>, vector<16x128xf32>
    %cst_211 = arith.constant dense<0.000000e+00> : vector<16x128xf32>
    %230 = tpu.matmul %228, %229, %cst_211 {dimension_numbers = #tpu.dot_dimension_numbers<[1], [0], [0], [1], [0, 0, 1, 1], [], []>} : vector<16x16xf32>, vector<16x128xf32>, vector<16x128xf32> -> vector<16x128xf32>
    %231 = arith.addf %226, %230 : vector<16x128xf32>
    %c1_212 = arith.constant 1 : index
    %c0_213 = arith.constant 0 : index
    %c0_214 = arith.constant 0 : index
    %232 = vector.load %arg12[%c1_212, %c0_213, %c0_214] : memref<9x16x16xf32, #tpu.memory_space<vmem>>, vector<1x16x16xf32>
    %233 = vector.shape_cast %232 : vector<1x16x16xf32> to vector<16x16xf32>
    %c0_215 = arith.constant 0 : index
    %c10_216 = arith.constant 10 : index
    %234 = vector.load %arg21[%c0_215, %c10_216] : memref<16x164xf32, #tpu.memory_space<vmem>>, vector<16x128xf32>
    %cst_217 = arith.constant dense<0.000000e+00> : vector<16x128xf32>
    %235 = tpu.matmul %233, %234, %cst_217 {dimension_numbers = #tpu.dot_dimension_numbers<[1], [0], [0], [1], [0, 0, 1, 1], [], []>} : vector<16x16xf32>, vector<16x128xf32>, vector<16x128xf32> -> vector<16x128xf32>
    %236 = arith.addf %231, %235 : vector<16x128xf32>
    %c2_218 = arith.constant 2 : index
    %c0_219 = arith.constant 0 : index
    %c0_220 = arith.constant 0 : index
    %237 = vector.load %arg12[%c2_218, %c0_219, %c0_220] : memref<9x16x16xf32, #tpu.memory_space<vmem>>, vector<1x16x16xf32>
    %238 = vector.shape_cast %237 : vector<1x16x16xf32> to vector<16x16xf32>
    %c0_221 = arith.constant 0 : index
    %c11_222 = arith.constant 11 : index
    %239 = vector.load %arg21[%c0_221, %c11_222] : memref<16x164xf32, #tpu.memory_space<vmem>>, vector<16x128xf32>
    %cst_223 = arith.constant dense<0.000000e+00> : vector<16x128xf32>
    %240 = tpu.matmul %238, %239, %cst_223 {dimension_numbers = #tpu.dot_dimension_numbers<[1], [0], [0], [1], [0, 0, 1, 1], [], []>} : vector<16x16xf32>, vector<16x128xf32>, vector<16x128xf32> -> vector<16x128xf32>
    %241 = arith.addf %236, %240 : vector<16x128xf32>
    %c3_224 = arith.constant 3 : index
    %c0_225 = arith.constant 0 : index
    %c0_226 = arith.constant 0 : index
    %242 = vector.load %arg12[%c3_224, %c0_225, %c0_226] : memref<9x16x16xf32, #tpu.memory_space<vmem>>, vector<1x16x16xf32>
    %243 = vector.shape_cast %242 : vector<1x16x16xf32> to vector<16x16xf32>
    %c0_227 = arith.constant 0 : index
    %c17_228 = arith.constant 17 : index
    %244 = vector.load %arg21[%c0_227, %c17_228] : memref<16x164xf32, #tpu.memory_space<vmem>>, vector<16x128xf32>
    %cst_229 = arith.constant dense<0.000000e+00> : vector<16x128xf32>
    %245 = tpu.matmul %243, %244, %cst_229 {dimension_numbers = #tpu.dot_dimension_numbers<[1], [0], [0], [1], [0, 0, 1, 1], [], []>} : vector<16x16xf32>, vector<16x128xf32>, vector<16x128xf32> -> vector<16x128xf32>
    %246 = arith.addf %241, %245 : vector<16x128xf32>
    %c4_230 = arith.constant 4 : index
    %c0_231 = arith.constant 0 : index
    %c0_232 = arith.constant 0 : index
    %247 = vector.load %arg12[%c4_230, %c0_231, %c0_232] : memref<9x16x16xf32, #tpu.memory_space<vmem>>, vector<1x16x16xf32>
    %248 = vector.shape_cast %247 : vector<1x16x16xf32> to vector<16x16xf32>
    %c0_233 = arith.constant 0 : index
    %c18_234 = arith.constant 18 : index
    %249 = vector.load %arg21[%c0_233, %c18_234] : memref<16x164xf32, #tpu.memory_space<vmem>>, vector<16x128xf32>
    %cst_235 = arith.constant dense<0.000000e+00> : vector<16x128xf32>
    %250 = tpu.matmul %248, %249, %cst_235 {dimension_numbers = #tpu.dot_dimension_numbers<[1], [0], [0], [1], [0, 0, 1, 1], [], []>} : vector<16x16xf32>, vector<16x128xf32>, vector<16x128xf32> -> vector<16x128xf32>
    %251 = arith.addf %246, %250 : vector<16x128xf32>
    %c5_236 = arith.constant 5 : index
    %c0_237 = arith.constant 0 : index
    %c0_238 = arith.constant 0 : index
    %252 = vector.load %arg12[%c5_236, %c0_237, %c0_238] : memref<9x16x16xf32, #tpu.memory_space<vmem>>, vector<1x16x16xf32>
    %253 = vector.shape_cast %252 : vector<1x16x16xf32> to vector<16x16xf32>
    %c0_239 = arith.constant 0 : index
    %c19_240 = arith.constant 19 : index
    %254 = vector.load %arg21[%c0_239, %c19_240] : memref<16x164xf32, #tpu.memory_space<vmem>>, vector<16x128xf32>
    %cst_241 = arith.constant dense<0.000000e+00> : vector<16x128xf32>
    %255 = tpu.matmul %253, %254, %cst_241 {dimension_numbers = #tpu.dot_dimension_numbers<[1], [0], [0], [1], [0, 0, 1, 1], [], []>} : vector<16x16xf32>, vector<16x128xf32>, vector<16x128xf32> -> vector<16x128xf32>
    %256 = arith.addf %251, %255 : vector<16x128xf32>
    %c6_242 = arith.constant 6 : index
    %c0_243 = arith.constant 0 : index
    %c0_244 = arith.constant 0 : index
    %257 = vector.load %arg12[%c6_242, %c0_243, %c0_244] : memref<9x16x16xf32, #tpu.memory_space<vmem>>, vector<1x16x16xf32>
    %258 = vector.shape_cast %257 : vector<1x16x16xf32> to vector<16x16xf32>
    %c0_245 = arith.constant 0 : index
    %c25_246 = arith.constant 25 : index
    %259 = vector.load %arg21[%c0_245, %c25_246] : memref<16x164xf32, #tpu.memory_space<vmem>>, vector<16x128xf32>
    %cst_247 = arith.constant dense<0.000000e+00> : vector<16x128xf32>
    %260 = tpu.matmul %258, %259, %cst_247 {dimension_numbers = #tpu.dot_dimension_numbers<[1], [0], [0], [1], [0, 0, 1, 1], [], []>} : vector<16x16xf32>, vector<16x128xf32>, vector<16x128xf32> -> vector<16x128xf32>
    %261 = arith.addf %256, %260 : vector<16x128xf32>
    %c7_248 = arith.constant 7 : index
    %c0_249 = arith.constant 0 : index
    %c0_250 = arith.constant 0 : index
    %262 = vector.load %arg12[%c7_248, %c0_249, %c0_250] : memref<9x16x16xf32, #tpu.memory_space<vmem>>, vector<1x16x16xf32>
    %263 = vector.shape_cast %262 : vector<1x16x16xf32> to vector<16x16xf32>
    %c0_251 = arith.constant 0 : index
    %c26_252 = arith.constant 26 : index
    %264 = vector.load %arg21[%c0_251, %c26_252] : memref<16x164xf32, #tpu.memory_space<vmem>>, vector<16x128xf32>
    %cst_253 = arith.constant dense<0.000000e+00> : vector<16x128xf32>
    %265 = tpu.matmul %263, %264, %cst_253 {dimension_numbers = #tpu.dot_dimension_numbers<[1], [0], [0], [1], [0, 0, 1, 1], [], []>} : vector<16x16xf32>, vector<16x128xf32>, vector<16x128xf32> -> vector<16x128xf32>
    %266 = arith.addf %261, %265 : vector<16x128xf32>
    %c8_254 = arith.constant 8 : index
    %c0_255 = arith.constant 0 : index
    %c0_256 = arith.constant 0 : index
    %267 = vector.load %arg12[%c8_254, %c0_255, %c0_256] : memref<9x16x16xf32, #tpu.memory_space<vmem>>, vector<1x16x16xf32>
    %268 = vector.shape_cast %267 : vector<1x16x16xf32> to vector<16x16xf32>
    %c0_257 = arith.constant 0 : index
    %c27_258 = arith.constant 27 : index
    %269 = vector.load %arg21[%c0_257, %c27_258] : memref<16x164xf32, #tpu.memory_space<vmem>>, vector<16x128xf32>
    %cst_259 = arith.constant dense<0.000000e+00> : vector<16x128xf32>
    %270 = tpu.matmul %268, %269, %cst_259 {dimension_numbers = #tpu.dot_dimension_numbers<[1], [0], [0], [1], [0, 0, 1, 1], [], []>} : vector<16x16xf32>, vector<16x128xf32>, vector<16x128xf32> -> vector<16x128xf32>
    %271 = arith.addf %266, %270 : vector<16x128xf32>
    %c0_260 = arith.constant 0 : index
    %c0_261 = arith.constant 0 : index
    %272 = vector.load %arg13[%c0_260, %c0_261] : memref<16x1xf32, #tpu.memory_space<vmem>>, vector<16x1xf32>
    %273 = vector.broadcast %272 : vector<16x1xf32> to vector<16x128xf32>
    %274 = arith.addf %271, %273 : vector<16x128xf32>
    %cst_262 = arith.constant 0.00999999977 : f32
    %275 = vector.broadcast %cst_262 : f32 to vector<16x128xf32>
    %276 = arith.mulf %275, %274 : vector<16x128xf32>
    %277 = arith.maximumf %274, %276 : vector<16x128xf32>
    %cst_263 = arith.constant 0.000000e+00 : f32
    %278 = vector.broadcast %cst_263 : f32 to vector<16x18xf32>
    %c0_264 = arith.constant 0 : index
    %c0_265 = arith.constant 0 : index
    %279 = vector.load %arg22[%c0_264, %c0_265] : memref<16x164xf32, #tpu.memory_space<vmem>>, vector<16x18xf32>
    tpu.vector_store %arg22[%c0_264, %c0_265], %278 {strides = array<i32>} : memref<16x164xf32, #tpu.memory_space<vmem>>, vector<16x18xf32>,
    %cst_266 = arith.constant 0.000000e+00 : f32
    %280 = vector.broadcast %cst_266 : f32 to vector<16x18xf32>
    %c0_267 = arith.constant 0 : index
    %c146_268 = arith.constant 146 : index
    %281 = vector.load %arg22[%c0_267, %c146_268] : memref<16x164xf32, #tpu.memory_space<vmem>>, vector<16x18xf32>
    tpu.vector_store %arg22[%c0_267, %c146_268], %280 {strides = array<i32>} : memref<16x164xf32, #tpu.memory_space<vmem>>, vector<16x18xf32>,
    %c0_269 = arith.constant 0 : index
    %c18_270 = arith.constant 18 : index
    %282 = vector.load %arg22[%c0_269, %c18_270] : memref<16x164xf32, #tpu.memory_space<vmem>>, vector<16x128xf32>
    tpu.vector_store %arg22[%c0_269, %c18_270], %277 {strides = array<i32>} : memref<16x164xf32, #tpu.memory_space<vmem>>, vector<16x128xf32>,
    %c0_271 = arith.constant 0 : index
    %c19_272 = arith.constant 19 : index
    %283 = vector.load %arg22[%c0_271, %c19_272] : memref<16x164xf32, #tpu.memory_space<vmem>>, vector<16x128xf32>
    %284 = arith.maximumf %277, %283 : vector<16x128xf32>
    %c0_273 = arith.constant 0 : index
    %c20 = arith.constant 20 : index
    %285 = vector.load %arg22[%c0_273, %c20] : memref<16x164xf32, #tpu.memory_space<vmem>>, vector<16x128xf32>
    %286 = arith.maximumf %284, %285 : vector<16x128xf32>
    %c0_274 = arith.constant 0 : index
    %c26_275 = arith.constant 26 : index
    %287 = vector.load %arg22[%c0_274, %c26_275] : memref<16x164xf32, #tpu.memory_space<vmem>>, vector<16x128xf32>
    %288 = arith.maximumf %286, %287 : vector<16x128xf32>
    %c0_276 = arith.constant 0 : index
    %c27_277 = arith.constant 27 : index
    %289 = vector.load %arg22[%c0_276, %c27_277] : memref<16x164xf32, #tpu.memory_space<vmem>>, vector<16x128xf32>
    %290 = arith.maximumf %288, %289 : vector<16x128xf32>
    %c0_278 = arith.constant 0 : index
    %c28 = arith.constant 28 : index
    %291 = vector.load %arg22[%c0_278, %c28] : memref<16x164xf32, #tpu.memory_space<vmem>>, vector<16x128xf32>
    %292 = arith.maximumf %290, %291 : vector<16x128xf32>
    %c0_279 = arith.constant 0 : index
    %c34 = arith.constant 34 : index
    %293 = vector.load %arg22[%c0_279, %c34] : memref<16x164xf32, #tpu.memory_space<vmem>>, vector<16x128xf32>
    %294 = arith.maximumf %292, %293 : vector<16x128xf32>
    %c0_280 = arith.constant 0 : index
    %c35 = arith.constant 35 : index
    %295 = vector.load %arg22[%c0_280, %c35] : memref<16x164xf32, #tpu.memory_space<vmem>>, vector<16x128xf32>
    %296 = arith.maximumf %294, %295 : vector<16x128xf32>
    %c0_281 = arith.constant 0 : index
    %c36 = arith.constant 36 : index
    %297 = vector.load %arg22[%c0_281, %c36] : memref<16x164xf32, #tpu.memory_space<vmem>>, vector<16x128xf32>
    %298 = arith.maximumf %296, %297 : vector<16x128xf32>
    %c0_282 = arith.constant 0 : index
    %c0_283 = arith.constant 0 : index
    %299 = vector.load %arg16[%c0_282, %c0_283] : memref<128x8xf32, #tpu.memory_space<vmem>>, vector<128x8xf32>
    %cst_284 = arith.constant dense<0.000000e+00> : vector<16x8xf32>
    %300 = tpu.matmul %298, %299, %cst_284 {dimension_numbers = #tpu.dot_dimension_numbers<[1], [0], [0], [1], [0, 0, 1, 1], [], []>} : vector<16x128xf32>, vector<128x8xf32>, vector<16x8xf32> -> vector<16x8xf32>
    %cst_285 = arith.constant dense<0.000000e+00> : vector<16xf32>
    %301 = vector.multi_reduction <add>, %300, %cst_285 [1] : vector<16x8xf32> to vector<16xf32>
    %302 = vector.shape_cast %301 : vector<16xf32> to vector<16x1xf32>
    %cst_286 = arith.constant 1.250000e-01 : f32
    %303 = vector.broadcast %cst_286 : f32 to vector<16x1xf32>
    %304 = arith.mulf %302, %303 : vector<16x1xf32>
    %305 = vector.broadcast %304 : vector<16x1xf32> to vector<16x8xf32>
    %306 = arith.subf %300, %305 : vector<16x8xf32>
    %307 = arith.mulf %306, %306 : vector<16x8xf32>
    %cst_287 = arith.constant dense<0.000000e+00> : vector<16xf32>
    %308 = vector.multi_reduction <add>, %307, %cst_287 [1] : vector<16x8xf32> to vector<16xf32>
    %309 = vector.shape_cast %308 : vector<16xf32> to vector<16x1xf32>
    %cst_288 = arith.constant 1.250000e-01 : f32
    %310 = vector.broadcast %cst_288 : f32 to vector<16x1xf32>
    %311 = arith.mulf %309, %310 : vector<16x1xf32>
    %c0_289 = arith.constant 0 : index
    %c0_290 = arith.constant 0 : index
    %312 = vector.load %arg14[%c0_289, %c0_290] : memref<16x1xf32, #tpu.memory_space<vmem>>, vector<16x1xf32>
    %cst_291 = arith.constant 9.99999974E-6 : f32
    %313 = vector.broadcast %cst_291 : f32 to vector<16x1xf32>
    %314 = arith.addf %311, %313 : vector<16x1xf32>
    %315 = math.rsqrt %314 : vector<16x1xf32>
    %316 = arith.mulf %312, %315 : vector<16x1xf32>
    %317 = vector.broadcast %316 : vector<16x1xf32> to vector<16x8xf32>
    %318 = arith.mulf %306, %317 : vector<16x8xf32>
    %c0_292 = arith.constant 0 : index
    %c0_293 = arith.constant 0 : index
    %319 = vector.load %arg15[%c0_292, %c0_293] : memref<16x1xf32, #tpu.memory_space<vmem>>, vector<16x1xf32>
    %320 = vector.broadcast %319 : vector<16x1xf32> to vector<16x8xf32>
    %321 = arith.addf %318, %320 : vector<16x8xf32>
    %322 = arith.negf %321 : vector<16x8xf32>
    %323 = math.exp %322 : vector<16x8xf32>
    %cst_294 = arith.constant 1.000000e+00 : f32
    %324 = vector.broadcast %cst_294 : f32 to vector<16x8xf32>
    %325 = arith.addf %324, %323 : vector<16x8xf32>
    %326 = arith.divf %324, %325 : vector<16x8xf32>
    %c0_295 = arith.constant 0 : index
    %c0_296 = arith.constant 0 : index
    %327 = vector.load %arg17[%c0_295, %c0_296] : memref<16x8xf32, #tpu.memory_space<vmem>>, vector<16x8xf32>
    tpu.vector_store %arg17[%c0_295, %c0_296], %326 {strides = array<i32>} : memref<16x8xf32, #tpu.memory_space<vmem>>, vector<16x8xf32>,
    return
  }
}

</mosaic_0001>

<llo_original>
// kernel: conv_model.1
$region0: #{conv_model.1}
  #allocation0 [shape = 'u32[]', space=smem, size = 0x4, offset = 0x4, fixed_abs, tag = 'smem constant byte address 0x4 - core index']
  #allocation1 [shape = 'u32[144,128]{1,0:T(1,128)}', space=vmem, size = 0x12000, scoped, tag = 'internal scratch']
  #allocation2 [shape = 'f32[8,884]{1,0:T(8,128)}', space=vmem, size = 0x7000, scoped, tag = 'scratch operand']
  #allocation3 [shape = 'f32[8,884]{1,0:T(8,128)}', space=vmem, size = 0x7000, scoped, tag = 'scratch operand']
  #allocation4 [shape = 'f32[8,164]{1,0:T(8,128)}', space=vmem, size = 0x2000, scoped, tag = 'scratch operand']
  #allocation5 [shape = 'f32[16,164]{1,0:T(8,128)}', space=vmem, size = 0x4000, scoped, tag = 'scratch operand']
  #allocation6 [shape = 'f32[16,164]{1,0:T(8,128)}', space=vmem, size = 0x4000, scoped, tag = 'scratch operand']
  %s0 = inlined_call_operand.vmem [shape: f32[4,884], index: 0, kind: input, shape index: {}]
  %s1 = inlined_call_operand.vmem [shape: f32[9,8,4], index: 1, kind: input, shape index: {}]
  %s2 = inlined_call_operand.vmem [shape: f32[8,1], index: 2, kind: input, shape index: {}]
  %s3 = inlined_call_operand.vmem [shape: f32[9,8,8], index: 3, kind: input, shape index: {}]
  %s4 = inlined_call_operand.vmem [shape: f32[8,1], index: 4, kind: input, shape index: {}]
  %s5 = inlined_call_operand.vmem [shape: f32[8,1], index: 5, kind: input, shape index: {}]
  %s6 = inlined_call_operand.vmem [shape: f32[8,1], index: 6, kind: input, shape index: {}]
  %s7 = inlined_call_operand.vmem [shape: f32[1,800], index: 7, kind: input, shape index: {}]
  %s8 = inlined_call_operand.vmem [shape: f32[800,128], index: 8, kind: input, shape index: {}]
  %s9 = inlined_call_operand.vmem [shape: f32[1,128], index: 9, kind: input, shape index: {}]
  %s10 = inlined_call_operand.vmem [shape: f32[9,16,8], index: 10, kind: input, shape index: {}]
  %s11 = inlined_call_operand.vmem [shape: f32[16,1], index: 11, kind: input, shape index: {}]
  %s12 = inlined_call_operand.vmem [shape: f32[9,16,16], index: 12, kind: input, shape index: {}]
  %s13 = inlined_call_operand.vmem [shape: f32[16,1], index: 13, kind: input, shape index: {}]
  %s14 = inlined_call_operand.vmem [shape: f32[16,1], index: 14, kind: input, shape index: {}]
  %s15 = inlined_call_operand.vmem [shape: f32[16,1], index: 15, kind: input, shape index: {}]
  %s16 = inlined_call_operand.vmem [shape: f32[128,8], index: 16, kind: input, shape index: {}]
  %s17 = inlined_call_operand.vmem [shape: f32[16,8], index: 17, kind: output, shape index: {}]
  %s18 = sld [smem:[#allocation0]]
  $region78: #{conv_model.1} parent=0
    _
  %s20 = ssub.s32 1, %s18
  %s21 = scalar_select 0, %s20, %s18
  // Predicated region
  $region2: #{conv_model.1} parent=0 // pred_check
    _
  $region3: #{conv_model.1} parent=0 // pred_check_branch
    %23 = sbr.rel (0) target = $region5
  $region4: #{conv_model.1} parent=0 // pred_region
    _
  $region5: #{conv_model.1} parent=0 // pred_fallthru
    _
  // Predicated region
  $region6: #{conv_model.1} parent=0 // pred_check
    _
  $region7: #{conv_model.1} parent=0 // pred_check_branch
    %25 = sbr.rel (0) target = $region9
  $region8: #{conv_model.1} parent=0 // pred_region
    _
  $region9: #{conv_model.1} parent=0 // pred_fallthru
    _
  // Predicated region
  $region10: #{conv_model.1} parent=0 // pred_check
    _
  $region11: #{conv_model.1} parent=0 // pred_check_branch
    %27 = sbr.rel (0) target = $region13
  $region12: #{conv_model.1} parent=0 // pred_region
    _
  $region13: #{conv_model.1} parent=0 // pred_fallthru
    _
  // Predicated region
  $region14: #{conv_model.1} parent=0 // pred_check
    _
  $region15: #{conv_model.1} parent=0 // pred_check_branch
    %29 = sbr.rel (0) target = $region17
  $region16: #{conv_model.1} parent=0 // pred_region
    _
  $region17: #{conv_model.1} parent=0 // pred_fallthru
    _
  // Predicated region
  $region18: #{conv_model.1} parent=0 // pred_check
    _
  $region19: #{conv_model.1} parent=0 // pred_check_branch
    %31 = sbr.rel (0) target = $region21
  $region20: #{conv_model.1} parent=0 // pred_region
    _
  $region21: #{conv_model.1} parent=0 // pred_fallthru
    _
  // Predicated region
  $region22: #{conv_model.1} parent=0 // pred_check
    _
  $region23: #{conv_model.1} parent=0 // pred_check_branch
    %33 = sbr.rel (0) target = $region25
  $region24: #{conv_model.1} parent=0 // pred_region
    _
  $region25: #{conv_model.1} parent=0 // pred_fallthru
    _
  // Predicated region
  $region26: #{conv_model.1} parent=0 // pred_check
    _
  $region27: #{conv_model.1} parent=0 // pred_check_branch
    %35 = sbr.rel (0) target = $region29
  $region28: #{conv_model.1} parent=0 // pred_region
    _
  $region29: #{conv_model.1} parent=0 // pred_fallthru
    _
  // Predicated region
  $region30: #{conv_model.1} parent=0 // pred_check
    _
  $region31: #{conv_model.1} parent=0 // pred_check_branch
    %37 = sbr.rel (0) target = $region33
  $region32: #{conv_model.1} parent=0 // pred_region
    _
  $region33: #{conv_model.1} parent=0 // pred_fallthru
    _
  // Predicated region
  $region34: #{conv_model.1} parent=0 // pred_check
    _
  $region35: #{conv_model.1} parent=0 // pred_check_branch
    %39 = sbr.rel (0) target = $region37
  $region36: #{conv_model.1} parent=0 // pred_region
    _
  $region37: #{conv_model.1} parent=0 // pred_fallthru
    _
  // Predicated region
  $region38: #{conv_model.1} parent=0 // pred_check
    _
  $region39: #{conv_model.1} parent=0 // pred_check_branch
    %41 = sbr.rel (0) target = $region41
  $region40: #{conv_model.1} parent=0 // pred_region
    _
  $region41: #{conv_model.1} parent=0 // pred_fallthru
    _
  // Predicated region
  $region42: #{conv_model.1} parent=0 // pred_check
    _
  $region43: #{conv_model.1} parent=0 // pred_check_branch
    %43 = sbr.rel (0) target = $region45
  $region44: #{conv_model.1} parent=0 // pred_region
    _
  $region45: #{conv_model.1} parent=0 // pred_fallthru
    _
  // Predicated region
  $region46: #{conv_model.1} parent=0 // pred_check
    _
  $region47: #{conv_model.1} parent=0 // pred_check_branch
    %45 = sbr.rel (0) target = $region49
  $region48: #{conv_model.1} parent=0 // pred_region
    _
  $region49: #{conv_model.1} parent=0 // pred_fallthru
    _
  // Predicated region
  $region50: #{conv_model.1} parent=0 // pred_check
    _
  $region51: #{conv_model.1} parent=0 // pred_check_branch
    %47 = sbr.rel (0) target = $region53
  $region52: #{conv_model.1} parent=0 // pred_region
    _
  $region53: #{conv_model.1} parent=0 // pred_fallthru
    _
  // Predicated region
  $region54: #{conv_model.1} parent=0 // pred_check
    _
  $region55: #{conv_model.1} parent=0 // pred_check_branch
    %49 = sbr.rel (0) target = $region57
  $region56: #{conv_model.1} parent=0 // pred_region
    _
  $region57: #{conv_model.1} parent=0 // pred_fallthru
    _
  // Predicated region
  $region58: #{conv_model.1} parent=0 // pred_check
    _
  $region59: #{conv_model.1} parent=0 // pred_check_branch
    %51 = sbr.rel (0) target = $region61
  $region60: #{conv_model.1} parent=0 // pred_region
    _
  $region61: #{conv_model.1} parent=0 // pred_fallthru
    _
  // Predicated region
  $region62: #{conv_model.1} parent=0 // pred_check
    _
  $region63: #{conv_model.1} parent=0 // pred_check_branch
    %53 = sbr.rel (0) target = $region65
  $region64: #{conv_model.1} parent=0 // pred_region
    _
  $region65: #{conv_model.1} parent=0 // pred_fallthru
    _
  // Predicated region
  $region66: #{conv_model.1} parent=0 // pred_check
    _
  $region67: #{conv_model.1} parent=0 // pred_check_branch
    %55 = sbr.rel (0) target = $region69
  $region68: #{conv_model.1} parent=0 // pred_region
    _
  $region69: #{conv_model.1} parent=0 // pred_fallthru
    _
  %v56 = vld [vmem:[%s7] sm:$0x7f]
  %v57 = vld [vmem:[%s9] sm:$0x1]
  %v58 = vld [vmem:[%s1] sm:$0xff]
  %v59 = vld [vmem:[%s0] sm:$0xff]
  %v60 = vld [vmem:[%s0 + $0x8] sm:$0xff]
  %v61 = vld [vmem:[%s0 + $0x10] sm:$0xff]
  %v62 = vld [vmem:[%s0 + $0x18] sm:$0xf]
  %s63 = scalar_lea.vmem %s1, 8
  %v64 = vld [vmem:[%s63] sm:$0xff]
  %v69 = vcombine.high %v59, %v59
  %v70 = vcombine.high %v60, %v60
  %v71 = vcombine.high %v61, %v61
  %72 = vrot.lane.b32.xlu0 %v59, 106
  %v73 = vpop.permute.xlu0 %72
  %74 = vrot.lane.b32.xlu0 %v69, 106
  %v75 = vpop.permute.xlu0 %74
  %76 = vrot.lane.b32.xlu0 %v60, 106
  %v77 = vpop.permute.xlu0 %76
  %78 = vrot.lane.b32.xlu0 %v70, 106
  %v79 = vpop.permute.xlu0 %78
  %80 = vrot.lane.b32.xlu0 %v61, 106
  %v81 = vpop.permute.xlu0 %80
  %82 = vrot.lane.b32.xlu0 %v71, 106
  %v83 = vpop.permute.xlu0 %82
  %84 = vrot.lane.b32.xlu0 %v62, 106
  %v85 = vpop.permute.xlu0 %84
  %vm86 = vcmask 867328
  %v87 = vsel %vm86, %v73, %v75
  %v88 = vsel %vm86, %v75, %v77
  %v89 = vsel %vm86, %v77, %v79
  %v90 = vsel %vm86, %v79, %v81
  %v91 = vsel %vm86, %v81, %v83
  %v92 = vsel %vm86, %v83, %v85
  %vm93 = vcmask 31744
  %v95 = vsel %vm93, %v64, 0
  %vm97 = vcmask 1043456
  %v98 = vsel %vm97, %v87, 0
  %v100 = vsel %vm97, %v88, 0
  %v102 = vsel %vm97, %v89, 0
  %v104 = vsel %vm97, %v90, 0
  %v106 = vsel %vm97, %v91, 0
  %v108 = vsel %vm97, %v92, 0
  %v110 = vsel %vm97, %v85, 0
  %112 = vmatprep.subr.mxu0 0.0
  %113 = vmatpush1.msra.mxu0 0.0
  %114 = vmatprep.subr.mxu0 0.0
  %115 = vmatpush1.msra.mxu0 0.0
  %116 = vmatprep.subr.mxu0 0.0
  %117 = vmatpush1.msra.mxu0 0.0
  %118 = vmatprep.subr.mxu0 0.0
  %119 = vmatpush1.msra.mxu0 0.0
  %120 = vmatprep.subr.mxu0 0.0
  %121 = vmatpush1.msra.mxu0 0.0
  %122 = vmatprep.subr.mxu0 0.0
  %123 = vmatpush1.msra.mxu0 0.0
  %124 = vmatprep.subr.mxu0 0.0
  %125 = vmatpush1.msra.mxu0 0.0
  %126 = vmatprep.subr.mxu0 0.0
  %127 = vmatpush1.msra.mxu0 0.0
  %128 = vmatprep.subr.mxu0 0.0
  %129 = vmatpush1.msra.mxu0 0.0
  %130 = vmatprep.subr.mxu0 0.0
  %131 = vmatpush1.msra.mxu0 0.0
  %132 = vmatprep.subr.mxu0 0.0
  %133 = vmatpush1.msra.mxu0 0.0
  %134 = vmatprep.subr.mxu0 0.0
  %135 = vmatpush1.msra.mxu0 0.0
  %136 = vmatprep.subr.mxu0 0.0
  %137 = vmatpush1.msra.mxu0 0.0
  %138 = vmatprep.subr.mxu0 0.0
  %139 = vmatpush1.msra.mxu0 0.0
  %140 = vmatprep.subr.mxu0 0.0
  %141 = vmatpush1.msra.mxu0 0.0
  %142 = vmatprep.subr.mxu0 %v100
  %143 = vmatpush1.msra.mxu0 %v98
  %144 = vmatprep.subr.mxu0 0.0
  %145 = vmatpush2.msra.mxu0 0.0
  %146 = vmatprep.subr.mxu0 0.0
  %147 = vmatpush2.msra.mxu0 0.0
  %148 = vmatprep.subr.mxu0 0.0
  %149 = vmatpush2.msra.mxu0 0.0
  %150 = vmatprep.subr.mxu0 0.0
  %151 = vmatpush2.msra.mxu0 0.0
  %152 = vmatprep.subr.mxu0 0.0
  %153 = vmatpush2.msra.mxu0 0.0
  %154 = vmatprep.subr.mxu0 0.0
  %155 = vmatpush2.msra.mxu0 0.0
  %156 = vmatprep.subr.mxu0 0.0
  %157 = vmatpush2.msra.mxu0 0.0
  %158 = vmatprep.subr.mxu0 0.0
  %159 = vmatpush2.msra.mxu0 0.0
  %160 = vmatprep.subr.mxu0 0.0
  %161 = vmatpush2.msra.mxu0 0.0
  %162 = vmatprep.subr.mxu0 0.0
  %163 = vmatpush2.msra.mxu0 0.0
  %164 = vmatprep.subr.mxu0 0.0
  %165 = vmatpush2.msra.mxu0 0.0
  %166 = vmatprep.subr.mxu0 0.0
  %167 = vmatpush2.msra.mxu0 0.0
  %168 = vmatprep.subr.mxu0 0.0
  %169 = vmatpush2.msra.mxu0 0.0
  %170 = vmatprep.subr.mxu0 0.0
  %171 = vmatpush2.msra.mxu0 0.0
  %172 = vmatprep.subr.mxu0 0.0
  %173 = vmatpush2.msra.mxu0 0.0
  %174 = vmatprep.subr.mxu0 0.0
  %175 = vmatpush2.msra.mxu0 0.0
  %176 = vmatprep.mubr.f32.mxu0 0.0
  %177 = vmatmul.mubr.f32.gmra.mxu0 %v95
  %v178 = vpop.f32.mrf.mxu0
  %v179 = vadd.f32 0.0, %v178
  %v180 = vpop.f32.mrf.mxu0
  %v181 = vadd.f32 0.0, %v180
  %182 = vdwg.mxu0
  %183 = vmatprep.subr.mxu0 0.0
  %184 = vmatpush1.msra.mxu0 0.0
  %185 = vmatprep.subr.mxu0 0.0
  %186 = vmatpush1.msra.mxu0 0.0
  %187 = vmatprep.subr.mxu0 0.0
  %188 = vmatpush1.msra.mxu0 0.0
  %189 = vmatprep.subr.mxu0 0.0
  %190 = vmatpush1.msra.mxu0 0.0
  %191 = vmatprep.subr.mxu0 0.0
  %192 = vmatpush1.msra.mxu0 0.0
  %193 = vmatprep.subr.mxu0 0.0
  %194 = vmatpush1.msra.mxu0 0.0
  %195 = vmatprep.subr.mxu0 0.0
  %196 = vmatpush1.msra.mxu0 0.0
  %197 = vmatprep.subr.mxu0 0.0
  %198 = vmatpush1.msra.mxu0 0.0
  %199 = vmatprep.subr.mxu0 0.0
  %200 = vmatpush1.msra.mxu0 0.0
  %201 = vmatprep.subr.mxu0 0.0
  %202 = vmatpush1.msra.mxu0 0.0
  %203 = vmatprep.subr.mxu0 0.0
  %204 = vmatpush1.msra.mxu0 0.0
  %205 = vmatprep.subr.mxu0 0.0
  %206 = vmatpush1.msra.mxu0 0.0
  %207 = vmatprep.subr.mxu0 0.0
  %208 = vmatpush1.msra.mxu0 0.0
  %209 = vmatprep.subr.mxu0 0.0
  %210 = vmatpush1.msra.mxu0 0.0
  %211 = vmatprep.subr.mxu0 0.0
  %212 = vmatpush1.msra.mxu0 0.0
  %213 = vmatprep.subr.mxu0 %v104
  %214 = vmatpush1.msra.mxu0 %v102
  %215 = vmatprep.subr.mxu0 0.0
  %216 = vmatpush2.msra.mxu0 0.0
  %217 = vmatprep.subr.mxu0 0.0
  %218 = vmatpush2.msra.mxu0 0.0
  %219 = vmatprep.subr.mxu0 0.0
  %220 = vmatpush2.msra.mxu0 0.0
  %221 = vmatprep.subr.mxu0 0.0
  %222 = vmatpush2.msra.mxu0 0.0
  %223 = vmatprep.subr.mxu0 0.0
  %224 = vmatpush2.msra.mxu0 0.0
  %225 = vmatprep.subr.mxu0 0.0
  %226 = vmatpush2.msra.mxu0 0.0
  %227 = vmatprep.subr.mxu0 0.0
  %228 = vmatpush2.msra.mxu0 0.0
  %229 = vmatprep.subr.mxu0 0.0
  %230 = vmatpush2.msra.mxu0 0.0
  %231 = vmatprep.subr.mxu0 0.0
  %232 = vmatpush2.msra.mxu0 0.0
  %233 = vmatprep.subr.mxu0 0.0
  %234 = vmatpush2.msra.mxu0 0.0
  %235 = vmatprep.subr.mxu0 0.0
  %236 = vmatpush2.msra.mxu0 0.0
  %237 = vmatprep.subr.mxu0 0.0
  %238 = vmatpush2.msra.mxu0 0.0
  %239 = vmatprep.subr.mxu0 0.0
  %240 = vmatpush2.msra.mxu0 0.0
  %241 = vmatprep.subr.mxu0 0.0
  %242 = vmatpush2.msra.mxu0 0.0
  %243 = vmatprep.subr.mxu0 0.0
  %244 = vmatpush2.msra.mxu0 0.0
  %245 = vmatprep.subr.mxu0 0.0
  %246 = vmatpush2.msra.mxu0 0.0
  %247 = vmatprep.mubr.f32.mxu0 0.0
  %248 = vmatmul.mubr.f32.gmra.mxu0 %v95
  %v249 = vpop.f32.mrf.mxu0
  %v250 = vadd.f32 0.0, %v249
  %v251 = vpop.f32.mrf.mxu0
  %v252 = vadd.f32 0.0, %v251
  %253 = vdwg.mxu0
  %254 = vmatprep.subr.mxu0 0.0
  %255 = vmatpush1.msra.mxu0 0.0
  %256 = vmatprep.subr.mxu0 0.0
  %257 = vmatpush1.msra.mxu0 0.0
  %258 = vmatprep.subr.mxu0 0.0
  %259 = vmatpush1.msra.mxu0 0.0
  %260 = vmatprep.subr.mxu0 0.0
  %261 = vmatpush1.msra.mxu0 0.0
  %262 = vmatprep.subr.mxu0 0.0
  %263 = vmatpush1.msra.mxu0 0.0
  %264 = vmatprep.subr.mxu0 0.0
  %265 = vmatpush1.msra.mxu0 0.0
  %266 = vmatprep.subr.mxu0 0.0
  %267 = vmatpush1.msra.mxu0 0.0
  %268 = vmatprep.subr.mxu0 0.0
  %269 = vmatpush1.msra.mxu0 0.0
  %270 = vmatprep.subr.mxu0 0.0
  %271 = vmatpush1.msra.mxu0 0.0
  %272 = vmatprep.subr.mxu0 0.0
  %273 = vmatpush1.msra.mxu0 0.0
  %274 = vmatprep.subr.mxu0 0.0
  %275 = vmatpush1.msra.mxu0 0.0
  %276 = vmatprep.subr.mxu0 0.0
  %277 = vmatpush1.msra.mxu0 0.0
  %278 = vmatprep.subr.mxu0 0.0
  %279 = vmatpush1.msra.mxu0 0.0
  %280 = vmatprep.subr.mxu0 0.0
  %281 = vmatpush1.msra.mxu0 0.0
  %282 = vmatprep.subr.mxu0 0.0
  %283 = vmatpush1.msra.mxu0 0.0
  %284 = vmatprep.subr.mxu0 %v108
  %285 = vmatpush1.msra.mxu0 %v106
  %286 = vmatprep.subr.mxu0 0.0
  %287 = vmatpush2.msra.mxu0 0.0
  %288 = vmatprep.subr.mxu0 0.0
  %289 = vmatpush2.msra.mxu0 0.0
  %290 = vmatprep.subr.mxu0 0.0
  %291 = vmatpush2.msra.mxu0 0.0
  %292 = vmatprep.subr.mxu0 0.0
  %293 = vmatpush2.msra.mxu0 0.0
  %294 = vmatprep.subr.mxu0 0.0
  %295 = vmatpush2.msra.mxu0 0.0
  %296 = vmatprep.subr.mxu0 0.0
  %297 = vmatpush2.msra.mxu0 0.0
  %298 = vmatprep.subr.mxu0 0.0
  %299 = vmatpush2.msra.mxu0 0.0
  %300 = vmatprep.subr.mxu0 0.0
  %301 = vmatpush2.msra.mxu0 0.0
  %302 = vmatprep.subr.mxu0 0.0
  %303 = vmatpush2.msra.mxu0 0.0
  %304 = vmatprep.subr.mxu0 0.0
  %305 = vmatpush2.msra.mxu0 0.0
  %306 = vmatprep.subr.mxu0 0.0
  %307 = vmatpush2.msra.mxu0 0.0
  %308 = vmatprep.subr.mxu0 0.0
  %309 = vmatpush2.msra.mxu0 0.0
  %310 = vmatprep.subr.mxu0 0.0
  %311 = vmatpush2.msra.mxu0 0.0
  %312 = vmatprep.subr.mxu0 0.0
  %313 = vmatpush2.msra.mxu0 0.0
  %314 = vmatprep.subr.mxu0 0.0
  %315 = vmatpush2.msra.mxu0 0.0
  %316 = vmatprep.subr.mxu0 0.0
  %317 = vmatpush2.msra.mxu0 0.0
  %318 = vmatprep.mubr.f32.mxu0 0.0
  %319 = vmatmul.mubr.f32.gmra.mxu0 %v95
  %v320 = vpop.f32.mrf.mxu0
  %v321 = vadd.f32 0.0, %v320
  %v322 = vpop.f32.mrf.mxu0
  %v323 = vadd.f32 0.0, %v322
  %324 = vdwg.mxu0
  %325 = vmatprep.subr.mxu0 0.0
  %326 = vmatpush1.msra.mxu0 0.0
  %327 = vmatprep.subr.mxu0 0.0
  %328 = vmatpush1.msra.mxu0 0.0
  %329 = vmatprep.subr.mxu0 0.0
  %330 = vmatpush1.msra.mxu0 0.0
  %331 = vmatprep.subr.mxu0 0.0
  %332 = vmatpush1.msra.mxu0 0.0
  %333 = vmatprep.subr.mxu0 0.0
  %334 = vmatpush1.msra.mxu0 0.0
  %335 = vmatprep.subr.mxu0 0.0
  %336 = vmatpush1.msra.mxu0 0.0
  %337 = vmatprep.subr.mxu0 0.0
  %338 = vmatpush1.msra.mxu0 0.0
  %339 = vmatprep.subr.mxu0 0.0
  %340 = vmatpush1.msra.mxu0 0.0
  %341 = vmatprep.subr.mxu0 0.0
  %342 = vmatpush1.msra.mxu0 0.0
  %343 = vmatprep.subr.mxu0 0.0
  %344 = vmatpush1.msra.mxu0 0.0
  %345 = vmatprep.subr.mxu0 0.0
  %346 = vmatpush1.msra.mxu0 0.0
  %347 = vmatprep.subr.mxu0 0.0
  %348 = vmatpush1.msra.mxu0 0.0
  %349 = vmatprep.subr.mxu0 0.0
  %350 = vmatpush1.msra.mxu0 0.0
  %351 = vmatprep.subr.mxu0 0.0
  %352 = vmatpush1.msra.mxu0 0.0
  %353 = vmatprep.subr.mxu0 0.0
  %354 = vmatpush1.msra.mxu0 0.0
  %355 = vmatprep.subr.mxu0 0.0
  %356 = vmatpush1.msra.mxu0 %v110
  %357 = vmatprep.subr.mxu0 0.0
  %358 = vmatpush2.msra.mxu0 0.0
  %359 = vmatprep.subr.mxu0 0.0
  %360 = vmatpush2.msra.mxu0 0.0
  %361 = vmatprep.subr.mxu0 0.0
  %362 = vmatpush2.msra.mxu0 0.0
  %363 = vmatprep.subr.mxu0 0.0
  %364 = vmatpush2.msra.mxu0 0.0
  %365 = vmatprep.subr.mxu0 0.0
  %366 = vmatpush2.msra.mxu0 0.0
  %367 = vmatprep.subr.mxu0 0.0
  %368 = vmatpush2.msra.mxu0 0.0
  %369 = vmatprep.subr.mxu0 0.0
  %370 = vmatpush2.msra.mxu0 0.0
  %371 = vmatprep.subr.mxu0 0.0
  %372 = vmatpush2.msra.mxu0 0.0
  %373 = vmatprep.subr.mxu0 0.0
  %374 = vmatpush2.msra.mxu0 0.0
  %375 = vmatprep.subr.mxu0 0.0
  %376 = vmatpush2.msra.mxu0 0.0
  %377 = vmatprep.subr.mxu0 0.0
  %378 = vmatpush2.msra.mxu0 0.0
  %379 = vmatprep.subr.mxu0 0.0
  %380 = vmatpush2.msra.mxu0 0.0
  %381 = vmatprep.subr.mxu0 0.0
  %382 = vmatpush2.msra.mxu0 0.0
  %383 = vmatprep.subr.mxu0 0.0
  %384 = vmatpush2.msra.mxu0 0.0
  %385 = vmatprep.subr.mxu0 0.0
  %386 = vmatpush2.msra.mxu0 0.0
  %387 = vmatprep.subr.mxu0 0.0
  %388 = vmatpush2.msra.mxu0 0.0
  %389 = vmatprep.mubr.f32.mxu0 0.0
  %390 = vmatmul.mubr.f32.gmra.mxu0 %v95
  %v391 = vpop.f32.mrf.mxu0
  %v392 = vadd.f32 0.0, %v391
  %v393 = vpop.f32.mrf.mxu0
  %394 = vdwg.mxu0
  %395 = vrot.lane.b32.xlu0 %v59, 107
  %v396 = vpop.permute.xlu0 %395
  %397 = vrot.lane.b32.xlu0 %v69, 107
  %v398 = vpop.permute.xlu0 %397
  %399 = vrot.lane.b32.xlu0 %v60, 107
  %v400 = vpop.permute.xlu0 %399
  %401 = vrot.lane.b32.xlu0 %v70, 107
  %v402 = vpop.permute.xlu0 %401
  %403 = vrot.lane.b32.xlu0 %v61, 107
  %v404 = vpop.permute.xlu0 %403
  %405 = vrot.lane.b32.xlu0 %v71, 107
  %v406 = vpop.permute.xlu0 %405
  %407 = vrot.lane.b32.xlu0 %v62, 107
  %v408 = vpop.permute.xlu0 %407
  %vm409 = vcmask 875520
  %v410 = vsel %vm409, %v396, %v398
  %v411 = vsel %vm409, %v398, %v400
  %v412 = vsel %vm409, %v400, %v402
  %v413 = vsel %vm409, %v402, %v404
  %v414 = vsel %vm409, %v404, %v406
  %v415 = vsel %vm409, %v406, %v408
  %v417 = vsel %vm93, %v58, 0
  %v419 = vsel %vm97, %v410, 0
  %v421 = vsel %vm97, %v411, 0
  %v423 = vsel %vm97, %v412, 0
  %v425 = vsel %vm97, %v413, 0
  %v427 = vsel %vm97, %v414, 0
  %v429 = vsel %vm97, %v415, 0
  %v431 = vsel %vm97, %v408, 0
  %433 = vmatprep.subr.mxu0 0.0
  %434 = vmatpush1.msra.mxu0 0.0
  %435 = vmatprep.subr.mxu0 0.0
  %436 = vmatpush1.msra.mxu0 0.0
  %437 = vmatprep.subr.mxu0 0.0
  %438 = vmatpush1.msra.mxu0 0.0
  %439 = vmatprep.subr.mxu0 0.0
  %440 = vmatpush1.msra.mxu0 0.0
  %441 = vmatprep.subr.mxu0 0.0
  %442 = vmatpush1.msra.mxu0 0.0
  %443 = vmatprep.subr.mxu0 0.0
  %444 = vmatpush1.msra.mxu0 0.0
  %445 = vmatprep.subr.mxu0 0.0
  %446 = vmatpush1.msra.mxu0 0.0
  %447 = vmatprep.subr.mxu0 0.0
  %448 = vmatpush1.msra.mxu0 0.0
  %449 = vmatprep.subr.mxu0 0.0
  %450 = vmatpush1.msra.mxu0 0.0
  %451 = vmatprep.subr.mxu0 0.0
  %452 = vmatpush1.msra.mxu0 0.0
  %453 = vmatprep.subr.mxu0 0.0
  %454 = vmatpush1.msra.mxu0 0.0
  %455 = vmatprep.subr.mxu0 0.0
  %456 = vmatpush1.msra.mxu0 0.0
  %457 = vmatprep.subr.mxu0 0.0
  %458 = vmatpush1.msra.mxu0 0.0
  %459 = vmatprep.subr.mxu0 0.0
  %460 = vmatpush1.msra.mxu0 0.0
  %461 = vmatprep.subr.mxu0 0.0
  %462 = vmatpush1.msra.mxu0 0.0
  %463 = vmatprep.subr.mxu0 %v421
  %464 = vmatpush1.msra.mxu0 %v419
  %465 = vmatprep.subr.mxu0 0.0
  %466 = vmatpush2.msra.mxu0 0.0
  %467 = vmatprep.subr.mxu0 0.0
  %468 = vmatpush2.msra.mxu0 0.0
  %469 = vmatprep.subr.mxu0 0.0
  %470 = vmatpush2.msra.mxu0 0.0
  %471 = vmatprep.subr.mxu0 0.0
  %472 = vmatpush2.msra.mxu0 0.0
  %473 = vmatprep.subr.mxu0 0.0
  %474 = vmatpush2.msra.mxu0 0.0
  %475 = vmatprep.subr.mxu0 0.0
  %476 = vmatpush2.msra.mxu0 0.0
  %477 = vmatprep.subr.mxu0 0.0
  %478 = vmatpush2.msra.mxu0 0.0
  %479 = vmatprep.subr.mxu0 0.0
  %480 = vmatpush2.msra.mxu0 0.0
  %481 = vmatprep.subr.mxu0 0.0
  %482 = vmatpush2.msra.mxu0 0.0
  %483 = vmatprep.subr.mxu0 0.0
  %484 = vmatpush2.msra.mxu0 0.0
  %485 = vmatprep.subr.mxu0 0.0
  %486 = vmatpush2.msra.mxu0 0.0
  %487 = vmatprep.subr.mxu0 0.0
  %488 = vmatpush2.msra.mxu0 0.0
  %489 = vmatprep.subr.mxu0 0.0
  %490 = vmatpush2.msra.mxu0 0.0
  %491 = vmatprep.subr.mxu0 0.0
  %492 = vmatpush2.msra.mxu0 0.0
  %493 = vmatprep.subr.mxu0 0.0
  %494 = vmatpush2.msra.mxu0 0.0
  %495 = vmatprep.subr.mxu0 0.0
  %496 = vmatpush2.msra.mxu0 0.0
  %497 = vmatprep.mubr.f32.mxu0 0.0
  %498 = vmatmul.mubr.f32.gmra.mxu0 %v417
  %v499 = vpop.f32.mrf.mxu0
  %v500 = vadd.f32 %v179, %v499
  %v501 = vpop.f32.mrf.mxu0
  %v502 = vadd.f32 %v181, %v501
  %503 = vdwg.mxu0
  %504 = vmatprep.subr.mxu0 0.0
  %505 = vmatpush1.msra.mxu0 0.0
  %506 = vmatprep.subr.mxu0 0.0
  %507 = vmatpush1.msra.mxu0 0.0
  %508 = vmatprep.subr.mxu0 0.0
  %509 = vmatpush1.msra.mxu0 0.0
  %510 = vmatprep.subr.mxu0 0.0
  %511 = vmatpush1.msra.mxu0 0.0
  %512 = vmatprep.subr.mxu0 0.0
  %513 = vmatpush1.msra.mxu0 0.0
  %514 = vmatprep.subr.mxu0 0.0
  %515 = vmatpush1.msra.mxu0 0.0
  %516 = vmatprep.subr.mxu0 0.0
  %517 = vmatpush1.msra.mxu0 0.0
  %518 = vmatprep.subr.mxu0 0.0
  %519 = vmatpush1.msra.mxu0 0.0
  %520 = vmatprep.subr.mxu0 0.0
  %521 = vmatpush1.msra.mxu0 0.0
  %522 = vmatprep.subr.mxu0 0.0
  %523 = vmatpush1.msra.mxu0 0.0
  %524 = vmatprep.subr.mxu0 0.0
  %525 = vmatpush1.msra.mxu0 0.0
  %526 = vmatprep.subr.mxu0 0.0
  %527 = vmatpush1.msra.mxu0 0.0
  %528 = vmatprep.subr.mxu0 0.0
  %529 = vmatpush1.msra.mxu0 0.0
  %530 = vmatprep.subr.mxu0 0.0
  %531 = vmatpush1.msra.mxu0 0.0
  %532 = vmatprep.subr.mxu0 0.0
  %533 = vmatpush1.msra.mxu0 0.0
  %534 = vmatprep.subr.mxu0 %v425
  %535 = vmatpush1.msra.mxu0 %v423
  %536 = vmatprep.subr.mxu0 0.0
  %537 = vmatpush2.msra.mxu0 0.0
  %538 = vmatprep.subr.mxu0 0.0
  %539 = vmatpush2.msra.mxu0 0.0
  %540 = vmatprep.subr.mxu0 0.0
  %541 = vmatpush2.msra.mxu0 0.0
  %542 = vmatprep.subr.mxu0 0.0
  %543 = vmatpush2.msra.mxu0 0.0
  %544 = vmatprep.subr.mxu0 0.0
  %545 = vmatpush2.msra.mxu0 0.0
  %546 = vmatprep.subr.mxu0 0.0
  %547 = vmatpush2.msra.mxu0 0.0
  %548 = vmatprep.subr.mxu0 0.0
  %549 = vmatpush2.msra.mxu0 0.0
  %550 = vmatprep.subr.mxu0 0.0
  %551 = vmatpush2.msra.mxu0 0.0
  %552 = vmatprep.subr.mxu0 0.0
  %553 = vmatpush2.msra.mxu0 0.0
  %554 = vmatprep.subr.mxu0 0.0
  %555 = vmatpush2.msra.mxu0 0.0
  %556 = vmatprep.subr.mxu0 0.0
  %557 = vmatpush2.msra.mxu0 0.0
  %558 = vmatprep.subr.mxu0 0.0
  %559 = vmatpush2.msra.mxu0 0.0
  %560 = vmatprep.subr.mxu0 0.0
  %561 = vmatpush2.msra.mxu0 0.0
  %562 = vmatprep.subr.mxu0 0.0
  %563 = vmatpush2.msra.mxu0 0.0
  %564 = vmatprep.subr.mxu0 0.0
  %565 = vmatpush2.msra.mxu0 0.0
  %566 = vmatprep.subr.mxu0 0.0
  %567 = vmatpush2.msra.mxu0 0.0
  %568 = vmatprep.mubr.f32.mxu0 0.0
  %569 = vmatmul.mubr.f32.gmra.mxu0 %v417
  %v570 = vpop.f32.mrf.mxu0
  %v571 = vadd.f32 %v250, %v570
  %v572 = vpop.f32.mrf.mxu0
  %v573 = vadd.f32 %v252, %v572
  %574 = vdwg.mxu0
  %575 = vmatprep.subr.mxu0 0.0
  %576 = vmatpush1.msra.mxu0 0.0
  %577 = vmatprep.subr.mxu0 0.0
  %578 = vmatpush1.msra.mxu0 0.0
  %579 = vmatprep.subr.mxu0 0.0
  %580 = vmatpush1.msra.mxu0 0.0
  %581 = vmatprep.subr.mxu0 0.0
  %582 = vmatpush1.msra.mxu0 0.0
  %583 = vmatprep.subr.mxu0 0.0
  %584 = vmatpush1.msra.mxu0 0.0
  %585 = vmatprep.subr.mxu0 0.0
  %586 = vmatpush1.msra.mxu0 0.0
  %587 = vmatprep.subr.mxu0 0.0
  %588 = vmatpush1.msra.mxu0 0.0
  %589 = vmatprep.subr.mxu0 0.0
  %590 = vmatpush1.msra.mxu0 0.0
  %591 = vmatprep.subr.mxu0 0.0
  %592 = vmatpush1.msra.mxu0 0.0
  %593 = vmatprep.subr.mxu0 0.0
  %594 = vmatpush1.msra.mxu0 0.0
  %595 = vmatprep.subr.mxu0 0.0
  %596 = vmatpush1.msra.mxu0 0.0
  %597 = vmatprep.subr.mxu0 0.0
  %598 = vmatpush1.msra.mxu0 0.0
  %599 = vmatprep.subr.mxu0 0.0
  %600 = vmatpush1.msra.mxu0 0.0
  %601 = vmatprep.subr.mxu0 0.0
  %602 = vmatpush1.msra.mxu0 0.0
  %603 = vmatprep.subr.mxu0 0.0
  %604 = vmatpush1.msra.mxu0 0.0
  %605 = vmatprep.subr.mxu0 %v429
  %606 = vmatpush1.msra.mxu0 %v427
  %607 = vmatprep.subr.mxu0 0.0
  %608 = vmatpush2.msra.mxu0 0.0
  %609 = vmatprep.subr.mxu0 0.0
  %610 = vmatpush2.msra.mxu0 0.0
  %611 = vmatprep.subr.mxu0 0.0
  %612 = vmatpush2.msra.mxu0 0.0
  %613 = vmatprep.subr.mxu0 0.0
  %614 = vmatpush2.msra.mxu0 0.0
  %615 = vmatprep.subr.mxu0 0.0
  %616 = vmatpush2.msra.mxu0 0.0
  %617 = vmatprep.subr.mxu0 0.0
  %618 = vmatpush2.msra.mxu0 0.0
  %619 = vmatprep.subr.mxu0 0.0
  %620 = vmatpush2.msra.mxu0 0.0
  %621 = vmatprep.subr.mxu0 0.0
  %622 = vmatpush2.msra.mxu0 0.0
  %623 = vmatprep.subr.mxu0 0.0
  %624 = vmatpush2.msra.mxu0 0.0
  %625 = vmatprep.subr.mxu0 0.0
  %626 = vmatpush2.msra.mxu0 0.0
  %627 = vmatprep.subr.mxu0 0.0
  %628 = vmatpush2.msra.mxu0 0.0
  %629 = vmatprep.subr.mxu0 0.0
  %630 = vmatpush2.msra.mxu0 0.0
  %631 = vmatprep.subr.mxu0 0.0
  %632 = vmatpush2.msra.mxu0 0.0
  %633 = vmatprep.subr.mxu0 0.0
  %634 = vmatpush2.msra.mxu0 0.0
  %635 = vmatprep.subr.mxu0 0.0
  %636 = vmatpush2.msra.mxu0 0.0
  %637 = vmatprep.subr.mxu0 0.0
  %638 = vmatpush2.msra.mxu0 0.0
  %639 = vmatprep.mubr.f32.mxu0 0.0
  %640 = vmatmul.mubr.f32.gmra.mxu0 %v417
  %v641 = vpop.f32.mrf.mxu0
  %v642 = vadd.f32 %v321, %v641
  %v643 = vpop.f32.mrf.mxu0
  %v644 = vadd.f32 %v323, %v643
  %645 = vdwg.mxu0
  %646 = vmatprep.subr.mxu0 0.0
  %647 = vmatpush1.msra.mxu0 0.0
  %648 = vmatprep.subr.mxu0 0.0
  %649 = vmatpush1.msra.mxu0 0.0
  %650 = vmatprep.subr.mxu0 0.0
  %651 = vmatpush1.msra.mxu0 0.0
  %652 = vmatprep.subr.mxu0 0.0
  %653 = vmatpush1.msra.mxu0 0.0
  %654 = vmatprep.subr.mxu0 0.0
  %655 = vmatpush1.msra.mxu0 0.0
  %656 = vmatprep.subr.mxu0 0.0
  %657 = vmatpush1.msra.mxu0 0.0
  %658 = vmatprep.subr.mxu0 0.0
  %659 = vmatpush1.msra.mxu0 0.0
  %660 = vmatprep.subr.mxu0 0.0
  %661 = vmatpush1.msra.mxu0 0.0
  %662 = vmatprep.subr.mxu0 0.0
  %663 = vmatpush1.msra.mxu0 0.0
  %664 = vmatprep.subr.mxu0 0.0
  %665 = vmatpush1.msra.mxu0 0.0
  %666 = vmatprep.subr.mxu0 0.0
  %667 = vmatpush1.msra.mxu0 0.0
  %668 = vmatprep.subr.mxu0 0.0
  %669 = vmatpush1.msra.mxu0 0.0
  %670 = vmatprep.subr.mxu0 0.0
  %671 = vmatpush1.msra.mxu0 0.0
  %672 = vmatprep.subr.mxu0 0.0
  %673 = vmatpush1.msra.mxu0 0.0
  %674 = vmatprep.subr.mxu0 0.0
  %675 = vmatpush1.msra.mxu0 0.0
  %676 = vmatprep.subr.mxu0 0.0
  %677 = vmatpush1.msra.mxu0 %v431
  %678 = vmatprep.subr.mxu0 0.0
  %679 = vmatpush2.msra.mxu0 0.0
  %680 = vmatprep.subr.mxu0 0.0
  %681 = vmatpush2.msra.mxu0 0.0
  %682 = vmatprep.subr.mxu0 0.0
  %683 = vmatpush2.msra.mxu0 0.0
  %684 = vmatprep.subr.mxu0 0.0
  %685 = vmatpush2.msra.mxu0 0.0
  %686 = vmatprep.subr.mxu0 0.0
  %687 = vmatpush2.msra.mxu0 0.0
  %688 = vmatprep.subr.mxu0 0.0
  %689 = vmatpush2.msra.mxu0 0.0
  %690 = vmatprep.subr.mxu0 0.0
  %691 = vmatpush2.msra.mxu0 0.0
  %692 = vmatprep.subr.mxu0 0.0
  %693 = vmatpush2.msra.mxu0 0.0
  %694 = vmatprep.subr.mxu0 0.0
  %695 = vmatpush2.msra.mxu0 0.0
  %696 = vmatprep.subr.mxu0 0.0
  %697 = vmatpush2.msra.mxu0 0.0
  %698 = vmatprep.subr.mxu0 0.0
  %699 = vmatpush2.msra.mxu0 0.0
  %700 = vmatprep.subr.mxu0 0.0
  %701 = vmatpush2.msra.mxu0 0.0
  %702 = vmatprep.subr.mxu0 0.0
  %703 = vmatpush2.msra.mxu0 0.0
  %704 = vmatprep.subr.mxu0 0.0
  %705 = vmatpush2.msra.mxu0 0.0
  %706 = vmatprep.subr.mxu0 0.0
  %707 = vmatpush2.msra.mxu0 0.0
  %708 = vmatprep.subr.mxu0 0.0
  %709 = vmatpush2.msra.mxu0 0.0
  %710 = vmatprep.mubr.f32.mxu0 0.0
  %711 = vmatmul.mubr.f32.gmra.mxu0 %v417
  %v712 = vpop.f32.mrf.mxu0
  %v713 = vadd.f32 %v392, %v712
  %v714 = vpop.f32.mrf.mxu0
  %715 = vdwg.mxu0
  %s716 = scalar_lea.vmem %s1, 16
  %v717 = vld [vmem:[%s716] sm:$0xff]
  %v718 = vld [vmem:[%s0] sm:$0xff]
  %v719 = vld [vmem:[%s0 + $0x8] sm:$0xff]
  %v720 = vld [vmem:[%s0 + $0x10] sm:$0xff]
  %v721 = vld [vmem:[%s0 + $0x18] sm:$0xf]
  %v726 = vcombine.high %v718, %v718
  %v727 = vcombine.high %v719, %v719
  %v728 = vcombine.high %v720, %v720
  %729 = vrot.lane.b32.xlu0 %v718, 105
  %v730 = vpop.permute.xlu0 %729
  %731 = vrot.lane.b32.xlu0 %v726, 105
  %v732 = vpop.permute.xlu0 %731
  %733 = vrot.lane.b32.xlu0 %v719, 105
  %v734 = vpop.permute.xlu0 %733
  %735 = vrot.lane.b32.xlu0 %v727, 105
  %v736 = vpop.permute.xlu0 %735
  %737 = vrot.lane.b32.xlu0 %v720, 105
  %v738 = vpop.permute.xlu0 %737
  %739 = vrot.lane.b32.xlu0 %v728, 105
  %v740 = vpop.permute.xlu0 %739
  %741 = vrot.lane.b32.xlu0 %v721, 105
  %v742 = vpop.permute.xlu0 %741
  %vm743 = vcmask 859136
  %v744 = vsel %vm743, %v730, %v732
  %v745 = vsel %vm743, %v732, %v734
  %v746 = vsel %vm743, %v734, %v736
  %v747 = vsel %vm743, %v736, %v738
  %v748 = vsel %vm743, %v738, %v740
  %v749 = vsel %vm743, %v740, %v742
  %v751 = vsel %vm93, %v717, 0
  %v753 = vsel %vm97, %v744, 0
  %v755 = vsel %vm97, %v745, 0
  %v757 = vsel %vm97, %v746, 0
  %v759 = vsel %vm97, %v747, 0
  %v761 = vsel %vm97, %v748, 0
  %v763 = vsel %vm97, %v749, 0
  %v765 = vsel %vm97, %v742, 0
  %767 = vmatprep.subr.mxu0 0.0
  %768 = vmatpush1.msra.mxu0 0.0
  %769 = vmatprep.subr.mxu0 0.0
  %770 = vmatpush1.msra.mxu0 0.0
  %771 = vmatprep.subr.mxu0 0.0
  %772 = vmatpush1.msra.mxu0 0.0
  %773 = vmatprep.subr.mxu0 0.0
  %774 = vmatpush1.msra.mxu0 0.0
  %775 = vmatprep.subr.mxu0 0.0
  %776 = vmatpush1.msra.mxu0 0.0
  %777 = vmatprep.subr.mxu0 0.0
  %778 = vmatpush1.msra.mxu0 0.0
  %779 = vmatprep.subr.mxu0 0.0
  %780 = vmatpush1.msra.mxu0 0.0
  %781 = vmatprep.subr.mxu0 0.0
  %782 = vmatpush1.msra.mxu0 0.0
  %783 = vmatprep.subr.mxu0 0.0
  %784 = vmatpush1.msra.mxu0 0.0
  %785 = vmatprep.subr.mxu0 0.0
  %786 = vmatpush1.msra.mxu0 0.0
  %787 = vmatprep.subr.mxu0 0.0
  %788 = vmatpush1.msra.mxu0 0.0
  %789 = vmatprep.subr.mxu0 0.0
  %790 = vmatpush1.msra.mxu0 0.0
  %791 = vmatprep.subr.mxu0 0.0
  %792 = vmatpush1.msra.mxu0 0.0
  %793 = vmatprep.subr.mxu0 0.0
  %794 = vmatpush1.msra.mxu0 0.0
  %795 = vmatprep.subr.mxu0 0.0
  %796 = vmatpush1.msra.mxu0 0.0
  %797 = vmatprep.subr.mxu0 %v755
  %798 = vmatpush1.msra.mxu0 %v753
  %799 = vmatprep.subr.mxu0 0.0
  %800 = vmatpush2.msra.mxu0 0.0
  %801 = vmatprep.subr.mxu0 0.0
  %802 = vmatpush2.msra.mxu0 0.0
  %803 = vmatprep.subr.mxu0 0.0
  %804 = vmatpush2.msra.mxu0 0.0
  %805 = vmatprep.subr.mxu0 0.0
  %806 = vmatpush2.msra.mxu0 0.0
  %807 = vmatprep.subr.mxu0 0.0
  %808 = vmatpush2.msra.mxu0 0.0
  %809 = vmatprep.subr.mxu0 0.0
  %810 = vmatpush2.msra.mxu0 0.0
  %811 = vmatprep.subr.mxu0 0.0
  %812 = vmatpush2.msra.mxu0 0.0
  %813 = vmatprep.subr.mxu0 0.0
  %814 = vmatpush2.msra.mxu0 0.0
  %815 = vmatprep.subr.mxu0 0.0
  %816 = vmatpush2.msra.mxu0 0.0
  %817 = vmatprep.subr.mxu0 0.0
  %818 = vmatpush2.msra.mxu0 0.0
  %819 = vmatprep.subr.mxu0 0.0
  %820 = vmatpush2.msra.mxu0 0.0
  %821 = vmatprep.subr.mxu0 0.0
  %822 = vmatpush2.msra.mxu0 0.0
  %823 = vmatprep.subr.mxu0 0.0
  %824 = vmatpush2.msra.mxu0 0.0
  %825 = vmatprep.subr.mxu0 0.0
  %826 = vmatpush2.msra.mxu0 0.0
  %827 = vmatprep.subr.mxu0 0.0
  %828 = vmatpush2.msra.mxu0 0.0
  %829 = vmatprep.subr.mxu0 0.0
  %830 = vmatpush2.msra.mxu0 0.0
  %831 = vmatprep.mubr.f32.mxu0 0.0
  %832 = vmatmul.mubr.f32.gmra.mxu0 %v751
  %v833 = vpop.f32.mrf.mxu0
  %v834 = vadd.f32 0.0, %v833
  %v835 = vpop.f32.mrf.mxu0
  %v836 = vadd.f32 0.0, %v835
  %837 = vdwg.mxu0
  %838 = vmatprep.subr.mxu0 0.0
  %839 = vmatpush1.msra.mxu0 0.0
  %840 = vmatprep.subr.mxu0 0.0
  %841 = vmatpush1.msra.mxu0 0.0
  %842 = vmatprep.subr.mxu0 0.0
  %843 = vmatpush1.msra.mxu0 0.0
  %844 = vmatprep.subr.mxu0 0.0
  %845 = vmatpush1.msra.mxu0 0.0
  %846 = vmatprep.subr.mxu0 0.0
  %847 = vmatpush1.msra.mxu0 0.0
  %848 = vmatprep.subr.mxu0 0.0
  %849 = vmatpush1.msra.mxu0 0.0
  %850 = vmatprep.subr.mxu0 0.0
  %851 = vmatpush1.msra.mxu0 0.0
  %852 = vmatprep.subr.mxu0 0.0
  %853 = vmatpush1.msra.mxu0 0.0
  %854 = vmatprep.subr.mxu0 0.0
  %855 = vmatpush1.msra.mxu0 0.0
  %856 = vmatprep.subr.mxu0 0.0
  %857 = vmatpush1.msra.mxu0 0.0
  %858 = vmatprep.subr.mxu0 0.0
  %859 = vmatpush1.msra.mxu0 0.0
  %860 = vmatprep.subr.mxu0 0.0
  %861 = vmatpush1.msra.mxu0 0.0
  %862 = vmatprep.subr.mxu0 0.0
  %863 = vmatpush1.msra.mxu0 0.0
  %864 = vmatprep.subr.mxu0 0.0
  %865 = vmatpush1.msra.mxu0 0.0
  %866 = vmatprep.subr.mxu0 0.0
  %867 = vmatpush1.msra.mxu0 0.0
  %868 = vmatprep.subr.mxu0 %v759
  %869 = vmatpush1.msra.mxu0 %v757
  %870 = vmatprep.subr.mxu0 0.0
  %871 = vmatpush2.msra.mxu0 0.0
  %872 = vmatprep.subr.mxu0 0.0
  %873 = vmatpush2.msra.mxu0 0.0
  %874 = vmatprep.subr.mxu0 0.0
  %875 = vmatpush2.msra.mxu0 0.0
  %876 = vmatprep.subr.mxu0 0.0
  %877 = vmatpush2.msra.mxu0 0.0
  %878 = vmatprep.subr.mxu0 0.0
  %879 = vmatpush2.msra.mxu0 0.0
  %880 = vmatprep.subr.mxu0 0.0
  %881 = vmatpush2.msra.mxu0 0.0
  %882 = vmatprep.subr.mxu0 0.0
  %883 = vmatpush2.msra.mxu0 0.0
  %884 = vmatprep.subr.mxu0 0.0
  %885 = vmatpush2.msra.mxu0 0.0
  %886 = vmatprep.subr.mxu0 0.0
  %887 = vmatpush2.msra.mxu0 0.0
  %888 = vmatprep.subr.mxu0 0.0
  %889 = vmatpush2.msra.mxu0 0.0
  %890 = vmatprep.subr.mxu0 0.0
  %891 = vmatpush2.msra.mxu0 0.0
  %892 = vmatprep.subr.mxu0 0.0
  %893 = vmatpush2.msra.mxu0 0.0
  %894 = vmatprep.subr.mxu0 0.0
  %895 = vmatpush2.msra.mxu0 0.0
  %896 = vmatprep.subr.mxu0 0.0
  %897 = vmatpush2.msra.mxu0 0.0
  %898 = vmatprep.subr.mxu0 0.0
  %899 = vmatpush2.msra.mxu0 0.0
  %900 = vmatprep.subr.mxu0 0.0
  %901 = vmatpush2.msra.mxu0 0.0
  %902 = vmatprep.mubr.f32.mxu0 0.0
  %903 = vmatmul.mubr.f32.gmra.mxu0 %v751
  %v904 = vpop.f32.mrf.mxu0
  %v905 = vadd.f32 0.0, %v904
  %v906 = vpop.f32.mrf.mxu0
  %v907 = vadd.f32 0.0, %v906
  %908 = vdwg.mxu0
  %909 = vmatprep.subr.mxu0 0.0
  %910 = vmatpush1.msra.mxu0 0.0
  %911 = vmatprep.subr.mxu0 0.0
  %912 = vmatpush1.msra.mxu0 0.0
  %913 = vmatprep.subr.mxu0 0.0
  %914 = vmatpush1.msra.mxu0 0.0
  %915 = vmatprep.subr.mxu0 0.0
  %916 = vmatpush1.msra.mxu0 0.0
  %917 = vmatprep.subr.mxu0 0.0
  %918 = vmatpush1.msra.mxu0 0.0
  %919 = vmatprep.subr.mxu0 0.0
  %920 = vmatpush1.msra.mxu0 0.0
  %921 = vmatprep.subr.mxu0 0.0
  %922 = vmatpush1.msra.mxu0 0.0
  %923 = vmatprep.subr.mxu0 0.0
  %924 = vmatpush1.msra.mxu0 0.0
  %925 = vmatprep.subr.mxu0 0.0
  %926 = vmatpush1.msra.mxu0 0.0
  %927 = vmatprep.subr.mxu0 0.0
  %928 = vmatpush1.msra.mxu0 0.0
  %929 = vmatprep.subr.mxu0 0.0
  %930 = vmatpush1.msra.mxu0 0.0
  %931 = vmatprep.subr.mxu0 0.0
  %932 = vmatpush1.msra.mxu0 0.0
  %933 = vmatprep.subr.mxu0 0.0
  %934 = vmatpush1.msra.mxu0 0.0
  %935 = vmatprep.subr.mxu0 0.0
  %936 = vmatpush1.msra.mxu0 0.0
  %937 = vmatprep.subr.mxu0 0.0
  %938 = vmatpush1.msra.mxu0 0.0
  %939 = vmatprep.subr.mxu0 %v763
  %940 = vmatpush1.msra.mxu0 %v761
  %941 = vmatprep.subr.mxu0 0.0
  %942 = vmatpush2.msra.mxu0 0.0
  %943 = vmatprep.subr.mxu0 0.0
  %944 = vmatpush2.msra.mxu0 0.0
  %945 = vmatprep.subr.mxu0 0.0
  %946 = vmatpush2.msra.mxu0 0.0
  %947 = vmatprep.subr.mxu0 0.0
  %948 = vmatpush2.msra.mxu0 0.0
  %949 = vmatprep.subr.mxu0 0.0
  %950 = vmatpush2.msra.mxu0 0.0
  %951 = vmatprep.subr.mxu0 0.0
  %952 = vmatpush2.msra.mxu0 0.0
  %953 = vmatprep.subr.mxu0 0.0
  %954 = vmatpush2.msra.mxu0 0.0
  %955 = vmatprep.subr.mxu0 0.0
  %956 = vmatpush2.msra.mxu0 0.0
  %957 = vmatprep.subr.mxu0 0.0
  %958 = vmatpush2.msra.mxu0 0.0
  %959 = vmatprep.subr.mxu0 0.0
  %960 = vmatpush2.msra.mxu0 0.0
  %961 = vmatprep.subr.mxu0 0.0
  %962 = vmatpush2.msra.mxu0 0.0
  %963 = vmatprep.subr.mxu0 0.0
  %964 = vmatpush2.msra.mxu0 0.0
  %965 = vmatprep.subr.mxu0 0.0
  %966 = vmatpush2.msra.mxu0 0.0
  %967 = vmatprep.subr.mxu0 0.0
  %968 = vmatpush2.msra.mxu0 0.0
  %969 = vmatprep.subr.mxu0 0.0
  %970 = vmatpush2.msra.mxu0 0.0
  %971 = vmatprep.subr.mxu0 0.0
  %972 = vmatpush2.msra.mxu0 0.0
  %973 = vmatprep.mubr.f32.mxu0 0.0
  %974 = vmatmul.mubr.f32.gmra.mxu0 %v751
  %v975 = vpop.f32.mrf.mxu0
  %v976 = vadd.f32 0.0, %v975
  %v977 = vpop.f32.mrf.mxu0
  %v978 = vadd.f32 0.0, %v977
  %979 = vdwg.mxu0
  %980 = vmatprep.subr.mxu0 0.0
  %981 = vmatpush1.msra.mxu0 0.0
  %982 = vmatprep.subr.mxu0 0.0
  %983 = vmatpush1.msra.mxu0 0.0
  %984 = vmatprep.subr.mxu0 0.0
  %985 = vmatpush1.msra.mxu0 0.0
  %986 = vmatprep.subr.mxu0 0.0
  %987 = vmatpush1.msra.mxu0 0.0
  %988 = vmatprep.subr.mxu0 0.0
  %989 = vmatpush1.msra.mxu0 0.0
  %990 = vmatprep.subr.mxu0 0.0
  %991 = vmatpush1.msra.mxu0 0.0
  %992 = vmatprep.subr.mxu0 0.0
  %993 = vmatpush1.msra.mxu0 0.0
  %994 = vmatprep.subr.mxu0 0.0
  %995 = vmatpush1.msra.mxu0 0.0
  %996 = vmatprep.subr.mxu0 0.0
  %997 = vmatpush1.msra.mxu0 0.0
  %998 = vmatprep.subr.mxu0 0.0
  %999 = vmatpush1.msra.mxu0 0.0
  %1000 = vmatprep.subr.mxu0 0.0
  %1001 = vmatpush1.msra.mxu0 0.0
  %1002 = vmatprep.subr.mxu0 0.0
  %1003 = vmatpush1.msra.mxu0 0.0
  %1004 = vmatprep.subr.mxu0 0.0
  %1005 = vmatpush1.msra.mxu0 0.0
  %1006 = vmatprep.subr.mxu0 0.0
  %1007 = vmatpush1.msra.mxu0 0.0
  %1008 = vmatprep.subr.mxu0 0.0
  %1009 = vmatpush1.msra.mxu0 0.0
  %1010 = vmatprep.subr.mxu0 0.0
  %1011 = vmatpush1.msra.mxu0 %v765
  %1012 = vmatprep.subr.mxu0 0.0
  %1013 = vmatpush2.msra.mxu0 0.0
  %1014 = vmatprep.subr.mxu0 0.0
  %1015 = vmatpush2.msra.mxu0 0.0
  %1016 = vmatprep.subr.mxu0 0.0
  %1017 = vmatpush2.msra.mxu0 0.0
  %1018 = vmatprep.subr.mxu0 0.0
  %1019 = vmatpush2.msra.mxu0 0.0
  %1020 = vmatprep.subr.mxu0 0.0
  %1021 = vmatpush2.msra.mxu0 0.0
  %1022 = vmatprep.subr.mxu0 0.0
  %1023 = vmatpush2.msra.mxu0 0.0
  %1024 = vmatprep.subr.mxu0 0.0
  %1025 = vmatpush2.msra.mxu0 0.0
  %1026 = vmatprep.subr.mxu0 0.0
  %1027 = vmatpush2.msra.mxu0 0.0
  %1028 = vmatprep.subr.mxu0 0.0
  %1029 = vmatpush2.msra.mxu0 0.0
  %1030 = vmatprep.subr.mxu0 0.0
  %1031 = vmatpush2.msra.mxu0 0.0
  %1032 = vmatprep.subr.mxu0 0.0
  %1033 = vmatpush2.msra.mxu0 0.0
  %1034 = vmatprep.subr.mxu0 0.0
  %1035 = vmatpush2.msra.mxu0 0.0
  %1036 = vmatprep.subr.mxu0 0.0
  %1037 = vmatpush2.msra.mxu0 0.0
  %1038 = vmatprep.subr.mxu0 0.0
  %1039 = vmatpush2.msra.mxu0 0.0
  %1040 = vmatprep.subr.mxu0 0.0
  %1041 = vmatpush2.msra.mxu0 0.0
  %1042 = vmatprep.subr.mxu0 0.0
  %1043 = vmatpush2.msra.mxu0 0.0
  %1044 = vmatprep.mubr.f32.mxu0 0.0
  %1045 = vmatmul.mubr.f32.gmra.mxu0 %v751
  %v1046 = vpop.f32.mrf.mxu0
  %v1047 = vadd.f32 0.0, %v1046
  %v1048 = vpop.f32.mrf.mxu0
  %1049 = vdwg.mxu0
  %v1050 = vadd.f32 %v500, %v834
  %v1051 = vadd.f32 %v502, %v836
  %v1052 = vadd.f32 %v571, %v905
  %v1053 = vadd.f32 %v573, %v907
  %v1054 = vadd.f32 %v642, %v976
  %v1055 = vadd.f32 %v644, %v978
  %v1056 = vadd.f32 %v713, %v1047
  %s1057 = scalar_lea.vmem %s1, 24
  %v1058 = vld [vmem:[%s1057] sm:$0xff]
  %v1059 = vld [vmem:[%s0] sm:$0xff]
  %v1060 = vld [vmem:[%s0 + $0x8] sm:$0xff]
  %v1061 = vld [vmem:[%s0 + $0x10] sm:$0xff]
  %v1062 = vld [vmem:[%s0 + $0x18] sm:$0xf]
  %v1067 = vcombine.high %v1059, %v1059
  %v1068 = vcombine.high %v1060, %v1060
  %v1069 = vcombine.high %v1061, %v1061
  %1070 = vrot.lane.b32.xlu0 %v1059, 87
  %v1071 = vpop.permute.xlu0 %1070
  %1072 = vrot.lane.b32.xlu0 %v1067, 87
  %v1073 = vpop.permute.xlu0 %1072
  %1074 = vrot.lane.b32.xlu0 %v1060, 87
  %v1075 = vpop.permute.xlu0 %1074
  %1076 = vrot.lane.b32.xlu0 %v1068, 87
  %v1077 = vpop.permute.xlu0 %1076
  %1078 = vrot.lane.b32.xlu0 %v1061, 87
  %v1079 = vpop.permute.xlu0 %1078
  %1080 = vrot.lane.b32.xlu0 %v1069, 87
  %v1081 = vpop.permute.xlu0 %1080
  %1082 = vrot.lane.b32.xlu0 %v1062, 87
  %v1083 = vpop.permute.xlu0 %1082
  %vm1084 = vcmask 711680
  %v1085 = vsel %vm1084, %v1071, %v1073
  %v1086 = vsel %vm1084, %v1073, %v1075
  %v1087 = vsel %vm1084, %v1075, %v1077
  %v1088 = vsel %vm1084, %v1077, %v1079
  %v1089 = vsel %vm1084, %v1079, %v1081
  %v1090 = vsel %vm1084, %v1081, %v1083
  %v1092 = vsel %vm93, %v1058, 0
  %v1094 = vsel %vm97, %v1085, 0
  %v1096 = vsel %vm97, %v1086, 0
  %v1098 = vsel %vm97, %v1087, 0
  %v1100 = vsel %vm97, %v1088, 0
  %v1102 = vsel %vm97, %v1089, 0
  %v1104 = vsel %vm97, %v1090, 0
  %v1106 = vsel %vm97, %v1083, 0
  %1108 = vmatprep.subr.mxu0 0.0
  %1109 = vmatpush1.msra.mxu0 0.0
  %1110 = vmatprep.subr.mxu0 0.0
  %1111 = vmatpush1.msra.mxu0 0.0
  %1112 = vmatprep.subr.mxu0 0.0
  %1113 = vmatpush1.msra.mxu0 0.0
  %1114 = vmatprep.subr.mxu0 0.0
  %1115 = vmatpush1.msra.mxu0 0.0
  %1116 = vmatprep.subr.mxu0 0.0
  %1117 = vmatpush1.msra.mxu0 0.0
  %1118 = vmatprep.subr.mxu0 0.0
  %1119 = vmatpush1.msra.mxu0 0.0
  %1120 = vmatprep.subr.mxu0 0.0
  %1121 = vmatpush1.msra.mxu0 0.0
  %1122 = vmatprep.subr.mxu0 0.0
  %1123 = vmatpush1.msra.mxu0 0.0
  %1124 = vmatprep.subr.mxu0 0.0
  %1125 = vmatpush1.msra.mxu0 0.0
  %1126 = vmatprep.subr.mxu0 0.0
  %1127 = vmatpush1.msra.mxu0 0.0
  %1128 = vmatprep.subr.mxu0 0.0
  %1129 = vmatpush1.msra.mxu0 0.0
  %1130 = vmatprep.subr.mxu0 0.0
  %1131 = vmatpush1.msra.mxu0 0.0
  %1132 = vmatprep.subr.mxu0 0.0
  %1133 = vmatpush1.msra.mxu0 0.0
  %1134 = vmatprep.subr.mxu0 0.0
  %1135 = vmatpush1.msra.mxu0 0.0
  %1136 = vmatprep.subr.mxu0 0.0
  %1137 = vmatpush1.msra.mxu0 0.0
  %1138 = vmatprep.subr.mxu0 %v1096
  %1139 = vmatpush1.msra.mxu0 %v1094
  %1140 = vmatprep.subr.mxu0 0.0
  %1141 = vmatpush2.msra.mxu0 0.0
  %1142 = vmatprep.subr.mxu0 0.0
  %1143 = vmatpush2.msra.mxu0 0.0
  %1144 = vmatprep.subr.mxu0 0.0
  %1145 = vmatpush2.msra.mxu0 0.0
  %1146 = vmatprep.subr.mxu0 0.0
  %1147 = vmatpush2.msra.mxu0 0.0
  %1148 = vmatprep.subr.mxu0 0.0
  %1149 = vmatpush2.msra.mxu0 0.0
  %1150 = vmatprep.subr.mxu0 0.0
  %1151 = vmatpush2.msra.mxu0 0.0
  %1152 = vmatprep.subr.mxu0 0.0
  %1153 = vmatpush2.msra.mxu0 0.0
  %1154 = vmatprep.subr.mxu0 0.0
  %1155 = vmatpush2.msra.mxu0 0.0
  %1156 = vmatprep.subr.mxu0 0.0
  %1157 = vmatpush2.msra.mxu0 0.0
  %1158 = vmatprep.subr.mxu0 0.0
  %1159 = vmatpush2.msra.mxu0 0.0
  %1160 = vmatprep.subr.mxu0 0.0
  %1161 = vmatpush2.msra.mxu0 0.0
  %1162 = vmatprep.subr.mxu0 0.0
  %1163 = vmatpush2.msra.mxu0 0.0
  %1164 = vmatprep.subr.mxu0 0.0
  %1165 = vmatpush2.msra.mxu0 0.0
  %1166 = vmatprep.subr.mxu0 0.0
  %1167 = vmatpush2.msra.mxu0 0.0
  %1168 = vmatprep.subr.mxu0 0.0
  %1169 = vmatpush2.msra.mxu0 0.0
  %1170 = vmatprep.subr.mxu0 0.0
  %1171 = vmatpush2.msra.mxu0 0.0
  %1172 = vmatprep.mubr.f32.mxu0 0.0
  %1173 = vmatmul.mubr.f32.gmra.mxu0 %v1092
  %v1174 = vpop.f32.mrf.mxu0
  %v1175 = vadd.f32 0.0, %v1174
  %v1176 = vpop.f32.mrf.mxu0
  %v1177 = vadd.f32 0.0, %v1176
  %1178 = vdwg.mxu0
  %1179 = vmatprep.subr.mxu0 0.0
  %1180 = vmatpush1.msra.mxu0 0.0
  %1181 = vmatprep.subr.mxu0 0.0
  %1182 = vmatpush1.msra.mxu0 0.0
  %1183 = vmatprep.subr.mxu0 0.0
  %1184 = vmatpush1.msra.mxu0 0.0
  %1185 = vmatprep.subr.mxu0 0.0
  %1186 = vmatpush1.msra.mxu0 0.0
  %1187 = vmatprep.subr.mxu0 0.0
  %1188 = vmatpush1.msra.mxu0 0.0
  %1189 = vmatprep.subr.mxu0 0.0
  %1190 = vmatpush1.msra.mxu0 0.0
  %1191 = vmatprep.subr.mxu0 0.0
  %1192 = vmatpush1.msra.mxu0 0.0
  %1193 = vmatprep.subr.mxu0 0.0
  %1194 = vmatpush1.msra.mxu0 0.0
  %1195 = vmatprep.subr.mxu0 0.0
  %1196 = vmatpush1.msra.mxu0 0.0
  %1197 = vmatprep.subr.mxu0 0.0
  %1198 = vmatpush1.msra.mxu0 0.0
  %1199 = vmatprep.subr.mxu0 0.0
  %1200 = vmatpush1.msra.mxu0 0.0
  %1201 = vmatprep.subr.mxu0 0.0
  %1202 = vmatpush1.msra.mxu0 0.0
  %1203 = vmatprep.subr.mxu0 0.0
  %1204 = vmatpush1.msra.mxu0 0.0
  %1205 = vmatprep.subr.mxu0 0.0
  %1206 = vmatpush1.msra.mxu0 0.0
  %1207 = vmatprep.subr.mxu0 0.0
  %1208 = vmatpush1.msra.mxu0 0.0
  %1209 = vmatprep.subr.mxu0 %v1100
  %1210 = vmatpush1.msra.mxu0 %v1098
  %1211 = vmatprep.subr.mxu0 0.0
  %1212 = vmatpush2.msra.mxu0 0.0
  %1213 = vmatprep.subr.mxu0 0.0
  %1214 = vmatpush2.msra.mxu0 0.0
  %1215 = vmatprep.subr.mxu0 0.0
  %1216 = vmatpush2.msra.mxu0 0.0
  %1217 = vmatprep.subr.mxu0 0.0
  %1218 = vmatpush2.msra.mxu0 0.0
  %1219 = vmatprep.subr.mxu0 0.0
  %1220 = vmatpush2.msra.mxu0 0.0
  %1221 = vmatprep.subr.mxu0 0.0
  %1222 = vmatpush2.msra.mxu0 0.0
  %1223 = vmatprep.subr.mxu0 0.0
  %1224 = vmatpush2.msra.mxu0 0.0
  %1225 = vmatprep.subr.mxu0 0.0
  %1226 = vmatpush2.msra.mxu0 0.0
  %1227 = vmatprep.subr.mxu0 0.0
  %1228 = vmatpush2.msra.mxu0 0.0
  %1229 = vmatprep.subr.mxu0 0.0
  %1230 = vmatpush2.msra.mxu0 0.0
  %1231 = vmatprep.subr.mxu0 0.0
  %1232 = vmatpush2.msra.mxu0 0.0
  %1233 = vmatprep.subr.mxu0 0.0
  %1234 = vmatpush2.msra.mxu0 0.0
  %1235 = vmatprep.subr.mxu0 0.0
  %1236 = vmatpush2.msra.mxu0 0.0
  %1237 = vmatprep.subr.mxu0 0.0
  %1238 = vmatpush2.msra.mxu0 0.0
  %1239 = vmatprep.subr.mxu0 0.0
  %1240 = vmatpush2.msra.mxu0 0.0
  %1241 = vmatprep.subr.mxu0 0.0
  %1242 = vmatpush2.msra.mxu0 0.0
  %1243 = vmatprep.mubr.f32.mxu0 0.0
  %1244 = vmatmul.mubr.f32.gmra.mxu0 %v1092
  %v1245 = vpop.f32.mrf.mxu0
  %v1246 = vadd.f32 0.0, %v1245
  %v1247 = vpop.f32.mrf.mxu0
  %v1248 = vadd.f32 0.0, %v1247
  %1249 = vdwg.mxu0
  %1250 = vmatprep.subr.mxu0 0.0
  %1251 = vmatpush1.msra.mxu0 0.0
  %1252 = vmatprep.subr.mxu0 0.0
  %1253 = vmatpush1.msra.mxu0 0.0
  %1254 = vmatprep.subr.mxu0 0.0
  %1255 = vmatpush1.msra.mxu0 0.0
  %1256 = vmatprep.subr.mxu0 0.0
  %1257 = vmatpush1.msra.mxu0 0.0
  %1258 = vmatprep.subr.mxu0 0.0
  %1259 = vmatpush1.msra.mxu0 0.0
  %1260 = vmatprep.subr.mxu0 0.0
  %1261 = vmatpush1.msra.mxu0 0.0
  %1262 = vmatprep.subr.mxu0 0.0
  %1263 = vmatpush1.msra.mxu0 0.0
  %1264 = vmatprep.subr.mxu0 0.0
  %1265 = vmatpush1.msra.mxu0 0.0
  %1266 = vmatprep.subr.mxu0 0.0
  %1267 = vmatpush1.msra.mxu0 0.0
  %1268 = vmatprep.subr.mxu0 0.0
  %1269 = vmatpush1.msra.mxu0 0.0
  %1270 = vmatprep.subr.mxu0 0.0
  %1271 = vmatpush1.msra.mxu0 0.0
  %1272 = vmatprep.subr.mxu0 0.0
  %1273 = vmatpush1.msra.mxu0 0.0
  %1274 = vmatprep.subr.mxu0 0.0
  %1275 = vmatpush1.msra.mxu0 0.0
  %1276 = vmatprep.subr.mxu0 0.0
  %1277 = vmatpush1.msra.mxu0 0.0
  %1278 = vmatprep.subr.mxu0 0.0
  %1279 = vmatpush1.msra.mxu0 0.0
  %1280 = vmatprep.subr.mxu0 %v1104
  %1281 = vmatpush1.msra.mxu0 %v1102
  %1282 = vmatprep.subr.mxu0 0.0
  %1283 = vmatpush2.msra.mxu0 0.0
  %1284 = vmatprep.subr.mxu0 0.0
  %1285 = vmatpush2.msra.mxu0 0.0
  %1286 = vmatprep.subr.mxu0 0.0
  %1287 = vmatpush2.msra.mxu0 0.0
  %1288 = vmatprep.subr.mxu0 0.0
  %1289 = vmatpush2.msra.mxu0 0.0
  %1290 = vmatprep.subr.mxu0 0.0
  %1291 = vmatpush2.msra.mxu0 0.0
  %1292 = vmatprep.subr.mxu0 0.0
  %1293 = vmatpush2.msra.mxu0 0.0
  %1294 = vmatprep.subr.mxu0 0.0
  %1295 = vmatpush2.msra.mxu0 0.0
  %1296 = vmatprep.subr.mxu0 0.0
  %1297 = vmatpush2.msra.mxu0 0.0
  %1298 = vmatprep.subr.mxu0 0.0
  %1299 = vmatpush2.msra.mxu0 0.0
  %1300 = vmatprep.subr.mxu0 0.0
  %1301 = vmatpush2.msra.mxu0 0.0
  %1302 = vmatprep.subr.mxu0 0.0
  %1303 = vmatpush2.msra.mxu0 0.0
  %1304 = vmatprep.subr.mxu0 0.0
  %1305 = vmatpush2.msra.mxu0 0.0
  %1306 = vmatprep.subr.mxu0 0.0
  %1307 = vmatpush2.msra.mxu0 0.0
  %1308 = vmatprep.subr.mxu0 0.0
  %1309 = vmatpush2.msra.mxu0 0.0
  %1310 = vmatprep.subr.mxu0 0.0
  %1311 = vmatpush2.msra.mxu0 0.0
  %1312 = vmatprep.subr.mxu0 0.0
  %1313 = vmatpush2.msra.mxu0 0.0
  %1314 = vmatprep.mubr.f32.mxu0 0.0
  %1315 = vmatmul.mubr.f32.gmra.mxu0 %v1092
  %v1316 = vpop.f32.mrf.mxu0
  %v1317 = vadd.f32 0.0, %v1316
  %v1318 = vpop.f32.mrf.mxu0
  %v1319 = vadd.f32 0.0, %v1318
  %1320 = vdwg.mxu0
  %1321 = vmatprep.subr.mxu0 0.0
  %1322 = vmatpush1.msra.mxu0 0.0
  %1323 = vmatprep.subr.mxu0 0.0
  %1324 = vmatpush1.msra.mxu0 0.0
  %1325 = vmatprep.subr.mxu0 0.0
  %1326 = vmatpush1.msra.mxu0 0.0
  %1327 = vmatprep.subr.mxu0 0.0
  %1328 = vmatpush1.msra.mxu0 0.0
  %1329 = vmatprep.subr.mxu0 0.0
  %1330 = vmatpush1.msra.mxu0 0.0
  %1331 = vmatprep.subr.mxu0 0.0
  %1332 = vmatpush1.msra.mxu0 0.0
  %1333 = vmatprep.subr.mxu0 0.0
  %1334 = vmatpush1.msra.mxu0 0.0
  %1335 = vmatprep.subr.mxu0 0.0
  %1336 = vmatpush1.msra.mxu0 0.0
  %1337 = vmatprep.subr.mxu0 0.0
  %1338 = vmatpush1.msra.mxu0 0.0
  %1339 = vmatprep.subr.mxu0 0.0
  %1340 = vmatpush1.msra.mxu0 0.0
  %1341 = vmatprep.subr.mxu0 0.0
  %1342 = vmatpush1.msra.mxu0 0.0
  %1343 = vmatprep.subr.mxu0 0.0
  %1344 = vmatpush1.msra.mxu0 0.0
  %1345 = vmatprep.subr.mxu0 0.0
  %1346 = vmatpush1.msra.mxu0 0.0
  %1347 = vmatprep.subr.mxu0 0.0
  %1348 = vmatpush1.msra.mxu0 0.0
  %1349 = vmatprep.subr.mxu0 0.0
  %1350 = vmatpush1.msra.mxu0 0.0
  %1351 = vmatprep.subr.mxu0 0.0
  %1352 = vmatpush1.msra.mxu0 %v1106
  %1353 = vmatprep.subr.mxu0 0.0
  %1354 = vmatpush2.msra.mxu0 0.0
  %1355 = vmatprep.subr.mxu0 0.0
  %1356 = vmatpush2.msra.mxu0 0.0
  %1357 = vmatprep.subr.mxu0 0.0
  %1358 = vmatpush2.msra.mxu0 0.0
  %1359 = vmatprep.subr.mxu0 0.0
  %1360 = vmatpush2.msra.mxu0 0.0
  %1361 = vmatprep.subr.mxu0 0.0
  %1362 = vmatpush2.msra.mxu0 0.0
  %1363 = vmatprep.subr.mxu0 0.0
  %1364 = vmatpush2.msra.mxu0 0.0
  %1365 = vmatprep.subr.mxu0 0.0
  %1366 = vmatpush2.msra.mxu0 0.0
  %1367 = vmatprep.subr.mxu0 0.0
  %1368 = vmatpush2.msra.mxu0 0.0
  %1369 = vmatprep.subr.mxu0 0.0
  %1370 = vmatpush2.msra.mxu0 0.0
  %1371 = vmatprep.subr.mxu0 0.0
  %1372 = vmatpush2.msra.mxu0 0.0
  %1373 = vmatprep.subr.mxu0 0.0
  %1374 = vmatpush2.msra.mxu0 0.0
  %1375 = vmatprep.subr.mxu0 0.0
  %1376 = vmatpush2.msra.mxu0 0.0
  %1377 = vmatprep.subr.mxu0 0.0
  %1378 = vmatpush2.msra.mxu0 0.0
  %1379 = vmatprep.subr.mxu0 0.0
  %1380 = vmatpush2.msra.mxu0 0.0
  %1381 = vmatprep.subr.mxu0 0.0
  %1382 = vmatpush2.msra.mxu0 0.0
  %1383 = vmatprep.subr.mxu0 0.0
  %1384 = vmatpush2.msra.mxu0 0.0
  %1385 = vmatprep.mubr.f32.mxu0 0.0
  %1386 = vmatmul.mubr.f32.gmra.mxu0 %v1092
  %v1387 = vpop.f32.mrf.mxu0
  %v1388 = vadd.f32 0.0, %v1387
  %v1389 = vpop.f32.mrf.mxu0
  %1390 = vdwg.mxu0
  %v1391 = vadd.f32 %v1050, %v1175
  %v1392 = vadd.f32 %v1051, %v1177
  %v1393 = vadd.f32 %v1052, %v1246
  %v1394 = vadd.f32 %v1053, %v1248
  %v1395 = vadd.f32 %v1054, %v1317
  %v1396 = vadd.f32 %v1055, %v1319
  %v1397 = vadd.f32 %v1056, %v1388
  %s1398 = scalar_lea.vmem %s1, 32
  %v1399 = vld [vmem:[%s1398] sm:$0xff]
  %v1400 = vld [vmem:[%s0] sm:$0xff]
  %v1401 = vld [vmem:[%s0 + $0x8] sm:$0xff]
  %v1402 = vld [vmem:[%s0 + $0x10] sm:$0xff]
  %v1403 = vld [vmem:[%s0 + $0x18] sm:$0xf]
  %v1408 = vcombine.high %v1400, %v1400
  %v1409 = vcombine.high %v1401, %v1401
  %v1410 = vcombine.high %v1402, %v1402
  %1411 = vrot.lane.b32.xlu0 %v1400, 86
  %v1412 = vpop.permute.xlu0 %1411
  %1413 = vrot.lane.b32.xlu0 %v1408, 86
  %v1414 = vpop.permute.xlu0 %1413
  %1415 = vrot.lane.b32.xlu0 %v1401, 86
  %v1416 = vpop.permute.xlu0 %1415
  %1417 = vrot.lane.b32.xlu0 %v1409, 86
  %v1418 = vpop.permute.xlu0 %1417
  %1419 = vrot.lane.b32.xlu0 %v1402, 86
  %v1420 = vpop.permute.xlu0 %1419
  %1421 = vrot.lane.b32.xlu0 %v1410, 86
  %v1422 = vpop.permute.xlu0 %1421
  %1423 = vrot.lane.b32.xlu0 %v1403, 86
  %v1424 = vpop.permute.xlu0 %1423
  %vm1425 = vcmask 703488
  %v1426 = vsel %vm1425, %v1412, %v1414
  %v1427 = vsel %vm1425, %v1414, %v1416
  %v1428 = vsel %vm1425, %v1416, %v1418
  %v1429 = vsel %vm1425, %v1418, %v1420
  %v1430 = vsel %vm1425, %v1420, %v1422
  %v1431 = vsel %vm1425, %v1422, %v1424
  %v1433 = vsel %vm93, %v1399, 0
  %v1435 = vsel %vm97, %v1426, 0
  %v1437 = vsel %vm97, %v1427, 0
  %v1439 = vsel %vm97, %v1428, 0
  %v1441 = vsel %vm97, %v1429, 0
  %v1443 = vsel %vm97, %v1430, 0
  %v1445 = vsel %vm97, %v1431, 0
  %v1447 = vsel %vm97, %v1424, 0
  %1449 = vmatprep.subr.mxu0 0.0
  %1450 = vmatpush1.msra.mxu0 0.0
  %1451 = vmatprep.subr.mxu0 0.0
  %1452 = vmatpush1.msra.mxu0 0.0
  %1453 = vmatprep.subr.mxu0 0.0
  %1454 = vmatpush1.msra.mxu0 0.0
  %1455 = vmatprep.subr.mxu0 0.0
  %1456 = vmatpush1.msra.mxu0 0.0
  %1457 = vmatprep.subr.mxu0 0.0
  %1458 = vmatpush1.msra.mxu0 0.0
  %1459 = vmatprep.subr.mxu0 0.0
  %1460 = vmatpush1.msra.mxu0 0.0
  %1461 = vmatprep.subr.mxu0 0.0
  %1462 = vmatpush1.msra.mxu0 0.0
  %1463 = vmatprep.subr.mxu0 0.0
  %1464 = vmatpush1.msra.mxu0 0.0
  %1465 = vmatprep.subr.mxu0 0.0
  %1466 = vmatpush1.msra.mxu0 0.0
  %1467 = vmatprep.subr.mxu0 0.0
  %1468 = vmatpush1.msra.mxu0 0.0
  %1469 = vmatprep.subr.mxu0 0.0
  %1470 = vmatpush1.msra.mxu0 0.0
  %1471 = vmatprep.subr.mxu0 0.0
  %1472 = vmatpush1.msra.mxu0 0.0
  %1473 = vmatprep.subr.mxu0 0.0
  %1474 = vmatpush1.msra.mxu0 0.0
  %1475 = vmatprep.subr.mxu0 0.0
  %1476 = vmatpush1.msra.mxu0 0.0
  %1477 = vmatprep.subr.mxu0 0.0
  %1478 = vmatpush1.msra.mxu0 0.0
  %1479 = vmatprep.subr.mxu0 %v1437
  %1480 = vmatpush1.msra.mxu0 %v1435
  %1481 = vmatprep.subr.mxu0 0.0
  %1482 = vmatpush2.msra.mxu0 0.0
  %1483 = vmatprep.subr.mxu0 0.0
  %1484 = vmatpush2.msra.mxu0 0.0
  %1485 = vmatprep.subr.mxu0 0.0
  %1486 = vmatpush2.msra.mxu0 0.0
  %1487 = vmatprep.subr.mxu0 0.0
  %1488 = vmatpush2.msra.mxu0 0.0
  %1489 = vmatprep.subr.mxu0 0.0
  %1490 = vmatpush2.msra.mxu0 0.0
  %1491 = vmatprep.subr.mxu0 0.0
  %1492 = vmatpush2.msra.mxu0 0.0
  %1493 = vmatprep.subr.mxu0 0.0
  %1494 = vmatpush2.msra.mxu0 0.0
  %1495 = vmatprep.subr.mxu0 0.0
  %1496 = vmatpush2.msra.mxu0 0.0
  %1497 = vmatprep.subr.mxu0 0.0
  %1498 = vmatpush2.msra.mxu0 0.0
  %1499 = vmatprep.subr.mxu0 0.0
  %1500 = vmatpush2.msra.mxu0 0.0
  %1501 = vmatprep.subr.mxu0 0.0
  %1502 = vmatpush2.msra.mxu0 0.0
  %1503 = vmatprep.subr.mxu0 0.0
  %1504 = vmatpush2.msra.mxu0 0.0
  %1505 = vmatprep.subr.mxu0 0.0
  %1506 = vmatpush2.msra.mxu0 0.0
  %1507 = vmatprep.subr.mxu0 0.0
  %1508 = vmatpush2.msra.mxu0 0.0
  %1509 = vmatprep.subr.mxu0 0.0
  %1510 = vmatpush2.msra.mxu0 0.0
  %1511 = vmatprep.subr.mxu0 0.0
  %1512 = vmatpush2.msra.mxu0 0.0
  %1513 = vmatprep.mubr.f32.mxu0 0.0
  %1514 = vmatmul.mubr.f32.gmra.mxu0 %v1433
  %v1515 = vpop.f32.mrf.mxu0
  %v1516 = vadd.f32 0.0, %v1515
  %v1517 = vpop.f32.mrf.mxu0
  %v1518 = vadd.f32 0.0, %v1517
  %1519 = vdwg.mxu0
  %1520 = vmatprep.subr.mxu0 0.0
  %1521 = vmatpush1.msra.mxu0 0.0
  %1522 = vmatprep.subr.mxu0 0.0
  %1523 = vmatpush1.msra.mxu0 0.0
  %1524 = vmatprep.subr.mxu0 0.0
  %1525 = vmatpush1.msra.mxu0 0.0
  %1526 = vmatprep.subr.mxu0 0.0
  %1527 = vmatpush1.msra.mxu0 0.0
  %1528 = vmatprep.subr.mxu0 0.0
  %1529 = vmatpush1.msra.mxu0 0.0
  %1530 = vmatprep.subr.mxu0 0.0
  %1531 = vmatpush1.msra.mxu0 0.0
  %1532 = vmatprep.subr.mxu0 0.0
  %1533 = vmatpush1.msra.mxu0 0.0
  %1534 = vmatprep.subr.mxu0 0.0
  %1535 = vmatpush1.msra.mxu0 0.0
  %1536 = vmatprep.subr.mxu0 0.0
  %1537 = vmatpush1.msra.mxu0 0.0
  %1538 = vmatprep.subr.mxu0 0.0
  %1539 = vmatpush1.msra.mxu0 0.0
  %1540 = vmatprep.subr.mxu0 0.0
  %1541 = vmatpush1.msra.mxu0 0.0
  %1542 = vmatprep.subr.mxu0 0.0
  %1543 = vmatpush1.msra.mxu0 0.0
  %1544 = vmatprep.subr.mxu0 0.0
  %1545 = vmatpush1.msra.mxu0 0.0
  %1546 = vmatprep.subr.mxu0 0.0
  %1547 = vmatpush1.msra.mxu0 0.0
  %1548 = vmatprep.subr.mxu0 0.0
  %1549 = vmatpush1.msra.mxu0 0.0
  %1550 = vmatprep.subr.mxu0 %v1441
  %1551 = vmatpush1.msra.mxu0 %v1439
  %1552 = vmatprep.subr.mxu0 0.0
  %1553 = vmatpush2.msra.mxu0 0.0
  %1554 = vmatprep.subr.mxu0 0.0
  %1555 = vmatpush2.msra.mxu0 0.0
  %1556 = vmatprep.subr.mxu0 0.0
  %1557 = vmatpush2.msra.mxu0 0.0
  %1558 = vmatprep.subr.mxu0 0.0
  %1559 = vmatpush2.msra.mxu0 0.0
  %1560 = vmatprep.subr.mxu0 0.0
  %1561 = vmatpush2.msra.mxu0 0.0
  %1562 = vmatprep.subr.mxu0 0.0
  %1563 = vmatpush2.msra.mxu0 0.0
  %1564 = vmatprep.subr.mxu0 0.0
  %1565 = vmatpush2.msra.mxu0 0.0
  %1566 = vmatprep.subr.mxu0 0.0
  %1567 = vmatpush2.msra.mxu0 0.0
  %1568 = vmatprep.subr.mxu0 0.0
  %1569 = vmatpush2.msra.mxu0 0.0
  %1570 = vmatprep.subr.mxu0 0.0
  %1571 = vmatpush2.msra.mxu0 0.0
  %1572 = vmatprep.subr.mxu0 0.0
  %1573 = vmatpush2.msra.mxu0 0.0
  %1574 = vmatprep.subr.mxu0 0.0
  %1575 = vmatpush2.msra.mxu0 0.0
  %1576 = vmatprep.subr.mxu0 0.0
  %1577 = vmatpush2.msra.mxu0 0.0
  %1578 = vmatprep.subr.mxu0 0.0
  %1579 = vmatpush2.msra.mxu0 0.0
  %1580 = vmatprep.subr.mxu0 0.0
  %1581 = vmatpush2.msra.mxu0 0.0
  %1582 = vmatprep.subr.mxu0 0.0
  %1583 = vmatpush2.msra.mxu0 0.0
  %1584 = vmatprep.mubr.f32.mxu0 0.0
  %1585 = vmatmul.mubr.f32.gmra.mxu0 %v1433
  %v1586 = vpop.f32.mrf.mxu0
  %v1587 = vadd.f32 0.0, %v1586
  %v1588 = vpop.f32.mrf.mxu0
  %v1589 = vadd.f32 0.0, %v1588
  %1590 = vdwg.mxu0
  %1591 = vmatprep.subr.mxu0 0.0
  %1592 = vmatpush1.msra.mxu0 0.0
  %1593 = vmatprep.subr.mxu0 0.0
  %1594 = vmatpush1.msra.mxu0 0.0
  %1595 = vmatprep.subr.mxu0 0.0
  %1596 = vmatpush1.msra.mxu0 0.0
  %1597 = vmatprep.subr.mxu0 0.0
  %1598 = vmatpush1.msra.mxu0 0.0
  %1599 = vmatprep.subr.mxu0 0.0
  %1600 = vmatpush1.msra.mxu0 0.0
  %1601 = vmatprep.subr.mxu0 0.0
  %1602 = vmatpush1.msra.mxu0 0.0
  %1603 = vmatprep.subr.mxu0 0.0
  %1604 = vmatpush1.msra.mxu0 0.0
  %1605 = vmatprep.subr.mxu0 0.0
  %1606 = vmatpush1.msra.mxu0 0.0
  %1607 = vmatprep.subr.mxu0 0.0
  %1608 = vmatpush1.msra.mxu0 0.0
  %1609 = vmatprep.subr.mxu0 0.0
  %1610 = vmatpush1.msra.mxu0 0.0
  %1611 = vmatprep.subr.mxu0 0.0
  %1612 = vmatpush1.msra.mxu0 0.0
  %1613 = vmatprep.subr.mxu0 0.0
  %1614 = vmatpush1.msra.mxu0 0.0
  %1615 = vmatprep.subr.mxu0 0.0
  %1616 = vmatpush1.msra.mxu0 0.0
  %1617 = vmatprep.subr.mxu0 0.0
  %1618 = vmatpush1.msra.mxu0 0.0
  %1619 = vmatprep.subr.mxu0 0.0
  %1620 = vmatpush1.msra.mxu0 0.0
  %1621 = vmatprep.subr.mxu0 %v1445
  %1622 = vmatpush1.msra.mxu0 %v1443
  %1623 = vmatprep.subr.mxu0 0.0
  %1624 = vmatpush2.msra.mxu0 0.0
  %1625 = vmatprep.subr.mxu0 0.0
  %1626 = vmatpush2.msra.mxu0 0.0
  %1627 = vmatprep.subr.mxu0 0.0
  %1628 = vmatpush2.msra.mxu0 0.0
  %1629 = vmatprep.subr.mxu0 0.0
  %1630 = vmatpush2.msra.mxu0 0.0
  %1631 = vmatprep.subr.mxu0 0.0
  %1632 = vmatpush2.msra.mxu0 0.0
  %1633 = vmatprep.subr.mxu0 0.0
  %1634 = vmatpush2.msra.mxu0 0.0
  %1635 = vmatprep.subr.mxu0 0.0
  %1636 = vmatpush2.msra.mxu0 0.0
  %1637 = vmatprep.subr.mxu0 0.0
  %1638 = vmatpush2.msra.mxu0 0.0
  %1639 = vmatprep.subr.mxu0 0.0
  %1640 = vmatpush2.msra.mxu0 0.0
  %1641 = vmatprep.subr.mxu0 0.0
  %1642 = vmatpush2.msra.mxu0 0.0
  %1643 = vmatprep.subr.mxu0 0.0
  %1644 = vmatpush2.msra.mxu0 0.0
  %1645 = vmatprep.subr.mxu0 0.0
  %1646 = vmatpush2.msra.mxu0 0.0
  %1647 = vmatprep.subr.mxu0 0.0
  %1648 = vmatpush2.msra.mxu0 0.0
  %1649 = vmatprep.subr.mxu0 0.0
  %1650 = vmatpush2.msra.mxu0 0.0
  %1651 = vmatprep.subr.mxu0 0.0
  %1652 = vmatpush2.msra.mxu0 0.0
  %1653 = vmatprep.subr.mxu0 0.0
  %1654 = vmatpush2.msra.mxu0 0.0
  %1655 = vmatprep.mubr.f32.mxu0 0.0
  %1656 = vmatmul.mubr.f32.gmra.mxu0 %v1433
  %v1657 = vpop.f32.mrf.mxu0
  %v1658 = vadd.f32 0.0, %v1657
  %v1659 = vpop.f32.mrf.mxu0
  %v1660 = vadd.f32 0.0, %v1659
  %1661 = vdwg.mxu0
  %1662 = vmatprep.subr.mxu0 0.0
  %1663 = vmatpush1.msra.mxu0 0.0
  %1664 = vmatprep.subr.mxu0 0.0
  %1665 = vmatpush1.msra.mxu0 0.0
  %1666 = vmatprep.subr.mxu0 0.0
  %1667 = vmatpush1.msra.mxu0 0.0
  %1668 = vmatprep.subr.mxu0 0.0
  %1669 = vmatpush1.msra.mxu0 0.0
  %1670 = vmatprep.subr.mxu0 0.0
  %1671 = vmatpush1.msra.mxu0 0.0
  %1672 = vmatprep.subr.mxu0 0.0
  %1673 = vmatpush1.msra.mxu0 0.0
  %1674 = vmatprep.subr.mxu0 0.0
  %1675 = vmatpush1.msra.mxu0 0.0
  %1676 = vmatprep.subr.mxu0 0.0
  %1677 = vmatpush1.msra.mxu0 0.0
  %1678 = vmatprep.subr.mxu0 0.0
  %1679 = vmatpush1.msra.mxu0 0.0
  %1680 = vmatprep.subr.mxu0 0.0
  %1681 = vmatpush1.msra.mxu0 0.0
  %1682 = vmatprep.subr.mxu0 0.0
  %1683 = vmatpush1.msra.mxu0 0.0
  %1684 = vmatprep.subr.mxu0 0.0
  %1685 = vmatpush1.msra.mxu0 0.0
  %1686 = vmatprep.subr.mxu0 0.0
  %1687 = vmatpush1.msra.mxu0 0.0
  %1688 = vmatprep.subr.mxu0 0.0
  %1689 = vmatpush1.msra.mxu0 0.0
  %1690 = vmatprep.subr.mxu0 0.0
  %1691 = vmatpush1.msra.mxu0 0.0
  %1692 = vmatprep.subr.mxu0 0.0
  %1693 = vmatpush1.msra.mxu0 %v1447
  %1694 = vmatprep.subr.mxu0 0.0
  %1695 = vmatpush2.msra.mxu0 0.0
  %1696 = vmatprep.subr.mxu0 0.0
  %1697 = vmatpush2.msra.mxu0 0.0
  %1698 = vmatprep.subr.mxu0 0.0
  %1699 = vmatpush2.msra.mxu0 0.0
  %1700 = vmatprep.subr.mxu0 0.0
  %1701 = vmatpush2.msra.mxu0 0.0
  %1702 = vmatprep.subr.mxu0 0.0
  %1703 = vmatpush2.msra.mxu0 0.0
  %1704 = vmatprep.subr.mxu0 0.0
  %1705 = vmatpush2.msra.mxu0 0.0
  %1706 = vmatprep.subr.mxu0 0.0
  %1707 = vmatpush2.msra.mxu0 0.0
  %1708 = vmatprep.subr.mxu0 0.0
  %1709 = vmatpush2.msra.mxu0 0.0
  %1710 = vmatprep.subr.mxu0 0.0
  %1711 = vmatpush2.msra.mxu0 0.0
  %1712 = vmatprep.subr.mxu0 0.0
  %1713 = vmatpush2.msra.mxu0 0.0
  %1714 = vmatprep.subr.mxu0 0.0
  %1715 = vmatpush2.msra.mxu0 0.0
  %1716 = vmatprep.subr.mxu0 0.0
  %1717 = vmatpush2.msra.mxu0 0.0
  %1718 = vmatprep.subr.mxu0 0.0
  %1719 = vmatpush2.msra.mxu0 0.0
  %1720 = vmatprep.subr.mxu0 0.0
  %1721 = vmatpush2.msra.mxu0 0.0
  %1722 = vmatprep.subr.mxu0 0.0
  %1723 = vmatpush2.msra.mxu0 0.0
  %1724 = vmatprep.subr.mxu0 0.0
  %1725 = vmatpush2.msra.mxu0 0.0
  %1726 = vmatprep.mubr.f32.mxu0 0.0
  %1727 = vmatmul.mubr.f32.gmra.mxu0 %v1433
  %v1728 = vpop.f32.mrf.mxu0
  %v1729 = vadd.f32 0.0, %v1728
  %v1730 = vpop.f32.mrf.mxu0
  %1731 = vdwg.mxu0
  %v1732 = vadd.f32 %v1391, %v1516
  %v1733 = vadd.f32 %v1392, %v1518
  %v1734 = vadd.f32 %v1393, %v1587
  %v1735 = vadd.f32 %v1394, %v1589
  %v1736 = vadd.f32 %v1395, %v1658
  %v1737 = vadd.f32 %v1396, %v1660
  %v1738 = vadd.f32 %v1397, %v1729
  %s1739 = scalar_lea.vmem %s1, 40
  %v1740 = vld [vmem:[%s1739] sm:$0xff]
  %v1741 = vld [vmem:[%s0] sm:$0xff]
  %v1742 = vld [vmem:[%s0 + $0x8] sm:$0xff]
  %v1743 = vld [vmem:[%s0 + $0x10] sm:$0xff]
  %v1744 = vld [vmem:[%s0 + $0x18] sm:$0xf]
  %v1749 = vcombine.high %v1741, %v1741
  %v1750 = vcombine.high %v1742, %v1742
  %v1751 = vcombine.high %v1743, %v1743
  %1752 = vrot.lane.b32.xlu0 %v1741, 85
  %v1753 = vpop.permute.xlu0 %1752
  %1754 = vrot.lane.b32.xlu0 %v1749, 85
  %v1755 = vpop.permute.xlu0 %1754
  %1756 = vrot.lane.b32.xlu0 %v1742, 85
  %v1757 = vpop.permute.xlu0 %1756
  %1758 = vrot.lane.b32.xlu0 %v1750, 85
  %v1759 = vpop.permute.xlu0 %1758
  %1760 = vrot.lane.b32.xlu0 %v1743, 85
  %v1761 = vpop.permute.xlu0 %1760
  %1762 = vrot.lane.b32.xlu0 %v1751, 85
  %v1763 = vpop.permute.xlu0 %1762
  %1764 = vrot.lane.b32.xlu0 %v1744, 85
  %v1765 = vpop.permute.xlu0 %1764
  %vm1766 = vcmask 695296
  %v1767 = vsel %vm1766, %v1753, %v1755
  %v1768 = vsel %vm1766, %v1755, %v1757
  %v1769 = vsel %vm1766, %v1757, %v1759
  %v1770 = vsel %vm1766, %v1759, %v1761
  %v1771 = vsel %vm1766, %v1761, %v1763
  %v1772 = vsel %vm1766, %v1763, %v1765
  %v1774 = vsel %vm93, %v1740, 0
  %v1776 = vsel %vm97, %v1767, 0
  %v1778 = vsel %vm97, %v1768, 0
  %v1780 = vsel %vm97, %v1769, 0
  %v1782 = vsel %vm97, %v1770, 0
  %v1784 = vsel %vm97, %v1771, 0
  %v1786 = vsel %vm97, %v1772, 0
  %v1788 = vsel %vm97, %v1765, 0
  %1790 = vmatprep.subr.mxu0 0.0
  %1791 = vmatpush1.msra.mxu0 0.0
  %1792 = vmatprep.subr.mxu0 0.0
  %1793 = vmatpush1.msra.mxu0 0.0
  %1794 = vmatprep.subr.mxu0 0.0
  %1795 = vmatpush1.msra.mxu0 0.0
  %1796 = vmatprep.subr.mxu0 0.0
  %1797 = vmatpush1.msra.mxu0 0.0
  %1798 = vmatprep.subr.mxu0 0.0
  %1799 = vmatpush1.msra.mxu0 0.0
  %1800 = vmatprep.subr.mxu0 0.0
  %1801 = vmatpush1.msra.mxu0 0.0
  %1802 = vmatprep.subr.mxu0 0.0
  %1803 = vmatpush1.msra.mxu0 0.0
  %1804 = vmatprep.subr.mxu0 0.0
  %1805 = vmatpush1.msra.mxu0 0.0
  %1806 = vmatprep.subr.mxu0 0.0
  %1807 = vmatpush1.msra.mxu0 0.0
  %1808 = vmatprep.subr.mxu0 0.0
  %1809 = vmatpush1.msra.mxu0 0.0
  %1810 = vmatprep.subr.mxu0 0.0
  %1811 = vmatpush1.msra.mxu0 0.0
  %1812 = vmatprep.subr.mxu0 0.0
  %1813 = vmatpush1.msra.mxu0 0.0
  %1814 = vmatprep.subr.mxu0 0.0
  %1815 = vmatpush1.msra.mxu0 0.0
  %1816 = vmatprep.subr.mxu0 0.0
  %1817 = vmatpush1.msra.mxu0 0.0
  %1818 = vmatprep.subr.mxu0 0.0
  %1819 = vmatpush1.msra.mxu0 0.0
  %1820 = vmatprep.subr.mxu0 %v1778
  %1821 = vmatpush1.msra.mxu0 %v1776
  %1822 = vmatprep.subr.mxu0 0.0
  %1823 = vmatpush2.msra.mxu0 0.0
  %1824 = vmatprep.subr.mxu0 0.0
  %1825 = vmatpush2.msra.mxu0 0.0
  %1826 = vmatprep.subr.mxu0 0.0
  %1827 = vmatpush2.msra.mxu0 0.0
  %1828 = vmatprep.subr.mxu0 0.0
  %1829 = vmatpush2.msra.mxu0 0.0
  %1830 = vmatprep.subr.mxu0 0.0
  %1831 = vmatpush2.msra.mxu0 0.0
  %1832 = vmatprep.subr.mxu0 0.0
  %1833 = vmatpush2.msra.mxu0 0.0
  %1834 = vmatprep.subr.mxu0 0.0
  %1835 = vmatpush2.msra.mxu0 0.0
  %1836 = vmatprep.subr.mxu0 0.0
  %1837 = vmatpush2.msra.mxu0 0.0
  %1838 = vmatprep.subr.mxu0 0.0
  %1839 = vmatpush2.msra.mxu0 0.0
  %1840 = vmatprep.subr.mxu0 0.0
  %1841 = vmatpush2.msra.mxu0 0.0
  %1842 = vmatprep.subr.mxu0 0.0
  %1843 = vmatpush2.msra.mxu0 0.0
  %1844 = vmatprep.subr.mxu0 0.0
  %1845 = vmatpush2.msra.mxu0 0.0
  %1846 = vmatprep.subr.mxu0 0.0
  %1847 = vmatpush2.msra.mxu0 0.0
  %1848 = vmatprep.subr.mxu0 0.0
  %1849 = vmatpush2.msra.mxu0 0.0
  %1850 = vmatprep.subr.mxu0 0.0
  %1851 = vmatpush2.msra.mxu0 0.0
  %1852 = vmatprep.subr.mxu0 0.0
  %1853 = vmatpush2.msra.mxu0 0.0
  %1854 = vmatprep.mubr.f32.mxu0 0.0
  %1855 = vmatmul.mubr.f32.gmra.mxu0 %v1774
  %v1856 = vpop.f32.mrf.mxu0
  %v1857 = vadd.f32 0.0, %v1856
  %v1858 = vpop.f32.mrf.mxu0
  %v1859 = vadd.f32 0.0, %v1858
  %1860 = vdwg.mxu0
  %1861 = vmatprep.subr.mxu0 0.0
  %1862 = vmatpush1.msra.mxu0 0.0
  %1863 = vmatprep.subr.mxu0 0.0
  %1864 = vmatpush1.msra.mxu0 0.0
  %1865 = vmatprep.subr.mxu0 0.0
  %1866 = vmatpush1.msra.mxu0 0.0
  %1867 = vmatprep.subr.mxu0 0.0
  %1868 = vmatpush1.msra.mxu0 0.0
  %1869 = vmatprep.subr.mxu0 0.0
  %1870 = vmatpush1.msra.mxu0 0.0
  %1871 = vmatprep.subr.mxu0 0.0
  %1872 = vmatpush1.msra.mxu0 0.0
  %1873 = vmatprep.subr.mxu0 0.0
  %1874 = vmatpush1.msra.mxu0 0.0
  %1875 = vmatprep.subr.mxu0 0.0
  %1876 = vmatpush1.msra.mxu0 0.0
  %1877 = vmatprep.subr.mxu0 0.0
  %1878 = vmatpush1.msra.mxu0 0.0
  %1879 = vmatprep.subr.mxu0 0.0
  %1880 = vmatpush1.msra.mxu0 0.0
  %1881 = vmatprep.subr.mxu0 0.0
  %1882 = vmatpush1.msra.mxu0 0.0
  %1883 = vmatprep.subr.mxu0 0.0
  %1884 = vmatpush1.msra.mxu0 0.0
  %1885 = vmatprep.subr.mxu0 0.0
  %1886 = vmatpush1.msra.mxu0 0.0
  %1887 = vmatprep.subr.mxu0 0.0
  %1888 = vmatpush1.msra.mxu0 0.0
  %1889 = vmatprep.subr.mxu0 0.0
  %1890 = vmatpush1.msra.mxu0 0.0
  %1891 = vmatprep.subr.mxu0 %v1782
  %1892 = vmatpush1.msra.mxu0 %v1780
  %1893 = vmatprep.subr.mxu0 0.0
  %1894 = vmatpush2.msra.mxu0 0.0
  %1895 = vmatprep.subr.mxu0 0.0
  %1896 = vmatpush2.msra.mxu0 0.0
  %1897 = vmatprep.subr.mxu0 0.0
  %1898 = vmatpush2.msra.mxu0 0.0
  %1899 = vmatprep.subr.mxu0 0.0
  %1900 = vmatpush2.msra.mxu0 0.0
  %1901 = vmatprep.subr.mxu0 0.0
  %1902 = vmatpush2.msra.mxu0 0.0
  %1903 = vmatprep.subr.mxu0 0.0
  %1904 = vmatpush2.msra.mxu0 0.0
  %1905 = vmatprep.subr.mxu0 0.0
  %1906 = vmatpush2.msra.mxu0 0.0
  %1907 = vmatprep.subr.mxu0 0.0
  %1908 = vmatpush2.msra.mxu0 0.0
  %1909 = vmatprep.subr.mxu0 0.0
  %1910 = vmatpush2.msra.mxu0 0.0
  %1911 = vmatprep.subr.mxu0 0.0
  %1912 = vmatpush2.msra.mxu0 0.0
  %1913 = vmatprep.subr.mxu0 0.0
  %1914 = vmatpush2.msra.mxu0 0.0
  %1915 = vmatprep.subr.mxu0 0.0
  %1916 = vmatpush2.msra.mxu0 0.0
  %1917 = vmatprep.subr.mxu0 0.0
  %1918 = vmatpush2.msra.mxu0 0.0
  %1919 = vmatprep.subr.mxu0 0.0
  %1920 = vmatpush2.msra.mxu0 0.0
  %1921 = vmatprep.subr.mxu0 0.0
  %1922 = vmatpush2.msra.mxu0 0.0
  %1923 = vmatprep.subr.mxu0 0.0
  %1924 = vmatpush2.msra.mxu0 0.0
  %1925 = vmatprep.mubr.f32.mxu0 0.0
  %1926 = vmatmul.mubr.f32.gmra.mxu0 %v1774
  %v1927 = vpop.f32.mrf.mxu0
  %v1928 = vadd.f32 0.0, %v1927
  %v1929 = vpop.f32.mrf.mxu0
  %v1930 = vadd.f32 0.0, %v1929
  %1931 = vdwg.mxu0
  %1932 = vmatprep.subr.mxu0 0.0
  %1933 = vmatpush1.msra.mxu0 0.0
  %1934 = vmatprep.subr.mxu0 0.0
  %1935 = vmatpush1.msra.mxu0 0.0
  %1936 = vmatprep.subr.mxu0 0.0
  %1937 = vmatpush1.msra.mxu0 0.0
  %1938 = vmatprep.subr.mxu0 0.0
  %1939 = vmatpush1.msra.mxu0 0.0
  %1940 = vmatprep.subr.mxu0 0.0
  %1941 = vmatpush1.msra.mxu0 0.0
  %1942 = vmatprep.subr.mxu0 0.0
  %1943 = vmatpush1.msra.mxu0 0.0
  %1944 = vmatprep.subr.mxu0 0.0
  %1945 = vmatpush1.msra.mxu0 0.0
  %1946 = vmatprep.subr.mxu0 0.0
  %1947 = vmatpush1.msra.mxu0 0.0
  %1948 = vmatprep.subr.mxu0 0.0
  %1949 = vmatpush1.msra.mxu0 0.0
  %1950 = vmatprep.subr.mxu0 0.0
  %1951 = vmatpush1.msra.mxu0 0.0
  %1952 = vmatprep.subr.mxu0 0.0
  %1953 = vmatpush1.msra.mxu0 0.0
  %1954 = vmatprep.subr.mxu0 0.0
  %1955 = vmatpush1.msra.mxu0 0.0
  %1956 = vmatprep.subr.mxu0 0.0
  %1957 = vmatpush1.msra.mxu0 0.0
  %1958 = vmatprep.subr.mxu0 0.0
  %1959 = vmatpush1.msra.mxu0 0.0
  %1960 = vmatprep.subr.mxu0 0.0
  %1961 = vmatpush1.msra.mxu0 0.0
  %1962 = vmatprep.subr.mxu0 %v1786
  %1963 = vmatpush1.msra.mxu0 %v1784
  %1964 = vmatprep.subr.mxu0 0.0
  %1965 = vmatpush2.msra.mxu0 0.0
  %1966 = vmatprep.subr.mxu0 0.0
  %1967 = vmatpush2.msra.mxu0 0.0
  %1968 = vmatprep.subr.mxu0 0.0
  %1969 = vmatpush2.msra.mxu0 0.0
  %1970 = vmatprep.subr.mxu0 0.0
  %1971 = vmatpush2.msra.mxu0 0.0
  %1972 = vmatprep.subr.mxu0 0.0
  %1973 = vmatpush2.msra.mxu0 0.0
  %1974 = vmatprep.subr.mxu0 0.0
  %1975 = vmatpush2.msra.mxu0 0.0
  %1976 = vmatprep.subr.mxu0 0.0
  %1977 = vmatpush2.msra.mxu0 0.0
  %1978 = vmatprep.subr.mxu0 0.0
  %1979 = vmatpush2.msra.mxu0 0.0
  %1980 = vmatprep.subr.mxu0 0.0
  %1981 = vmatpush2.msra.mxu0 0.0
  %1982 = vmatprep.subr.mxu0 0.0
  %1983 = vmatpush2.msra.mxu0 0.0
  %1984 = vmatprep.subr.mxu0 0.0
  %1985 = vmatpush2.msra.mxu0 0.0
  %1986 = vmatprep.subr.mxu0 0.0
  %1987 = vmatpush2.msra.mxu0 0.0
  %1988 = vmatprep.subr.mxu0 0.0
  %1989 = vmatpush2.msra.mxu0 0.0
  %1990 = vmatprep.subr.mxu0 0.0
  %1991 = vmatpush2.msra.mxu0 0.0
  %1992 = vmatprep.subr.mxu0 0.0
  %1993 = vmatpush2.msra.mxu0 0.0
  %1994 = vmatprep.subr.mxu0 0.0
  %1995 = vmatpush2.msra.mxu0 0.0
  %1996 = vmatprep.mubr.f32.mxu0 0.0
  %1997 = vmatmul.mubr.f32.gmra.mxu0 %v1774
  %v1998 = vpop.f32.mrf.mxu0
  %v1999 = vadd.f32 0.0, %v1998
  %v2000 = vpop.f32.mrf.mxu0
  %v2001 = vadd.f32 0.0, %v2000
  %2002 = vdwg.mxu0
  %2003 = vmatprep.subr.mxu0 0.0
  %2004 = vmatpush1.msra.mxu0 0.0
  %2005 = vmatprep.subr.mxu0 0.0
  %2006 = vmatpush1.msra.mxu0 0.0
  %2007 = vmatprep.subr.mxu0 0.0
  %2008 = vmatpush1.msra.mxu0 0.0
  %2009 = vmatprep.subr.mxu0 0.0
  %2010 = vmatpush1.msra.mxu0 0.0
  %2011 = vmatprep.subr.mxu0 0.0
  %2012 = vmatpush1.msra.mxu0 0.0
  %2013 = vmatprep.subr.mxu0 0.0
  %2014 = vmatpush1.msra.mxu0 0.0
  %2015 = vmatprep.subr.mxu0 0.0
  %2016 = vmatpush1.msra.mxu0 0.0
  %2017 = vmatprep.subr.mxu0 0.0
  %2018 = vmatpush1.msra.mxu0 0.0
  %2019 = vmatprep.subr.mxu0 0.0
  %2020 = vmatpush1.msra.mxu0 0.0
  %2021 = vmatprep.subr.mxu0 0.0
  %2022 = vmatpush1.msra.mxu0 0.0
  %2023 = vmatprep.subr.mxu0 0.0
  %2024 = vmatpush1.msra.mxu0 0.0
  %2025 = vmatprep.subr.mxu0 0.0
  %2026 = vmatpush1.msra.mxu0 0.0
  %2027 = vmatprep.subr.mxu0 0.0
  %2028 = vmatpush1.msra.mxu0 0.0
  %2029 = vmatprep.subr.mxu0 0.0
  %2030 = vmatpush1.msra.mxu0 0.0
  %2031 = vmatprep.subr.mxu0 0.0
  %2032 = vmatpush1.msra.mxu0 0.0
  %2033 = vmatprep.subr.mxu0 0.0
  %2034 = vmatpush1.msra.mxu0 %v1788
  %2035 = vmatprep.subr.mxu0 0.0
  %2036 = vmatpush2.msra.mxu0 0.0
  %2037 = vmatprep.subr.mxu0 0.0
  %2038 = vmatpush2.msra.mxu0 0.0
  %2039 = vmatprep.subr.mxu0 0.0
  %2040 = vmatpush2.msra.mxu0 0.0
  %2041 = vmatprep.subr.mxu0 0.0
  %2042 = vmatpush2.msra.mxu0 0.0
  %2043 = vmatprep.subr.mxu0 0.0
  %2044 = vmatpush2.msra.mxu0 0.0
  %2045 = vmatprep.subr.mxu0 0.0
  %2046 = vmatpush2.msra.mxu0 0.0
  %2047 = vmatprep.subr.mxu0 0.0
  %2048 = vmatpush2.msra.mxu0 0.0
  %2049 = vmatprep.subr.mxu0 0.0
  %2050 = vmatpush2.msra.mxu0 0.0
  %2051 = vmatprep.subr.mxu0 0.0
  %2052 = vmatpush2.msra.mxu0 0.0
  %2053 = vmatprep.subr.mxu0 0.0
  %2054 = vmatpush2.msra.mxu0 0.0
  %2055 = vmatprep.subr.mxu0 0.0
  %2056 = vmatpush2.msra.mxu0 0.0
  %2057 = vmatprep.subr.mxu0 0.0
  %2058 = vmatpush2.msra.mxu0 0.0
  %2059 = vmatprep.subr.mxu0 0.0
  %2060 = vmatpush2.msra.mxu0 0.0
  %2061 = vmatprep.subr.mxu0 0.0
  %2062 = vmatpush2.msra.mxu0 0.0
  %2063 = vmatprep.subr.mxu0 0.0
  %2064 = vmatpush2.msra.mxu0 0.0
  %2065 = vmatprep.subr.mxu0 0.0
  %2066 = vmatpush2.msra.mxu0 0.0
  %2067 = vmatprep.mubr.f32.mxu0 0.0
  %2068 = vmatmul.mubr.f32.gmra.mxu0 %v1774
  %v2069 = vpop.f32.mrf.mxu0
  %v2070 = vadd.f32 0.0, %v2069
  %v2071 = vpop.f32.mrf.mxu0
  %2072 = vdwg.mxu0
  %v2073 = vadd.f32 %v1732, %v1857
  %v2074 = vadd.f32 %v1733, %v1859
  %v2075 = vadd.f32 %v1734, %v1928
  %v2076 = vadd.f32 %v1735, %v1930
  %v2077 = vadd.f32 %v1736, %v1999
  %v2078 = vadd.f32 %v1737, %v2001
  %v2079 = vadd.f32 %v1738, %v2070
  %s2080 = scalar_lea.vmem %s1, 48
  %v2081 = vld [vmem:[%s2080] sm:$0xff]
  %v2082 = vld [vmem:[%s0] sm:$0xff]
  %v2083 = vld [vmem:[%s0 + $0x8] sm:$0xff]
  %v2084 = vld [vmem:[%s0 + $0x10] sm:$0xff]
  %v2085 = vld [vmem:[%s0 + $0x18] sm:$0xf]
  %v2090 = vcombine.high %v2082, %v2082
  %v2091 = vcombine.high %v2083, %v2083
  %v2092 = vcombine.high %v2084, %v2084
  %2093 = vrot.lane.b32.xlu0 %v2082, 67
  %v2094 = vpop.permute.xlu0 %2093
  %2095 = vrot.lane.b32.xlu0 %v2090, 67
  %v2096 = vpop.permute.xlu0 %2095
  %2097 = vrot.lane.b32.xlu0 %v2083, 67
  %v2098 = vpop.permute.xlu0 %2097
  %2099 = vrot.lane.b32.xlu0 %v2091, 67
  %v2100 = vpop.permute.xlu0 %2099
  %2101 = vrot.lane.b32.xlu0 %v2084, 67
  %v2102 = vpop.permute.xlu0 %2101
  %2103 = vrot.lane.b32.xlu0 %v2092, 67
  %v2104 = vpop.permute.xlu0 %2103
  %2105 = vrot.lane.b32.xlu0 %v2085, 67
  %v2106 = vpop.permute.xlu0 %2105
  %vm2107 = vcmask 547840
  %v2108 = vsel %vm2107, %v2094, %v2096
  %v2109 = vsel %vm2107, %v2096, %v2098
  %v2110 = vsel %vm2107, %v2098, %v2100
  %v2111 = vsel %vm2107, %v2100, %v2102
  %v2112 = vsel %vm2107, %v2102, %v2104
  %v2113 = vsel %vm2107, %v2104, %v2106
  %v2115 = vsel %vm93, %v2081, 0
  %v2117 = vsel %vm97, %v2108, 0
  %v2119 = vsel %vm97, %v2109, 0
  %v2121 = vsel %vm97, %v2110, 0
  %v2123 = vsel %vm97, %v2111, 0
  %v2125 = vsel %vm97, %v2112, 0
  %v2127 = vsel %vm97, %v2113, 0
  %v2129 = vsel %vm97, %v2106, 0
  %2131 = vmatprep.subr.mxu0 0.0
  %2132 = vmatpush1.msra.mxu0 0.0
  %2133 = vmatprep.subr.mxu0 0.0
  %2134 = vmatpush1.msra.mxu0 0.0
  %2135 = vmatprep.subr.mxu0 0.0
  %2136 = vmatpush1.msra.mxu0 0.0
  %2137 = vmatprep.subr.mxu0 0.0
  %2138 = vmatpush1.msra.mxu0 0.0
  %2139 = vmatprep.subr.mxu0 0.0
  %2140 = vmatpush1.msra.mxu0 0.0
  %2141 = vmatprep.subr.mxu0 0.0
  %2142 = vmatpush1.msra.mxu0 0.0
  %2143 = vmatprep.subr.mxu0 0.0
  %2144 = vmatpush1.msra.mxu0 0.0
  %2145 = vmatprep.subr.mxu0 0.0
  %2146 = vmatpush1.msra.mxu0 0.0
  %2147 = vmatprep.subr.mxu0 0.0
  %2148 = vmatpush1.msra.mxu0 0.0
  %2149 = vmatprep.subr.mxu0 0.0
  %2150 = vmatpush1.msra.mxu0 0.0
  %2151 = vmatprep.subr.mxu0 0.0
  %2152 = vmatpush1.msra.mxu0 0.0
  %2153 = vmatprep.subr.mxu0 0.0
  %2154 = vmatpush1.msra.mxu0 0.0
  %2155 = vmatprep.subr.mxu0 0.0
  %2156 = vmatpush1.msra.mxu0 0.0
  %2157 = vmatprep.subr.mxu0 0.0
  %2158 = vmatpush1.msra.mxu0 0.0
  %2159 = vmatprep.subr.mxu0 0.0
  %2160 = vmatpush1.msra.mxu0 0.0
  %2161 = vmatprep.subr.mxu0 %v2119
  %2162 = vmatpush1.msra.mxu0 %v2117
  %2163 = vmatprep.subr.mxu0 0.0
  %2164 = vmatpush2.msra.mxu0 0.0
  %2165 = vmatprep.subr.mxu0 0.0
  %2166 = vmatpush2.msra.mxu0 0.0
  %2167 = vmatprep.subr.mxu0 0.0
  %2168 = vmatpush2.msra.mxu0 0.0
  %2169 = vmatprep.subr.mxu0 0.0
  %2170 = vmatpush2.msra.mxu0 0.0
  %2171 = vmatprep.subr.mxu0 0.0
  %2172 = vmatpush2.msra.mxu0 0.0
  %2173 = vmatprep.subr.mxu0 0.0
  %2174 = vmatpush2.msra.mxu0 0.0
  %2175 = vmatprep.subr.mxu0 0.0
  %2176 = vmatpush2.msra.mxu0 0.0
  %2177 = vmatprep.subr.mxu0 0.0
  %2178 = vmatpush2.msra.mxu0 0.0
  %2179 = vmatprep.subr.mxu0 0.0
  %2180 = vmatpush2.msra.mxu0 0.0
  %2181 = vmatprep.subr.mxu0 0.0
  %2182 = vmatpush2.msra.mxu0 0.0
  %2183 = vmatprep.subr.mxu0 0.0
  %2184 = vmatpush2.msra.mxu0 0.0
  %2185 = vmatprep.subr.mxu0 0.0
  %2186 = vmatpush2.msra.mxu0 0.0
  %2187 = vmatprep.subr.mxu0 0.0
  %2188 = vmatpush2.msra.mxu0 0.0
  %2189 = vmatprep.subr.mxu0 0.0
  %2190 = vmatpush2.msra.mxu0 0.0
  %2191 = vmatprep.subr.mxu0 0.0
  %2192 = vmatpush2.msra.mxu0 0.0
  %2193 = vmatprep.subr.mxu0 0.0
  %2194 = vmatpush2.msra.mxu0 0.0
  %2195 = vmatprep.mubr.f32.mxu0 0.0
  %2196 = vmatmul.mubr.f32.gmra.mxu0 %v2115
  %v2197 = vpop.f32.mrf.mxu0
  %v2198 = vadd.f32 0.0, %v2197
  %v2199 = vpop.f32.mrf.mxu0
  %v2200 = vadd.f32 0.0, %v2199
  %2201 = vdwg.mxu0
  %2202 = vmatprep.subr.mxu0 0.0
  %2203 = vmatpush1.msra.mxu0 0.0
  %2204 = vmatprep.subr.mxu0 0.0
  %2205 = vmatpush1.msra.mxu0 0.0
  %2206 = vmatprep.subr.mxu0 0.0
  %2207 = vmatpush1.msra.mxu0 0.0
  %2208 = vmatprep.subr.mxu0 0.0
  %2209 = vmatpush1.msra.mxu0 0.0
  %2210 = vmatprep.subr.mxu0 0.0
  %2211 = vmatpush1.msra.mxu0 0.0
  %2212 = vmatprep.subr.mxu0 0.0
  %2213 = vmatpush1.msra.mxu0 0.0
  %2214 = vmatprep.subr.mxu0 0.0
  %2215 = vmatpush1.msra.mxu0 0.0
  %2216 = vmatprep.subr.mxu0 0.0
  %2217 = vmatpush1.msra.mxu0 0.0
  %2218 = vmatprep.subr.mxu0 0.0
  %2219 = vmatpush1.msra.mxu0 0.0
  %2220 = vmatprep.subr.mxu0 0.0
  %2221 = vmatpush1.msra.mxu0 0.0
  %2222 = vmatprep.subr.mxu0 0.0
  %2223 = vmatpush1.msra.mxu0 0.0
  %2224 = vmatprep.subr.mxu0 0.0
  %2225 = vmatpush1.msra.mxu0 0.0
  %2226 = vmatprep.subr.mxu0 0.0
  %2227 = vmatpush1.msra.mxu0 0.0
  %2228 = vmatprep.subr.mxu0 0.0
  %2229 = vmatpush1.msra.mxu0 0.0
  %2230 = vmatprep.subr.mxu0 0.0
  %2231 = vmatpush1.msra.mxu0 0.0
  %2232 = vmatprep.subr.mxu0 %v2123
  %2233 = vmatpush1.msra.mxu0 %v2121
  %2234 = vmatprep.subr.mxu0 0.0
  %2235 = vmatpush2.msra.mxu0 0.0
  %2236 = vmatprep.subr.mxu0 0.0
  %2237 = vmatpush2.msra.mxu0 0.0
  %2238 = vmatprep.subr.mxu0 0.0
  %2239 = vmatpush2.msra.mxu0 0.0
  %2240 = vmatprep.subr.mxu0 0.0
  %2241 = vmatpush2.msra.mxu0 0.0
  %2242 = vmatprep.subr.mxu0 0.0
  %2243 = vmatpush2.msra.mxu0 0.0
  %2244 = vmatprep.subr.mxu0 0.0
  %2245 = vmatpush2.msra.mxu0 0.0
  %2246 = vmatprep.subr.mxu0 0.0
  %2247 = vmatpush2.msra.mxu0 0.0
  %2248 = vmatprep.subr.mxu0 0.0
  %2249 = vmatpush2.msra.mxu0 0.0
  %2250 = vmatprep.subr.mxu0 0.0
  %2251 = vmatpush2.msra.mxu0 0.0
  %2252 = vmatprep.subr.mxu0 0.0
  %2253 = vmatpush2.msra.mxu0 0.0
  %2254 = vmatprep.subr.mxu0 0.0
  %2255 = vmatpush2.msra.mxu0 0.0
  %2256 = vmatprep.subr.mxu0 0.0
  %2257 = vmatpush2.msra.mxu0 0.0
  %2258 = vmatprep.subr.mxu0 0.0
  %2259 = vmatpush2.msra.mxu0 0.0
  %2260 = vmatprep.subr.mxu0 0.0
  %2261 = vmatpush2.msra.mxu0 0.0
  %2262 = vmatprep.subr.mxu0 0.0
  %2263 = vmatpush2.msra.mxu0 0.0
  %2264 = vmatprep.subr.mxu0 0.0
  %2265 = vmatpush2.msra.mxu0 0.0
  %2266 = vmatprep.mubr.f32.mxu0 0.0
  %2267 = vmatmul.mubr.f32.gmra.mxu0 %v2115
  %v2268 = vpop.f32.mrf.mxu0
  %v2269 = vadd.f32 0.0, %v2268
  %v2270 = vpop.f32.mrf.mxu0
  %v2271 = vadd.f32 0.0, %v2270
  %2272 = vdwg.mxu0
  %2273 = vmatprep.subr.mxu0 0.0
  %2274 = vmatpush1.msra.mxu0 0.0
  %2275 = vmatprep.subr.mxu0 0.0
  %2276 = vmatpush1.msra.mxu0 0.0
  %2277 = vmatprep.subr.mxu0 0.0
  %2278 = vmatpush1.msra.mxu0 0.0
  %2279 = vmatprep.subr.mxu0 0.0
  %2280 = vmatpush1.msra.mxu0 0.0
  %2281 = vmatprep.subr.mxu0 0.0
  %2282 = vmatpush1.msra.mxu0 0.0
  %2283 = vmatprep.subr.mxu0 0.0
  %2284 = vmatpush1.msra.mxu0 0.0
  %2285 = vmatprep.subr.mxu0 0.0
  %2286 = vmatpush1.msra.mxu0 0.0
  %2287 = vmatprep.subr.mxu0 0.0
  %2288 = vmatpush1.msra.mxu0 0.0
  %2289 = vmatprep.subr.mxu0 0.0
  %2290 = vmatpush1.msra.mxu0 0.0
  %2291 = vmatprep.subr.mxu0 0.0
  %2292 = vmatpush1.msra.mxu0 0.0
  %2293 = vmatprep.subr.mxu0 0.0
  %2294 = vmatpush1.msra.mxu0 0.0
  %2295 = vmatprep.subr.mxu0 0.0
  %2296 = vmatpush1.msra.mxu0 0.0
  %2297 = vmatprep.subr.mxu0 0.0
  %2298 = vmatpush1.msra.mxu0 0.0
  %2299 = vmatprep.subr.mxu0 0.0
  %2300 = vmatpush1.msra.mxu0 0.0
  %2301 = vmatprep.subr.mxu0 0.0
  %2302 = vmatpush1.msra.mxu0 0.0
  %2303 = vmatprep.subr.mxu0 %v2127
  %2304 = vmatpush1.msra.mxu0 %v2125
  %2305 = vmatprep.subr.mxu0 0.0
  %2306 = vmatpush2.msra.mxu0 0.0
  %2307 = vmatprep.subr.mxu0 0.0
  %2308 = vmatpush2.msra.mxu0 0.0
  %2309 = vmatprep.subr.mxu0 0.0
  %2310 = vmatpush2.msra.mxu0 0.0
  %2311 = vmatprep.subr.mxu0 0.0
  %2312 = vmatpush2.msra.mxu0 0.0
  %2313 = vmatprep.subr.mxu0 0.0
  %2314 = vmatpush2.msra.mxu0 0.0
  %2315 = vmatprep.subr.mxu0 0.0
  %2316 = vmatpush2.msra.mxu0 0.0
  %2317 = vmatprep.subr.mxu0 0.0
  %2318 = vmatpush2.msra.mxu0 0.0
  %2319 = vmatprep.subr.mxu0 0.0
  %2320 = vmatpush2.msra.mxu0 0.0
  %2321 = vmatprep.subr.mxu0 0.0
  %2322 = vmatpush2.msra.mxu0 0.0
  %2323 = vmatprep.subr.mxu0 0.0
  %2324 = vmatpush2.msra.mxu0 0.0
  %2325 = vmatprep.subr.mxu0 0.0
  %2326 = vmatpush2.msra.mxu0 0.0
  %2327 = vmatprep.subr.mxu0 0.0
  %2328 = vmatpush2.msra.mxu0 0.0
  %2329 = vmatprep.subr.mxu0 0.0
  %2330 = vmatpush2.msra.mxu0 0.0
  %2331 = vmatprep.subr.mxu0 0.0
  %2332 = vmatpush2.msra.mxu0 0.0
  %2333 = vmatprep.subr.mxu0 0.0
  %2334 = vmatpush2.msra.mxu0 0.0
  %2335 = vmatprep.subr.mxu0 0.0
  %2336 = vmatpush2.msra.mxu0 0.0
  %2337 = vmatprep.mubr.f32.mxu0 0.0
  %2338 = vmatmul.mubr.f32.gmra.mxu0 %v2115
  %v2339 = vpop.f32.mrf.mxu0
  %v2340 = vadd.f32 0.0, %v2339
  %v2341 = vpop.f32.mrf.mxu0
  %v2342 = vadd.f32 0.0, %v2341
  %2343 = vdwg.mxu0
  %2344 = vmatprep.subr.mxu0 0.0
  %2345 = vmatpush1.msra.mxu0 0.0
  %2346 = vmatprep.subr.mxu0 0.0
  %2347 = vmatpush1.msra.mxu0 0.0
  %2348 = vmatprep.subr.mxu0 0.0
  %2349 = vmatpush1.msra.mxu0 0.0
  %2350 = vmatprep.subr.mxu0 0.0
  %2351 = vmatpush1.msra.mxu0 0.0
  %2352 = vmatprep.subr.mxu0 0.0
  %2353 = vmatpush1.msra.mxu0 0.0
  %2354 = vmatprep.subr.mxu0 0.0
  %2355 = vmatpush1.msra.mxu0 0.0
  %2356 = vmatprep.subr.mxu0 0.0
  %2357 = vmatpush1.msra.mxu0 0.0
  %2358 = vmatprep.subr.mxu0 0.0
  %2359 = vmatpush1.msra.mxu0 0.0
  %2360 = vmatprep.subr.mxu0 0.0
  %2361 = vmatpush1.msra.mxu0 0.0
  %2362 = vmatprep.subr.mxu0 0.0
  %2363 = vmatpush1.msra.mxu0 0.0
  %2364 = vmatprep.subr.mxu0 0.0
  %2365 = vmatpush1.msra.mxu0 0.0
  %2366 = vmatprep.subr.mxu0 0.0
  %2367 = vmatpush1.msra.mxu0 0.0
  %2368 = vmatprep.subr.mxu0 0.0
  %2369 = vmatpush1.msra.mxu0 0.0
  %2370 = vmatprep.subr.mxu0 0.0
  %2371 = vmatpush1.msra.mxu0 0.0
  %2372 = vmatprep.subr.mxu0 0.0
  %2373 = vmatpush1.msra.mxu0 0.0
  %2374 = vmatprep.subr.mxu0 0.0
  %2375 = vmatpush1.msra.mxu0 %v2129
  %2376 = vmatprep.subr.mxu0 0.0
  %2377 = vmatpush2.msra.mxu0 0.0
  %2378 = vmatprep.subr.mxu0 0.0
  %2379 = vmatpush2.msra.mxu0 0.0
  %2380 = vmatprep.subr.mxu0 0.0
  %2381 = vmatpush2.msra.mxu0 0.0
  %2382 = vmatprep.subr.mxu0 0.0
  %2383 = vmatpush2.msra.mxu0 0.0
  %2384 = vmatprep.subr.mxu0 0.0
  %2385 = vmatpush2.msra.mxu0 0.0
  %2386 = vmatprep.subr.mxu0 0.0
  %2387 = vmatpush2.msra.mxu0 0.0
  %2388 = vmatprep.subr.mxu0 0.0
  %2389 = vmatpush2.msra.mxu0 0.0
  %2390 = vmatprep.subr.mxu0 0.0
  %2391 = vmatpush2.msra.mxu0 0.0
  %2392 = vmatprep.subr.mxu0 0.0
  %2393 = vmatpush2.msra.mxu0 0.0
  %2394 = vmatprep.subr.mxu0 0.0
  %2395 = vmatpush2.msra.mxu0 0.0
  %2396 = vmatprep.subr.mxu0 0.0
  %2397 = vmatpush2.msra.mxu0 0.0
  %2398 = vmatprep.subr.mxu0 0.0
  %2399 = vmatpush2.msra.mxu0 0.0
  %2400 = vmatprep.subr.mxu0 0.0
  %2401 = vmatpush2.msra.mxu0 0.0
  %2402 = vmatprep.subr.mxu0 0.0
  %2403 = vmatpush2.msra.mxu0 0.0
  %2404 = vmatprep.subr.mxu0 0.0
  %2405 = vmatpush2.msra.mxu0 0.0
  %2406 = vmatprep.subr.mxu0 0.0
  %2407 = vmatpush2.msra.mxu0 0.0
  %2408 = vmatprep.mubr.f32.mxu0 0.0
  %2409 = vmatmul.mubr.f32.gmra.mxu0 %v2115
  %v2410 = vpop.f32.mrf.mxu0
  %v2411 = vadd.f32 0.0, %v2410
  %v2412 = vpop.f32.mrf.mxu0
  %2413 = vdwg.mxu0
  %v2414 = vadd.f32 %v2073, %v2198
  %v2415 = vadd.f32 %v2074, %v2200
  %v2416 = vadd.f32 %v2075, %v2269
  %v2417 = vadd.f32 %v2076, %v2271
  %v2418 = vadd.f32 %v2077, %v2340
  %v2419 = vadd.f32 %v2078, %v2342
  %v2420 = vadd.f32 %v2079, %v2411
  %s2421 = scalar_lea.vmem %s1, 56
  %v2422 = vld [vmem:[%s2421] sm:$0xff]
  %v2423 = vld [vmem:[%s0] sm:$0xff]
  %v2424 = vld [vmem:[%s0 + $0x8] sm:$0xff]
  %v2425 = vld [vmem:[%s0 + $0x10] sm:$0xff]
  %v2426 = vld [vmem:[%s0 + $0x18] sm:$0xf]
  %v2431 = vcombine.high %v2423, %v2423
  %v2432 = vcombine.high %v2424, %v2424
  %v2433 = vcombine.high %v2425, %v2425
  %2434 = vrot.lane.b32.xlu0 %v2423, 66
  %v2435 = vpop.permute.xlu0 %2434
  %2436 = vrot.lane.b32.xlu0 %v2431, 66
  %v2437 = vpop.permute.xlu0 %2436
  %2438 = vrot.lane.b32.xlu0 %v2424, 66
  %v2439 = vpop.permute.xlu0 %2438
  %2440 = vrot.lane.b32.xlu0 %v2432, 66
  %v2441 = vpop.permute.xlu0 %2440
  %2442 = vrot.lane.b32.xlu0 %v2425, 66
  %v2443 = vpop.permute.xlu0 %2442
  %2444 = vrot.lane.b32.xlu0 %v2433, 66
  %v2445 = vpop.permute.xlu0 %2444
  %2446 = vrot.lane.b32.xlu0 %v2426, 66
  %v2447 = vpop.permute.xlu0 %2446
  %vm2448 = vcmask 539648
  %v2449 = vsel %vm2448, %v2435, %v2437
  %v2450 = vsel %vm2448, %v2437, %v2439
  %v2451 = vsel %vm2448, %v2439, %v2441
  %v2452 = vsel %vm2448, %v2441, %v2443
  %v2453 = vsel %vm2448, %v2443, %v2445
  %v2454 = vsel %vm2448, %v2445, %v2447
  %v2456 = vsel %vm93, %v2422, 0
  %v2458 = vsel %vm97, %v2449, 0
  %v2460 = vsel %vm97, %v2450, 0
  %v2462 = vsel %vm97, %v2451, 0
  %v2464 = vsel %vm97, %v2452, 0
  %v2466 = vsel %vm97, %v2453, 0
  %v2468 = vsel %vm97, %v2454, 0
  %v2470 = vsel %vm97, %v2447, 0
  %2472 = vmatprep.subr.mxu0 0.0
  %2473 = vmatpush1.msra.mxu0 0.0
  %2474 = vmatprep.subr.mxu0 0.0
  %2475 = vmatpush1.msra.mxu0 0.0
  %2476 = vmatprep.subr.mxu0 0.0
  %2477 = vmatpush1.msra.mxu0 0.0
  %2478 = vmatprep.subr.mxu0 0.0
  %2479 = vmatpush1.msra.mxu0 0.0
  %2480 = vmatprep.subr.mxu0 0.0
  %2481 = vmatpush1.msra.mxu0 0.0
  %2482 = vmatprep.subr.mxu0 0.0
  %2483 = vmatpush1.msra.mxu0 0.0
  %2484 = vmatprep.subr.mxu0 0.0
  %2485 = vmatpush1.msra.mxu0 0.0
  %2486 = vmatprep.subr.mxu0 0.0
  %2487 = vmatpush1.msra.mxu0 0.0
  %2488 = vmatprep.subr.mxu0 0.0
  %2489 = vmatpush1.msra.mxu0 0.0
  %2490 = vmatprep.subr.mxu0 0.0
  %2491 = vmatpush1.msra.mxu0 0.0
  %2492 = vmatprep.subr.mxu0 0.0
  %2493 = vmatpush1.msra.mxu0 0.0
  %2494 = vmatprep.subr.mxu0 0.0
  %2495 = vmatpush1.msra.mxu0 0.0
  %2496 = vmatprep.subr.mxu0 0.0
  %2497 = vmatpush1.msra.mxu0 0.0
  %2498 = vmatprep.subr.mxu0 0.0
  %2499 = vmatpush1.msra.mxu0 0.0
  %2500 = vmatprep.subr.mxu0 0.0
  %2501 = vmatpush1.msra.mxu0 0.0
  %2502 = vmatprep.subr.mxu0 %v2460
  %2503 = vmatpush1.msra.mxu0 %v2458
  %2504 = vmatprep.subr.mxu0 0.0
  %2505 = vmatpush2.msra.mxu0 0.0
  %2506 = vmatprep.subr.mxu0 0.0
  %2507 = vmatpush2.msra.mxu0 0.0
  %2508 = vmatprep.subr.mxu0 0.0
  %2509 = vmatpush2.msra.mxu0 0.0
  %2510 = vmatprep.subr.mxu0 0.0
  %2511 = vmatpush2.msra.mxu0 0.0
  %2512 = vmatprep.subr.mxu0 0.0
  %2513 = vmatpush2.msra.mxu0 0.0
  %2514 = vmatprep.subr.mxu0 0.0
  %2515 = vmatpush2.msra.mxu0 0.0
  %2516 = vmatprep.subr.mxu0 0.0
  %2517 = vmatpush2.msra.mxu0 0.0
  %2518 = vmatprep.subr.mxu0 0.0
  %2519 = vmatpush2.msra.mxu0 0.0
  %2520 = vmatprep.subr.mxu0 0.0
  %2521 = vmatpush2.msra.mxu0 0.0
  %2522 = vmatprep.subr.mxu0 0.0
  %2523 = vmatpush2.msra.mxu0 0.0
  %2524 = vmatprep.subr.mxu0 0.0
  %2525 = vmatpush2.msra.mxu0 0.0
  %2526 = vmatprep.subr.mxu0 0.0
  %2527 = vmatpush2.msra.mxu0 0.0
  %2528 = vmatprep.subr.mxu0 0.0
  %2529 = vmatpush2.msra.mxu0 0.0
  %2530 = vmatprep.subr.mxu0 0.0
  %2531 = vmatpush2.msra.mxu0 0.0
  %2532 = vmatprep.subr.mxu0 0.0
  %2533 = vmatpush2.msra.mxu0 0.0
  %2534 = vmatprep.subr.mxu0 0.0
  %2535 = vmatpush2.msra.mxu0 0.0
  %2536 = vmatprep.mubr.f32.mxu0 0.0
  %2537 = vmatmul.mubr.f32.gmra.mxu0 %v2456
  %v2538 = vpop.f32.mrf.mxu0
  %v2539 = vadd.f32 0.0, %v2538
  %v2540 = vpop.f32.mrf.mxu0
  %v2541 = vadd.f32 0.0, %v2540
  %2542 = vdwg.mxu0
  %2543 = vmatprep.subr.mxu0 0.0
  %2544 = vmatpush1.msra.mxu0 0.0
  %2545 = vmatprep.subr.mxu0 0.0
  %2546 = vmatpush1.msra.mxu0 0.0
  %2547 = vmatprep.subr.mxu0 0.0
  %2548 = vmatpush1.msra.mxu0 0.0
  %2549 = vmatprep.subr.mxu0 0.0
  %2550 = vmatpush1.msra.mxu0 0.0
  %2551 = vmatprep.subr.mxu0 0.0
  %2552 = vmatpush1.msra.mxu0 0.0
  %2553 = vmatprep.subr.mxu0 0.0
  %2554 = vmatpush1.msra.mxu0 0.0
  %2555 = vmatprep.subr.mxu0 0.0
  %2556 = vmatpush1.msra.mxu0 0.0
  %2557 = vmatprep.subr.mxu0 0.0
  %2558 = vmatpush1.msra.mxu0 0.0
  %2559 = vmatprep.subr.mxu0 0.0
  %2560 = vmatpush1.msra.mxu0 0.0
  %2561 = vmatprep.subr.mxu0 0.0
  %2562 = vmatpush1.msra.mxu0 0.0
  %2563 = vmatprep.subr.mxu0 0.0
  %2564 = vmatpush1.msra.mxu0 0.0
  %2565 = vmatprep.subr.mxu0 0.0
  %2566 = vmatpush1.msra.mxu0 0.0
  %2567 = vmatprep.subr.mxu0 0.0
  %2568 = vmatpush1.msra.mxu0 0.0
  %2569 = vmatprep.subr.mxu0 0.0
  %2570 = vmatpush1.msra.mxu0 0.0
  %2571 = vmatprep.subr.mxu0 0.0
  %2572 = vmatpush1.msra.mxu0 0.0
  %2573 = vmatprep.subr.mxu0 %v2464
  %2574 = vmatpush1.msra.mxu0 %v2462
  %2575 = vmatprep.subr.mxu0 0.0
  %2576 = vmatpush2.msra.mxu0 0.0
  %2577 = vmatprep.subr.mxu0 0.0
  %2578 = vmatpush2.msra.mxu0 0.0
  %2579 = vmatprep.subr.mxu0 0.0
  %2580 = vmatpush2.msra.mxu0 0.0
  %2581 = vmatprep.subr.mxu0 0.0
  %2582 = vmatpush2.msra.mxu0 0.0
  %2583 = vmatprep.subr.mxu0 0.0
  %2584 = vmatpush2.msra.mxu0 0.0
  %2585 = vmatprep.subr.mxu0 0.0
  %2586 = vmatpush2.msra.mxu0 0.0
  %2587 = vmatprep.subr.mxu0 0.0
  %2588 = vmatpush2.msra.mxu0 0.0
  %2589 = vmatprep.subr.mxu0 0.0
  %2590 = vmatpush2.msra.mxu0 0.0
  %2591 = vmatprep.subr.mxu0 0.0
  %2592 = vmatpush2.msra.mxu0 0.0
  %2593 = vmatprep.subr.mxu0 0.0
  %2594 = vmatpush2.msra.mxu0 0.0
  %2595 = vmatprep.subr.mxu0 0.0
  %2596 = vmatpush2.msra.mxu0 0.0
  %2597 = vmatprep.subr.mxu0 0.0
  %2598 = vmatpush2.msra.mxu0 0.0
  %2599 = vmatprep.subr.mxu0 0.0
  %2600 = vmatpush2.msra.mxu0 0.0
  %2601 = vmatprep.subr.mxu0 0.0
  %2602 = vmatpush2.msra.mxu0 0.0
  %2603 = vmatprep.subr.mxu0 0.0
  %2604 = vmatpush2.msra.mxu0 0.0
  %2605 = vmatprep.subr.mxu0 0.0
  %2606 = vmatpush2.msra.mxu0 0.0
  %2607 = vmatprep.mubr.f32.mxu0 0.0
  %2608 = vmatmul.mubr.f32.gmra.mxu0 %v2456
  %v2609 = vpop.f32.mrf.mxu0
  %v2610 = vadd.f32 0.0, %v2609
  %v2611 = vpop.f32.mrf.mxu0
  %v2612 = vadd.f32 0.0, %v2611
  %2613 = vdwg.mxu0
  %2614 = vmatprep.subr.mxu0 0.0
  %2615 = vmatpush1.msra.mxu0 0.0
  %2616 = vmatprep.subr.mxu0 0.0
  %2617 = vmatpush1.msra.mxu0 0.0
  %2618 = vmatprep.subr.mxu0 0.0
  %2619 = vmatpush1.msra.mxu0 0.0
  %2620 = vmatprep.subr.mxu0 0.0
  %2621 = vmatpush1.msra.mxu0 0.0
  %2622 = vmatprep.subr.mxu0 0.0
  %2623 = vmatpush1.msra.mxu0 0.0
  %2624 = vmatprep.subr.mxu0 0.0
  %2625 = vmatpush1.msra.mxu0 0.0
  %2626 = vmatprep.subr.mxu0 0.0
  %2627 = vmatpush1.msra.mxu0 0.0
  %2628 = vmatprep.subr.mxu0 0.0
  %2629 = vmatpush1.msra.mxu0 0.0
  %2630 = vmatprep.subr.mxu0 0.0
  %2631 = vmatpush1.msra.mxu0 0.0
  %2632 = vmatprep.subr.mxu0 0.0
  %2633 = vmatpush1.msra.mxu0 0.0
  %2634 = vmatprep.subr.mxu0 0.0
  %2635 = vmatpush1.msra.mxu0 0.0
  %2636 = vmatprep.subr.mxu0 0.0
  %2637 = vmatpush1.msra.mxu0 0.0
  %2638 = vmatprep.subr.mxu0 0.0
  %2639 = vmatpush1.msra.mxu0 0.0
  %2640 = vmatprep.subr.mxu0 0.0
  %2641 = vmatpush1.msra.mxu0 0.0
  %2642 = vmatprep.subr.mxu0 0.0
  %2643 = vmatpush1.msra.mxu0 0.0
  %2644 = vmatprep.subr.mxu0 %v2468
  %2645 = vmatpush1.msra.mxu0 %v2466
  %2646 = vmatprep.subr.mxu0 0.0
  %2647 = vmatpush2.msra.mxu0 0.0
  %2648 = vmatprep.subr.mxu0 0.0
  %2649 = vmatpush2.msra.mxu0 0.0
  %2650 = vmatprep.subr.mxu0 0.0
  %2651 = vmatpush2.msra.mxu0 0.0
  %2652 = vmatprep.subr.mxu0 0.0
  %2653 = vmatpush2.msra.mxu0 0.0
  %2654 = vmatprep.subr.mxu0 0.0
  %2655 = vmatpush2.msra.mxu0 0.0
  %2656 = vmatprep.subr.mxu0 0.0
  %2657 = vmatpush2.msra.mxu0 0.0
  %2658 = vmatprep.subr.mxu0 0.0
  %2659 = vmatpush2.msra.mxu0 0.0
  %2660 = vmatprep.subr.mxu0 0.0
  %2661 = vmatpush2.msra.mxu0 0.0
  %2662 = vmatprep.subr.mxu0 0.0
  %2663 = vmatpush2.msra.mxu0 0.0
  %2664 = vmatprep.subr.mxu0 0.0
  %2665 = vmatpush2.msra.mxu0 0.0
  %2666 = vmatprep.subr.mxu0 0.0
  %2667 = vmatpush2.msra.mxu0 0.0
  %2668 = vmatprep.subr.mxu0 0.0
  %2669 = vmatpush2.msra.mxu0 0.0
  %2670 = vmatprep.subr.mxu0 0.0
  %2671 = vmatpush2.msra.mxu0 0.0
  %2672 = vmatprep.subr.mxu0 0.0
  %2673 = vmatpush2.msra.mxu0 0.0
  %2674 = vmatprep.subr.mxu0 0.0
  %2675 = vmatpush2.msra.mxu0 0.0
  %2676 = vmatprep.subr.mxu0 0.0
  %2677 = vmatpush2.msra.mxu0 0.0
  %2678 = vmatprep.mubr.f32.mxu0 0.0
  %2679 = vmatmul.mubr.f32.gmra.mxu0 %v2456
  %v2680 = vpop.f32.mrf.mxu0
  %v2681 = vadd.f32 0.0, %v2680
  %v2682 = vpop.f32.mrf.mxu0
  %v2683 = vadd.f32 0.0, %v2682
  %2684 = vdwg.mxu0
  %2685 = vmatprep.subr.mxu0 0.0
  %2686 = vmatpush1.msra.mxu0 0.0
  %2687 = vmatprep.subr.mxu0 0.0
  %2688 = vmatpush1.msra.mxu0 0.0
  %2689 = vmatprep.subr.mxu0 0.0
  %2690 = vmatpush1.msra.mxu0 0.0
  %2691 = vmatprep.subr.mxu0 0.0
  %2692 = vmatpush1.msra.mxu0 0.0
  %2693 = vmatprep.subr.mxu0 0.0
  %2694 = vmatpush1.msra.mxu0 0.0
  %2695 = vmatprep.subr.mxu0 0.0
  %2696 = vmatpush1.msra.mxu0 0.0
  %2697 = vmatprep.subr.mxu0 0.0
  %2698 = vmatpush1.msra.mxu0 0.0
  %2699 = vmatprep.subr.mxu0 0.0
  %2700 = vmatpush1.msra.mxu0 0.0
  %2701 = vmatprep.subr.mxu0 0.0
  %2702 = vmatpush1.msra.mxu0 0.0
  %2703 = vmatprep.subr.mxu0 0.0
  %2704 = vmatpush1.msra.mxu0 0.0
  %2705 = vmatprep.subr.mxu0 0.0
  %2706 = vmatpush1.msra.mxu0 0.0
  %2707 = vmatprep.subr.mxu0 0.0
  %2708 = vmatpush1.msra.mxu0 0.0
  %2709 = vmatprep.subr.mxu0 0.0
  %2710 = vmatpush1.msra.mxu0 0.0
  %2711 = vmatprep.subr.mxu0 0.0
  %2712 = vmatpush1.msra.mxu0 0.0
  %2713 = vmatprep.subr.mxu0 0.0
  %2714 = vmatpush1.msra.mxu0 0.0
  %2715 = vmatprep.subr.mxu0 0.0
  %2716 = vmatpush1.msra.mxu0 %v2470
  %2717 = vmatprep.subr.mxu0 0.0
  %2718 = vmatpush2.msra.mxu0 0.0
  %2719 = vmatprep.subr.mxu0 0.0
  %2720 = vmatpush2.msra.mxu0 0.0
  %2721 = vmatprep.subr.mxu0 0.0
  %2722 = vmatpush2.msra.mxu0 0.0
  %2723 = vmatprep.subr.mxu0 0.0
  %2724 = vmatpush2.msra.mxu0 0.0
  %2725 = vmatprep.subr.mxu0 0.0
  %2726 = vmatpush2.msra.mxu0 0.0
  %2727 = vmatprep.subr.mxu0 0.0
  %2728 = vmatpush2.msra.mxu0 0.0
  %2729 = vmatprep.subr.mxu0 0.0
  %2730 = vmatpush2.msra.mxu0 0.0
  %2731 = vmatprep.subr.mxu0 0.0
  %2732 = vmatpush2.msra.mxu0 0.0
  %2733 = vmatprep.subr.mxu0 0.0
  %2734 = vmatpush2.msra.mxu0 0.0
  %2735 = vmatprep.subr.mxu0 0.0
  %2736 = vmatpush2.msra.mxu0 0.0
  %2737 = vmatprep.subr.mxu0 0.0
  %2738 = vmatpush2.msra.mxu0 0.0
  %2739 = vmatprep.subr.mxu0 0.0
  %2740 = vmatpush2.msra.mxu0 0.0
  %2741 = vmatprep.subr.mxu0 0.0
  %2742 = vmatpush2.msra.mxu0 0.0
  %2743 = vmatprep.subr.mxu0 0.0
  %2744 = vmatpush2.msra.mxu0 0.0
  %2745 = vmatprep.subr.mxu0 0.0
  %2746 = vmatpush2.msra.mxu0 0.0
  %2747 = vmatprep.subr.mxu0 0.0
  %2748 = vmatpush2.msra.mxu0 0.0
  %2749 = vmatprep.mubr.f32.mxu0 0.0
  %2750 = vmatmul.mubr.f32.gmra.mxu0 %v2456
  %v2751 = vpop.f32.mrf.mxu0
  %v2752 = vadd.f32 0.0, %v2751
  %v2753 = vpop.f32.mrf.mxu0
  %2754 = vdwg.mxu0
  %v2755 = vadd.f32 %v2414, %v2539
  %v2756 = vadd.f32 %v2415, %v2541
  %v2757 = vadd.f32 %v2416, %v2610
  %v2758 = vadd.f32 %v2417, %v2612
  %v2759 = vadd.f32 %v2418, %v2681
  %v2760 = vadd.f32 %v2419, %v2683
  %v2761 = vadd.f32 %v2420, %v2752
  %s2762 = scalar_lea.vmem %s1, 64
  %v2763 = vld [vmem:[%s2762] sm:$0xff]
  %v2764 = vld [vmem:[%s0] sm:$0xff]
  %v2765 = vld [vmem:[%s0 + $0x8] sm:$0xff]
  %v2766 = vld [vmem:[%s0 + $0x10] sm:$0xff]
  %v2767 = vld [vmem:[%s0 + $0x18] sm:$0xf]
  %v2772 = vcombine.high %v2764, %v2764
  %v2773 = vcombine.high %v2765, %v2765
  %v2774 = vcombine.high %v2766, %v2766
  %2775 = vrot.lane.b32.xlu0 %v2764, 65
  %v2776 = vpop.permute.xlu0 %2775
  %2777 = vrot.lane.b32.xlu0 %v2772, 65
  %v2778 = vpop.permute.xlu0 %2777
  %2779 = vrot.lane.b32.xlu0 %v2765, 65
  %v2780 = vpop.permute.xlu0 %2779
  %2781 = vrot.lane.b32.xlu0 %v2773, 65
  %v2782 = vpop.permute.xlu0 %2781
  %2783 = vrot.lane.b32.xlu0 %v2766, 65
  %v2784 = vpop.permute.xlu0 %2783
  %2785 = vrot.lane.b32.xlu0 %v2774, 65
  %v2786 = vpop.permute.xlu0 %2785
  %2787 = vrot.lane.b32.xlu0 %v2767, 65
  %v2788 = vpop.permute.xlu0 %2787
  %vm2789 = vcmask 531456
  %v2790 = vsel %vm2789, %v2776, %v2778
  %v2791 = vsel %vm2789, %v2778, %v2780
  %v2792 = vsel %vm2789, %v2780, %v2782
  %v2793 = vsel %vm2789, %v2782, %v2784
  %v2794 = vsel %vm2789, %v2784, %v2786
  %v2795 = vsel %vm2789, %v2786, %v2788
  %v2797 = vsel %vm93, %v2763, 0
  %v2799 = vsel %vm97, %v2790, 0
  %v2801 = vsel %vm97, %v2791, 0
  %v2803 = vsel %vm97, %v2792, 0
  %v2805 = vsel %vm97, %v2793, 0
  %v2807 = vsel %vm97, %v2794, 0
  %v2809 = vsel %vm97, %v2795, 0
  %v2811 = vsel %vm97, %v2788, 0
  %2813 = vmatprep.subr.mxu0 0.0
  %2814 = vmatpush1.msra.mxu0 0.0
  %2815 = vmatprep.subr.mxu0 0.0
  %2816 = vmatpush1.msra.mxu0 0.0
  %2817 = vmatprep.subr.mxu0 0.0
  %2818 = vmatpush1.msra.mxu0 0.0
  %2819 = vmatprep.subr.mxu0 0.0
  %2820 = vmatpush1.msra.mxu0 0.0
  %2821 = vmatprep.subr.mxu0 0.0
  %2822 = vmatpush1.msra.mxu0 0.0
  %2823 = vmatprep.subr.mxu0 0.0
  %2824 = vmatpush1.msra.mxu0 0.0
  %2825 = vmatprep.subr.mxu0 0.0
  %2826 = vmatpush1.msra.mxu0 0.0
  %2827 = vmatprep.subr.mxu0 0.0
  %2828 = vmatpush1.msra.mxu0 0.0
  %2829 = vmatprep.subr.mxu0 0.0
  %2830 = vmatpush1.msra.mxu0 0.0
  %2831 = vmatprep.subr.mxu0 0.0
  %2832 = vmatpush1.msra.mxu0 0.0
  %2833 = vmatprep.subr.mxu0 0.0
  %2834 = vmatpush1.msra.mxu0 0.0
  %2835 = vmatprep.subr.mxu0 0.0
  %2836 = vmatpush1.msra.mxu0 0.0
  %2837 = vmatprep.subr.mxu0 0.0
  %2838 = vmatpush1.msra.mxu0 0.0
  %2839 = vmatprep.subr.mxu0 0.0
  %2840 = vmatpush1.msra.mxu0 0.0
  %2841 = vmatprep.subr.mxu0 0.0
  %2842 = vmatpush1.msra.mxu0 0.0
  %2843 = vmatprep.subr.mxu0 %v2801
  %2844 = vmatpush1.msra.mxu0 %v2799
  %2845 = vmatprep.subr.mxu0 0.0
  %2846 = vmatpush2.msra.mxu0 0.0
  %2847 = vmatprep.subr.mxu0 0.0
  %2848 = vmatpush2.msra.mxu0 0.0
  %2849 = vmatprep.subr.mxu0 0.0
  %2850 = vmatpush2.msra.mxu0 0.0
  %2851 = vmatprep.subr.mxu0 0.0
  %2852 = vmatpush2.msra.mxu0 0.0
  %2853 = vmatprep.subr.mxu0 0.0
  %2854 = vmatpush2.msra.mxu0 0.0
  %2855 = vmatprep.subr.mxu0 0.0
  %2856 = vmatpush2.msra.mxu0 0.0
  %2857 = vmatprep.subr.mxu0 0.0
  %2858 = vmatpush2.msra.mxu0 0.0
  %2859 = vmatprep.subr.mxu0 0.0
  %2860 = vmatpush2.msra.mxu0 0.0
  %2861 = vmatprep.subr.mxu0 0.0
  %2862 = vmatpush2.msra.mxu0 0.0
  %2863 = vmatprep.subr.mxu0 0.0
  %2864 = vmatpush2.msra.mxu0 0.0
  %2865 = vmatprep.subr.mxu0 0.0
  %2866 = vmatpush2.msra.mxu0 0.0
  %2867 = vmatprep.subr.mxu0 0.0
  %2868 = vmatpush2.msra.mxu0 0.0
  %2869 = vmatprep.subr.mxu0 0.0
  %2870 = vmatpush2.msra.mxu0 0.0
  %2871 = vmatprep.subr.mxu0 0.0
  %2872 = vmatpush2.msra.mxu0 0.0
  %2873 = vmatprep.subr.mxu0 0.0
  %2874 = vmatpush2.msra.mxu0 0.0
  %2875 = vmatprep.subr.mxu0 0.0
  %2876 = vmatpush2.msra.mxu0 0.0
  %2877 = vmatprep.mubr.f32.mxu0 0.0
  %2878 = vmatmul.mubr.f32.gmra.mxu0 %v2797
  %v2879 = vpop.f32.mrf.mxu0
  %v2880 = vadd.f32 0.0, %v2879
  %v2881 = vpop.f32.mrf.mxu0
  %v2882 = vadd.f32 0.0, %v2881
  %2883 = vdwg.mxu0
  %2884 = vmatprep.subr.mxu0 0.0
  %2885 = vmatpush1.msra.mxu0 0.0
  %2886 = vmatprep.subr.mxu0 0.0
  %2887 = vmatpush1.msra.mxu0 0.0
  %2888 = vmatprep.subr.mxu0 0.0
  %2889 = vmatpush1.msra.mxu0 0.0
  %2890 = vmatprep.subr.mxu0 0.0
  %2891 = vmatpush1.msra.mxu0 0.0
  %2892 = vmatprep.subr.mxu0 0.0
  %2893 = vmatpush1.msra.mxu0 0.0
  %2894 = vmatprep.subr.mxu0 0.0
  %2895 = vmatpush1.msra.mxu0 0.0
  %2896 = vmatprep.subr.mxu0 0.0
  %2897 = vmatpush1.msra.mxu0 0.0
  %2898 = vmatprep.subr.mxu0 0.0
  %2899 = vmatpush1.msra.mxu0 0.0
  %2900 = vmatprep.subr.mxu0 0.0
  %2901 = vmatpush1.msra.mxu0 0.0
  %2902 = vmatprep.subr.mxu0 0.0
  %2903 = vmatpush1.msra.mxu0 0.0
  %2904 = vmatprep.subr.mxu0 0.0
  %2905 = vmatpush1.msra.mxu0 0.0
  %2906 = vmatprep.subr.mxu0 0.0
  %2907 = vmatpush1.msra.mxu0 0.0
  %2908 = vmatprep.subr.mxu0 0.0
  %2909 = vmatpush1.msra.mxu0 0.0
  %2910 = vmatprep.subr.mxu0 0.0
  %2911 = vmatpush1.msra.mxu0 0.0
  %2912 = vmatprep.subr.mxu0 0.0
  %2913 = vmatpush1.msra.mxu0 0.0
  %2914 = vmatprep.subr.mxu0 %v2805
  %2915 = vmatpush1.msra.mxu0 %v2803
  %2916 = vmatprep.subr.mxu0 0.0
  %2917 = vmatpush2.msra.mxu0 0.0
  %2918 = vmatprep.subr.mxu0 0.0
  %2919 = vmatpush2.msra.mxu0 0.0
  %2920 = vmatprep.subr.mxu0 0.0
  %2921 = vmatpush2.msra.mxu0 0.0
  %2922 = vmatprep.subr.mxu0 0.0
  %2923 = vmatpush2.msra.mxu0 0.0
  %2924 = vmatprep.subr.mxu0 0.0
  %2925 = vmatpush2.msra.mxu0 0.0
  %2926 = vmatprep.subr.mxu0 0.0
  %2927 = vmatpush2.msra.mxu0 0.0
  %2928 = vmatprep.subr.mxu0 0.0
  %2929 = vmatpush2.msra.mxu0 0.0
  %2930 = vmatprep.subr.mxu0 0.0
  %2931 = vmatpush2.msra.mxu0 0.0
  %2932 = vmatprep.subr.mxu0 0.0
  %2933 = vmatpush2.msra.mxu0 0.0
  %2934 = vmatprep.subr.mxu0 0.0
  %2935 = vmatpush2.msra.mxu0 0.0
  %2936 = vmatprep.subr.mxu0 0.0
  %2937 = vmatpush2.msra.mxu0 0.0
  %2938 = vmatprep.subr.mxu0 0.0
  %2939 = vmatpush2.msra.mxu0 0.0
  %2940 = vmatprep.subr.mxu0 0.0
  %2941 = vmatpush2.msra.mxu0 0.0
  %2942 = vmatprep.subr.mxu0 0.0
  %2943 = vmatpush2.msra.mxu0 0.0
  %2944 = vmatprep.subr.mxu0 0.0
  %2945 = vmatpush2.msra.mxu0 0.0
  %2946 = vmatprep.subr.mxu0 0.0
  %2947 = vmatpush2.msra.mxu0 0.0
  %2948 = vmatprep.mubr.f32.mxu0 0.0
  %2949 = vmatmul.mubr.f32.gmra.mxu0 %v2797
  %v2950 = vpop.f32.mrf.mxu0
  %v2951 = vadd.f32 0.0, %v2950
  %v2952 = vpop.f32.mrf.mxu0
  %v2953 = vadd.f32 0.0, %v2952
  %2954 = vdwg.mxu0
  %2955 = vmatprep.subr.mxu0 0.0
  %2956 = vmatpush1.msra.mxu0 0.0
  %2957 = vmatprep.subr.mxu0 0.0
  %2958 = vmatpush1.msra.mxu0 0.0
  %2959 = vmatprep.subr.mxu0 0.0
  %2960 = vmatpush1.msra.mxu0 0.0
  %2961 = vmatprep.subr.mxu0 0.0
  %2962 = vmatpush1.msra.mxu0 0.0
  %2963 = vmatprep.subr.mxu0 0.0
  %2964 = vmatpush1.msra.mxu0 0.0
  %2965 = vmatprep.subr.mxu0 0.0
  %2966 = vmatpush1.msra.mxu0 0.0
  %2967 = vmatprep.subr.mxu0 0.0
  %2968 = vmatpush1.msra.mxu0 0.0
  %2969 = vmatprep.subr.mxu0 0.0
  %2970 = vmatpush1.msra.mxu0 0.0
  %2971 = vmatprep.subr.mxu0 0.0
  %2972 = vmatpush1.msra.mxu0 0.0
  %2973 = vmatprep.subr.mxu0 0.0
  %2974 = vmatpush1.msra.mxu0 0.0
  %2975 = vmatprep.subr.mxu0 0.0
  %2976 = vmatpush1.msra.mxu0 0.0
  %2977 = vmatprep.subr.mxu0 0.0
  %2978 = vmatpush1.msra.mxu0 0.0
  %2979 = vmatprep.subr.mxu0 0.0
  %2980 = vmatpush1.msra.mxu0 0.0
  %2981 = vmatprep.subr.mxu0 0.0
  %2982 = vmatpush1.msra.mxu0 0.0
  %2983 = vmatprep.subr.mxu0 0.0
  %2984 = vmatpush1.msra.mxu0 0.0
  %2985 = vmatprep.subr.mxu0 %v2809
  %2986 = vmatpush1.msra.mxu0 %v2807
  %2987 = vmatprep.subr.mxu0 0.0
  %2988 = vmatpush2.msra.mxu0 0.0
  %2989 = vmatprep.subr.mxu0 0.0
  %2990 = vmatpush2.msra.mxu0 0.0
  %2991 = vmatprep.subr.mxu0 0.0
  %2992 = vmatpush2.msra.mxu0 0.0
  %2993 = vmatprep.subr.mxu0 0.0
  %2994 = vmatpush2.msra.mxu0 0.0
  %2995 = vmatprep.subr.mxu0 0.0
  %2996 = vmatpush2.msra.mxu0 0.0
  %2997 = vmatprep.subr.mxu0 0.0
  %2998 = vmatpush2.msra.mxu0 0.0
  %2999 = vmatprep.subr.mxu0 0.0
  %3000 = vmatpush2.msra.mxu0 0.0
  %3001 = vmatprep.subr.mxu0 0.0
  %3002 = vmatpush2.msra.mxu0 0.0
  %3003 = vmatprep.subr.mxu0 0.0
  %3004 = vmatpush2.msra.mxu0 0.0
  %3005 = vmatprep.subr.mxu0 0.0
  %3006 = vmatpush2.msra.mxu0 0.0
  %3007 = vmatprep.subr.mxu0 0.0
  %3008 = vmatpush2.msra.mxu0 0.0
  %3009 = vmatprep.subr.mxu0 0.0
  %3010 = vmatpush2.msra.mxu0 0.0
  %3011 = vmatprep.subr.mxu0 0.0
  %3012 = vmatpush2.msra.mxu0 0.0
  %3013 = vmatprep.subr.mxu0 0.0
  %3014 = vmatpush2.msra.mxu0 0.0
  %3015 = vmatprep.subr.mxu0 0.0
  %3016 = vmatpush2.msra.mxu0 0.0
  %3017 = vmatprep.subr.mxu0 0.0
  %3018 = vmatpush2.msra.mxu0 0.0
  %3019 = vmatprep.mubr.f32.mxu0 0.0
  %3020 = vmatmul.mubr.f32.gmra.mxu0 %v2797
  %v3021 = vpop.f32.mrf.mxu0
  %v3022 = vadd.f32 0.0, %v3021
  %v3023 = vpop.f32.mrf.mxu0
  %v3024 = vadd.f32 0.0, %v3023
  %3025 = vdwg.mxu0
  %3026 = vmatprep.subr.mxu0 0.0
  %3027 = vmatpush1.msra.mxu0 0.0
  %3028 = vmatprep.subr.mxu0 0.0
  %3029 = vmatpush1.msra.mxu0 0.0
  %3030 = vmatprep.subr.mxu0 0.0
  %3031 = vmatpush1.msra.mxu0 0.0
  %3032 = vmatprep.subr.mxu0 0.0
  %3033 = vmatpush1.msra.mxu0 0.0
  %3034 = vmatprep.subr.mxu0 0.0
  %3035 = vmatpush1.msra.mxu0 0.0
  %3036 = vmatprep.subr.mxu0 0.0
  %3037 = vmatpush1.msra.mxu0 0.0
  %3038 = vmatprep.subr.mxu0 0.0
  %3039 = vmatpush1.msra.mxu0 0.0
  %3040 = vmatprep.subr.mxu0 0.0
  %3041 = vmatpush1.msra.mxu0 0.0
  %3042 = vmatprep.subr.mxu0 0.0
  %3043 = vmatpush1.msra.mxu0 0.0
  %3044 = vmatprep.subr.mxu0 0.0
  %3045 = vmatpush1.msra.mxu0 0.0
  %3046 = vmatprep.subr.mxu0 0.0
  %3047 = vmatpush1.msra.mxu0 0.0
  %3048 = vmatprep.subr.mxu0 0.0
  %3049 = vmatpush1.msra.mxu0 0.0
  %3050 = vmatprep.subr.mxu0 0.0
  %3051 = vmatpush1.msra.mxu0 0.0
  %3052 = vmatprep.subr.mxu0 0.0
  %3053 = vmatpush1.msra.mxu0 0.0
  %3054 = vmatprep.subr.mxu0 0.0
  %3055 = vmatpush1.msra.mxu0 0.0
  %3056 = vmatprep.subr.mxu0 0.0
  %3057 = vmatpush1.msra.mxu0 %v2811
  %3058 = vmatprep.subr.mxu0 0.0
  %3059 = vmatpush2.msra.mxu0 0.0
  %3060 = vmatprep.subr.mxu0 0.0
  %3061 = vmatpush2.msra.mxu0 0.0
  %3062 = vmatprep.subr.mxu0 0.0
  %3063 = vmatpush2.msra.mxu0 0.0
  %3064 = vmatprep.subr.mxu0 0.0
  %3065 = vmatpush2.msra.mxu0 0.0
  %3066 = vmatprep.subr.mxu0 0.0
  %3067 = vmatpush2.msra.mxu0 0.0
  %3068 = vmatprep.subr.mxu0 0.0
  %3069 = vmatpush2.msra.mxu0 0.0
  %3070 = vmatprep.subr.mxu0 0.0
  %3071 = vmatpush2.msra.mxu0 0.0
  %3072 = vmatprep.subr.mxu0 0.0
  %3073 = vmatpush2.msra.mxu0 0.0
  %3074 = vmatprep.subr.mxu0 0.0
  %3075 = vmatpush2.msra.mxu0 0.0
  %3076 = vmatprep.subr.mxu0 0.0
  %3077 = vmatpush2.msra.mxu0 0.0
  %3078 = vmatprep.subr.mxu0 0.0
  %3079 = vmatpush2.msra.mxu0 0.0
  %3080 = vmatprep.subr.mxu0 0.0
  %3081 = vmatpush2.msra.mxu0 0.0
  %3082 = vmatprep.subr.mxu0 0.0
  %3083 = vmatpush2.msra.mxu0 0.0
  %3084 = vmatprep.subr.mxu0 0.0
  %3085 = vmatpush2.msra.mxu0 0.0
  %3086 = vmatprep.subr.mxu0 0.0
  %3087 = vmatpush2.msra.mxu0 0.0
  %3088 = vmatprep.subr.mxu0 0.0
  %3089 = vmatpush2.msra.mxu0 0.0
  %3090 = vmatprep.mubr.f32.mxu0 0.0
  %3091 = vmatmul.mubr.f32.gmra.mxu0 %v2797
  %v3092 = vpop.f32.mrf.mxu0
  %v3093 = vadd.f32 0.0, %v3092
  %v3094 = vpop.f32.mrf.mxu0
  %3095 = vdwg.mxu0
  %v3096 = vadd.f32 %v2755, %v2880
  %v3097 = vadd.f32 %v2756, %v2882
  %v3098 = vadd.f32 %v2757, %v2951
  %v3099 = vadd.f32 %v2758, %v2953
  %v3100 = vadd.f32 %v2759, %v3022
  %v3101 = vadd.f32 %v2760, %v3024
  %v3102 = vadd.f32 %v2761, %v3093
  %v3103 = vld [vmem:[%s2] sm:$0xff]
  %3105 = vset.pattern.permute.xlu0 0
  %3106 = vperm.xlu0 %3105, %v3103
  %v3107 = vpop.permute.xlu0 %3106
  %v3109 = vadd.f32 %v3096, %v3107
  %v3110 = vadd.f32 %v3097, %v3107
  %v3111 = vadd.f32 %v3098, %v3107
  %v3112 = vadd.f32 %v3099, %v3107
  %v3113 = vadd.f32 %v3100, %v3107
  %v3114 = vadd.f32 %v3101, %v3107
  %v3115 = vadd.f32 %v3102, %v3107
  %v3116 = vmul.f32 %v3109, 0.01
  %v3117 = vmul.f32 %v3110, 0.01
  %v3118 = vmul.f32 %v3111, 0.01
  %v3119 = vmul.f32 %v3112, 0.01
  %v3120 = vmul.f32 %v3113, 0.01
  %v3121 = vmul.f32 %v3114, 0.01
  %v3122 = vmul.f32 %v3115, 0.01
  %v3123 = vmax.f32 %v3109, %v3116
  %v3124 = vmax.f32 %v3110, %v3117
  %v3125 = vmax.f32 %v3111, %v3118
  %v3126 = vmax.f32 %v3112, %v3119
  %v3127 = vmax.f32 %v3113, %v3120
  %v3128 = vmax.f32 %v3114, %v3121
  %v3129 = vmax.f32 %v3115, %v3122
  %v3131 = vlaneseq
  %v3132 = vshrl.u32 %v3131, 7
  %v3133 = vsub.s32 0, %v3132
  %v3134 = vrot.slane %v56, %v3133
  %v3135 = vlaneseq
  %v3136 = vshrl.u32 %v3135, 7
  %v3137 = vsub.s32 1, %v3136
  %v3138 = vrot.slane %v56, %v3137
  %v3139 = vlaneseq
  %v3140 = vshrl.u32 %v3139, 7
  %v3141 = vsub.s32 2, %v3140
  %v3142 = vrot.slane %v56, %v3141
  %v3143 = vlaneseq
  %v3144 = vshrl.u32 %v3143, 7
  %v3145 = vsub.s32 3, %v3144
  %v3146 = vrot.slane %v56, %v3145
  %v3147 = vlaneseq
  %v3148 = vshrl.u32 %v3147, 7
  %v3149 = vsub.s32 4, %v3148
  %v3150 = vrot.slane %v56, %v3149
  %v3151 = vlaneseq
  %v3152 = vshrl.u32 %v3151, 7
  %v3153 = vsub.s32 5, %v3152
  %v3154 = vrot.slane %v56, %v3153
  %v3155 = vlaneseq
  %v3156 = vshrl.u32 %v3155, 7
  %v3157 = vsub.s32 6, %v3156
  %v3158 = vrot.slane %v56, %v3157
  %v3166 = vmul.f32 %v3123, %v3134
  %v3167 = vmul.f32 %v3124, %v3138
  %v3168 = vmul.f32 %v3125, %v3142
  %v3169 = vmul.f32 %v3126, %v3146
  %v3170 = vmul.f32 %v3127, %v3150
  %v3171 = vmul.f32 %v3128, %v3154
  %v3172 = vmul.f32 %v3129, %v3158
  %vm3173 = vcmask 343040
  %3174 = vst.msk [vmem:[#allocation2] sm:$0xff] %vm3173, 0.0
  %vm3175 = vcmask 949840
  %3176 = vst.msk [vmem:[#allocation2 + $0x30] sm:$0xff] %vm3175, 0.0
  %3184 = vrot.lane.b32.xlu0 %v3166, 42
  %v3185 = vpop.permute.xlu0 %3184
  %3186 = vrot.lane.b32.xlu0 %v3167, 42
  %v3187 = vpop.permute.xlu0 %3186
  %3188 = vrot.lane.b32.xlu0 %v3168, 42
  %v3189 = vpop.permute.xlu0 %3188
  %3190 = vrot.lane.b32.xlu0 %v3169, 42
  %v3191 = vpop.permute.xlu0 %3190
  %3192 = vrot.lane.b32.xlu0 %v3170, 42
  %v3193 = vpop.permute.xlu0 %3192
  %3194 = vrot.lane.b32.xlu0 %v3171, 42
  %v3195 = vpop.permute.xlu0 %3194
  %3196 = vrot.lane.b32.xlu0 %v3172, 42
  %v3197 = vpop.permute.xlu0 %3196
  %v3198 = vsel %vm3173, %v3185, %v3187
  %v3199 = vsel %vm3173, %v3187, %v3189
  %v3200 = vsel %vm3173, %v3189, %v3191
  %v3201 = vsel %vm3173, %v3191, %v3193
  %v3202 = vsel %vm3173, %v3193, %v3195
  %v3203 = vsel %vm3173, %v3195, %v3197
  %vm3211 = vcmask 1047888
  %3212 = vst.msk [vmem:[#allocation2] sm:$0xff] %vm3211, %v3185
  %3213 = vst [vmem:[#allocation2 + $0x8] sm:$0xff] %v3198
  %3214 = vst [vmem:[#allocation2 + $0x10] sm:$0xff] %v3199
  %3215 = vst [vmem:[#allocation2 + $0x18] sm:$0xff] %v3200
  %3216 = vst [vmem:[#allocation2 + $0x20] sm:$0xff] %v3201
  %3217 = vst [vmem:[#allocation2 + $0x28] sm:$0xff] %v3202
  %vm3218 = vcmask 605184
  %3219 = vst.msk [vmem:[#allocation2 + $0x30] sm:$0xff] %vm3218, %v3203
  %v3220 = vld [vmem:[%s3] sm:$0xff]
  %v3221 = vld [vmem:[#allocation2] sm:$0xff]
  %v3222 = vld [vmem:[#allocation2 + $0x8] sm:$0xff]
  %v3223 = vld [vmem:[#allocation2 + $0x10] sm:$0xff]
  %v3224 = vld [vmem:[#allocation2 + $0x18] sm:$0xff]
  %v3225 = vld [vmem:[#allocation2 + $0x20] sm:$0xff]
  %v3226 = vld [vmem:[#allocation2 + $0x28] sm:$0xff]
  %v3227 = vld [vmem:[#allocation2 + $0x30] sm:$0xff]
  %s3228 = scalar_lea.vmem %s3, 8
  %v3229 = vld [vmem:[%s3228] sm:$0xff]
  %3237 = vrot.lane.b32.xlu0 %v3221, 106
  %v3238 = vpop.permute.xlu0 %3237
  %3239 = vrot.lane.b32.xlu0 %v3222, 106
  %v3240 = vpop.permute.xlu0 %3239
  %3241 = vrot.lane.b32.xlu0 %v3223, 106
  %v3242 = vpop.permute.xlu0 %3241
  %3243 = vrot.lane.b32.xlu0 %v3224, 106
  %v3244 = vpop.permute.xlu0 %3243
  %3245 = vrot.lane.b32.xlu0 %v3225, 106
  %v3246 = vpop.permute.xlu0 %3245
  %3247 = vrot.lane.b32.xlu0 %v3226, 106
  %v3248 = vpop.permute.xlu0 %3247
  %3249 = vrot.lane.b32.xlu0 %v3227, 106
  %v3250 = vpop.permute.xlu0 %3249
  %v3251 = vsel %vm86, %v3238, %v3240
  %v3252 = vsel %vm86, %v3240, %v3242
  %v3253 = vsel %vm86, %v3242, %v3244
  %v3254 = vsel %vm86, %v3244, %v3246
  %v3255 = vsel %vm86, %v3246, %v3248
  %v3256 = vsel %vm86, %v3248, %v3250
  %vm3264 = vcmask 64512
  %v3266 = vsel %vm3264, %v3229, 0
  %3268 = vmatprep.subr.mxu0 0.0
  %3269 = vmatpush1.msra.mxu0 0.0
  %3270 = vmatprep.subr.mxu0 0.0
  %3271 = vmatpush1.msra.mxu0 0.0
  %3272 = vmatprep.subr.mxu0 0.0
  %3273 = vmatpush1.msra.mxu0 0.0
  %3274 = vmatprep.subr.mxu0 0.0
  %3275 = vmatpush1.msra.mxu0 0.0
  %3276 = vmatprep.subr.mxu0 0.0
  %3277 = vmatpush1.msra.mxu0 0.0
  %3278 = vmatprep.subr.mxu0 0.0
  %3279 = vmatpush1.msra.mxu0 0.0
  %3280 = vmatprep.subr.mxu0 0.0
  %3281 = vmatpush1.msra.mxu0 0.0
  %3282 = vmatprep.subr.mxu0 0.0
  %3283 = vmatpush1.msra.mxu0 0.0
  %3284 = vmatprep.subr.mxu0 0.0
  %3285 = vmatpush1.msra.mxu0 0.0
  %3286 = vmatprep.subr.mxu0 0.0
  %3287 = vmatpush1.msra.mxu0 0.0
  %3288 = vmatprep.subr.mxu0 0.0
  %3289 = vmatpush1.msra.mxu0 0.0
  %3290 = vmatprep.subr.mxu0 0.0
  %3291 = vmatpush1.msra.mxu0 0.0
  %3292 = vmatprep.subr.mxu0 0.0
  %3293 = vmatpush1.msra.mxu0 0.0
  %3294 = vmatprep.subr.mxu0 0.0
  %3295 = vmatpush1.msra.mxu0 0.0
  %3296 = vmatprep.subr.mxu0 0.0
  %3297 = vmatpush1.msra.mxu0 0.0
  %3298 = vmatprep.subr.mxu0 %v3252
  %3299 = vmatpush1.msra.mxu0 %v3251
  %3300 = vmatprep.subr.mxu0 0.0
  %3301 = vmatpush2.msra.mxu0 0.0
  %3302 = vmatprep.subr.mxu0 0.0
  %3303 = vmatpush2.msra.mxu0 0.0
  %3304 = vmatprep.subr.mxu0 0.0
  %3305 = vmatpush2.msra.mxu0 0.0
  %3306 = vmatprep.subr.mxu0 0.0
  %3307 = vmatpush2.msra.mxu0 0.0
  %3308 = vmatprep.subr.mxu0 0.0
  %3309 = vmatpush2.msra.mxu0 0.0
  %3310 = vmatprep.subr.mxu0 0.0
  %3311 = vmatpush2.msra.mxu0 0.0
  %3312 = vmatprep.subr.mxu0 0.0
  %3313 = vmatpush2.msra.mxu0 0.0
  %3314 = vmatprep.subr.mxu0 0.0
  %3315 = vmatpush2.msra.mxu0 0.0
  %3316 = vmatprep.subr.mxu0 0.0
  %3317 = vmatpush2.msra.mxu0 0.0
  %3318 = vmatprep.subr.mxu0 0.0
  %3319 = vmatpush2.msra.mxu0 0.0
  %3320 = vmatprep.subr.mxu0 0.0
  %3321 = vmatpush2.msra.mxu0 0.0
  %3322 = vmatprep.subr.mxu0 0.0
  %3323 = vmatpush2.msra.mxu0 0.0
  %3324 = vmatprep.subr.mxu0 0.0
  %3325 = vmatpush2.msra.mxu0 0.0
  %3326 = vmatprep.subr.mxu0 0.0
  %3327 = vmatpush2.msra.mxu0 0.0
  %3328 = vmatprep.subr.mxu0 0.0
  %3329 = vmatpush2.msra.mxu0 0.0
  %3330 = vmatprep.subr.mxu0 0.0
  %3331 = vmatpush2.msra.mxu0 0.0
  %3332 = vmatprep.mubr.f32.mxu0 0.0
  %3333 = vmatmul.mubr.f32.gmra.mxu0 %v3266
  %v3334 = vpop.f32.mrf.mxu0
  %v3335 = vadd.f32 0.0, %v3334
  %v3336 = vpop.f32.mrf.mxu0
  %v3337 = vadd.f32 0.0, %v3336
  %3338 = vdwg.mxu0
  %3339 = vmatprep.subr.mxu0 0.0
  %3340 = vmatpush1.msra.mxu0 0.0
  %3341 = vmatprep.subr.mxu0 0.0
  %3342 = vmatpush1.msra.mxu0 0.0
  %3343 = vmatprep.subr.mxu0 0.0
  %3344 = vmatpush1.msra.mxu0 0.0
  %3345 = vmatprep.subr.mxu0 0.0
  %3346 = vmatpush1.msra.mxu0 0.0
  %3347 = vmatprep.subr.mxu0 0.0
  %3348 = vmatpush1.msra.mxu0 0.0
  %3349 = vmatprep.subr.mxu0 0.0
  %3350 = vmatpush1.msra.mxu0 0.0
  %3351 = vmatprep.subr.mxu0 0.0
  %3352 = vmatpush1.msra.mxu0 0.0
  %3353 = vmatprep.subr.mxu0 0.0
  %3354 = vmatpush1.msra.mxu0 0.0
  %3355 = vmatprep.subr.mxu0 0.0
  %3356 = vmatpush1.msra.mxu0 0.0
  %3357 = vmatprep.subr.mxu0 0.0
  %3358 = vmatpush1.msra.mxu0 0.0
  %3359 = vmatprep.subr.mxu0 0.0
  %3360 = vmatpush1.msra.mxu0 0.0
  %3361 = vmatprep.subr.mxu0 0.0
  %3362 = vmatpush1.msra.mxu0 0.0
  %3363 = vmatprep.subr.mxu0 0.0
  %3364 = vmatpush1.msra.mxu0 0.0
  %3365 = vmatprep.subr.mxu0 0.0
  %3366 = vmatpush1.msra.mxu0 0.0
  %3367 = vmatprep.subr.mxu0 0.0
  %3368 = vmatpush1.msra.mxu0 0.0
  %3369 = vmatprep.subr.mxu0 %v3254
  %3370 = vmatpush1.msra.mxu0 %v3253
  %3371 = vmatprep.subr.mxu0 0.0
  %3372 = vmatpush2.msra.mxu0 0.0
  %3373 = vmatprep.subr.mxu0 0.0
  %3374 = vmatpush2.msra.mxu0 0.0
  %3375 = vmatprep.subr.mxu0 0.0
  %3376 = vmatpush2.msra.mxu0 0.0
  %3377 = vmatprep.subr.mxu0 0.0
  %3378 = vmatpush2.msra.mxu0 0.0
  %3379 = vmatprep.subr.mxu0 0.0
  %3380 = vmatpush2.msra.mxu0 0.0
  %3381 = vmatprep.subr.mxu0 0.0
  %3382 = vmatpush2.msra.mxu0 0.0
  %3383 = vmatprep.subr.mxu0 0.0
  %3384 = vmatpush2.msra.mxu0 0.0
  %3385 = vmatprep.subr.mxu0 0.0
  %3386 = vmatpush2.msra.mxu0 0.0
  %3387 = vmatprep.subr.mxu0 0.0
  %3388 = vmatpush2.msra.mxu0 0.0
  %3389 = vmatprep.subr.mxu0 0.0
  %3390 = vmatpush2.msra.mxu0 0.0
  %3391 = vmatprep.subr.mxu0 0.0
  %3392 = vmatpush2.msra.mxu0 0.0
  %3393 = vmatprep.subr.mxu0 0.0
  %3394 = vmatpush2.msra.mxu0 0.0
  %3395 = vmatprep.subr.mxu0 0.0
  %3396 = vmatpush2.msra.mxu0 0.0
  %3397 = vmatprep.subr.mxu0 0.0
  %3398 = vmatpush2.msra.mxu0 0.0
  %3399 = vmatprep.subr.mxu0 0.0
  %3400 = vmatpush2.msra.mxu0 0.0
  %3401 = vmatprep.subr.mxu0 0.0
  %3402 = vmatpush2.msra.mxu0 0.0
  %3403 = vmatprep.mubr.f32.mxu0 0.0
  %3404 = vmatmul.mubr.f32.gmra.mxu0 %v3266
  %v3405 = vpop.f32.mrf.mxu0
  %v3406 = vadd.f32 0.0, %v3405
  %v3407 = vpop.f32.mrf.mxu0
  %v3408 = vadd.f32 0.0, %v3407
  %3409 = vdwg.mxu0
  %3410 = vmatprep.subr.mxu0 0.0
  %3411 = vmatpush1.msra.mxu0 0.0
  %3412 = vmatprep.subr.mxu0 0.0
  %3413 = vmatpush1.msra.mxu0 0.0
  %3414 = vmatprep.subr.mxu0 0.0
  %3415 = vmatpush1.msra.mxu0 0.0
  %3416 = vmatprep.subr.mxu0 0.0
  %3417 = vmatpush1.msra.mxu0 0.0
  %3418 = vmatprep.subr.mxu0 0.0
  %3419 = vmatpush1.msra.mxu0 0.0
  %3420 = vmatprep.subr.mxu0 0.0
  %3421 = vmatpush1.msra.mxu0 0.0
  %3422 = vmatprep.subr.mxu0 0.0
  %3423 = vmatpush1.msra.mxu0 0.0
  %3424 = vmatprep.subr.mxu0 0.0
  %3425 = vmatpush1.msra.mxu0 0.0
  %3426 = vmatprep.subr.mxu0 0.0
  %3427 = vmatpush1.msra.mxu0 0.0
  %3428 = vmatprep.subr.mxu0 0.0
  %3429 = vmatpush1.msra.mxu0 0.0
  %3430 = vmatprep.subr.mxu0 0.0
  %3431 = vmatpush1.msra.mxu0 0.0
  %3432 = vmatprep.subr.mxu0 0.0
  %3433 = vmatpush1.msra.mxu0 0.0
  %3434 = vmatprep.subr.mxu0 0.0
  %3435 = vmatpush1.msra.mxu0 0.0
  %3436 = vmatprep.subr.mxu0 0.0
  %3437 = vmatpush1.msra.mxu0 0.0
  %3438 = vmatprep.subr.mxu0 0.0
  %3439 = vmatpush1.msra.mxu0 0.0
  %3440 = vmatprep.subr.mxu0 %v3256
  %3441 = vmatpush1.msra.mxu0 %v3255
  %3442 = vmatprep.subr.mxu0 0.0
  %3443 = vmatpush2.msra.mxu0 0.0
  %3444 = vmatprep.subr.mxu0 0.0
  %3445 = vmatpush2.msra.mxu0 0.0
  %3446 = vmatprep.subr.mxu0 0.0
  %3447 = vmatpush2.msra.mxu0 0.0
  %3448 = vmatprep.subr.mxu0 0.0
  %3449 = vmatpush2.msra.mxu0 0.0
  %3450 = vmatprep.subr.mxu0 0.0
  %3451 = vmatpush2.msra.mxu0 0.0
  %3452 = vmatprep.subr.mxu0 0.0
  %3453 = vmatpush2.msra.mxu0 0.0
  %3454 = vmatprep.subr.mxu0 0.0
  %3455 = vmatpush2.msra.mxu0 0.0
  %3456 = vmatprep.subr.mxu0 0.0
  %3457 = vmatpush2.msra.mxu0 0.0
  %3458 = vmatprep.subr.mxu0 0.0
  %3459 = vmatpush2.msra.mxu0 0.0
  %3460 = vmatprep.subr.mxu0 0.0
  %3461 = vmatpush2.msra.mxu0 0.0
  %3462 = vmatprep.subr.mxu0 0.0
  %3463 = vmatpush2.msra.mxu0 0.0
  %3464 = vmatprep.subr.mxu0 0.0
  %3465 = vmatpush2.msra.mxu0 0.0
  %3466 = vmatprep.subr.mxu0 0.0
  %3467 = vmatpush2.msra.mxu0 0.0
  %3468 = vmatprep.subr.mxu0 0.0
  %3469 = vmatpush2.msra.mxu0 0.0
  %3470 = vmatprep.subr.mxu0 0.0
  %3471 = vmatpush2.msra.mxu0 0.0
  %3472 = vmatprep.subr.mxu0 0.0
  %3473 = vmatpush2.msra.mxu0 0.0
  %3474 = vmatprep.mubr.f32.mxu0 0.0
  %3475 = vmatmul.mubr.f32.gmra.mxu0 %v3266
  %v3476 = vpop.f32.mrf.mxu0
  %v3477 = vadd.f32 0.0, %v3476
  %v3478 = vpop.f32.mrf.mxu0
  %v3479 = vadd.f32 0.0, %v3478
  %3480 = vdwg.mxu0
  %3481 = vmatprep.subr.mxu0 0.0
  %3482 = vmatpush1.msra.mxu0 0.0
  %3483 = vmatprep.subr.mxu0 0.0
  %3484 = vmatpush1.msra.mxu0 0.0
  %3485 = vmatprep.subr.mxu0 0.0
  %3486 = vmatpush1.msra.mxu0 0.0
  %3487 = vmatprep.subr.mxu0 0.0
  %3488 = vmatpush1.msra.mxu0 0.0
  %3489 = vmatprep.subr.mxu0 0.0
  %3490 = vmatpush1.msra.mxu0 0.0
  %3491 = vmatprep.subr.mxu0 0.0
  %3492 = vmatpush1.msra.mxu0 0.0
  %3493 = vmatprep.subr.mxu0 0.0
  %3494 = vmatpush1.msra.mxu0 0.0
  %3495 = vmatprep.subr.mxu0 0.0
  %3496 = vmatpush1.msra.mxu0 0.0
  %3497 = vmatprep.subr.mxu0 0.0
  %3498 = vmatpush1.msra.mxu0 0.0
  %3499 = vmatprep.subr.mxu0 0.0
  %3500 = vmatpush1.msra.mxu0 0.0
  %3501 = vmatprep.subr.mxu0 0.0
  %3502 = vmatpush1.msra.mxu0 0.0
  %3503 = vmatprep.subr.mxu0 0.0
  %3504 = vmatpush1.msra.mxu0 0.0
  %3505 = vmatprep.subr.mxu0 0.0
  %3506 = vmatpush1.msra.mxu0 0.0
  %3507 = vmatprep.subr.mxu0 0.0
  %3508 = vmatpush1.msra.mxu0 0.0
  %3509 = vmatprep.subr.mxu0 0.0
  %3510 = vmatpush1.msra.mxu0 0.0
  %3511 = vmatprep.subr.mxu0 0.0
  %3512 = vmatpush1.msra.mxu0 %v3250
  %3513 = vmatprep.subr.mxu0 0.0
  %3514 = vmatpush2.msra.mxu0 0.0
  %3515 = vmatprep.subr.mxu0 0.0
  %3516 = vmatpush2.msra.mxu0 0.0
  %3517 = vmatprep.subr.mxu0 0.0
  %3518 = vmatpush2.msra.mxu0 0.0
  %3519 = vmatprep.subr.mxu0 0.0
  %3520 = vmatpush2.msra.mxu0 0.0
  %3521 = vmatprep.subr.mxu0 0.0
  %3522 = vmatpush2.msra.mxu0 0.0
  %3523 = vmatprep.subr.mxu0 0.0
  %3524 = vmatpush2.msra.mxu0 0.0
  %3525 = vmatprep.subr.mxu0 0.0
  %3526 = vmatpush2.msra.mxu0 0.0
  %3527 = vmatprep.subr.mxu0 0.0
  %3528 = vmatpush2.msra.mxu0 0.0
  %3529 = vmatprep.subr.mxu0 0.0
  %3530 = vmatpush2.msra.mxu0 0.0
  %3531 = vmatprep.subr.mxu0 0.0
  %3532 = vmatpush2.msra.mxu0 0.0
  %3533 = vmatprep.subr.mxu0 0.0
  %3534 = vmatpush2.msra.mxu0 0.0
  %3535 = vmatprep.subr.mxu0 0.0
  %3536 = vmatpush2.msra.mxu0 0.0
  %3537 = vmatprep.subr.mxu0 0.0
  %3538 = vmatpush2.msra.mxu0 0.0
  %3539 = vmatprep.subr.mxu0 0.0
  %3540 = vmatpush2.msra.mxu0 0.0
  %3541 = vmatprep.subr.mxu0 0.0
  %3542 = vmatpush2.msra.mxu0 0.0
  %3543 = vmatprep.subr.mxu0 0.0
  %3544 = vmatpush2.msra.mxu0 0.0
  %3545 = vmatprep.mubr.f32.mxu0 0.0
  %3546 = vmatmul.mubr.f32.gmra.mxu0 %v3266
  %v3547 = vpop.f32.mrf.mxu0
  %v3548 = vadd.f32 0.0, %v3547
  %v3549 = vpop.f32.mrf.mxu0
  %3550 = vdwg.mxu0
  %3551 = vrot.lane.b32.xlu0 %v3221, 107
  %v3552 = vpop.permute.xlu0 %3551
  %3553 = vrot.lane.b32.xlu0 %v3222, 107
  %v3554 = vpop.permute.xlu0 %3553
  %3555 = vrot.lane.b32.xlu0 %v3223, 107
  %v3556 = vpop.permute.xlu0 %3555
  %3557 = vrot.lane.b32.xlu0 %v3224, 107
  %v3558 = vpop.permute.xlu0 %3557
  %3559 = vrot.lane.b32.xlu0 %v3225, 107
  %v3560 = vpop.permute.xlu0 %3559
  %3561 = vrot.lane.b32.xlu0 %v3226, 107
  %v3562 = vpop.permute.xlu0 %3561
  %3563 = vrot.lane.b32.xlu0 %v3227, 107
  %v3564 = vpop.permute.xlu0 %3563
  %v3565 = vsel %vm409, %v3552, %v3554
  %v3566 = vsel %vm409, %v3554, %v3556
  %v3567 = vsel %vm409, %v3556, %v3558
  %v3568 = vsel %vm409, %v3558, %v3560
  %v3569 = vsel %vm409, %v3560, %v3562
  %v3570 = vsel %vm409, %v3562, %v3564
  %v3579 = vsel %vm3264, %v3220, 0
  %3581 = vmatprep.subr.mxu0 0.0
  %3582 = vmatpush1.msra.mxu0 0.0
  %3583 = vmatprep.subr.mxu0 0.0
  %3584 = vmatpush1.msra.mxu0 0.0
  %3585 = vmatprep.subr.mxu0 0.0
  %3586 = vmatpush1.msra.mxu0 0.0
  %3587 = vmatprep.subr.mxu0 0.0
  %3588 = vmatpush1.msra.mxu0 0.0
  %3589 = vmatprep.subr.mxu0 0.0
  %3590 = vmatpush1.msra.mxu0 0.0
  %3591 = vmatprep.subr.mxu0 0.0
  %3592 = vmatpush1.msra.mxu0 0.0
  %3593 = vmatprep.subr.mxu0 0.0
  %3594 = vmatpush1.msra.mxu0 0.0
  %3595 = vmatprep.subr.mxu0 0.0
  %3596 = vmatpush1.msra.mxu0 0.0
  %3597 = vmatprep.subr.mxu0 0.0
  %3598 = vmatpush1.msra.mxu0 0.0
  %3599 = vmatprep.subr.mxu0 0.0
  %3600 = vmatpush1.msra.mxu0 0.0
  %3601 = vmatprep.subr.mxu0 0.0
  %3602 = vmatpush1.msra.mxu0 0.0
  %3603 = vmatprep.subr.mxu0 0.0
  %3604 = vmatpush1.msra.mxu0 0.0
  %3605 = vmatprep.subr.mxu0 0.0
  %3606 = vmatpush1.msra.mxu0 0.0
  %3607 = vmatprep.subr.mxu0 0.0
  %3608 = vmatpush1.msra.mxu0 0.0
  %3609 = vmatprep.subr.mxu0 0.0
  %3610 = vmatpush1.msra.mxu0 0.0
  %3611 = vmatprep.subr.mxu0 %v3566
  %3612 = vmatpush1.msra.mxu0 %v3565
  %3613 = vmatprep.subr.mxu0 0.0
  %3614 = vmatpush2.msra.mxu0 0.0
  %3615 = vmatprep.subr.mxu0 0.0
  %3616 = vmatpush2.msra.mxu0 0.0
  %3617 = vmatprep.subr.mxu0 0.0
  %3618 = vmatpush2.msra.mxu0 0.0
  %3619 = vmatprep.subr.mxu0 0.0
  %3620 = vmatpush2.msra.mxu0 0.0
  %3621 = vmatprep.subr.mxu0 0.0
  %3622 = vmatpush2.msra.mxu0 0.0
  %3623 = vmatprep.subr.mxu0 0.0
  %3624 = vmatpush2.msra.mxu0 0.0
  %3625 = vmatprep.subr.mxu0 0.0
  %3626 = vmatpush2.msra.mxu0 0.0
  %3627 = vmatprep.subr.mxu0 0.0
  %3628 = vmatpush2.msra.mxu0 0.0
  %3629 = vmatprep.subr.mxu0 0.0
  %3630 = vmatpush2.msra.mxu0 0.0
  %3631 = vmatprep.subr.mxu0 0.0
  %3632 = vmatpush2.msra.mxu0 0.0
  %3633 = vmatprep.subr.mxu0 0.0
  %3634 = vmatpush2.msra.mxu0 0.0
  %3635 = vmatprep.subr.mxu0 0.0
  %3636 = vmatpush2.msra.mxu0 0.0
  %3637 = vmatprep.subr.mxu0 0.0
  %3638 = vmatpush2.msra.mxu0 0.0
  %3639 = vmatprep.subr.mxu0 0.0
  %3640 = vmatpush2.msra.mxu0 0.0
  %3641 = vmatprep.subr.mxu0 0.0
  %3642 = vmatpush2.msra.mxu0 0.0
  %3643 = vmatprep.subr.mxu0 0.0
  %3644 = vmatpush2.msra.mxu0 0.0
  %3645 = vmatprep.mubr.f32.mxu0 0.0
  %3646 = vmatmul.mubr.f32.gmra.mxu0 %v3579
  %v3647 = vpop.f32.mrf.mxu0
  %v3648 = vadd.f32 %v3335, %v3647
  %v3649 = vpop.f32.mrf.mxu0
  %v3650 = vadd.f32 %v3337, %v3649
  %3651 = vdwg.mxu0
  %3652 = vmatprep.subr.mxu0 0.0
  %3653 = vmatpush1.msra.mxu0 0.0
  %3654 = vmatprep.subr.mxu0 0.0
  %3655 = vmatpush1.msra.mxu0 0.0
  %3656 = vmatprep.subr.mxu0 0.0
  %3657 = vmatpush1.msra.mxu0 0.0
  %3658 = vmatprep.subr.mxu0 0.0
  %3659 = vmatpush1.msra.mxu0 0.0
  %3660 = vmatprep.subr.mxu0 0.0
  %3661 = vmatpush1.msra.mxu0 0.0
  %3662 = vmatprep.subr.mxu0 0.0
  %3663 = vmatpush1.msra.mxu0 0.0
  %3664 = vmatprep.subr.mxu0 0.0
  %3665 = vmatpush1.msra.mxu0 0.0
  %3666 = vmatprep.subr.mxu0 0.0
  %3667 = vmatpush1.msra.mxu0 0.0
  %3668 = vmatprep.subr.mxu0 0.0
  %3669 = vmatpush1.msra.mxu0 0.0
  %3670 = vmatprep.subr.mxu0 0.0
  %3671 = vmatpush1.msra.mxu0 0.0
  %3672 = vmatprep.subr.mxu0 0.0
  %3673 = vmatpush1.msra.mxu0 0.0
  %3674 = vmatprep.subr.mxu0 0.0
  %3675 = vmatpush1.msra.mxu0 0.0
  %3676 = vmatprep.subr.mxu0 0.0
  %3677 = vmatpush1.msra.mxu0 0.0
  %3678 = vmatprep.subr.mxu0 0.0
  %3679 = vmatpush1.msra.mxu0 0.0
  %3680 = vmatprep.subr.mxu0 0.0
  %3681 = vmatpush1.msra.mxu0 0.0
  %3682 = vmatprep.subr.mxu0 %v3568
  %3683 = vmatpush1.msra.mxu0 %v3567
  %3684 = vmatprep.subr.mxu0 0.0
  %3685 = vmatpush2.msra.mxu0 0.0
  %3686 = vmatprep.subr.mxu0 0.0
  %3687 = vmatpush2.msra.mxu0 0.0
  %3688 = vmatprep.subr.mxu0 0.0
  %3689 = vmatpush2.msra.mxu0 0.0
  %3690 = vmatprep.subr.mxu0 0.0
  %3691 = vmatpush2.msra.mxu0 0.0
  %3692 = vmatprep.subr.mxu0 0.0
  %3693 = vmatpush2.msra.mxu0 0.0
  %3694 = vmatprep.subr.mxu0 0.0
  %3695 = vmatpush2.msra.mxu0 0.0
  %3696 = vmatprep.subr.mxu0 0.0
  %3697 = vmatpush2.msra.mxu0 0.0
  %3698 = vmatprep.subr.mxu0 0.0
  %3699 = vmatpush2.msra.mxu0 0.0
  %3700 = vmatprep.subr.mxu0 0.0
  %3701 = vmatpush2.msra.mxu0 0.0
  %3702 = vmatprep.subr.mxu0 0.0
  %3703 = vmatpush2.msra.mxu0 0.0
  %3704 = vmatprep.subr.mxu0 0.0
  %3705 = vmatpush2.msra.mxu0 0.0
  %3706 = vmatprep.subr.mxu0 0.0
  %3707 = vmatpush2.msra.mxu0 0.0
  %3708 = vmatprep.subr.mxu0 0.0
  %3709 = vmatpush2.msra.mxu0 0.0
  %3710 = vmatprep.subr.mxu0 0.0
  %3711 = vmatpush2.msra.mxu0 0.0
  %3712 = vmatprep.subr.mxu0 0.0
  %3713 = vmatpush2.msra.mxu0 0.0
  %3714 = vmatprep.subr.mxu0 0.0
  %3715 = vmatpush2.msra.mxu0 0.0
  %3716 = vmatprep.mubr.f32.mxu0 0.0
  %3717 = vmatmul.mubr.f32.gmra.mxu0 %v3579
  %v3718 = vpop.f32.mrf.mxu0
  %v3719 = vadd.f32 %v3406, %v3718
  %v3720 = vpop.f32.mrf.mxu0
  %v3721 = vadd.f32 %v3408, %v3720
  %3722 = vdwg.mxu0
  %3723 = vmatprep.subr.mxu0 0.0
  %3724 = vmatpush1.msra.mxu0 0.0
  %3725 = vmatprep.subr.mxu0 0.0
  %3726 = vmatpush1.msra.mxu0 0.0
  %3727 = vmatprep.subr.mxu0 0.0
  %3728 = vmatpush1.msra.mxu0 0.0
  %3729 = vmatprep.subr.mxu0 0.0
  %3730 = vmatpush1.msra.mxu0 0.0
  %3731 = vmatprep.subr.mxu0 0.0
  %3732 = vmatpush1.msra.mxu0 0.0
  %3733 = vmatprep.subr.mxu0 0.0
  %3734 = vmatpush1.msra.mxu0 0.0
  %3735 = vmatprep.subr.mxu0 0.0
  %3736 = vmatpush1.msra.mxu0 0.0
  %3737 = vmatprep.subr.mxu0 0.0
  %3738 = vmatpush1.msra.mxu0 0.0
  %3739 = vmatprep.subr.mxu0 0.0
  %3740 = vmatpush1.msra.mxu0 0.0
  %3741 = vmatprep.subr.mxu0 0.0
  %3742 = vmatpush1.msra.mxu0 0.0
  %3743 = vmatprep.subr.mxu0 0.0
  %3744 = vmatpush1.msra.mxu0 0.0
  %3745 = vmatprep.subr.mxu0 0.0
  %3746 = vmatpush1.msra.mxu0 0.0
  %3747 = vmatprep.subr.mxu0 0.0
  %3748 = vmatpush1.msra.mxu0 0.0
  %3749 = vmatprep.subr.mxu0 0.0
  %3750 = vmatpush1.msra.mxu0 0.0
  %3751 = vmatprep.subr.mxu0 0.0
  %3752 = vmatpush1.msra.mxu0 0.0
  %3753 = vmatprep.subr.mxu0 %v3570
  %3754 = vmatpush1.msra.mxu0 %v3569
  %3755 = vmatprep.subr.mxu0 0.0
  %3756 = vmatpush2.msra.mxu0 0.0
  %3757 = vmatprep.subr.mxu0 0.0
  %3758 = vmatpush2.msra.mxu0 0.0
  %3759 = vmatprep.subr.mxu0 0.0
  %3760 = vmatpush2.msra.mxu0 0.0
  %3761 = vmatprep.subr.mxu0 0.0
  %3762 = vmatpush2.msra.mxu0 0.0
  %3763 = vmatprep.subr.mxu0 0.0
  %3764 = vmatpush2.msra.mxu0 0.0
  %3765 = vmatprep.subr.mxu0 0.0
  %3766 = vmatpush2.msra.mxu0 0.0
  %3767 = vmatprep.subr.mxu0 0.0
  %3768 = vmatpush2.msra.mxu0 0.0
  %3769 = vmatprep.subr.mxu0 0.0
  %3770 = vmatpush2.msra.mxu0 0.0
  %3771 = vmatprep.subr.mxu0 0.0
  %3772 = vmatpush2.msra.mxu0 0.0
  %3773 = vmatprep.subr.mxu0 0.0
  %3774 = vmatpush2.msra.mxu0 0.0
  %3775 = vmatprep.subr.mxu0 0.0
  %3776 = vmatpush2.msra.mxu0 0.0
  %3777 = vmatprep.subr.mxu0 0.0
  %3778 = vmatpush2.msra.mxu0 0.0
  %3779 = vmatprep.subr.mxu0 0.0
  %3780 = vmatpush2.msra.mxu0 0.0
  %3781 = vmatprep.subr.mxu0 0.0
  %3782 = vmatpush2.msra.mxu0 0.0
  %3783 = vmatprep.subr.mxu0 0.0
  %3784 = vmatpush2.msra.mxu0 0.0
  %3785 = vmatprep.subr.mxu0 0.0
  %3786 = vmatpush2.msra.mxu0 0.0
  %3787 = vmatprep.mubr.f32.mxu0 0.0
  %3788 = vmatmul.mubr.f32.gmra.mxu0 %v3579
  %v3789 = vpop.f32.mrf.mxu0
  %v3790 = vadd.f32 %v3477, %v3789
  %v3791 = vpop.f32.mrf.mxu0
  %v3792 = vadd.f32 %v3479, %v3791
  %3793 = vdwg.mxu0
  %3794 = vmatprep.subr.mxu0 0.0
  %3795 = vmatpush1.msra.mxu0 0.0
  %3796 = vmatprep.subr.mxu0 0.0
  %3797 = vmatpush1.msra.mxu0 0.0
  %3798 = vmatprep.subr.mxu0 0.0
  %3799 = vmatpush1.msra.mxu0 0.0
  %3800 = vmatprep.subr.mxu0 0.0
  %3801 = vmatpush1.msra.mxu0 0.0
  %3802 = vmatprep.subr.mxu0 0.0
  %3803 = vmatpush1.msra.mxu0 0.0
  %3804 = vmatprep.subr.mxu0 0.0
  %3805 = vmatpush1.msra.mxu0 0.0
  %3806 = vmatprep.subr.mxu0 0.0
  %3807 = vmatpush1.msra.mxu0 0.0
  %3808 = vmatprep.subr.mxu0 0.0
  %3809 = vmatpush1.msra.mxu0 0.0
  %3810 = vmatprep.subr.mxu0 0.0
  %3811 = vmatpush1.msra.mxu0 0.0
  %3812 = vmatprep.subr.mxu0 0.0
  %3813 = vmatpush1.msra.mxu0 0.0
  %3814 = vmatprep.subr.mxu0 0.0
  %3815 = vmatpush1.msra.mxu0 0.0
  %3816 = vmatprep.subr.mxu0 0.0
  %3817 = vmatpush1.msra.mxu0 0.0
  %3818 = vmatprep.subr.mxu0 0.0
  %3819 = vmatpush1.msra.mxu0 0.0
  %3820 = vmatprep.subr.mxu0 0.0
  %3821 = vmatpush1.msra.mxu0 0.0
  %3822 = vmatprep.subr.mxu0 0.0
  %3823 = vmatpush1.msra.mxu0 0.0
  %3824 = vmatprep.subr.mxu0 0.0
  %3825 = vmatpush1.msra.mxu0 %v3564
  %3826 = vmatprep.subr.mxu0 0.0
  %3827 = vmatpush2.msra.mxu0 0.0
  %3828 = vmatprep.subr.mxu0 0.0
  %3829 = vmatpush2.msra.mxu0 0.0
  %3830 = vmatprep.subr.mxu0 0.0
  %3831 = vmatpush2.msra.mxu0 0.0
  %3832 = vmatprep.subr.mxu0 0.0
  %3833 = vmatpush2.msra.mxu0 0.0
  %3834 = vmatprep.subr.mxu0 0.0
  %3835 = vmatpush2.msra.mxu0 0.0
  %3836 = vmatprep.subr.mxu0 0.0
  %3837 = vmatpush2.msra.mxu0 0.0
  %3838 = vmatprep.subr.mxu0 0.0
  %3839 = vmatpush2.msra.mxu0 0.0
  %3840 = vmatprep.subr.mxu0 0.0
  %3841 = vmatpush2.msra.mxu0 0.0
  %3842 = vmatprep.subr.mxu0 0.0
  %3843 = vmatpush2.msra.mxu0 0.0
  %3844 = vmatprep.subr.mxu0 0.0
  %3845 = vmatpush2.msra.mxu0 0.0
  %3846 = vmatprep.subr.mxu0 0.0
  %3847 = vmatpush2.msra.mxu0 0.0
  %3848 = vmatprep.subr.mxu0 0.0
  %3849 = vmatpush2.msra.mxu0 0.0
  %3850 = vmatprep.subr.mxu0 0.0
  %3851 = vmatpush2.msra.mxu0 0.0
  %3852 = vmatprep.subr.mxu0 0.0
  %3853 = vmatpush2.msra.mxu0 0.0
  %3854 = vmatprep.subr.mxu0 0.0
  %3855 = vmatpush2.msra.mxu0 0.0
  %3856 = vmatprep.subr.mxu0 0.0
  %3857 = vmatpush2.msra.mxu0 0.0
  %3858 = vmatprep.mubr.f32.mxu0 0.0
  %3859 = vmatmul.mubr.f32.gmra.mxu0 %v3579
  %v3860 = vpop.f32.mrf.mxu0
  %v3861 = vadd.f32 %v3548, %v3860
  %v3862 = vpop.f32.mrf.mxu0
  %3863 = vdwg.mxu0
  %s3864 = scalar_lea.vmem %s3, 16
  %v3865 = vld [vmem:[%s3864] sm:$0xff]
  %3866 = vrot.lane.b32.xlu0 %v3221, 105
  %v3867 = vpop.permute.xlu0 %3866
  %3868 = vrot.lane.b32.xlu0 %v3222, 105
  %v3869 = vpop.permute.xlu0 %3868
  %3870 = vrot.lane.b32.xlu0 %v3223, 105
  %v3871 = vpop.permute.xlu0 %3870
  %3872 = vrot.lane.b32.xlu0 %v3224, 105
  %v3873 = vpop.permute.xlu0 %3872
  %3874 = vrot.lane.b32.xlu0 %v3225, 105
  %v3875 = vpop.permute.xlu0 %3874
  %3876 = vrot.lane.b32.xlu0 %v3226, 105
  %v3877 = vpop.permute.xlu0 %3876
  %3878 = vrot.lane.b32.xlu0 %v3227, 105
  %v3879 = vpop.permute.xlu0 %3878
  %v3880 = vsel %vm743, %v3867, %v3869
  %v3881 = vsel %vm743, %v3869, %v3871
  %v3882 = vsel %vm743, %v3871, %v3873
  %v3883 = vsel %vm743, %v3873, %v3875
  %v3884 = vsel %vm743, %v3875, %v3877
  %v3885 = vsel %vm743, %v3877, %v3879
  %v3894 = vsel %vm3264, %v3865, 0
  %3896 = vmatprep.subr.mxu0 0.0
  %3897 = vmatpush1.msra.mxu0 0.0
  %3898 = vmatprep.subr.mxu0 0.0
  %3899 = vmatpush1.msra.mxu0 0.0
  %3900 = vmatprep.subr.mxu0 0.0
  %3901 = vmatpush1.msra.mxu0 0.0
  %3902 = vmatprep.subr.mxu0 0.0
  %3903 = vmatpush1.msra.mxu0 0.0
  %3904 = vmatprep.subr.mxu0 0.0
  %3905 = vmatpush1.msra.mxu0 0.0
  %3906 = vmatprep.subr.mxu0 0.0
  %3907 = vmatpush1.msra.mxu0 0.0
  %3908 = vmatprep.subr.mxu0 0.0
  %3909 = vmatpush1.msra.mxu0 0.0
  %3910 = vmatprep.subr.mxu0 0.0
  %3911 = vmatpush1.msra.mxu0 0.0
  %3912 = vmatprep.subr.mxu0 0.0
  %3913 = vmatpush1.msra.mxu0 0.0
  %3914 = vmatprep.subr.mxu0 0.0
  %3915 = vmatpush1.msra.mxu0 0.0
  %3916 = vmatprep.subr.mxu0 0.0
  %3917 = vmatpush1.msra.mxu0 0.0
  %3918 = vmatprep.subr.mxu0 0.0
  %3919 = vmatpush1.msra.mxu0 0.0
  %3920 = vmatprep.subr.mxu0 0.0
  %3921 = vmatpush1.msra.mxu0 0.0
  %3922 = vmatprep.subr.mxu0 0.0
  %3923 = vmatpush1.msra.mxu0 0.0
  %3924 = vmatprep.subr.mxu0 0.0
  %3925 = vmatpush1.msra.mxu0 0.0
  %3926 = vmatprep.subr.mxu0 %v3881
  %3927 = vmatpush1.msra.mxu0 %v3880
  %3928 = vmatprep.subr.mxu0 0.0
  %3929 = vmatpush2.msra.mxu0 0.0
  %3930 = vmatprep.subr.mxu0 0.0
  %3931 = vmatpush2.msra.mxu0 0.0
  %3932 = vmatprep.subr.mxu0 0.0
  %3933 = vmatpush2.msra.mxu0 0.0
  %3934 = vmatprep.subr.mxu0 0.0
  %3935 = vmatpush2.msra.mxu0 0.0
  %3936 = vmatprep.subr.mxu0 0.0
  %3937 = vmatpush2.msra.mxu0 0.0
  %3938 = vmatprep.subr.mxu0 0.0
  %3939 = vmatpush2.msra.mxu0 0.0
  %3940 = vmatprep.subr.mxu0 0.0
  %3941 = vmatpush2.msra.mxu0 0.0
  %3942 = vmatprep.subr.mxu0 0.0
  %3943 = vmatpush2.msra.mxu0 0.0
  %3944 = vmatprep.subr.mxu0 0.0
  %3945 = vmatpush2.msra.mxu0 0.0
  %3946 = vmatprep.subr.mxu0 0.0
  %3947 = vmatpush2.msra.mxu0 0.0
  %3948 = vmatprep.subr.mxu0 0.0
  %3949 = vmatpush2.msra.mxu0 0.0
  %3950 = vmatprep.subr.mxu0 0.0
  %3951 = vmatpush2.msra.mxu0 0.0
  %3952 = vmatprep.subr.mxu0 0.0
  %3953 = vmatpush2.msra.mxu0 0.0
  %3954 = vmatprep.subr.mxu0 0.0
  %3955 = vmatpush2.msra.mxu0 0.0
  %3956 = vmatprep.subr.mxu0 0.0
  %3957 = vmatpush2.msra.mxu0 0.0
  %3958 = vmatprep.subr.mxu0 0.0
  %3959 = vmatpush2.msra.mxu0 0.0
  %3960 = vmatprep.mubr.f32.mxu0 0.0
  %3961 = vmatmul.mubr.f32.gmra.mxu0 %v3894
  %v3962 = vpop.f32.mrf.mxu0
  %v3963 = vadd.f32 0.0, %v3962
  %v3964 = vpop.f32.mrf.mxu0
  %v3965 = vadd.f32 0.0, %v3964
  %3966 = vdwg.mxu0
  %3967 = vmatprep.subr.mxu0 0.0
  %3968 = vmatpush1.msra.mxu0 0.0
  %3969 = vmatprep.subr.mxu0 0.0
  %3970 = vmatpush1.msra.mxu0 0.0
  %3971 = vmatprep.subr.mxu0 0.0
  %3972 = vmatpush1.msra.mxu0 0.0
  %3973 = vmatprep.subr.mxu0 0.0
  %3974 = vmatpush1.msra.mxu0 0.0
  %3975 = vmatprep.subr.mxu0 0.0
  %3976 = vmatpush1.msra.mxu0 0.0
  %3977 = vmatprep.subr.mxu0 0.0
  %3978 = vmatpush1.msra.mxu0 0.0
  %3979 = vmatprep.subr.mxu0 0.0
  %3980 = vmatpush1.msra.mxu0 0.0
  %3981 = vmatprep.subr.mxu0 0.0
  %3982 = vmatpush1.msra.mxu0 0.0
  %3983 = vmatprep.subr.mxu0 0.0
  %3984 = vmatpush1.msra.mxu0 0.0
  %3985 = vmatprep.subr.mxu0 0.0
  %3986 = vmatpush1.msra.mxu0 0.0
  %3987 = vmatprep.subr.mxu0 0.0
  %3988 = vmatpush1.msra.mxu0 0.0
  %3989 = vmatprep.subr.mxu0 0.0
  %3990 = vmatpush1.msra.mxu0 0.0
  %3991 = vmatprep.subr.mxu0 0.0
  %3992 = vmatpush1.msra.mxu0 0.0
  %3993 = vmatprep.subr.mxu0 0.0
  %3994 = vmatpush1.msra.mxu0 0.0
  %3995 = vmatprep.subr.mxu0 0.0
  %3996 = vmatpush1.msra.mxu0 0.0
  %3997 = vmatprep.subr.mxu0 %v3883
  %3998 = vmatpush1.msra.mxu0 %v3882
  %3999 = vmatprep.subr.mxu0 0.0
  %4000 = vmatpush2.msra.mxu0 0.0
  %4001 = vmatprep.subr.mxu0 0.0
  %4002 = vmatpush2.msra.mxu0 0.0
  %4003 = vmatprep.subr.mxu0 0.0
  %4004 = vmatpush2.msra.mxu0 0.0
  %4005 = vmatprep.subr.mxu0 0.0
  %4006 = vmatpush2.msra.mxu0 0.0
  %4007 = vmatprep.subr.mxu0 0.0
  %4008 = vmatpush2.msra.mxu0 0.0
  %4009 = vmatprep.subr.mxu0 0.0
  %4010 = vmatpush2.msra.mxu0 0.0
  %4011 = vmatprep.subr.mxu0 0.0
  %4012 = vmatpush2.msra.mxu0 0.0
  %4013 = vmatprep.subr.mxu0 0.0
  %4014 = vmatpush2.msra.mxu0 0.0
  %4015 = vmatprep.subr.mxu0 0.0
  %4016 = vmatpush2.msra.mxu0 0.0
  %4017 = vmatprep.subr.mxu0 0.0
  %4018 = vmatpush2.msra.mxu0 0.0
  %4019 = vmatprep.subr.mxu0 0.0
  %4020 = vmatpush2.msra.mxu0 0.0
  %4021 = vmatprep.subr.mxu0 0.0
  %4022 = vmatpush2.msra.mxu0 0.0
  %4023 = vmatprep.subr.mxu0 0.0
  %4024 = vmatpush2.msra.mxu0 0.0
  %4025 = vmatprep.subr.mxu0 0.0
  %4026 = vmatpush2.msra.mxu0 0.0
  %4027 = vmatprep.subr.mxu0 0.0
  %4028 = vmatpush2.msra.mxu0 0.0
  %4029 = vmatprep.subr.mxu0 0.0
  %4030 = vmatpush2.msra.mxu0 0.0
  %4031 = vmatprep.mubr.f32.mxu0 0.0
  %4032 = vmatmul.mubr.f32.gmra.mxu0 %v3894
  %v4033 = vpop.f32.mrf.mxu0
  %v4034 = vadd.f32 0.0, %v4033
  %v4035 = vpop.f32.mrf.mxu0
  %v4036 = vadd.f32 0.0, %v4035
  %4037 = vdwg.mxu0
  %4038 = vmatprep.subr.mxu0 0.0
  %4039 = vmatpush1.msra.mxu0 0.0
  %4040 = vmatprep.subr.mxu0 0.0
  %4041 = vmatpush1.msra.mxu0 0.0
  %4042 = vmatprep.subr.mxu0 0.0
  %4043 = vmatpush1.msra.mxu0 0.0
  %4044 = vmatprep.subr.mxu0 0.0
  %4045 = vmatpush1.msra.mxu0 0.0
  %4046 = vmatprep.subr.mxu0 0.0
  %4047 = vmatpush1.msra.mxu0 0.0
  %4048 = vmatprep.subr.mxu0 0.0
  %4049 = vmatpush1.msra.mxu0 0.0
  %4050 = vmatprep.subr.mxu0 0.0
  %4051 = vmatpush1.msra.mxu0 0.0
  %4052 = vmatprep.subr.mxu0 0.0
  %4053 = vmatpush1.msra.mxu0 0.0
  %4054 = vmatprep.subr.mxu0 0.0
  %4055 = vmatpush1.msra.mxu0 0.0
  %4056 = vmatprep.subr.mxu0 0.0
  %4057 = vmatpush1.msra.mxu0 0.0
  %4058 = vmatprep.subr.mxu0 0.0
  %4059 = vmatpush1.msra.mxu0 0.0
  %4060 = vmatprep.subr.mxu0 0.0
  %4061 = vmatpush1.msra.mxu0 0.0
  %4062 = vmatprep.subr.mxu0 0.0
  %4063 = vmatpush1.msra.mxu0 0.0
  %4064 = vmatprep.subr.mxu0 0.0
  %4065 = vmatpush1.msra.mxu0 0.0
  %4066 = vmatprep.subr.mxu0 0.0
  %4067 = vmatpush1.msra.mxu0 0.0
  %4068 = vmatprep.subr.mxu0 %v3885
  %4069 = vmatpush1.msra.mxu0 %v3884
  %4070 = vmatprep.subr.mxu0 0.0
  %4071 = vmatpush2.msra.mxu0 0.0
  %4072 = vmatprep.subr.mxu0 0.0
  %4073 = vmatpush2.msra.mxu0 0.0
  %4074 = vmatprep.subr.mxu0 0.0
  %4075 = vmatpush2.msra.mxu0 0.0
  %4076 = vmatprep.subr.mxu0 0.0
  %4077 = vmatpush2.msra.mxu0 0.0
  %4078 = vmatprep.subr.mxu0 0.0
  %4079 = vmatpush2.msra.mxu0 0.0
  %4080 = vmatprep.subr.mxu0 0.0
  %4081 = vmatpush2.msra.mxu0 0.0
  %4082 = vmatprep.subr.mxu0 0.0
  %4083 = vmatpush2.msra.mxu0 0.0
  %4084 = vmatprep.subr.mxu0 0.0
  %4085 = vmatpush2.msra.mxu0 0.0
  %4086 = vmatprep.subr.mxu0 0.0
  %4087 = vmatpush2.msra.mxu0 0.0
  %4088 = vmatprep.subr.mxu0 0.0
  %4089 = vmatpush2.msra.mxu0 0.0
  %4090 = vmatprep.subr.mxu0 0.0
  %4091 = vmatpush2.msra.mxu0 0.0
  %4092 = vmatprep.subr.mxu0 0.0
  %4093 = vmatpush2.msra.mxu0 0.0
  %4094 = vmatprep.subr.mxu0 0.0
  %4095 = vmatpush2.msra.mxu0 0.0
  %4096 = vmatprep.subr.mxu0 0.0
  %4097 = vmatpush2.msra.mxu0 0.0
  %4098 = vmatprep.subr.mxu0 0.0
  %4099 = vmatpush2.msra.mxu0 0.0
  %4100 = vmatprep.subr.mxu0 0.0
  %4101 = vmatpush2.msra.mxu0 0.0
  %4102 = vmatprep.mubr.f32.mxu0 0.0
  %4103 = vmatmul.mubr.f32.gmra.mxu0 %v3894
  %v4104 = vpop.f32.mrf.mxu0
  %v4105 = vadd.f32 0.0, %v4104
  %v4106 = vpop.f32.mrf.mxu0
  %v4107 = vadd.f32 0.0, %v4106
  %4108 = vdwg.mxu0
  %4109 = vmatprep.subr.mxu0 0.0
  %4110 = vmatpush1.msra.mxu0 0.0
  %4111 = vmatprep.subr.mxu0 0.0
  %4112 = vmatpush1.msra.mxu0 0.0
  %4113 = vmatprep.subr.mxu0 0.0
  %4114 = vmatpush1.msra.mxu0 0.0
  %4115 = vmatprep.subr.mxu0 0.0
  %4116 = vmatpush1.msra.mxu0 0.0
  %4117 = vmatprep.subr.mxu0 0.0
  %4118 = vmatpush1.msra.mxu0 0.0
  %4119 = vmatprep.subr.mxu0 0.0
  %4120 = vmatpush1.msra.mxu0 0.0
  %4121 = vmatprep.subr.mxu0 0.0
  %4122 = vmatpush1.msra.mxu0 0.0
  %4123 = vmatprep.subr.mxu0 0.0
  %4124 = vmatpush1.msra.mxu0 0.0
  %4125 = vmatprep.subr.mxu0 0.0
  %4126 = vmatpush1.msra.mxu0 0.0
  %4127 = vmatprep.subr.mxu0 0.0
  %4128 = vmatpush1.msra.mxu0 0.0
  %4129 = vmatprep.subr.mxu0 0.0
  %4130 = vmatpush1.msra.mxu0 0.0
  %4131 = vmatprep.subr.mxu0 0.0
  %4132 = vmatpush1.msra.mxu0 0.0
  %4133 = vmatprep.subr.mxu0 0.0
  %4134 = vmatpush1.msra.mxu0 0.0
  %4135 = vmatprep.subr.mxu0 0.0
  %4136 = vmatpush1.msra.mxu0 0.0
  %4137 = vmatprep.subr.mxu0 0.0
  %4138 = vmatpush1.msra.mxu0 0.0
  %4139 = vmatprep.subr.mxu0 0.0
  %4140 = vmatpush1.msra.mxu0 %v3879
  %4141 = vmatprep.subr.mxu0 0.0
  %4142 = vmatpush2.msra.mxu0 0.0
  %4143 = vmatprep.subr.mxu0 0.0
  %4144 = vmatpush2.msra.mxu0 0.0
  %4145 = vmatprep.subr.mxu0 0.0
  %4146 = vmatpush2.msra.mxu0 0.0
  %4147 = vmatprep.subr.mxu0 0.0
  %4148 = vmatpush2.msra.mxu0 0.0
  %4149 = vmatprep.subr.mxu0 0.0
  %4150 = vmatpush2.msra.mxu0 0.0
  %4151 = vmatprep.subr.mxu0 0.0
  %4152 = vmatpush2.msra.mxu0 0.0
  %4153 = vmatprep.subr.mxu0 0.0
  %4154 = vmatpush2.msra.mxu0 0.0
  %4155 = vmatprep.subr.mxu0 0.0
  %4156 = vmatpush2.msra.mxu0 0.0
  %4157 = vmatprep.subr.mxu0 0.0
  %4158 = vmatpush2.msra.mxu0 0.0
  %4159 = vmatprep.subr.mxu0 0.0
  %4160 = vmatpush2.msra.mxu0 0.0
  %4161 = vmatprep.subr.mxu0 0.0
  %4162 = vmatpush2.msra.mxu0 0.0
  %4163 = vmatprep.subr.mxu0 0.0
  %4164 = vmatpush2.msra.mxu0 0.0
  %4165 = vmatprep.subr.mxu0 0.0
  %4166 = vmatpush2.msra.mxu0 0.0
  %4167 = vmatprep.subr.mxu0 0.0
  %4168 = vmatpush2.msra.mxu0 0.0
  %4169 = vmatprep.subr.mxu0 0.0
  %4170 = vmatpush2.msra.mxu0 0.0
  %4171 = vmatprep.subr.mxu0 0.0
  %4172 = vmatpush2.msra.mxu0 0.0
  %4173 = vmatprep.mubr.f32.mxu0 0.0
  %4174 = vmatmul.mubr.f32.gmra.mxu0 %v3894
  %v4175 = vpop.f32.mrf.mxu0
  %v4176 = vadd.f32 0.0, %v4175
  %v4177 = vpop.f32.mrf.mxu0
  %4178 = vdwg.mxu0
  %v4179 = vadd.f32 %v3648, %v3963
  %v4180 = vadd.f32 %v3650, %v3965
  %v4181 = vadd.f32 %v3719, %v4034
  %v4182 = vadd.f32 %v3721, %v4036
  %v4183 = vadd.f32 %v3790, %v4105
  %v4184 = vadd.f32 %v3792, %v4107
  %v4185 = vadd.f32 %v3861, %v4176
  %s4186 = scalar_lea.vmem %s3, 24
  %v4187 = vld [vmem:[%s4186] sm:$0xff]
  %4188 = vrot.lane.b32.xlu0 %v3221, 87
  %v4189 = vpop.permute.xlu0 %4188
  %4190 = vrot.lane.b32.xlu0 %v3222, 87
  %v4191 = vpop.permute.xlu0 %4190
  %4192 = vrot.lane.b32.xlu0 %v3223, 87
  %v4193 = vpop.permute.xlu0 %4192
  %4194 = vrot.lane.b32.xlu0 %v3224, 87
  %v4195 = vpop.permute.xlu0 %4194
  %4196 = vrot.lane.b32.xlu0 %v3225, 87
  %v4197 = vpop.permute.xlu0 %4196
  %4198 = vrot.lane.b32.xlu0 %v3226, 87
  %v4199 = vpop.permute.xlu0 %4198
  %4200 = vrot.lane.b32.xlu0 %v3227, 87
  %v4201 = vpop.permute.xlu0 %4200
  %v4202 = vsel %vm1084, %v4189, %v4191
  %v4203 = vsel %vm1084, %v4191, %v4193
  %v4204 = vsel %vm1084, %v4193, %v4195
  %v4205 = vsel %vm1084, %v4195, %v4197
  %v4206 = vsel %vm1084, %v4197, %v4199
  %v4207 = vsel %vm1084, %v4199, %v4201
  %v4216 = vsel %vm3264, %v4187, 0
  %4218 = vmatprep.subr.mxu0 0.0
  %4219 = vmatpush1.msra.mxu0 0.0
  %4220 = vmatprep.subr.mxu0 0.0
  %4221 = vmatpush1.msra.mxu0 0.0
  %4222 = vmatprep.subr.mxu0 0.0
  %4223 = vmatpush1.msra.mxu0 0.0
  %4224 = vmatprep.subr.mxu0 0.0
  %4225 = vmatpush1.msra.mxu0 0.0
  %4226 = vmatprep.subr.mxu0 0.0
  %4227 = vmatpush1.msra.mxu0 0.0
  %4228 = vmatprep.subr.mxu0 0.0
  %4229 = vmatpush1.msra.mxu0 0.0
  %4230 = vmatprep.subr.mxu0 0.0
  %4231 = vmatpush1.msra.mxu0 0.0
  %4232 = vmatprep.subr.mxu0 0.0
  %4233 = vmatpush1.msra.mxu0 0.0
  %4234 = vmatprep.subr.mxu0 0.0
  %4235 = vmatpush1.msra.mxu0 0.0
  %4236 = vmatprep.subr.mxu0 0.0
  %4237 = vmatpush1.msra.mxu0 0.0
  %4238 = vmatprep.subr.mxu0 0.0
  %4239 = vmatpush1.msra.mxu0 0.0
  %4240 = vmatprep.subr.mxu0 0.0
  %4241 = vmatpush1.msra.mxu0 0.0
  %4242 = vmatprep.subr.mxu0 0.0
  %4243 = vmatpush1.msra.mxu0 0.0
  %4244 = vmatprep.subr.mxu0 0.0
  %4245 = vmatpush1.msra.mxu0 0.0
  %4246 = vmatprep.subr.mxu0 0.0
  %4247 = vmatpush1.msra.mxu0 0.0
  %4248 = vmatprep.subr.mxu0 %v4203
  %4249 = vmatpush1.msra.mxu0 %v4202
  %4250 = vmatprep.subr.mxu0 0.0
  %4251 = vmatpush2.msra.mxu0 0.0
  %4252 = vmatprep.subr.mxu0 0.0
  %4253 = vmatpush2.msra.mxu0 0.0
  %4254 = vmatprep.subr.mxu0 0.0
  %4255 = vmatpush2.msra.mxu0 0.0
  %4256 = vmatprep.subr.mxu0 0.0
  %4257 = vmatpush2.msra.mxu0 0.0
  %4258 = vmatprep.subr.mxu0 0.0
  %4259 = vmatpush2.msra.mxu0 0.0
  %4260 = vmatprep.subr.mxu0 0.0
  %4261 = vmatpush2.msra.mxu0 0.0
  %4262 = vmatprep.subr.mxu0 0.0
  %4263 = vmatpush2.msra.mxu0 0.0
  %4264 = vmatprep.subr.mxu0 0.0
  %4265 = vmatpush2.msra.mxu0 0.0
  %4266 = vmatprep.subr.mxu0 0.0
  %4267 = vmatpush2.msra.mxu0 0.0
  %4268 = vmatprep.subr.mxu0 0.0
  %4269 = vmatpush2.msra.mxu0 0.0
  %4270 = vmatprep.subr.mxu0 0.0
  %4271 = vmatpush2.msra.mxu0 0.0
  %4272 = vmatprep.subr.mxu0 0.0
  %4273 = vmatpush2.msra.mxu0 0.0
  %4274 = vmatprep.subr.mxu0 0.0
  %4275 = vmatpush2.msra.mxu0 0.0
  %4276 = vmatprep.subr.mxu0 0.0
  %4277 = vmatpush2.msra.mxu0 0.0
  %4278 = vmatprep.subr.mxu0 0.0
  %4279 = vmatpush2.msra.mxu0 0.0
  %4280 = vmatprep.subr.mxu0 0.0
  %4281 = vmatpush2.msra.mxu0 0.0
  %4282 = vmatprep.mubr.f32.mxu0 0.0
  %4283 = vmatmul.mubr.f32.gmra.mxu0 %v4216
  %v4284 = vpop.f32.mrf.mxu0
  %v4285 = vadd.f32 0.0, %v4284
  %v4286 = vpop.f32.mrf.mxu0
  %v4287 = vadd.f32 0.0, %v4286
  %4288 = vdwg.mxu0
  %4289 = vmatprep.subr.mxu0 0.0
  %4290 = vmatpush1.msra.mxu0 0.0
  %4291 = vmatprep.subr.mxu0 0.0
  %4292 = vmatpush1.msra.mxu0 0.0
  %4293 = vmatprep.subr.mxu0 0.0
  %4294 = vmatpush1.msra.mxu0 0.0
  %4295 = vmatprep.subr.mxu0 0.0
  %4296 = vmatpush1.msra.mxu0 0.0
  %4297 = vmatprep.subr.mxu0 0.0
  %4298 = vmatpush1.msra.mxu0 0.0
  %4299 = vmatprep.subr.mxu0 0.0
  %4300 = vmatpush1.msra.mxu0 0.0
  %4301 = vmatprep.subr.mxu0 0.0
  %4302 = vmatpush1.msra.mxu0 0.0
  %4303 = vmatprep.subr.mxu0 0.0
  %4304 = vmatpush1.msra.mxu0 0.0
  %4305 = vmatprep.subr.mxu0 0.0
  %4306 = vmatpush1.msra.mxu0 0.0
  %4307 = vmatprep.subr.mxu0 0.0
  %4308 = vmatpush1.msra.mxu0 0.0
  %4309 = vmatprep.subr.mxu0 0.0
  %4310 = vmatpush1.msra.mxu0 0.0
  %4311 = vmatprep.subr.mxu0 0.0
  %4312 = vmatpush1.msra.mxu0 0.0
  %4313 = vmatprep.subr.mxu0 0.0
  %4314 = vmatpush1.msra.mxu0 0.0
  %4315 = vmatprep.subr.mxu0 0.0
  %4316 = vmatpush1.msra.mxu0 0.0
  %4317 = vmatprep.subr.mxu0 0.0
  %4318 = vmatpush1.msra.mxu0 0.0
  %4319 = vmatprep.subr.mxu0 %v4205
  %4320 = vmatpush1.msra.mxu0 %v4204
  %4321 = vmatprep.subr.mxu0 0.0
  %4322 = vmatpush2.msra.mxu0 0.0
  %4323 = vmatprep.subr.mxu0 0.0
  %4324 = vmatpush2.msra.mxu0 0.0
  %4325 = vmatprep.subr.mxu0 0.0
  %4326 = vmatpush2.msra.mxu0 0.0
  %4327 = vmatprep.subr.mxu0 0.0
  %4328 = vmatpush2.msra.mxu0 0.0
  %4329 = vmatprep.subr.mxu0 0.0
  %4330 = vmatpush2.msra.mxu0 0.0
  %4331 = vmatprep.subr.mxu0 0.0
  %4332 = vmatpush2.msra.mxu0 0.0
  %4333 = vmatprep.subr.mxu0 0.0
  %4334 = vmatpush2.msra.mxu0 0.0
  %4335 = vmatprep.subr.mxu0 0.0
  %4336 = vmatpush2.msra.mxu0 0.0
  %4337 = vmatprep.subr.mxu0 0.0
  %4338 = vmatpush2.msra.mxu0 0.0
  %4339 = vmatprep.subr.mxu0 0.0
  %4340 = vmatpush2.msra.mxu0 0.0
  %4341 = vmatprep.subr.mxu0 0.0
  %4342 = vmatpush2.msra.mxu0 0.0
  %4343 = vmatprep.subr.mxu0 0.0
  %4344 = vmatpush2.msra.mxu0 0.0
  %4345 = vmatprep.subr.mxu0 0.0
  %4346 = vmatpush2.msra.mxu0 0.0
  %4347 = vmatprep.subr.mxu0 0.0
  %4348 = vmatpush2.msra.mxu0 0.0
  %4349 = vmatprep.subr.mxu0 0.0
  %4350 = vmatpush2.msra.mxu0 0.0
  %4351 = vmatprep.subr.mxu0 0.0
  %4352 = vmatpush2.msra.mxu0 0.0
  %4353 = vmatprep.mubr.f32.mxu0 0.0
  %4354 = vmatmul.mubr.f32.gmra.mxu0 %v4216
  %v4355 = vpop.f32.mrf.mxu0
  %v4356 = vadd.f32 0.0, %v4355
  %v4357 = vpop.f32.mrf.mxu0
  %v4358 = vadd.f32 0.0, %v4357
  %4359 = vdwg.mxu0
  %4360 = vmatprep.subr.mxu0 0.0
  %4361 = vmatpush1.msra.mxu0 0.0
  %4362 = vmatprep.subr.mxu0 0.0
  %4363 = vmatpush1.msra.mxu0 0.0
  %4364 = vmatprep.subr.mxu0 0.0
  %4365 = vmatpush1.msra.mxu0 0.0
  %4366 = vmatprep.subr.mxu0 0.0
  %4367 = vmatpush1.msra.mxu0 0.0
  %4368 = vmatprep.subr.mxu0 0.0
  %4369 = vmatpush1.msra.mxu0 0.0
  %4370 = vmatprep.subr.mxu0 0.0
  %4371 = vmatpush1.msra.mxu0 0.0
  %4372 = vmatprep.subr.mxu0 0.0
  %4373 = vmatpush1.msra.mxu0 0.0
  %4374 = vmatprep.subr.mxu0 0.0
  %4375 = vmatpush1.msra.mxu0 0.0
  %4376 = vmatprep.subr.mxu0 0.0
  %4377 = vmatpush1.msra.mxu0 0.0
  %4378 = vmatprep.subr.mxu0 0.0
  %4379 = vmatpush1.msra.mxu0 0.0
  %4380 = vmatprep.subr.mxu0 0.0
  %4381 = vmatpush1.msra.mxu0 0.0
  %4382 = vmatprep.subr.mxu0 0.0
  %4383 = vmatpush1.msra.mxu0 0.0
  %4384 = vmatprep.subr.mxu0 0.0
  %4385 = vmatpush1.msra.mxu0 0.0
  %4386 = vmatprep.subr.mxu0 0.0
  %4387 = vmatpush1.msra.mxu0 0.0
  %4388 = vmatprep.subr.mxu0 0.0
  %4389 = vmatpush1.msra.mxu0 0.0
  %4390 = vmatprep.subr.mxu0 %v4207
  %4391 = vmatpush1.msra.mxu0 %v4206
  %4392 = vmatprep.subr.mxu0 0.0
  %4393 = vmatpush2.msra.mxu0 0.0
  %4394 = vmatprep.subr.mxu0 0.0
  %4395 = vmatpush2.msra.mxu0 0.0
  %4396 = vmatprep.subr.mxu0 0.0
  %4397 = vmatpush2.msra.mxu0 0.0
  %4398 = vmatprep.subr.mxu0 0.0
  %4399 = vmatpush2.msra.mxu0 0.0
  %4400 = vmatprep.subr.mxu0 0.0
  %4401 = vmatpush2.msra.mxu0 0.0
  %4402 = vmatprep.subr.mxu0 0.0
  %4403 = vmatpush2.msra.mxu0 0.0
  %4404 = vmatprep.subr.mxu0 0.0
  %4405 = vmatpush2.msra.mxu0 0.0
  %4406 = vmatprep.subr.mxu0 0.0
  %4407 = vmatpush2.msra.mxu0 0.0
  %4408 = vmatprep.subr.mxu0 0.0
  %4409 = vmatpush2.msra.mxu0 0.0
  %4410 = vmatprep.subr.mxu0 0.0
  %4411 = vmatpush2.msra.mxu0 0.0
  %4412 = vmatprep.subr.mxu0 0.0
  %4413 = vmatpush2.msra.mxu0 0.0
  %4414 = vmatprep.subr.mxu0 0.0
  %4415 = vmatpush2.msra.mxu0 0.0
  %4416 = vmatprep.subr.mxu0 0.0
  %4417 = vmatpush2.msra.mxu0 0.0
  %4418 = vmatprep.subr.mxu0 0.0
  %4419 = vmatpush2.msra.mxu0 0.0
  %4420 = vmatprep.subr.mxu0 0.0
  %4421 = vmatpush2.msra.mxu0 0.0
  %4422 = vmatprep.subr.mxu0 0.0
  %4423 = vmatpush2.msra.mxu0 0.0
  %4424 = vmatprep.mubr.f32.mxu0 0.0
  %4425 = vmatmul.mubr.f32.gmra.mxu0 %v4216
  %v4426 = vpop.f32.mrf.mxu0
  %v4427 = vadd.f32 0.0, %v4426
  %v4428 = vpop.f32.mrf.mxu0
  %v4429 = vadd.f32 0.0, %v4428
  %4430 = vdwg.mxu0
  %4431 = vmatprep.subr.mxu0 0.0
  %4432 = vmatpush1.msra.mxu0 0.0
  %4433 = vmatprep.subr.mxu0 0.0
  %4434 = vmatpush1.msra.mxu0 0.0
  %4435 = vmatprep.subr.mxu0 0.0
  %4436 = vmatpush1.msra.mxu0 0.0
  %4437 = vmatprep.subr.mxu0 0.0
  %4438 = vmatpush1.msra.mxu0 0.0
  %4439 = vmatprep.subr.mxu0 0.0
  %4440 = vmatpush1.msra.mxu0 0.0
  %4441 = vmatprep.subr.mxu0 0.0
  %4442 = vmatpush1.msra.mxu0 0.0
  %4443 = vmatprep.subr.mxu0 0.0
  %4444 = vmatpush1.msra.mxu0 0.0
  %4445 = vmatprep.subr.mxu0 0.0
  %4446 = vmatpush1.msra.mxu0 0.0
  %4447 = vmatprep.subr.mxu0 0.0
  %4448 = vmatpush1.msra.mxu0 0.0
  %4449 = vmatprep.subr.mxu0 0.0
  %4450 = vmatpush1.msra.mxu0 0.0
  %4451 = vmatprep.subr.mxu0 0.0
  %4452 = vmatpush1.msra.mxu0 0.0
  %4453 = vmatprep.subr.mxu0 0.0
  %4454 = vmatpush1.msra.mxu0 0.0
  %4455 = vmatprep.subr.mxu0 0.0
  %4456 = vmatpush1.msra.mxu0 0.0
  %4457 = vmatprep.subr.mxu0 0.0
  %4458 = vmatpush1.msra.mxu0 0.0
  %4459 = vmatprep.subr.mxu0 0.0
  %4460 = vmatpush1.msra.mxu0 0.0
  %4461 = vmatprep.subr.mxu0 0.0
  %4462 = vmatpush1.msra.mxu0 %v4201
  %4463 = vmatprep.subr.mxu0 0.0
  %4464 = vmatpush2.msra.mxu0 0.0
  %4465 = vmatprep.subr.mxu0 0.0
  %4466 = vmatpush2.msra.mxu0 0.0
  %4467 = vmatprep.subr.mxu0 0.0
  %4468 = vmatpush2.msra.mxu0 0.0
  %4469 = vmatprep.subr.mxu0 0.0
  %4470 = vmatpush2.msra.mxu0 0.0
  %4471 = vmatprep.subr.mxu0 0.0
  %4472 = vmatpush2.msra.mxu0 0.0
  %4473 = vmatprep.subr.mxu0 0.0
  %4474 = vmatpush2.msra.mxu0 0.0
  %4475 = vmatprep.subr.mxu0 0.0
  %4476 = vmatpush2.msra.mxu0 0.0
  %4477 = vmatprep.subr.mxu0 0.0
  %4478 = vmatpush2.msra.mxu0 0.0
  %4479 = vmatprep.subr.mxu0 0.0
  %4480 = vmatpush2.msra.mxu0 0.0
  %4481 = vmatprep.subr.mxu0 0.0
  %4482 = vmatpush2.msra.mxu0 0.0
  %4483 = vmatprep.subr.mxu0 0.0
  %4484 = vmatpush2.msra.mxu0 0.0
  %4485 = vmatprep.subr.mxu0 0.0
  %4486 = vmatpush2.msra.mxu0 0.0
  %4487 = vmatprep.subr.mxu0 0.0
  %4488 = vmatpush2.msra.mxu0 0.0
  %4489 = vmatprep.subr.mxu0 0.0
  %4490 = vmatpush2.msra.mxu0 0.0
  %4491 = vmatprep.subr.mxu0 0.0
  %4492 = vmatpush2.msra.mxu0 0.0
  %4493 = vmatprep.subr.mxu0 0.0
  %4494 = vmatpush2.msra.mxu0 0.0
  %4495 = vmatprep.mubr.f32.mxu0 0.0
  %4496 = vmatmul.mubr.f32.gmra.mxu0 %v4216
  %v4497 = vpop.f32.mrf.mxu0
  %v4498 = vadd.f32 0.0, %v4497
  %v4499 = vpop.f32.mrf.mxu0
  %4500 = vdwg.mxu0
  %v4501 = vadd.f32 %v4179, %v4285
  %v4502 = vadd.f32 %v4180, %v4287
  %v4503 = vadd.f32 %v4181, %v4356
  %v4504 = vadd.f32 %v4182, %v4358
  %v4505 = vadd.f32 %v4183, %v4427
  %v4506 = vadd.f32 %v4184, %v4429
  %v4507 = vadd.f32 %v4185, %v4498
  %s4508 = scalar_lea.vmem %s3, 32
  %v4509 = vld [vmem:[%s4508] sm:$0xff]
  %4510 = vrot.lane.b32.xlu0 %v3221, 86
  %v4511 = vpop.permute.xlu0 %4510
  %4512 = vrot.lane.b32.xlu0 %v3222, 86
  %v4513 = vpop.permute.xlu0 %4512
  %4514 = vrot.lane.b32.xlu0 %v3223, 86
  %v4515 = vpop.permute.xlu0 %4514
  %4516 = vrot.lane.b32.xlu0 %v3224, 86
  %v4517 = vpop.permute.xlu0 %4516
  %4518 = vrot.lane.b32.xlu0 %v3225, 86
  %v4519 = vpop.permute.xlu0 %4518
  %4520 = vrot.lane.b32.xlu0 %v3226, 86
  %v4521 = vpop.permute.xlu0 %4520
  %4522 = vrot.lane.b32.xlu0 %v3227, 86
  %v4523 = vpop.permute.xlu0 %4522
  %v4524 = vsel %vm1425, %v4511, %v4513
  %v4525 = vsel %vm1425, %v4513, %v4515
  %v4526 = vsel %vm1425, %v4515, %v4517
  %v4527 = vsel %vm1425, %v4517, %v4519
  %v4528 = vsel %vm1425, %v4519, %v4521
  %v4529 = vsel %vm1425, %v4521, %v4523
  %v4538 = vsel %vm3264, %v4509, 0
  %4540 = vmatprep.subr.mxu0 0.0
  %4541 = vmatpush1.msra.mxu0 0.0
  %4542 = vmatprep.subr.mxu0 0.0
  %4543 = vmatpush1.msra.mxu0 0.0
  %4544 = vmatprep.subr.mxu0 0.0
  %4545 = vmatpush1.msra.mxu0 0.0
  %4546 = vmatprep.subr.mxu0 0.0
  %4547 = vmatpush1.msra.mxu0 0.0
  %4548 = vmatprep.subr.mxu0 0.0
  %4549 = vmatpush1.msra.mxu0 0.0
  %4550 = vmatprep.subr.mxu0 0.0
  %4551 = vmatpush1.msra.mxu0 0.0
  %4552 = vmatprep.subr.mxu0 0.0
  %4553 = vmatpush1.msra.mxu0 0.0
  %4554 = vmatprep.subr.mxu0 0.0
  %4555 = vmatpush1.msra.mxu0 0.0
  %4556 = vmatprep.subr.mxu0 0.0
  %4557 = vmatpush1.msra.mxu0 0.0
  %4558 = vmatprep.subr.mxu0 0.0
  %4559 = vmatpush1.msra.mxu0 0.0
  %4560 = vmatprep.subr.mxu0 0.0
  %4561 = vmatpush1.msra.mxu0 0.0
  %4562 = vmatprep.subr.mxu0 0.0
  %4563 = vmatpush1.msra.mxu0 0.0
  %4564 = vmatprep.subr.mxu0 0.0
  %4565 = vmatpush1.msra.mxu0 0.0
  %4566 = vmatprep.subr.mxu0 0.0
  %4567 = vmatpush1.msra.mxu0 0.0
  %4568 = vmatprep.subr.mxu0 0.0
  %4569 = vmatpush1.msra.mxu0 0.0
  %4570 = vmatprep.subr.mxu0 %v4525
  %4571 = vmatpush1.msra.mxu0 %v4524
  %4572 = vmatprep.subr.mxu0 0.0
  %4573 = vmatpush2.msra.mxu0 0.0
  %4574 = vmatprep.subr.mxu0 0.0
  %4575 = vmatpush2.msra.mxu0 0.0
  %4576 = vmatprep.subr.mxu0 0.0
  %4577 = vmatpush2.msra.mxu0 0.0
  %4578 = vmatprep.subr.mxu0 0.0
  %4579 = vmatpush2.msra.mxu0 0.0
  %4580 = vmatprep.subr.mxu0 0.0
  %4581 = vmatpush2.msra.mxu0 0.0
  %4582 = vmatprep.subr.mxu0 0.0
  %4583 = vmatpush2.msra.mxu0 0.0
  %4584 = vmatprep.subr.mxu0 0.0
  %4585 = vmatpush2.msra.mxu0 0.0
  %4586 = vmatprep.subr.mxu0 0.0
  %4587 = vmatpush2.msra.mxu0 0.0
  %4588 = vmatprep.subr.mxu0 0.0
  %4589 = vmatpush2.msra.mxu0 0.0
  %4590 = vmatprep.subr.mxu0 0.0
  %4591 = vmatpush2.msra.mxu0 0.0
  %4592 = vmatprep.subr.mxu0 0.0
  %4593 = vmatpush2.msra.mxu0 0.0
  %4594 = vmatprep.subr.mxu0 0.0
  %4595 = vmatpush2.msra.mxu0 0.0
  %4596 = vmatprep.subr.mxu0 0.0
  %4597 = vmatpush2.msra.mxu0 0.0
  %4598 = vmatprep.subr.mxu0 0.0
  %4599 = vmatpush2.msra.mxu0 0.0
  %4600 = vmatprep.subr.mxu0 0.0
  %4601 = vmatpush2.msra.mxu0 0.0
  %4602 = vmatprep.subr.mxu0 0.0
  %4603 = vmatpush2.msra.mxu0 0.0
  %4604 = vmatprep.mubr.f32.mxu0 0.0
  %4605 = vmatmul.mubr.f32.gmra.mxu0 %v4538
  %v4606 = vpop.f32.mrf.mxu0
  %v4607 = vadd.f32 0.0, %v4606
  %v4608 = vpop.f32.mrf.mxu0
  %v4609 = vadd.f32 0.0, %v4608
  %4610 = vdwg.mxu0
  %4611 = vmatprep.subr.mxu0 0.0
  %4612 = vmatpush1.msra.mxu0 0.0
  %4613 = vmatprep.subr.mxu0 0.0
  %4614 = vmatpush1.msra.mxu0 0.0
  %4615 = vmatprep.subr.mxu0 0.0
  %4616 = vmatpush1.msra.mxu0 0.0
  %4617 = vmatprep.subr.mxu0 0.0
  %4618 = vmatpush1.msra.mxu0 0.0
  %4619 = vmatprep.subr.mxu0 0.0
  %4620 = vmatpush1.msra.mxu0 0.0
  %4621 = vmatprep.subr.mxu0 0.0
  %4622 = vmatpush1.msra.mxu0 0.0
  %4623 = vmatprep.subr.mxu0 0.0
  %4624 = vmatpush1.msra.mxu0 0.0
  %4625 = vmatprep.subr.mxu0 0.0
  %4626 = vmatpush1.msra.mxu0 0.0
  %4627 = vmatprep.subr.mxu0 0.0
  %4628 = vmatpush1.msra.mxu0 0.0
  %4629 = vmatprep.subr.mxu0 0.0
  %4630 = vmatpush1.msra.mxu0 0.0
  %4631 = vmatprep.subr.mxu0 0.0
  %4632 = vmatpush1.msra.mxu0 0.0
  %4633 = vmatprep.subr.mxu0 0.0
  %4634 = vmatpush1.msra.mxu0 0.0
  %4635 = vmatprep.subr.mxu0 0.0
  %4636 = vmatpush1.msra.mxu0 0.0
  %4637 = vmatprep.subr.mxu0 0.0
  %4638 = vmatpush1.msra.mxu0 0.0
  %4639 = vmatprep.subr.mxu0 0.0
  %4640 = vmatpush1.msra.mxu0 0.0
  %4641 = vmatprep.subr.mxu0 %v4527
  %4642 = vmatpush1.msra.mxu0 %v4526
  %4643 = vmatprep.subr.mxu0 0.0
  %4644 = vmatpush2.msra.mxu0 0.0
  %4645 = vmatprep.subr.mxu0 0.0
  %4646 = vmatpush2.msra.mxu0 0.0
  %4647 = vmatprep.subr.mxu0 0.0
  %4648 = vmatpush2.msra.mxu0 0.0
  %4649 = vmatprep.subr.mxu0 0.0
  %4650 = vmatpush2.msra.mxu0 0.0
  %4651 = vmatprep.subr.mxu0 0.0
  %4652 = vmatpush2.msra.mxu0 0.0
  %4653 = vmatprep.subr.mxu0 0.0
  %4654 = vmatpush2.msra.mxu0 0.0
  %4655 = vmatprep.subr.mxu0 0.0
  %4656 = vmatpush2.msra.mxu0 0.0
  %4657 = vmatprep.subr.mxu0 0.0
  %4658 = vmatpush2.msra.mxu0 0.0
  %4659 = vmatprep.subr.mxu0 0.0
  %4660 = vmatpush2.msra.mxu0 0.0
  %4661 = vmatprep.subr.mxu0 0.0
  %4662 = vmatpush2.msra.mxu0 0.0
  %4663 = vmatprep.subr.mxu0 0.0
  %4664 = vmatpush2.msra.mxu0 0.0
  %4665 = vmatprep.subr.mxu0 0.0
  %4666 = vmatpush2.msra.mxu0 0.0
  %4667 = vmatprep.subr.mxu0 0.0
  %4668 = vmatpush2.msra.mxu0 0.0
  %4669 = vmatprep.subr.mxu0 0.0
  %4670 = vmatpush2.msra.mxu0 0.0
  %4671 = vmatprep.subr.mxu0 0.0
  %4672 = vmatpush2.msra.mxu0 0.0
  %4673 = vmatprep.subr.mxu0 0.0
  %4674 = vmatpush2.msra.mxu0 0.0
  %4675 = vmatprep.mubr.f32.mxu0 0.0
  %4676 = vmatmul.mubr.f32.gmra.mxu0 %v4538
  %v4677 = vpop.f32.mrf.mxu0
  %v4678 = vadd.f32 0.0, %v4677
  %v4679 = vpop.f32.mrf.mxu0
  %v4680 = vadd.f32 0.0, %v4679
  %4681 = vdwg.mxu0
  %4682 = vmatprep.subr.mxu0 0.0
  %4683 = vmatpush1.msra.mxu0 0.0
  %4684 = vmatprep.subr.mxu0 0.0
  %4685 = vmatpush1.msra.mxu0 0.0
  %4686 = vmatprep.subr.mxu0 0.0
  %4687 = vmatpush1.msra.mxu0 0.0
  %4688 = vmatprep.subr.mxu0 0.0
  %4689 = vmatpush1.msra.mxu0 0.0
  %4690 = vmatprep.subr.mxu0 0.0
  %4691 = vmatpush1.msra.mxu0 0.0
  %4692 = vmatprep.subr.mxu0 0.0
  %4693 = vmatpush1.msra.mxu0 0.0
  %4694 = vmatprep.subr.mxu0 0.0
  %4695 = vmatpush1.msra.mxu0 0.0
  %4696 = vmatprep.subr.mxu0 0.0
  %4697 = vmatpush1.msra.mxu0 0.0
  %4698 = vmatprep.subr.mxu0 0.0
  %4699 = vmatpush1.msra.mxu0 0.0
  %4700 = vmatprep.subr.mxu0 0.0
  %4701 = vmatpush1.msra.mxu0 0.0
  %4702 = vmatprep.subr.mxu0 0.0
  %4703 = vmatpush1.msra.mxu0 0.0
  %4704 = vmatprep.subr.mxu0 0.0
  %4705 = vmatpush1.msra.mxu0 0.0
  %4706 = vmatprep.subr.mxu0 0.0
  %4707 = vmatpush1.msra.mxu0 0.0
  %4708 = vmatprep.subr.mxu0 0.0
  %4709 = vmatpush1.msra.mxu0 0.0
  %4710 = vmatprep.subr.mxu0 0.0
  %4711 = vmatpush1.msra.mxu0 0.0
  %4712 = vmatprep.subr.mxu0 %v4529
  %4713 = vmatpush1.msra.mxu0 %v4528
  %4714 = vmatprep.subr.mxu0 0.0
  %4715 = vmatpush2.msra.mxu0 0.0
  %4716 = vmatprep.subr.mxu0 0.0
  %4717 = vmatpush2.msra.mxu0 0.0
  %4718 = vmatprep.subr.mxu0 0.0
  %4719 = vmatpush2.msra.mxu0 0.0
  %4720 = vmatprep.subr.mxu0 0.0
  %4721 = vmatpush2.msra.mxu0 0.0
  %4722 = vmatprep.subr.mxu0 0.0
  %4723 = vmatpush2.msra.mxu0 0.0
  %4724 = vmatprep.subr.mxu0 0.0
  %4725 = vmatpush2.msra.mxu0 0.0
  %4726 = vmatprep.subr.mxu0 0.0
  %4727 = vmatpush2.msra.mxu0 0.0
  %4728 = vmatprep.subr.mxu0 0.0
  %4729 = vmatpush2.msra.mxu0 0.0
  %4730 = vmatprep.subr.mxu0 0.0
  %4731 = vmatpush2.msra.mxu0 0.0
  %4732 = vmatprep.subr.mxu0 0.0
  %4733 = vmatpush2.msra.mxu0 0.0
  %4734 = vmatprep.subr.mxu0 0.0
  %4735 = vmatpush2.msra.mxu0 0.0
  %4736 = vmatprep.subr.mxu0 0.0
  %4737 = vmatpush2.msra.mxu0 0.0
  %4738 = vmatprep.subr.mxu0 0.0
  %4739 = vmatpush2.msra.mxu0 0.0
  %4740 = vmatprep.subr.mxu0 0.0
  %4741 = vmatpush2.msra.mxu0 0.0
  %4742 = vmatprep.subr.mxu0 0.0
  %4743 = vmatpush2.msra.mxu0 0.0
  %4744 = vmatprep.subr.mxu0 0.0
  %4745 = vmatpush2.msra.mxu0 0.0
  %4746 = vmatprep.mubr.f32.mxu0 0.0
  %4747 = vmatmul.mubr.f32.gmra.mxu0 %v4538
  %v4748 = vpop.f32.mrf.mxu0
  %v4749 = vadd.f32 0.0, %v4748
  %v4750 = vpop.f32.mrf.mxu0
  %v4751 = vadd.f32 0.0, %v4750
  %4752 = vdwg.mxu0
  %4753 = vmatprep.subr.mxu0 0.0
  %4754 = vmatpush1.msra.mxu0 0.0
  %4755 = vmatprep.subr.mxu0 0.0
  %4756 = vmatpush1.msra.mxu0 0.0
  %4757 = vmatprep.subr.mxu0 0.0
  %4758 = vmatpush1.msra.mxu0 0.0
  %4759 = vmatprep.subr.mxu0 0.0
  %4760 = vmatpush1.msra.mxu0 0.0
  %4761 = vmatprep.subr.mxu0 0.0
  %4762 = vmatpush1.msra.mxu0 0.0
  %4763 = vmatprep.subr.mxu0 0.0
  %4764 = vmatpush1.msra.mxu0 0.0
  %4765 = vmatprep.subr.mxu0 0.0
  %4766 = vmatpush1.msra.mxu0 0.0
  %4767 = vmatprep.subr.mxu0 0.0
  %4768 = vmatpush1.msra.mxu0 0.0
  %4769 = vmatprep.subr.mxu0 0.0
  %4770 = vmatpush1.msra.mxu0 0.0
  %4771 = vmatprep.subr.mxu0 0.0
  %4772 = vmatpush1.msra.mxu0 0.0
  %4773 = vmatprep.subr.mxu0 0.0
  %4774 = vmatpush1.msra.mxu0 0.0
  %4775 = vmatprep.subr.mxu0 0.0
  %4776 = vmatpush1.msra.mxu0 0.0
  %4777 = vmatprep.subr.mxu0 0.0
  %4778 = vmatpush1.msra.mxu0 0.0
  %4779 = vmatprep.subr.mxu0 0.0
  %4780 = vmatpush1.msra.mxu0 0.0
  %4781 = vmatprep.subr.mxu0 0.0
  %4782 = vmatpush1.msra.mxu0 0.0
  %4783 = vmatprep.subr.mxu0 0.0
  %4784 = vmatpush1.msra.mxu0 %v4523
  %4785 = vmatprep.subr.mxu0 0.0
  %4786 = vmatpush2.msra.mxu0 0.0
  %4787 = vmatprep.subr.mxu0 0.0
  %4788 = vmatpush2.msra.mxu0 0.0
  %4789 = vmatprep.subr.mxu0 0.0
  %4790 = vmatpush2.msra.mxu0 0.0
  %4791 = vmatprep.subr.mxu0 0.0
  %4792 = vmatpush2.msra.mxu0 0.0
  %4793 = vmatprep.subr.mxu0 0.0
  %4794 = vmatpush2.msra.mxu0 0.0
  %4795 = vmatprep.subr.mxu0 0.0
  %4796 = vmatpush2.msra.mxu0 0.0
  %4797 = vmatprep.subr.mxu0 0.0
  %4798 = vmatpush2.msra.mxu0 0.0
  %4799 = vmatprep.subr.mxu0 0.0
  %4800 = vmatpush2.msra.mxu0 0.0
  %4801 = vmatprep.subr.mxu0 0.0
  %4802 = vmatpush2.msra.mxu0 0.0
  %4803 = vmatprep.subr.mxu0 0.0
  %4804 = vmatpush2.msra.mxu0 0.0
  %4805 = vmatprep.subr.mxu0 0.0
  %4806 = vmatpush2.msra.mxu0 0.0
  %4807 = vmatprep.subr.mxu0 0.0
  %4808 = vmatpush2.msra.mxu0 0.0
  %4809 = vmatprep.subr.mxu0 0.0
  %4810 = vmatpush2.msra.mxu0 0.0
  %4811 = vmatprep.subr.mxu0 0.0
  %4812 = vmatpush2.msra.mxu0 0.0
  %4813 = vmatprep.subr.mxu0 0.0
  %4814 = vmatpush2.msra.mxu0 0.0
  %4815 = vmatprep.subr.mxu0 0.0
  %4816 = vmatpush2.msra.mxu0 0.0
  %4817 = vmatprep.mubr.f32.mxu0 0.0
  %4818 = vmatmul.mubr.f32.gmra.mxu0 %v4538
  %v4819 = vpop.f32.mrf.mxu0
  %v4820 = vadd.f32 0.0, %v4819
  %v4821 = vpop.f32.mrf.mxu0
  %4822 = vdwg.mxu0
  %v4823 = vadd.f32 %v4501, %v4607
  %v4824 = vadd.f32 %v4502, %v4609
  %v4825 = vadd.f32 %v4503, %v4678
  %v4826 = vadd.f32 %v4504, %v4680
  %v4827 = vadd.f32 %v4505, %v4749
  %v4828 = vadd.f32 %v4506, %v4751
  %v4829 = vadd.f32 %v4507, %v4820
  %s4830 = scalar_lea.vmem %s3, 40
  %v4831 = vld [vmem:[%s4830] sm:$0xff]
  %4832 = vrot.lane.b32.xlu0 %v3221, 85
  %v4833 = vpop.permute.xlu0 %4832
  %4834 = vrot.lane.b32.xlu0 %v3222, 85
  %v4835 = vpop.permute.xlu0 %4834
  %4836 = vrot.lane.b32.xlu0 %v3223, 85
  %v4837 = vpop.permute.xlu0 %4836
  %4838 = vrot.lane.b32.xlu0 %v3224, 85
  %v4839 = vpop.permute.xlu0 %4838
  %4840 = vrot.lane.b32.xlu0 %v3225, 85
  %v4841 = vpop.permute.xlu0 %4840
  %4842 = vrot.lane.b32.xlu0 %v3226, 85
  %v4843 = vpop.permute.xlu0 %4842
  %4844 = vrot.lane.b32.xlu0 %v3227, 85
  %v4845 = vpop.permute.xlu0 %4844
  %v4846 = vsel %vm1766, %v4833, %v4835
  %v4847 = vsel %vm1766, %v4835, %v4837
  %v4848 = vsel %vm1766, %v4837, %v4839
  %v4849 = vsel %vm1766, %v4839, %v4841
  %v4850 = vsel %vm1766, %v4841, %v4843
  %v4851 = vsel %vm1766, %v4843, %v4845
  %v4860 = vsel %vm3264, %v4831, 0
  %4862 = vmatprep.subr.mxu0 0.0
  %4863 = vmatpush1.msra.mxu0 0.0
  %4864 = vmatprep.subr.mxu0 0.0
  %4865 = vmatpush1.msra.mxu0 0.0
  %4866 = vmatprep.subr.mxu0 0.0
  %4867 = vmatpush1.msra.mxu0 0.0
  %4868 = vmatprep.subr.mxu0 0.0
  %4869 = vmatpush1.msra.mxu0 0.0
  %4870 = vmatprep.subr.mxu0 0.0
  %4871 = vmatpush1.msra.mxu0 0.0
  %4872 = vmatprep.subr.mxu0 0.0
  %4873 = vmatpush1.msra.mxu0 0.0
  %4874 = vmatprep.subr.mxu0 0.0
  %4875 = vmatpush1.msra.mxu0 0.0
  %4876 = vmatprep.subr.mxu0 0.0
  %4877 = vmatpush1.msra.mxu0 0.0
  %4878 = vmatprep.subr.mxu0 0.0
  %4879 = vmatpush1.msra.mxu0 0.0
  %4880 = vmatprep.subr.mxu0 0.0
  %4881 = vmatpush1.msra.mxu0 0.0
  %4882 = vmatprep.subr.mxu0 0.0
  %4883 = vmatpush1.msra.mxu0 0.0
  %4884 = vmatprep.subr.mxu0 0.0
  %4885 = vmatpush1.msra.mxu0 0.0
  %4886 = vmatprep.subr.mxu0 0.0
  %4887 = vmatpush1.msra.mxu0 0.0
  %4888 = vmatprep.subr.mxu0 0.0
  %4889 = vmatpush1.msra.mxu0 0.0
  %4890 = vmatprep.subr.mxu0 0.0
  %4891 = vmatpush1.msra.mxu0 0.0
  %4892 = vmatprep.subr.mxu0 %v4847
  %4893 = vmatpush1.msra.mxu0 %v4846
  %4894 = vmatprep.subr.mxu0 0.0
  %4895 = vmatpush2.msra.mxu0 0.0
  %4896 = vmatprep.subr.mxu0 0.0
  %4897 = vmatpush2.msra.mxu0 0.0
  %4898 = vmatprep.subr.mxu0 0.0
  %4899 = vmatpush2.msra.mxu0 0.0
  %4900 = vmatprep.subr.mxu0 0.0
  %4901 = vmatpush2.msra.mxu0 0.0
  %4902 = vmatprep.subr.mxu0 0.0
  %4903 = vmatpush2.msra.mxu0 0.0
  %4904 = vmatprep.subr.mxu0 0.0
  %4905 = vmatpush2.msra.mxu0 0.0
  %4906 = vmatprep.subr.mxu0 0.0
  %4907 = vmatpush2.msra.mxu0 0.0
  %4908 = vmatprep.subr.mxu0 0.0
  %4909 = vmatpush2.msra.mxu0 0.0
  %4910 = vmatprep.subr.mxu0 0.0
  %4911 = vmatpush2.msra.mxu0 0.0
  %4912 = vmatprep.subr.mxu0 0.0
  %4913 = vmatpush2.msra.mxu0 0.0
  %4914 = vmatprep.subr.mxu0 0.0
  %4915 = vmatpush2.msra.mxu0 0.0
  %4916 = vmatprep.subr.mxu0 0.0
  %4917 = vmatpush2.msra.mxu0 0.0
  %4918 = vmatprep.subr.mxu0 0.0
  %4919 = vmatpush2.msra.mxu0 0.0
  %4920 = vmatprep.subr.mxu0 0.0
  %4921 = vmatpush2.msra.mxu0 0.0
  %4922 = vmatprep.subr.mxu0 0.0
  %4923 = vmatpush2.msra.mxu0 0.0
  %4924 = vmatprep.subr.mxu0 0.0
  %4925 = vmatpush2.msra.mxu0 0.0
  %4926 = vmatprep.mubr.f32.mxu0 0.0
  %4927 = vmatmul.mubr.f32.gmra.mxu0 %v4860
  %v4928 = vpop.f32.mrf.mxu0
  %v4929 = vadd.f32 0.0, %v4928
  %v4930 = vpop.f32.mrf.mxu0
  %v4931 = vadd.f32 0.0, %v4930
  %4932 = vdwg.mxu0
  %4933 = vmatprep.subr.mxu0 0.0
  %4934 = vmatpush1.msra.mxu0 0.0
  %4935 = vmatprep.subr.mxu0 0.0
  %4936 = vmatpush1.msra.mxu0 0.0
  %4937 = vmatprep.subr.mxu0 0.0
  %4938 = vmatpush1.msra.mxu0 0.0
  %4939 = vmatprep.subr.mxu0 0.0
  %4940 = vmatpush1.msra.mxu0 0.0
  %4941 = vmatprep.subr.mxu0 0.0
  %4942 = vmatpush1.msra.mxu0 0.0
  %4943 = vmatprep.subr.mxu0 0.0
  %4944 = vmatpush1.msra.mxu0 0.0
  %4945 = vmatprep.subr.mxu0 0.0
  %4946 = vmatpush1.msra.mxu0 0.0
  %4947 = vmatprep.subr.mxu0 0.0
  %4948 = vmatpush1.msra.mxu0 0.0
  %4949 = vmatprep.subr.mxu0 0.0
  %4950 = vmatpush1.msra.mxu0 0.0
  %4951 = vmatprep.subr.mxu0 0.0
  %4952 = vmatpush1.msra.mxu0 0.0
  %4953 = vmatprep.subr.mxu0 0.0
  %4954 = vmatpush1.msra.mxu0 0.0
  %4955 = vmatprep.subr.mxu0 0.0
  %4956 = vmatpush1.msra.mxu0 0.0
  %4957 = vmatprep.subr.mxu0 0.0
  %4958 = vmatpush1.msra.mxu0 0.0
  %4959 = vmatprep.subr.mxu0 0.0
  %4960 = vmatpush1.msra.mxu0 0.0
  %4961 = vmatprep.subr.mxu0 0.0
  %4962 = vmatpush1.msra.mxu0 0.0
  %4963 = vmatprep.subr.mxu0 %v4849
  %4964 = vmatpush1.msra.mxu0 %v4848
  %4965 = vmatprep.subr.mxu0 0.0
  %4966 = vmatpush2.msra.mxu0 0.0
  %4967 = vmatprep.subr.mxu0 0.0
  %4968 = vmatpush2.msra.mxu0 0.0
  %4969 = vmatprep.subr.mxu0 0.0
  %4970 = vmatpush2.msra.mxu0 0.0
  %4971 = vmatprep.subr.mxu0 0.0
  %4972 = vmatpush2.msra.mxu0 0.0
  %4973 = vmatprep.subr.mxu0 0.0
  %4974 = vmatpush2.msra.mxu0 0.0
  %4975 = vmatprep.subr.mxu0 0.0
  %4976 = vmatpush2.msra.mxu0 0.0
  %4977 = vmatprep.subr.mxu0 0.0
  %4978 = vmatpush2.msra.mxu0 0.0
  %4979 = vmatprep.subr.mxu0 0.0
  %4980 = vmatpush2.msra.mxu0 0.0
  %4981 = vmatprep.subr.mxu0 0.0
  %4982 = vmatpush2.msra.mxu0 0.0
  %4983 = vmatprep.subr.mxu0 0.0
  %4984 = vmatpush2.msra.mxu0 0.0
  %4985 = vmatprep.subr.mxu0 0.0
  %4986 = vmatpush2.msra.mxu0 0.0
  %4987 = vmatprep.subr.mxu0 0.0
  %4988 = vmatpush2.msra.mxu0 0.0
  %4989 = vmatprep.subr.mxu0 0.0
  %4990 = vmatpush2.msra.mxu0 0.0
  %4991 = vmatprep.subr.mxu0 0.0
  %4992 = vmatpush2.msra.mxu0 0.0
  %4993 = vmatprep.subr.mxu0 0.0
  %4994 = vmatpush2.msra.mxu0 0.0
  %4995 = vmatprep.subr.mxu0 0.0
  %4996 = vmatpush2.msra.mxu0 0.0
  %4997 = vmatprep.mubr.f32.mxu0 0.0
  %4998 = vmatmul.mubr.f32.gmra.mxu0 %v4860
  %v4999 = vpop.f32.mrf.mxu0
  %v5000 = vadd.f32 0.0, %v4999
  %v5001 = vpop.f32.mrf.mxu0
  %v5002 = vadd.f32 0.0, %v5001
  %5003 = vdwg.mxu0
  %5004 = vmatprep.subr.mxu0 0.0
  %5005 = vmatpush1.msra.mxu0 0.0
  %5006 = vmatprep.subr.mxu0 0.0
  %5007 = vmatpush1.msra.mxu0 0.0
  %5008 = vmatprep.subr.mxu0 0.0
  %5009 = vmatpush1.msra.mxu0 0.0
  %5010 = vmatprep.subr.mxu0 0.0
  %5011 = vmatpush1.msra.mxu0 0.0
  %5012 = vmatprep.subr.mxu0 0.0
  %5013 = vmatpush1.msra.mxu0 0.0
  %5014 = vmatprep.subr.mxu0 0.0
  %5015 = vmatpush1.msra.mxu0 0.0
  %5016 = vmatprep.subr.mxu0 0.0
  %5017 = vmatpush1.msra.mxu0 0.0
  %5018 = vmatprep.subr.mxu0 0.0
  %5019 = vmatpush1.msra.mxu0 0.0
  %5020 = vmatprep.subr.mxu0 0.0
  %5021 = vmatpush1.msra.mxu0 0.0
  %5022 = vmatprep.subr.mxu0 0.0
  %5023 = vmatpush1.msra.mxu0 0.0
  %5024 = vmatprep.subr.mxu0 0.0
  %5025 = vmatpush1.msra.mxu0 0.0
  %5026 = vmatprep.subr.mxu0 0.0
  %5027 = vmatpush1.msra.mxu0 0.0
  %5028 = vmatprep.subr.mxu0 0.0
  %5029 = vmatpush1.msra.mxu0 0.0
  %5030 = vmatprep.subr.mxu0 0.0
  %5031 = vmatpush1.msra.mxu0 0.0
  %5032 = vmatprep.subr.mxu0 0.0
  %5033 = vmatpush1.msra.mxu0 0.0
  %5034 = vmatprep.subr.mxu0 %v4851
  %5035 = vmatpush1.msra.mxu0 %v4850
  %5036 = vmatprep.subr.mxu0 0.0
  %5037 = vmatpush2.msra.mxu0 0.0
  %5038 = vmatprep.subr.mxu0 0.0
  %5039 = vmatpush2.msra.mxu0 0.0
  %5040 = vmatprep.subr.mxu0 0.0
  %5041 = vmatpush2.msra.mxu0 0.0
  %5042 = vmatprep.subr.mxu0 0.0
  %5043 = vmatpush2.msra.mxu0 0.0
  %5044 = vmatprep.subr.mxu0 0.0
  %5045 = vmatpush2.msra.mxu0 0.0
  %5046 = vmatprep.subr.mxu0 0.0
  %5047 = vmatpush2.msra.mxu0 0.0
  %5048 = vmatprep.subr.mxu0 0.0
  %5049 = vmatpush2.msra.mxu0 0.0
  %5050 = vmatprep.subr.mxu0 0.0
  %5051 = vmatpush2.msra.mxu0 0.0
  %5052 = vmatprep.subr.mxu0 0.0
  %5053 = vmatpush2.msra.mxu0 0.0
  %5054 = vmatprep.subr.mxu0 0.0
  %5055 = vmatpush2.msra.mxu0 0.0
  %5056 = vmatprep.subr.mxu0 0.0
  %5057 = vmatpush2.msra.mxu0 0.0
  %5058 = vmatprep.subr.mxu0 0.0
  %5059 = vmatpush2.msra.mxu0 0.0
  %5060 = vmatprep.subr.mxu0 0.0
  %5061 = vmatpush2.msra.mxu0 0.0
  %5062 = vmatprep.subr.mxu0 0.0
  %5063 = vmatpush2.msra.mxu0 0.0
  %5064 = vmatprep.subr.mxu0 0.0
  %5065 = vmatpush2.msra.mxu0 0.0
  %5066 = vmatprep.subr.mxu0 0.0
  %5067 = vmatpush2.msra.mxu0 0.0
  %5068 = vmatprep.mubr.f32.mxu0 0.0
  %5069 = vmatmul.mubr.f32.gmra.mxu0 %v4860
  %v5070 = vpop.f32.mrf.mxu0
  %v5071 = vadd.f32 0.0, %v5070
  %v5072 = vpop.f32.mrf.mxu0
  %v5073 = vadd.f32 0.0, %v5072
  %5074 = vdwg.mxu0
  %5075 = vmatprep.subr.mxu0 0.0
  %5076 = vmatpush1.msra.mxu0 0.0
  %5077 = vmatprep.subr.mxu0 0.0
  %5078 = vmatpush1.msra.mxu0 0.0
  %5079 = vmatprep.subr.mxu0 0.0
  %5080 = vmatpush1.msra.mxu0 0.0
  %5081 = vmatprep.subr.mxu0 0.0
  %5082 = vmatpush1.msra.mxu0 0.0
  %5083 = vmatprep.subr.mxu0 0.0
  %5084 = vmatpush1.msra.mxu0 0.0
  %5085 = vmatprep.subr.mxu0 0.0
  %5086 = vmatpush1.msra.mxu0 0.0
  %5087 = vmatprep.subr.mxu0 0.0
  %5088 = vmatpush1.msra.mxu0 0.0
  %5089 = vmatprep.subr.mxu0 0.0
  %5090 = vmatpush1.msra.mxu0 0.0
  %5091 = vmatprep.subr.mxu0 0.0
  %5092 = vmatpush1.msra.mxu0 0.0
  %5093 = vmatprep.subr.mxu0 0.0
  %5094 = vmatpush1.msra.mxu0 0.0
  %5095 = vmatprep.subr.mxu0 0.0
  %5096 = vmatpush1.msra.mxu0 0.0
  %5097 = vmatprep.subr.mxu0 0.0
  %5098 = vmatpush1.msra.mxu0 0.0
  %5099 = vmatprep.subr.mxu0 0.0
  %5100 = vmatpush1.msra.mxu0 0.0
  %5101 = vmatprep.subr.mxu0 0.0
  %5102 = vmatpush1.msra.mxu0 0.0
  %5103 = vmatprep.subr.mxu0 0.0
  %5104 = vmatpush1.msra.mxu0 0.0
  %5105 = vmatprep.subr.mxu0 0.0
  %5106 = vmatpush1.msra.mxu0 %v4845
  %5107 = vmatprep.subr.mxu0 0.0
  %5108 = vmatpush2.msra.mxu0 0.0
  %5109 = vmatprep.subr.mxu0 0.0
  %5110 = vmatpush2.msra.mxu0 0.0
  %5111 = vmatprep.subr.mxu0 0.0
  %5112 = vmatpush2.msra.mxu0 0.0
  %5113 = vmatprep.subr.mxu0 0.0
  %5114 = vmatpush2.msra.mxu0 0.0
  %5115 = vmatprep.subr.mxu0 0.0
  %5116 = vmatpush2.msra.mxu0 0.0
  %5117 = vmatprep.subr.mxu0 0.0
  %5118 = vmatpush2.msra.mxu0 0.0
  %5119 = vmatprep.subr.mxu0 0.0
  %5120 = vmatpush2.msra.mxu0 0.0
  %5121 = vmatprep.subr.mxu0 0.0
  %5122 = vmatpush2.msra.mxu0 0.0
  %5123 = vmatprep.subr.mxu0 0.0
  %5124 = vmatpush2.msra.mxu0 0.0
  %5125 = vmatprep.subr.mxu0 0.0
  %5126 = vmatpush2.msra.mxu0 0.0
  %5127 = vmatprep.subr.mxu0 0.0
  %5128 = vmatpush2.msra.mxu0 0.0
  %5129 = vmatprep.subr.mxu0 0.0
  %5130 = vmatpush2.msra.mxu0 0.0
  %5131 = vmatprep.subr.mxu0 0.0
  %5132 = vmatpush2.msra.mxu0 0.0
  %5133 = vmatprep.subr.mxu0 0.0
  %5134 = vmatpush2.msra.mxu0 0.0
  %5135 = vmatprep.subr.mxu0 0.0
  %5136 = vmatpush2.msra.mxu0 0.0
  %5137 = vmatprep.subr.mxu0 0.0
  %5138 = vmatpush2.msra.mxu0 0.0
  %5139 = vmatprep.mubr.f32.mxu0 0.0
  %5140 = vmatmul.mubr.f32.gmra.mxu0 %v4860
  %v5141 = vpop.f32.mrf.mxu0
  %v5142 = vadd.f32 0.0, %v5141
  %v5143 = vpop.f32.mrf.mxu0
  %5144 = vdwg.mxu0
  %v5145 = vadd.f32 %v4823, %v4929
  %v5146 = vadd.f32 %v4824, %v4931
  %v5147 = vadd.f32 %v4825, %v5000
  %v5148 = vadd.f32 %v4826, %v5002
  %v5149 = vadd.f32 %v4827, %v5071
  %v5150 = vadd.f32 %v4828, %v5073
  %v5151 = vadd.f32 %v4829, %v5142
  %s5152 = scalar_lea.vmem %s3, 48
  %v5153 = vld [vmem:[%s5152] sm:$0xff]
  %5154 = vrot.lane.b32.xlu0 %v3221, 67
  %v5155 = vpop.permute.xlu0 %5154
  %5156 = vrot.lane.b32.xlu0 %v3222, 67
  %v5157 = vpop.permute.xlu0 %5156
  %5158 = vrot.lane.b32.xlu0 %v3223, 67
  %v5159 = vpop.permute.xlu0 %5158
  %5160 = vrot.lane.b32.xlu0 %v3224, 67
  %v5161 = vpop.permute.xlu0 %5160
  %5162 = vrot.lane.b32.xlu0 %v3225, 67
  %v5163 = vpop.permute.xlu0 %5162
  %5164 = vrot.lane.b32.xlu0 %v3226, 67
  %v5165 = vpop.permute.xlu0 %5164
  %5166 = vrot.lane.b32.xlu0 %v3227, 67
  %v5167 = vpop.permute.xlu0 %5166
  %v5168 = vsel %vm2107, %v5155, %v5157
  %v5169 = vsel %vm2107, %v5157, %v5159
  %v5170 = vsel %vm2107, %v5159, %v5161
  %v5171 = vsel %vm2107, %v5161, %v5163
  %v5172 = vsel %vm2107, %v5163, %v5165
  %v5173 = vsel %vm2107, %v5165, %v5167
  %v5182 = vsel %vm3264, %v5153, 0
  %5184 = vmatprep.subr.mxu0 0.0
  %5185 = vmatpush1.msra.mxu0 0.0
  %5186 = vmatprep.subr.mxu0 0.0
  %5187 = vmatpush1.msra.mxu0 0.0
  %5188 = vmatprep.subr.mxu0 0.0
  %5189 = vmatpush1.msra.mxu0 0.0
  %5190 = vmatprep.subr.mxu0 0.0
  %5191 = vmatpush1.msra.mxu0 0.0
  %5192 = vmatprep.subr.mxu0 0.0
  %5193 = vmatpush1.msra.mxu0 0.0
  %5194 = vmatprep.subr.mxu0 0.0
  %5195 = vmatpush1.msra.mxu0 0.0
  %5196 = vmatprep.subr.mxu0 0.0
  %5197 = vmatpush1.msra.mxu0 0.0
  %5198 = vmatprep.subr.mxu0 0.0
  %5199 = vmatpush1.msra.mxu0 0.0
  %5200 = vmatprep.subr.mxu0 0.0
  %5201 = vmatpush1.msra.mxu0 0.0
  %5202 = vmatprep.subr.mxu0 0.0
  %5203 = vmatpush1.msra.mxu0 0.0
  %5204 = vmatprep.subr.mxu0 0.0
  %5205 = vmatpush1.msra.mxu0 0.0
  %5206 = vmatprep.subr.mxu0 0.0
  %5207 = vmatpush1.msra.mxu0 0.0
  %5208 = vmatprep.subr.mxu0 0.0
  %5209 = vmatpush1.msra.mxu0 0.0
  %5210 = vmatprep.subr.mxu0 0.0
  %5211 = vmatpush1.msra.mxu0 0.0
  %5212 = vmatprep.subr.mxu0 0.0
  %5213 = vmatpush1.msra.mxu0 0.0
  %5214 = vmatprep.subr.mxu0 %v5169
  %5215 = vmatpush1.msra.mxu0 %v5168
  %5216 = vmatprep.subr.mxu0 0.0
  %5217 = vmatpush2.msra.mxu0 0.0
  %5218 = vmatprep.subr.mxu0 0.0
  %5219 = vmatpush2.msra.mxu0 0.0
  %5220 = vmatprep.subr.mxu0 0.0
  %5221 = vmatpush2.msra.mxu0 0.0
  %5222 = vmatprep.subr.mxu0 0.0
  %5223 = vmatpush2.msra.mxu0 0.0
  %5224 = vmatprep.subr.mxu0 0.0
  %5225 = vmatpush2.msra.mxu0 0.0
  %5226 = vmatprep.subr.mxu0 0.0
  %5227 = vmatpush2.msra.mxu0 0.0
  %5228 = vmatprep.subr.mxu0 0.0
  %5229 = vmatpush2.msra.mxu0 0.0
  %5230 = vmatprep.subr.mxu0 0.0
  %5231 = vmatpush2.msra.mxu0 0.0
  %5232 = vmatprep.subr.mxu0 0.0
  %5233 = vmatpush2.msra.mxu0 0.0
  %5234 = vmatprep.subr.mxu0 0.0
  %5235 = vmatpush2.msra.mxu0 0.0
  %5236 = vmatprep.subr.mxu0 0.0
  %5237 = vmatpush2.msra.mxu0 0.0
  %5238 = vmatprep.subr.mxu0 0.0
  %5239 = vmatpush2.msra.mxu0 0.0
  %5240 = vmatprep.subr.mxu0 0.0
  %5241 = vmatpush2.msra.mxu0 0.0
  %5242 = vmatprep.subr.mxu0 0.0
  %5243 = vmatpush2.msra.mxu0 0.0
  %5244 = vmatprep.subr.mxu0 0.0
  %5245 = vmatpush2.msra.mxu0 0.0
  %5246 = vmatprep.subr.mxu0 0.0
  %5247 = vmatpush2.msra.mxu0 0.0
  %5248 = vmatprep.mubr.f32.mxu0 0.0
  %5249 = vmatmul.mubr.f32.gmra.mxu0 %v5182
  %v5250 = vpop.f32.mrf.mxu0
  %v5251 = vadd.f32 0.0, %v5250
  %v5252 = vpop.f32.mrf.mxu0
  %v5253 = vadd.f32 0.0, %v5252
  %5254 = vdwg.mxu0
  %5255 = vmatprep.subr.mxu0 0.0
  %5256 = vmatpush1.msra.mxu0 0.0
  %5257 = vmatprep.subr.mxu0 0.0
  %5258 = vmatpush1.msra.mxu0 0.0
  %5259 = vmatprep.subr.mxu0 0.0
  %5260 = vmatpush1.msra.mxu0 0.0
  %5261 = vmatprep.subr.mxu0 0.0
  %5262 = vmatpush1.msra.mxu0 0.0
  %5263 = vmatprep.subr.mxu0 0.0
  %5264 = vmatpush1.msra.mxu0 0.0
  %5265 = vmatprep.subr.mxu0 0.0
  %5266 = vmatpush1.msra.mxu0 0.0
  %5267 = vmatprep.subr.mxu0 0.0
  %5268 = vmatpush1.msra.mxu0 0.0
  %5269 = vmatprep.subr.mxu0 0.0
  %5270 = vmatpush1.msra.mxu0 0.0
  %5271 = vmatprep.subr.mxu0 0.0
  %5272 = vmatpush1.msra.mxu0 0.0
  %5273 = vmatprep.subr.mxu0 0.0
  %5274 = vmatpush1.msra.mxu0 0.0
  %5275 = vmatprep.subr.mxu0 0.0
  %5276 = vmatpush1.msra.mxu0 0.0
  %5277 = vmatprep.subr.mxu0 0.0
  %5278 = vmatpush1.msra.mxu0 0.0
  %5279 = vmatprep.subr.mxu0 0.0
  %5280 = vmatpush1.msra.mxu0 0.0
  %5281 = vmatprep.subr.mxu0 0.0
  %5282 = vmatpush1.msra.mxu0 0.0
  %5283 = vmatprep.subr.mxu0 0.0
  %5284 = vmatpush1.msra.mxu0 0.0
  %5285 = vmatprep.subr.mxu0 %v5171
  %5286 = vmatpush1.msra.mxu0 %v5170
  %5287 = vmatprep.subr.mxu0 0.0
  %5288 = vmatpush2.msra.mxu0 0.0
  %5289 = vmatprep.subr.mxu0 0.0
  %5290 = vmatpush2.msra.mxu0 0.0
  %5291 = vmatprep.subr.mxu0 0.0
  %5292 = vmatpush2.msra.mxu0 0.0
  %5293 = vmatprep.subr.mxu0 0.0
  %5294 = vmatpush2.msra.mxu0 0.0
  %5295 = vmatprep.subr.mxu0 0.0
  %5296 = vmatpush2.msra.mxu0 0.0
  %5297 = vmatprep.subr.mxu0 0.0
  %5298 = vmatpush2.msra.mxu0 0.0
  %5299 = vmatprep.subr.mxu0 0.0
  %5300 = vmatpush2.msra.mxu0 0.0
  %5301 = vmatprep.subr.mxu0 0.0
  %5302 = vmatpush2.msra.mxu0 0.0
  %5303 = vmatprep.subr.mxu0 0.0
  %5304 = vmatpush2.msra.mxu0 0.0
  %5305 = vmatprep.subr.mxu0 0.0
  %5306 = vmatpush2.msra.mxu0 0.0
  %5307 = vmatprep.subr.mxu0 0.0
  %5308 = vmatpush2.msra.mxu0 0.0
  %5309 = vmatprep.subr.mxu0 0.0
  %5310 = vmatpush2.msra.mxu0 0.0
  %5311 = vmatprep.subr.mxu0 0.0
  %5312 = vmatpush2.msra.mxu0 0.0
  %5313 = vmatprep.subr.mxu0 0.0
  %5314 = vmatpush2.msra.mxu0 0.0
  %5315 = vmatprep.subr.mxu0 0.0
  %5316 = vmatpush2.msra.mxu0 0.0
  %5317 = vmatprep.subr.mxu0 0.0
  %5318 = vmatpush2.msra.mxu0 0.0
  %5319 = vmatprep.mubr.f32.mxu0 0.0
  %5320 = vmatmul.mubr.f32.gmra.mxu0 %v5182
  %v5321 = vpop.f32.mrf.mxu0
  %v5322 = vadd.f32 0.0, %v5321
  %v5323 = vpop.f32.mrf.mxu0
  %v5324 = vadd.f32 0.0, %v5323
  %5325 = vdwg.mxu0
  %5326 = vmatprep.subr.mxu0 0.0
  %5327 = vmatpush1.msra.mxu0 0.0
  %5328 = vmatprep.subr.mxu0 0.0
  %5329 = vmatpush1.msra.mxu0 0.0
  %5330 = vmatprep.subr.mxu0 0.0
  %5331 = vmatpush1.msra.mxu0 0.0
  %5332 = vmatprep.subr.mxu0 0.0
  %5333 = vmatpush1.msra.mxu0 0.0
  %5334 = vmatprep.subr.mxu0 0.0
  %5335 = vmatpush1.msra.mxu0 0.0
  %5336 = vmatprep.subr.mxu0 0.0
  %5337 = vmatpush1.msra.mxu0 0.0
  %5338 = vmatprep.subr.mxu0 0.0
  %5339 = vmatpush1.msra.mxu0 0.0
  %5340 = vmatprep.subr.mxu0 0.0
  %5341 = vmatpush1.msra.mxu0 0.0
  %5342 = vmatprep.subr.mxu0 0.0
  %5343 = vmatpush1.msra.mxu0 0.0
  %5344 = vmatprep.subr.mxu0 0.0
  %5345 = vmatpush1.msra.mxu0 0.0
  %5346 = vmatprep.subr.mxu0 0.0
  %5347 = vmatpush1.msra.mxu0 0.0
  %5348 = vmatprep.subr.mxu0 0.0
  %5349 = vmatpush1.msra.mxu0 0.0
  %5350 = vmatprep.subr.mxu0 0.0
  %5351 = vmatpush1.msra.mxu0 0.0
  %5352 = vmatprep.subr.mxu0 0.0
  %5353 = vmatpush1.msra.mxu0 0.0
  %5354 = vmatprep.subr.mxu0 0.0
  %5355 = vmatpush1.msra.mxu0 0.0
  %5356 = vmatprep.subr.mxu0 %v5173
  %5357 = vmatpush1.msra.mxu0 %v5172
  %5358 = vmatprep.subr.mxu0 0.0
  %5359 = vmatpush2.msra.mxu0 0.0
  %5360 = vmatprep.subr.mxu0 0.0
  %5361 = vmatpush2.msra.mxu0 0.0
  %5362 = vmatprep.subr.mxu0 0.0
  %5363 = vmatpush2.msra.mxu0 0.0
  %5364 = vmatprep.subr.mxu0 0.0
  %5365 = vmatpush2.msra.mxu0 0.0
  %5366 = vmatprep.subr.mxu0 0.0
  %5367 = vmatpush2.msra.mxu0 0.0
  %5368 = vmatprep.subr.mxu0 0.0
  %5369 = vmatpush2.msra.mxu0 0.0
  %5370 = vmatprep.subr.mxu0 0.0
  %5371 = vmatpush2.msra.mxu0 0.0
  %5372 = vmatprep.subr.mxu0 0.0
  %5373 = vmatpush2.msra.mxu0 0.0
  %5374 = vmatprep.subr.mxu0 0.0
  %5375 = vmatpush2.msra.mxu0 0.0
  %5376 = vmatprep.subr.mxu0 0.0
  %5377 = vmatpush2.msra.mxu0 0.0
  %5378 = vmatprep.subr.mxu0 0.0
  %5379 = vmatpush2.msra.mxu0 0.0
  %5380 = vmatprep.subr.mxu0 0.0
  %5381 = vmatpush2.msra.mxu0 0.0
  %5382 = vmatprep.subr.mxu0 0.0
  %5383 = vmatpush2.msra.mxu0 0.0
  %5384 = vmatprep.subr.mxu0 0.0
  %5385 = vmatpush2.msra.mxu0 0.0
  %5386 = vmatprep.subr.mxu0 0.0
  %5387 = vmatpush2.msra.mxu0 0.0
  %5388 = vmatprep.subr.mxu0 0.0
  %5389 = vmatpush2.msra.mxu0 0.0
  %5390 = vmatprep.mubr.f32.mxu0 0.0
  %5391 = vmatmul.mubr.f32.gmra.mxu0 %v5182
  %v5392 = vpop.f32.mrf.mxu0
  %v5393 = vadd.f32 0.0, %v5392
  %v5394 = vpop.f32.mrf.mxu0
  %v5395 = vadd.f32 0.0, %v5394
  %5396 = vdwg.mxu0
  %5397 = vmatprep.subr.mxu0 0.0
  %5398 = vmatpush1.msra.mxu0 0.0
  %5399 = vmatprep.subr.mxu0 0.0
  %5400 = vmatpush1.msra.mxu0 0.0
  %5401 = vmatprep.subr.mxu0 0.0
  %5402 = vmatpush1.msra.mxu0 0.0
  %5403 = vmatprep.subr.mxu0 0.0
  %5404 = vmatpush1.msra.mxu0 0.0
  %5405 = vmatprep.subr.mxu0 0.0
  %5406 = vmatpush1.msra.mxu0 0.0
  %5407 = vmatprep.subr.mxu0 0.0
  %5408 = vmatpush1.msra.mxu0 0.0
  %5409 = vmatprep.subr.mxu0 0.0
  %5410 = vmatpush1.msra.mxu0 0.0
  %5411 = vmatprep.subr.mxu0 0.0
  %5412 = vmatpush1.msra.mxu0 0.0
  %5413 = vmatprep.subr.mxu0 0.0
  %5414 = vmatpush1.msra.mxu0 0.0
  %5415 = vmatprep.subr.mxu0 0.0
  %5416 = vmatpush1.msra.mxu0 0.0
  %5417 = vmatprep.subr.mxu0 0.0
  %5418 = vmatpush1.msra.mxu0 0.0
  %5419 = vmatprep.subr.mxu0 0.0
  %5420 = vmatpush1.msra.mxu0 0.0
  %5421 = vmatprep.subr.mxu0 0.0
  %5422 = vmatpush1.msra.mxu0 0.0
  %5423 = vmatprep.subr.mxu0 0.0
  %5424 = vmatpush1.msra.mxu0 0.0
  %5425 = vmatprep.subr.mxu0 0.0
  %5426 = vmatpush1.msra.mxu0 0.0
  %5427 = vmatprep.subr.mxu0 0.0
  %5428 = vmatpush1.msra.mxu0 %v5167
  %5429 = vmatprep.subr.mxu0 0.0
  %5430 = vmatpush2.msra.mxu0 0.0
  %5431 = vmatprep.subr.mxu0 0.0
  %5432 = vmatpush2.msra.mxu0 0.0
  %5433 = vmatprep.subr.mxu0 0.0
  %5434 = vmatpush2.msra.mxu0 0.0
  %5435 = vmatprep.subr.mxu0 0.0
  %5436 = vmatpush2.msra.mxu0 0.0
  %5437 = vmatprep.subr.mxu0 0.0
  %5438 = vmatpush2.msra.mxu0 0.0
  %5439 = vmatprep.subr.mxu0 0.0
  %5440 = vmatpush2.msra.mxu0 0.0
  %5441 = vmatprep.subr.mxu0 0.0
  %5442 = vmatpush2.msra.mxu0 0.0
  %5443 = vmatprep.subr.mxu0 0.0
  %5444 = vmatpush2.msra.mxu0 0.0
  %5445 = vmatprep.subr.mxu0 0.0
  %5446 = vmatpush2.msra.mxu0 0.0
  %5447 = vmatprep.subr.mxu0 0.0
  %5448 = vmatpush2.msra.mxu0 0.0
  %5449 = vmatprep.subr.mxu0 0.0
  %5450 = vmatpush2.msra.mxu0 0.0
  %5451 = vmatprep.subr.mxu0 0.0
  %5452 = vmatpush2.msra.mxu0 0.0
  %5453 = vmatprep.subr.mxu0 0.0
  %5454 = vmatpush2.msra.mxu0 0.0
  %5455 = vmatprep.subr.mxu0 0.0
  %5456 = vmatpush2.msra.mxu0 0.0
  %5457 = vmatprep.subr.mxu0 0.0
  %5458 = vmatpush2.msra.mxu0 0.0
  %5459 = vmatprep.subr.mxu0 0.0
  %5460 = vmatpush2.msra.mxu0 0.0
  %5461 = vmatprep.mubr.f32.mxu0 0.0
  %5462 = vmatmul.mubr.f32.gmra.mxu0 %v5182
  %v5463 = vpop.f32.mrf.mxu0
  %v5464 = vadd.f32 0.0, %v5463
  %v5465 = vpop.f32.mrf.mxu0
  %5466 = vdwg.mxu0
  %v5467 = vadd.f32 %v5145, %v5251
  %v5468 = vadd.f32 %v5146, %v5253
  %v5469 = vadd.f32 %v5147, %v5322
  %v5470 = vadd.f32 %v5148, %v5324
  %v5471 = vadd.f32 %v5149, %v5393
  %v5472 = vadd.f32 %v5150, %v5395
  %v5473 = vadd.f32 %v5151, %v5464
  %s5474 = scalar_lea.vmem %s3, 56
  %v5475 = vld [vmem:[%s5474] sm:$0xff]
  %5476 = vrot.lane.b32.xlu0 %v3221, 66
  %v5477 = vpop.permute.xlu0 %5476
  %5478 = vrot.lane.b32.xlu0 %v3222, 66
  %v5479 = vpop.permute.xlu0 %5478
  %5480 = vrot.lane.b32.xlu0 %v3223, 66
  %v5481 = vpop.permute.xlu0 %5480
  %5482 = vrot.lane.b32.xlu0 %v3224, 66
  %v5483 = vpop.permute.xlu0 %5482
  %5484 = vrot.lane.b32.xlu0 %v3225, 66
  %v5485 = vpop.permute.xlu0 %5484
  %5486 = vrot.lane.b32.xlu0 %v3226, 66
  %v5487 = vpop.permute.xlu0 %5486
  %5488 = vrot.lane.b32.xlu0 %v3227, 66
  %v5489 = vpop.permute.xlu0 %5488
  %v5490 = vsel %vm2448, %v5477, %v5479
  %v5491 = vsel %vm2448, %v5479, %v5481
  %v5492 = vsel %vm2448, %v5481, %v5483
  %v5493 = vsel %vm2448, %v5483, %v5485
  %v5494 = vsel %vm2448, %v5485, %v5487
  %v5495 = vsel %vm2448, %v5487, %v5489
  %v5504 = vsel %vm3264, %v5475, 0
  %5506 = vmatprep.subr.mxu0 0.0
  %5507 = vmatpush1.msra.mxu0 0.0
  %5508 = vmatprep.subr.mxu0 0.0
  %5509 = vmatpush1.msra.mxu0 0.0
  %5510 = vmatprep.subr.mxu0 0.0
  %5511 = vmatpush1.msra.mxu0 0.0
  %5512 = vmatprep.subr.mxu0 0.0
  %5513 = vmatpush1.msra.mxu0 0.0
  %5514 = vmatprep.subr.mxu0 0.0
  %5515 = vmatpush1.msra.mxu0 0.0
  %5516 = vmatprep.subr.mxu0 0.0
  %5517 = vmatpush1.msra.mxu0 0.0
  %5518 = vmatprep.subr.mxu0 0.0
  %5519 = vmatpush1.msra.mxu0 0.0
  %5520 = vmatprep.subr.mxu0 0.0
  %5521 = vmatpush1.msra.mxu0 0.0
  %5522 = vmatprep.subr.mxu0 0.0
  %5523 = vmatpush1.msra.mxu0 0.0
  %5524 = vmatprep.subr.mxu0 0.0
  %5525 = vmatpush1.msra.mxu0 0.0
  %5526 = vmatprep.subr.mxu0 0.0
  %5527 = vmatpush1.msra.mxu0 0.0
  %5528 = vmatprep.subr.mxu0 0.0
  %5529 = vmatpush1.msra.mxu0 0.0
  %5530 = vmatprep.subr.mxu0 0.0
  %5531 = vmatpush1.msra.mxu0 0.0
  %5532 = vmatprep.subr.mxu0 0.0
  %5533 = vmatpush1.msra.mxu0 0.0
  %5534 = vmatprep.subr.mxu0 0.0
  %5535 = vmatpush1.msra.mxu0 0.0
  %5536 = vmatprep.subr.mxu0 %v5491
  %5537 = vmatpush1.msra.mxu0 %v5490
  %5538 = vmatprep.subr.mxu0 0.0
  %5539 = vmatpush2.msra.mxu0 0.0
  %5540 = vmatprep.subr.mxu0 0.0
  %5541 = vmatpush2.msra.mxu0 0.0
  %5542 = vmatprep.subr.mxu0 0.0
  %5543 = vmatpush2.msra.mxu0 0.0
  %5544 = vmatprep.subr.mxu0 0.0
  %5545 = vmatpush2.msra.mxu0 0.0
  %5546 = vmatprep.subr.mxu0 0.0
  %5547 = vmatpush2.msra.mxu0 0.0
  %5548 = vmatprep.subr.mxu0 0.0
  %5549 = vmatpush2.msra.mxu0 0.0
  %5550 = vmatprep.subr.mxu0 0.0
  %5551 = vmatpush2.msra.mxu0 0.0
  %5552 = vmatprep.subr.mxu0 0.0
  %5553 = vmatpush2.msra.mxu0 0.0
  %5554 = vmatprep.subr.mxu0 0.0
  %5555 = vmatpush2.msra.mxu0 0.0
  %5556 = vmatprep.subr.mxu0 0.0
  %5557 = vmatpush2.msra.mxu0 0.0
  %5558 = vmatprep.subr.mxu0 0.0
  %5559 = vmatpush2.msra.mxu0 0.0
  %5560 = vmatprep.subr.mxu0 0.0
  %5561 = vmatpush2.msra.mxu0 0.0
  %5562 = vmatprep.subr.mxu0 0.0
  %5563 = vmatpush2.msra.mxu0 0.0
  %5564 = vmatprep.subr.mxu0 0.0
  %5565 = vmatpush2.msra.mxu0 0.0
  %5566 = vmatprep.subr.mxu0 0.0
  %5567 = vmatpush2.msra.mxu0 0.0
  %5568 = vmatprep.subr.mxu0 0.0
  %5569 = vmatpush2.msra.mxu0 0.0
  %5570 = vmatprep.mubr.f32.mxu0 0.0
  %5571 = vmatmul.mubr.f32.gmra.mxu0 %v5504
  %v5572 = vpop.f32.mrf.mxu0
  %v5573 = vadd.f32 0.0, %v5572
  %v5574 = vpop.f32.mrf.mxu0
  %v5575 = vadd.f32 0.0, %v5574
  %5576 = vdwg.mxu0
  %5577 = vmatprep.subr.mxu0 0.0
  %5578 = vmatpush1.msra.mxu0 0.0
  %5579 = vmatprep.subr.mxu0 0.0
  %5580 = vmatpush1.msra.mxu0 0.0
  %5581 = vmatprep.subr.mxu0 0.0
  %5582 = vmatpush1.msra.mxu0 0.0
  %5583 = vmatprep.subr.mxu0 0.0
  %5584 = vmatpush1.msra.mxu0 0.0
  %5585 = vmatprep.subr.mxu0 0.0
  %5586 = vmatpush1.msra.mxu0 0.0
  %5587 = vmatprep.subr.mxu0 0.0
  %5588 = vmatpush1.msra.mxu0 0.0
  %5589 = vmatprep.subr.mxu0 0.0
  %5590 = vmatpush1.msra.mxu0 0.0
  %5591 = vmatprep.subr.mxu0 0.0
  %5592 = vmatpush1.msra.mxu0 0.0
  %5593 = vmatprep.subr.mxu0 0.0
  %5594 = vmatpush1.msra.mxu0 0.0
  %5595 = vmatprep.subr.mxu0 0.0
  %5596 = vmatpush1.msra.mxu0 0.0
  %5597 = vmatprep.subr.mxu0 0.0
  %5598 = vmatpush1.msra.mxu0 0.0
  %5599 = vmatprep.subr.mxu0 0.0
  %5600 = vmatpush1.msra.mxu0 0.0
  %5601 = vmatprep.subr.mxu0 0.0
  %5602 = vmatpush1.msra.mxu0 0.0
  %5603 = vmatprep.subr.mxu0 0.0
  %5604 = vmatpush1.msra.mxu0 0.0
  %5605 = vmatprep.subr.mxu0 0.0
  %5606 = vmatpush1.msra.mxu0 0.0
  %5607 = vmatprep.subr.mxu0 %v5493
  %5608 = vmatpush1.msra.mxu0 %v5492
  %5609 = vmatprep.subr.mxu0 0.0
  %5610 = vmatpush2.msra.mxu0 0.0
  %5611 = vmatprep.subr.mxu0 0.0
  %5612 = vmatpush2.msra.mxu0 0.0
  %5613 = vmatprep.subr.mxu0 0.0
  %5614 = vmatpush2.msra.mxu0 0.0
  %5615 = vmatprep.subr.mxu0 0.0
  %5616 = vmatpush2.msra.mxu0 0.0
  %5617 = vmatprep.subr.mxu0 0.0
  %5618 = vmatpush2.msra.mxu0 0.0
  %5619 = vmatprep.subr.mxu0 0.0
  %5620 = vmatpush2.msra.mxu0 0.0
  %5621 = vmatprep.subr.mxu0 0.0
  %5622 = vmatpush2.msra.mxu0 0.0
  %5623 = vmatprep.subr.mxu0 0.0
  %5624 = vmatpush2.msra.mxu0 0.0
  %5625 = vmatprep.subr.mxu0 0.0
  %5626 = vmatpush2.msra.mxu0 0.0
  %5627 = vmatprep.subr.mxu0 0.0
  %5628 = vmatpush2.msra.mxu0 0.0
  %5629 = vmatprep.subr.mxu0 0.0
  %5630 = vmatpush2.msra.mxu0 0.0
  %5631 = vmatprep.subr.mxu0 0.0
  %5632 = vmatpush2.msra.mxu0 0.0
  %5633 = vmatprep.subr.mxu0 0.0
  %5634 = vmatpush2.msra.mxu0 0.0
  %5635 = vmatprep.subr.mxu0 0.0
  %5636 = vmatpush2.msra.mxu0 0.0
  %5637 = vmatprep.subr.mxu0 0.0
  %5638 = vmatpush2.msra.mxu0 0.0
  %5639 = vmatprep.subr.mxu0 0.0
  %5640 = vmatpush2.msra.mxu0 0.0
  %5641 = vmatprep.mubr.f32.mxu0 0.0
  %5642 = vmatmul.mubr.f32.gmra.mxu0 %v5504
  %v5643 = vpop.f32.mrf.mxu0
  %v5644 = vadd.f32 0.0, %v5643
  %v5645 = vpop.f32.mrf.mxu0
  %v5646 = vadd.f32 0.0, %v5645
  %5647 = vdwg.mxu0
  %5648 = vmatprep.subr.mxu0 0.0
  %5649 = vmatpush1.msra.mxu0 0.0
  %5650 = vmatprep.subr.mxu0 0.0
  %5651 = vmatpush1.msra.mxu0 0.0
  %5652 = vmatprep.subr.mxu0 0.0
  %5653 = vmatpush1.msra.mxu0 0.0
  %5654 = vmatprep.subr.mxu0 0.0
  %5655 = vmatpush1.msra.mxu0 0.0
  %5656 = vmatprep.subr.mxu0 0.0
  %5657 = vmatpush1.msra.mxu0 0.0
  %5658 = vmatprep.subr.mxu0 0.0
  %5659 = vmatpush1.msra.mxu0 0.0
  %5660 = vmatprep.subr.mxu0 0.0
  %5661 = vmatpush1.msra.mxu0 0.0
  %5662 = vmatprep.subr.mxu0 0.0
  %5663 = vmatpush1.msra.mxu0 0.0
  %5664 = vmatprep.subr.mxu0 0.0
  %5665 = vmatpush1.msra.mxu0 0.0
  %5666 = vmatprep.subr.mxu0 0.0
  %5667 = vmatpush1.msra.mxu0 0.0
  %5668 = vmatprep.subr.mxu0 0.0
  %5669 = vmatpush1.msra.mxu0 0.0
  %5670 = vmatprep.subr.mxu0 0.0
  %5671 = vmatpush1.msra.mxu0 0.0
  %5672 = vmatprep.subr.mxu0 0.0
  %5673 = vmatpush1.msra.mxu0 0.0
  %5674 = vmatprep.subr.mxu0 0.0
  %5675 = vmatpush1.msra.mxu0 0.0
  %5676 = vmatprep.subr.mxu0 0.0
  %5677 = vmatpush1.msra.mxu0 0.0
  %5678 = vmatprep.subr.mxu0 %v5495
  %5679 = vmatpush1.msra.mxu0 %v5494
  %5680 = vmatprep.subr.mxu0 0.0
  %5681 = vmatpush2.msra.mxu0 0.0
  %5682 = vmatprep.subr.mxu0 0.0
  %5683 = vmatpush2.msra.mxu0 0.0
  %5684 = vmatprep.subr.mxu0 0.0
  %5685 = vmatpush2.msra.mxu0 0.0
  %5686 = vmatprep.subr.mxu0 0.0
  %5687 = vmatpush2.msra.mxu0 0.0
  %5688 = vmatprep.subr.mxu0 0.0
  %5689 = vmatpush2.msra.mxu0 0.0
  %5690 = vmatprep.subr.mxu0 0.0
  %5691 = vmatpush2.msra.mxu0 0.0
  %5692 = vmatprep.subr.mxu0 0.0
  %5693 = vmatpush2.msra.mxu0 0.0
  %5694 = vmatprep.subr.mxu0 0.0
  %5695 = vmatpush2.msra.mxu0 0.0
  %5696 = vmatprep.subr.mxu0 0.0
  %5697 = vmatpush2.msra.mxu0 0.0
  %5698 = vmatprep.subr.mxu0 0.0
  %5699 = vmatpush2.msra.mxu0 0.0
  %5700 = vmatprep.subr.mxu0 0.0
  %5701 = vmatpush2.msra.mxu0 0.0
  %5702 = vmatprep.subr.mxu0 0.0
  %5703 = vmatpush2.msra.mxu0 0.0
  %5704 = vmatprep.subr.mxu0 0.0
  %5705 = vmatpush2.msra.mxu0 0.0
  %5706 = vmatprep.subr.mxu0 0.0
  %5707 = vmatpush2.msra.mxu0 0.0
  %5708 = vmatprep.subr.mxu0 0.0
  %5709 = vmatpush2.msra.mxu0 0.0
  %5710 = vmatprep.subr.mxu0 0.0
  %5711 = vmatpush2.msra.mxu0 0.0
  %5712 = vmatprep.mubr.f32.mxu0 0.0
  %5713 = vmatmul.mubr.f32.gmra.mxu0 %v5504
  %v5714 = vpop.f32.mrf.mxu0
  %v5715 = vadd.f32 0.0, %v5714
  %v5716 = vpop.f32.mrf.mxu0
  %v5717 = vadd.f32 0.0, %v5716
  %5718 = vdwg.mxu0
  %5719 = vmatprep.subr.mxu0 0.0
  %5720 = vmatpush1.msra.mxu0 0.0
  %5721 = vmatprep.subr.mxu0 0.0
  %5722 = vmatpush1.msra.mxu0 0.0
  %5723 = vmatprep.subr.mxu0 0.0
  %5724 = vmatpush1.msra.mxu0 0.0
  %5725 = vmatprep.subr.mxu0 0.0
  %5726 = vmatpush1.msra.mxu0 0.0
  %5727 = vmatprep.subr.mxu0 0.0
  %5728 = vmatpush1.msra.mxu0 0.0
  %5729 = vmatprep.subr.mxu0 0.0
  %5730 = vmatpush1.msra.mxu0 0.0
  %5731 = vmatprep.subr.mxu0 0.0
  %5732 = vmatpush1.msra.mxu0 0.0
  %5733 = vmatprep.subr.mxu0 0.0
  %5734 = vmatpush1.msra.mxu0 0.0
  %5735 = vmatprep.subr.mxu0 0.0
  %5736 = vmatpush1.msra.mxu0 0.0
  %5737 = vmatprep.subr.mxu0 0.0
  %5738 = vmatpush1.msra.mxu0 0.0
  %5739 = vmatprep.subr.mxu0 0.0
  %5740 = vmatpush1.msra.mxu0 0.0
  %5741 = vmatprep.subr.mxu0 0.0
  %5742 = vmatpush1.msra.mxu0 0.0
  %5743 = vmatprep.subr.mxu0 0.0
  %5744 = vmatpush1.msra.mxu0 0.0
  %5745 = vmatprep.subr.mxu0 0.0
  %5746 = vmatpush1.msra.mxu0 0.0
  %5747 = vmatprep.subr.mxu0 0.0
  %5748 = vmatpush1.msra.mxu0 0.0
  %5749 = vmatprep.subr.mxu0 0.0
  %5750 = vmatpush1.msra.mxu0 %v5489
  %5751 = vmatprep.subr.mxu0 0.0
  %5752 = vmatpush2.msra.mxu0 0.0
  %5753 = vmatprep.subr.mxu0 0.0
  %5754 = vmatpush2.msra.mxu0 0.0
  %5755 = vmatprep.subr.mxu0 0.0
  %5756 = vmatpush2.msra.mxu0 0.0
  %5757 = vmatprep.subr.mxu0 0.0
  %5758 = vmatpush2.msra.mxu0 0.0
  %5759 = vmatprep.subr.mxu0 0.0
  %5760 = vmatpush2.msra.mxu0 0.0
  %5761 = vmatprep.subr.mxu0 0.0
  %5762 = vmatpush2.msra.mxu0 0.0
  %5763 = vmatprep.subr.mxu0 0.0
  %5764 = vmatpush2.msra.mxu0 0.0
  %5765 = vmatprep.subr.mxu0 0.0
  %5766 = vmatpush2.msra.mxu0 0.0
  %5767 = vmatprep.subr.mxu0 0.0
  %5768 = vmatpush2.msra.mxu0 0.0
  %5769 = vmatprep.subr.mxu0 0.0
  %5770 = vmatpush2.msra.mxu0 0.0
  %5771 = vmatprep.subr.mxu0 0.0
  %5772 = vmatpush2.msra.mxu0 0.0
  %5773 = vmatprep.subr.mxu0 0.0
  %5774 = vmatpush2.msra.mxu0 0.0
  %5775 = vmatprep.subr.mxu0 0.0
  %5776 = vmatpush2.msra.mxu0 0.0
  %5777 = vmatprep.subr.mxu0 0.0
  %5778 = vmatpush2.msra.mxu0 0.0
  %5779 = vmatprep.subr.mxu0 0.0
  %5780 = vmatpush2.msra.mxu0 0.0
  %5781 = vmatprep.subr.mxu0 0.0
  %5782 = vmatpush2.msra.mxu0 0.0
  %5783 = vmatprep.mubr.f32.mxu0 0.0
  %5784 = vmatmul.mubr.f32.gmra.mxu0 %v5504
  %v5785 = vpop.f32.mrf.mxu0
  %v5786 = vadd.f32 0.0, %v5785
  %v5787 = vpop.f32.mrf.mxu0
  %5788 = vdwg.mxu0
  %v5789 = vadd.f32 %v5467, %v5573
  %v5790 = vadd.f32 %v5468, %v5575
  %v5791 = vadd.f32 %v5469, %v5644
  %v5792 = vadd.f32 %v5470, %v5646
  %v5793 = vadd.f32 %v5471, %v5715
  %v5794 = vadd.f32 %v5472, %v5717
  %v5795 = vadd.f32 %v5473, %v5786
  %s5796 = scalar_lea.vmem %s3, 64
  %v5797 = vld [vmem:[%s5796] sm:$0xff]
  %5798 = vrot.lane.b32.xlu0 %v3221, 65
  %v5799 = vpop.permute.xlu0 %5798
  %5800 = vrot.lane.b32.xlu0 %v3222, 65
  %v5801 = vpop.permute.xlu0 %5800
  %5802 = vrot.lane.b32.xlu0 %v3223, 65
  %v5803 = vpop.permute.xlu0 %5802
  %5804 = vrot.lane.b32.xlu0 %v3224, 65
  %v5805 = vpop.permute.xlu0 %5804
  %5806 = vrot.lane.b32.xlu0 %v3225, 65
  %v5807 = vpop.permute.xlu0 %5806
  %5808 = vrot.lane.b32.xlu0 %v3226, 65
  %v5809 = vpop.permute.xlu0 %5808
  %5810 = vrot.lane.b32.xlu0 %v3227, 65
  %v5811 = vpop.permute.xlu0 %5810
  %v5812 = vsel %vm2789, %v5799, %v5801
  %v5813 = vsel %vm2789, %v5801, %v5803
  %v5814 = vsel %vm2789, %v5803, %v5805
  %v5815 = vsel %vm2789, %v5805, %v5807
  %v5816 = vsel %vm2789, %v5807, %v5809
  %v5817 = vsel %vm2789, %v5809, %v5811
  %v5826 = vsel %vm3264, %v5797, 0
  %5828 = vmatprep.subr.mxu0 0.0
  %5829 = vmatpush1.msra.mxu0 0.0
  %5830 = vmatprep.subr.mxu0 0.0
  %5831 = vmatpush1.msra.mxu0 0.0
  %5832 = vmatprep.subr.mxu0 0.0
  %5833 = vmatpush1.msra.mxu0 0.0
  %5834 = vmatprep.subr.mxu0 0.0
  %5835 = vmatpush1.msra.mxu0 0.0
  %5836 = vmatprep.subr.mxu0 0.0
  %5837 = vmatpush1.msra.mxu0 0.0
  %5838 = vmatprep.subr.mxu0 0.0
  %5839 = vmatpush1.msra.mxu0 0.0
  %5840 = vmatprep.subr.mxu0 0.0
  %5841 = vmatpush1.msra.mxu0 0.0
  %5842 = vmatprep.subr.mxu0 0.0
  %5843 = vmatpush1.msra.mxu0 0.0
  %5844 = vmatprep.subr.mxu0 0.0
  %5845 = vmatpush1.msra.mxu0 0.0
  %5846 = vmatprep.subr.mxu0 0.0
  %5847 = vmatpush1.msra.mxu0 0.0
  %5848 = vmatprep.subr.mxu0 0.0
  %5849 = vmatpush1.msra.mxu0 0.0
  %5850 = vmatprep.subr.mxu0 0.0
  %5851 = vmatpush1.msra.mxu0 0.0
  %5852 = vmatprep.subr.mxu0 0.0
  %5853 = vmatpush1.msra.mxu0 0.0
  %5854 = vmatprep.subr.mxu0 0.0
  %5855 = vmatpush1.msra.mxu0 0.0
  %5856 = vmatprep.subr.mxu0 0.0
  %5857 = vmatpush1.msra.mxu0 0.0
  %5858 = vmatprep.subr.mxu0 %v5813
  %5859 = vmatpush1.msra.mxu0 %v5812
  %5860 = vmatprep.subr.mxu0 0.0
  %5861 = vmatpush2.msra.mxu0 0.0
  %5862 = vmatprep.subr.mxu0 0.0
  %5863 = vmatpush2.msra.mxu0 0.0
  %5864 = vmatprep.subr.mxu0 0.0
  %5865 = vmatpush2.msra.mxu0 0.0
  %5866 = vmatprep.subr.mxu0 0.0
  %5867 = vmatpush2.msra.mxu0 0.0
  %5868 = vmatprep.subr.mxu0 0.0
  %5869 = vmatpush2.msra.mxu0 0.0
  %5870 = vmatprep.subr.mxu0 0.0
  %5871 = vmatpush2.msra.mxu0 0.0
  %5872 = vmatprep.subr.mxu0 0.0
  %5873 = vmatpush2.msra.mxu0 0.0
  %5874 = vmatprep.subr.mxu0 0.0
  %5875 = vmatpush2.msra.mxu0 0.0
  %5876 = vmatprep.subr.mxu0 0.0
  %5877 = vmatpush2.msra.mxu0 0.0
  %5878 = vmatprep.subr.mxu0 0.0
  %5879 = vmatpush2.msra.mxu0 0.0
  %5880 = vmatprep.subr.mxu0 0.0
  %5881 = vmatpush2.msra.mxu0 0.0
  %5882 = vmatprep.subr.mxu0 0.0
  %5883 = vmatpush2.msra.mxu0 0.0
  %5884 = vmatprep.subr.mxu0 0.0
  %5885 = vmatpush2.msra.mxu0 0.0
  %5886 = vmatprep.subr.mxu0 0.0
  %5887 = vmatpush2.msra.mxu0 0.0
  %5888 = vmatprep.subr.mxu0 0.0
  %5889 = vmatpush2.msra.mxu0 0.0
  %5890 = vmatprep.subr.mxu0 0.0
  %5891 = vmatpush2.msra.mxu0 0.0
  %5892 = vmatprep.mubr.f32.mxu0 0.0
  %5893 = vmatmul.mubr.f32.gmra.mxu0 %v5826
  %v5894 = vpop.f32.mrf.mxu0
  %v5895 = vadd.f32 0.0, %v5894
  %v5896 = vpop.f32.mrf.mxu0
  %v5897 = vadd.f32 0.0, %v5896
  %5898 = vdwg.mxu0
  %5899 = vmatprep.subr.mxu0 0.0
  %5900 = vmatpush1.msra.mxu0 0.0
  %5901 = vmatprep.subr.mxu0 0.0
  %5902 = vmatpush1.msra.mxu0 0.0
  %5903 = vmatprep.subr.mxu0 0.0
  %5904 = vmatpush1.msra.mxu0 0.0
  %5905 = vmatprep.subr.mxu0 0.0
  %5906 = vmatpush1.msra.mxu0 0.0
  %5907 = vmatprep.subr.mxu0 0.0
  %5908 = vmatpush1.msra.mxu0 0.0
  %5909 = vmatprep.subr.mxu0 0.0
  %5910 = vmatpush1.msra.mxu0 0.0
  %5911 = vmatprep.subr.mxu0 0.0
  %5912 = vmatpush1.msra.mxu0 0.0
  %5913 = vmatprep.subr.mxu0 0.0
  %5914 = vmatpush1.msra.mxu0 0.0
  %5915 = vmatprep.subr.mxu0 0.0
  %5916 = vmatpush1.msra.mxu0 0.0
  %5917 = vmatprep.subr.mxu0 0.0
  %5918 = vmatpush1.msra.mxu0 0.0
  %5919 = vmatprep.subr.mxu0 0.0
  %5920 = vmatpush1.msra.mxu0 0.0
  %5921 = vmatprep.subr.mxu0 0.0
  %5922 = vmatpush1.msra.mxu0 0.0
  %5923 = vmatprep.subr.mxu0 0.0
  %5924 = vmatpush1.msra.mxu0 0.0
  %5925 = vmatprep.subr.mxu0 0.0
  %5926 = vmatpush1.msra.mxu0 0.0
  %5927 = vmatprep.subr.mxu0 0.0
  %5928 = vmatpush1.msra.mxu0 0.0
  %5929 = vmatprep.subr.mxu0 %v5815
  %5930 = vmatpush1.msra.mxu0 %v5814
  %5931 = vmatprep.subr.mxu0 0.0
  %5932 = vmatpush2.msra.mxu0 0.0
  %5933 = vmatprep.subr.mxu0 0.0
  %5934 = vmatpush2.msra.mxu0 0.0
  %5935 = vmatprep.subr.mxu0 0.0
  %5936 = vmatpush2.msra.mxu0 0.0
  %5937 = vmatprep.subr.mxu0 0.0
  %5938 = vmatpush2.msra.mxu0 0.0
  %5939 = vmatprep.subr.mxu0 0.0
  %5940 = vmatpush2.msra.mxu0 0.0
  %5941 = vmatprep.subr.mxu0 0.0
  %5942 = vmatpush2.msra.mxu0 0.0
  %5943 = vmatprep.subr.mxu0 0.0
  %5944 = vmatpush2.msra.mxu0 0.0
  %5945 = vmatprep.subr.mxu0 0.0
  %5946 = vmatpush2.msra.mxu0 0.0
  %5947 = vmatprep.subr.mxu0 0.0
  %5948 = vmatpush2.msra.mxu0 0.0
  %5949 = vmatprep.subr.mxu0 0.0
  %5950 = vmatpush2.msra.mxu0 0.0
  %5951 = vmatprep.subr.mxu0 0.0
  %5952 = vmatpush2.msra.mxu0 0.0
  %5953 = vmatprep.subr.mxu0 0.0
  %5954 = vmatpush2.msra.mxu0 0.0
  %5955 = vmatprep.subr.mxu0 0.0
  %5956 = vmatpush2.msra.mxu0 0.0
  %5957 = vmatprep.subr.mxu0 0.0
  %5958 = vmatpush2.msra.mxu0 0.0
  %5959 = vmatprep.subr.mxu0 0.0
  %5960 = vmatpush2.msra.mxu0 0.0
  %5961 = vmatprep.subr.mxu0 0.0
  %5962 = vmatpush2.msra.mxu0 0.0
  %5963 = vmatprep.mubr.f32.mxu0 0.0
  %5964 = vmatmul.mubr.f32.gmra.mxu0 %v5826
  %v5965 = vpop.f32.mrf.mxu0
  %v5966 = vadd.f32 0.0, %v5965
  %v5967 = vpop.f32.mrf.mxu0
  %v5968 = vadd.f32 0.0, %v5967
  %5969 = vdwg.mxu0
  %5970 = vmatprep.subr.mxu0 0.0
  %5971 = vmatpush1.msra.mxu0 0.0
  %5972 = vmatprep.subr.mxu0 0.0
  %5973 = vmatpush1.msra.mxu0 0.0
  %5974 = vmatprep.subr.mxu0 0.0
  %5975 = vmatpush1.msra.mxu0 0.0
  %5976 = vmatprep.subr.mxu0 0.0
  %5977 = vmatpush1.msra.mxu0 0.0
  %5978 = vmatprep.subr.mxu0 0.0
  %5979 = vmatpush1.msra.mxu0 0.0
  %5980 = vmatprep.subr.mxu0 0.0
  %5981 = vmatpush1.msra.mxu0 0.0
  %5982 = vmatprep.subr.mxu0 0.0
  %5983 = vmatpush1.msra.mxu0 0.0
  %5984 = vmatprep.subr.mxu0 0.0
  %5985 = vmatpush1.msra.mxu0 0.0
  %5986 = vmatprep.subr.mxu0 0.0
  %5987 = vmatpush1.msra.mxu0 0.0
  %5988 = vmatprep.subr.mxu0 0.0
  %5989 = vmatpush1.msra.mxu0 0.0
  %5990 = vmatprep.subr.mxu0 0.0
  %5991 = vmatpush1.msra.mxu0 0.0
  %5992 = vmatprep.subr.mxu0 0.0
  %5993 = vmatpush1.msra.mxu0 0.0
  %5994 = vmatprep.subr.mxu0 0.0
  %5995 = vmatpush1.msra.mxu0 0.0
  %5996 = vmatprep.subr.mxu0 0.0
  %5997 = vmatpush1.msra.mxu0 0.0
  %5998 = vmatprep.subr.mxu0 0.0
  %5999 = vmatpush1.msra.mxu0 0.0
  %6000 = vmatprep.subr.mxu0 %v5817
  %6001 = vmatpush1.msra.mxu0 %v5816
  %6002 = vmatprep.subr.mxu0 0.0
  %6003 = vmatpush2.msra.mxu0 0.0
  %6004 = vmatprep.subr.mxu0 0.0
  %6005 = vmatpush2.msra.mxu0 0.0
  %6006 = vmatprep.subr.mxu0 0.0
  %6007 = vmatpush2.msra.mxu0 0.0
  %6008 = vmatprep.subr.mxu0 0.0
  %6009 = vmatpush2.msra.mxu0 0.0
  %6010 = vmatprep.subr.mxu0 0.0
  %6011 = vmatpush2.msra.mxu0 0.0
  %6012 = vmatprep.subr.mxu0 0.0
  %6013 = vmatpush2.msra.mxu0 0.0
  %6014 = vmatprep.subr.mxu0 0.0
  %6015 = vmatpush2.msra.mxu0 0.0
  %6016 = vmatprep.subr.mxu0 0.0
  %6017 = vmatpush2.msra.mxu0 0.0
  %6018 = vmatprep.subr.mxu0 0.0
  %6019 = vmatpush2.msra.mxu0 0.0
  %6020 = vmatprep.subr.mxu0 0.0
  %6021 = vmatpush2.msra.mxu0 0.0
  %6022 = vmatprep.subr.mxu0 0.0
  %6023 = vmatpush2.msra.mxu0 0.0
  %6024 = vmatprep.subr.mxu0 0.0
  %6025 = vmatpush2.msra.mxu0 0.0
  %6026 = vmatprep.subr.mxu0 0.0
  %6027 = vmatpush2.msra.mxu0 0.0
  %6028 = vmatprep.subr.mxu0 0.0
  %6029 = vmatpush2.msra.mxu0 0.0
  %6030 = vmatprep.subr.mxu0 0.0
  %6031 = vmatpush2.msra.mxu0 0.0
  %6032 = vmatprep.subr.mxu0 0.0
  %6033 = vmatpush2.msra.mxu0 0.0
  %6034 = vmatprep.mubr.f32.mxu0 0.0
  %6035 = vmatmul.mubr.f32.gmra.mxu0 %v5826
  %v6036 = vpop.f32.mrf.mxu0
  %v6037 = vadd.f32 0.0, %v6036
  %v6038 = vpop.f32.mrf.mxu0
  %v6039 = vadd.f32 0.0, %v6038
  %6040 = vdwg.mxu0
  %6041 = vmatprep.subr.mxu0 0.0
  %6042 = vmatpush1.msra.mxu0 0.0
  %6043 = vmatprep.subr.mxu0 0.0
  %6044 = vmatpush1.msra.mxu0 0.0
  %6045 = vmatprep.subr.mxu0 0.0
  %6046 = vmatpush1.msra.mxu0 0.0
  %6047 = vmatprep.subr.mxu0 0.0
  %6048 = vmatpush1.msra.mxu0 0.0
  %6049 = vmatprep.subr.mxu0 0.0
  %6050 = vmatpush1.msra.mxu0 0.0
  %6051 = vmatprep.subr.mxu0 0.0
  %6052 = vmatpush1.msra.mxu0 0.0
  %6053 = vmatprep.subr.mxu0 0.0
  %6054 = vmatpush1.msra.mxu0 0.0
  %6055 = vmatprep.subr.mxu0 0.0
  %6056 = vmatpush1.msra.mxu0 0.0
  %6057 = vmatprep.subr.mxu0 0.0
  %6058 = vmatpush1.msra.mxu0 0.0
  %6059 = vmatprep.subr.mxu0 0.0
  %6060 = vmatpush1.msra.mxu0 0.0
  %6061 = vmatprep.subr.mxu0 0.0
  %6062 = vmatpush1.msra.mxu0 0.0
  %6063 = vmatprep.subr.mxu0 0.0
  %6064 = vmatpush1.msra.mxu0 0.0
  %6065 = vmatprep.subr.mxu0 0.0
  %6066 = vmatpush1.msra.mxu0 0.0
  %6067 = vmatprep.subr.mxu0 0.0
  %6068 = vmatpush1.msra.mxu0 0.0
  %6069 = vmatprep.subr.mxu0 0.0
  %6070 = vmatpush1.msra.mxu0 0.0
  %6071 = vmatprep.subr.mxu0 0.0
  %6072 = vmatpush1.msra.mxu0 %v5811
  %6073 = vmatprep.subr.mxu0 0.0
  %6074 = vmatpush2.msra.mxu0 0.0
  %6075 = vmatprep.subr.mxu0 0.0
  %6076 = vmatpush2.msra.mxu0 0.0
  %6077 = vmatprep.subr.mxu0 0.0
  %6078 = vmatpush2.msra.mxu0 0.0
  %6079 = vmatprep.subr.mxu0 0.0
  %6080 = vmatpush2.msra.mxu0 0.0
  %6081 = vmatprep.subr.mxu0 0.0
  %6082 = vmatpush2.msra.mxu0 0.0
  %6083 = vmatprep.subr.mxu0 0.0
  %6084 = vmatpush2.msra.mxu0 0.0
  %6085 = vmatprep.subr.mxu0 0.0
  %6086 = vmatpush2.msra.mxu0 0.0
  %6087 = vmatprep.subr.mxu0 0.0
  %6088 = vmatpush2.msra.mxu0 0.0
  %6089 = vmatprep.subr.mxu0 0.0
  %6090 = vmatpush2.msra.mxu0 0.0
  %6091 = vmatprep.subr.mxu0 0.0
  %6092 = vmatpush2.msra.mxu0 0.0
  %6093 = vmatprep.subr.mxu0 0.0
  %6094 = vmatpush2.msra.mxu0 0.0
  %6095 = vmatprep.subr.mxu0 0.0
  %6096 = vmatpush2.msra.mxu0 0.0
  %6097 = vmatprep.subr.mxu0 0.0
  %6098 = vmatpush2.msra.mxu0 0.0
  %6099 = vmatprep.subr.mxu0 0.0
  %6100 = vmatpush2.msra.mxu0 0.0
  %6101 = vmatprep.subr.mxu0 0.0
  %6102 = vmatpush2.msra.mxu0 0.0
  %6103 = vmatprep.subr.mxu0 0.0
  %6104 = vmatpush2.msra.mxu0 0.0
  %6105 = vmatprep.mubr.f32.mxu0 0.0
  %6106 = vmatmul.mubr.f32.gmra.mxu0 %v5826
  %v6107 = vpop.f32.mrf.mxu0
  %v6108 = vadd.f32 0.0, %v6107
  %v6109 = vpop.f32.mrf.mxu0
  %6110 = vdwg.mxu0
  %v6111 = vadd.f32 %v5789, %v5895
  %v6112 = vadd.f32 %v5790, %v5897
  %v6113 = vadd.f32 %v5791, %v5966
  %v6114 = vadd.f32 %v5792, %v5968
  %v6115 = vadd.f32 %v5793, %v6037
  %v6116 = vadd.f32 %v5794, %v6039
  %v6117 = vadd.f32 %v5795, %v6108
  %v6118 = vld [vmem:[%s4] sm:$0xff]
  %6120 = vset.pattern.permute.xlu0 0
  %6121 = vperm.xlu0 %6120, %v6118
  %v6122 = vpop.permute.xlu0 %6121
  %v6124 = vadd.f32 %v6111, %v6122
  %v6125 = vadd.f32 %v6112, %v6122
  %v6126 = vadd.f32 %v6113, %v6122
  %v6127 = vadd.f32 %v6114, %v6122
  %v6128 = vadd.f32 %v6115, %v6122
  %v6129 = vadd.f32 %v6116, %v6122
  %v6130 = vadd.f32 %v6117, %v6122
  %v6131 = vmul.f32 %v6124, 0.01
  %v6132 = vmul.f32 %v6125, 0.01
  %v6133 = vmul.f32 %v6126, 0.01
  %v6134 = vmul.f32 %v6127, 0.01
  %v6135 = vmul.f32 %v6128, 0.01
  %v6136 = vmul.f32 %v6129, 0.01
  %v6137 = vmul.f32 %v6130, 0.01
  %v6138 = vmax.f32 %v6124, %v6131
  %v6139 = vmax.f32 %v6125, %v6132
  %v6140 = vmax.f32 %v6126, %v6133
  %v6141 = vmax.f32 %v6127, %v6134
  %v6142 = vmax.f32 %v6128, %v6135
  %v6143 = vmax.f32 %v6129, %v6136
  %v6144 = vmax.f32 %v6130, %v6137
  %6145 = vst.msk [vmem:[#allocation3] sm:$0xff] %vm3173, 0.0
  %6146 = vst.msk [vmem:[#allocation3 + $0x30] sm:$0xff] %vm3175, 0.0
  %6154 = vrot.lane.b32.xlu0 %v6138, 42
  %v6155 = vpop.permute.xlu0 %6154
  %6156 = vrot.lane.b32.xlu0 %v6139, 42
  %v6157 = vpop.permute.xlu0 %6156
  %6158 = vrot.lane.b32.xlu0 %v6140, 42
  %v6159 = vpop.permute.xlu0 %6158
  %6160 = vrot.lane.b32.xlu0 %v6141, 42
  %v6161 = vpop.permute.xlu0 %6160
  %6162 = vrot.lane.b32.xlu0 %v6142, 42
  %v6163 = vpop.permute.xlu0 %6162
  %6164 = vrot.lane.b32.xlu0 %v6143, 42
  %v6165 = vpop.permute.xlu0 %6164
  %6166 = vrot.lane.b32.xlu0 %v6144, 42
  %v6167 = vpop.permute.xlu0 %6166
  %v6168 = vsel %vm3173, %v6155, %v6157
  %v6169 = vsel %vm3173, %v6157, %v6159
  %v6170 = vsel %vm3173, %v6159, %v6161
  %v6171 = vsel %vm3173, %v6161, %v6163
  %v6172 = vsel %vm3173, %v6163, %v6165
  %v6173 = vsel %vm3173, %v6165, %v6167
  %6181 = vst.msk [vmem:[#allocation3] sm:$0xff] %vm3211, %v6155
  %6182 = vst [vmem:[#allocation3 + $0x8] sm:$0xff] %v6168
  %6183 = vst [vmem:[#allocation3 + $0x10] sm:$0xff] %v6169
  %6184 = vst [vmem:[#allocation3 + $0x18] sm:$0xff] %v6170
  %6185 = vst [vmem:[#allocation3 + $0x20] sm:$0xff] %v6171
  %6186 = vst [vmem:[#allocation3 + $0x28] sm:$0xff] %v6172
  %6187 = vst.msk [vmem:[#allocation3 + $0x30] sm:$0xff] %vm3218, %v6173
  %v6188 = vld [vmem:[#allocation3] sm:$0xff]
  %v6189 = vld [vmem:[#allocation3 + $0x8] sm:$0xff]
  %v6190 = vld [vmem:[#allocation3 + $0x10] sm:$0xff]
  %v6191 = vld [vmem:[#allocation3 + $0x18] sm:$0xff]
  %v6192 = vld [vmem:[#allocation3 + $0x20] sm:$0xff]
  %v6193 = vld [vmem:[#allocation3 + $0x28] sm:$0xff]
  %v6194 = vld [vmem:[#allocation3 + $0x30] sm:$0xff]
  %6202 = vrot.lane.b32.xlu0 %v6188, 85
  %v6203 = vpop.permute.xlu0 %6202
  %6204 = vrot.lane.b32.xlu0 %v6189, 85
  %v6205 = vpop.permute.xlu0 %6204
  %6206 = vrot.lane.b32.xlu0 %v6190, 85
  %v6207 = vpop.permute.xlu0 %6206
  %6208 = vrot.lane.b32.xlu0 %v6191, 85
  %v6209 = vpop.permute.xlu0 %6208
  %6210 = vrot.lane.b32.xlu0 %v6192, 85
  %v6211 = vpop.permute.xlu0 %6210
  %6212 = vrot.lane.b32.xlu0 %v6193, 85
  %v6213 = vpop.permute.xlu0 %6212
  %6214 = vrot.lane.b32.xlu0 %v6194, 85
  %v6215 = vpop.permute.xlu0 %6214
  %v6216 = vsel %vm1766, %v6203, %v6205
  %v6217 = vsel %vm1766, %v6205, %v6207
  %v6218 = vsel %vm1766, %v6207, %v6209
  %v6219 = vsel %vm1766, %v6209, %v6211
  %v6220 = vsel %vm1766, %v6211, %v6213
  %v6221 = vsel %vm1766, %v6213, %v6215
  %v6229 = vmax.f32 %v6138, %v6216
  %v6230 = vmax.f32 %v6139, %v6217
  %v6231 = vmax.f32 %v6140, %v6218
  %v6232 = vmax.f32 %v6141, %v6219
  %v6233 = vmax.f32 %v6142, %v6220
  %v6234 = vmax.f32 %v6143, %v6221
  %v6235 = vmax.f32 %v6144, %v6215
  %6236 = vrot.lane.b32.xlu0 %v6188, 84
  %v6237 = vpop.permute.xlu0 %6236
  %6238 = vrot.lane.b32.xlu0 %v6189, 84
  %v6239 = vpop.permute.xlu0 %6238
  %6240 = vrot.lane.b32.xlu0 %v6190, 84
  %v6241 = vpop.permute.xlu0 %6240
  %6242 = vrot.lane.b32.xlu0 %v6191, 84
  %v6243 = vpop.permute.xlu0 %6242
  %6244 = vrot.lane.b32.xlu0 %v6192, 84
  %v6245 = vpop.permute.xlu0 %6244
  %6246 = vrot.lane.b32.xlu0 %v6193, 84
  %v6247 = vpop.permute.xlu0 %6246
  %6248 = vrot.lane.b32.xlu0 %v6194, 84
  %v6249 = vpop.permute.xlu0 %6248
  %vm6250 = vcmask 687104
  %v6251 = vsel %vm6250, %v6237, %v6239
  %v6252 = vsel %vm6250, %v6239, %v6241
  %v6253 = vsel %vm6250, %v6241, %v6243
  %v6254 = vsel %vm6250, %v6243, %v6245
  %v6255 = vsel %vm6250, %v6245, %v6247
  %v6256 = vsel %vm6250, %v6247, %v6249
  %v6264 = vmax.f32 %v6229, %v6251
  %v6265 = vmax.f32 %v6230, %v6252
  %v6266 = vmax.f32 %v6231, %v6253
  %v6267 = vmax.f32 %v6232, %v6254
  %v6268 = vmax.f32 %v6233, %v6255
  %v6269 = vmax.f32 %v6234, %v6256
  %v6270 = vmax.f32 %v6235, %v6249
  %6271 = vrot.lane.b32.xlu0 %v6188, 66
  %v6272 = vpop.permute.xlu0 %6271
  %6273 = vrot.lane.b32.xlu0 %v6189, 66
  %v6274 = vpop.permute.xlu0 %6273
  %6275 = vrot.lane.b32.xlu0 %v6190, 66
  %v6276 = vpop.permute.xlu0 %6275
  %6277 = vrot.lane.b32.xlu0 %v6191, 66
  %v6278 = vpop.permute.xlu0 %6277
  %6279 = vrot.lane.b32.xlu0 %v6192, 66
  %v6280 = vpop.permute.xlu0 %6279
  %6281 = vrot.lane.b32.xlu0 %v6193, 66
  %v6282 = vpop.permute.xlu0 %6281
  %6283 = vrot.lane.b32.xlu0 %v6194, 66
  %v6284 = vpop.permute.xlu0 %6283
  %v6285 = vsel %vm2448, %v6272, %v6274
  %v6286 = vsel %vm2448, %v6274, %v6276
  %v6287 = vsel %vm2448, %v6276, %v6278
  %v6288 = vsel %vm2448, %v6278, %v6280
  %v6289 = vsel %vm2448, %v6280, %v6282
  %v6290 = vsel %vm2448, %v6282, %v6284
  %v6298 = vmax.f32 %v6264, %v6285
  %v6299 = vmax.f32 %v6265, %v6286
  %v6300 = vmax.f32 %v6266, %v6287
  %v6301 = vmax.f32 %v6267, %v6288
  %v6302 = vmax.f32 %v6268, %v6289
  %v6303 = vmax.f32 %v6269, %v6290
  %v6304 = vmax.f32 %v6270, %v6284
  %6305 = vrot.lane.b32.xlu0 %v6188, 65
  %v6306 = vpop.permute.xlu0 %6305
  %6307 = vrot.lane.b32.xlu0 %v6189, 65
  %v6308 = vpop.permute.xlu0 %6307
  %6309 = vrot.lane.b32.xlu0 %v6190, 65
  %v6310 = vpop.permute.xlu0 %6309
  %6311 = vrot.lane.b32.xlu0 %v6191, 65
  %v6312 = vpop.permute.xlu0 %6311
  %6313 = vrot.lane.b32.xlu0 %v6192, 65
  %v6314 = vpop.permute.xlu0 %6313
  %6315 = vrot.lane.b32.xlu0 %v6193, 65
  %v6316 = vpop.permute.xlu0 %6315
  %6317 = vrot.lane.b32.xlu0 %v6194, 65
  %v6318 = vpop.permute.xlu0 %6317
  %v6319 = vsel %vm2789, %v6306, %v6308
  %v6320 = vsel %vm2789, %v6308, %v6310
  %v6321 = vsel %vm2789, %v6310, %v6312
  %v6322 = vsel %vm2789, %v6312, %v6314
  %v6323 = vsel %vm2789, %v6314, %v6316
  %v6324 = vsel %vm2789, %v6316, %v6318
  %v6332 = vmax.f32 %v6298, %v6319
  %v6333 = vmax.f32 %v6299, %v6320
  %v6334 = vmax.f32 %v6300, %v6321
  %v6335 = vmax.f32 %v6301, %v6322
  %v6336 = vmax.f32 %v6302, %v6323
  %v6337 = vmax.f32 %v6303, %v6324
  %v6338 = vmax.f32 %v6304, %v6318
  %6339 = vrot.lane.b32.xlu0 %v6188, 64
  %v6340 = vpop.permute.xlu0 %6339
  %6341 = vrot.lane.b32.xlu0 %v6189, 64
  %v6342 = vpop.permute.xlu0 %6341
  %6343 = vrot.lane.b32.xlu0 %v6190, 64
  %v6344 = vpop.permute.xlu0 %6343
  %6345 = vrot.lane.b32.xlu0 %v6191, 64
  %v6346 = vpop.permute.xlu0 %6345
  %6347 = vrot.lane.b32.xlu0 %v6192, 64
  %v6348 = vpop.permute.xlu0 %6347
  %6349 = vrot.lane.b32.xlu0 %v6193, 64
  %v6350 = vpop.permute.xlu0 %6349
  %6351 = vrot.lane.b32.xlu0 %v6194, 64
  %v6352 = vpop.permute.xlu0 %6351
  %vm6353 = vcmask 523264
  %v6354 = vsel %vm6353, %v6340, %v6342
  %v6355 = vsel %vm6353, %v6342, %v6344
  %v6356 = vsel %vm6353, %v6344, %v6346
  %v6357 = vsel %vm6353, %v6346, %v6348
  %v6358 = vsel %vm6353, %v6348, %v6350
  %v6359 = vsel %vm6353, %v6350, %v6352
  %v6367 = vmax.f32 %v6332, %v6354
  %v6368 = vmax.f32 %v6333, %v6355
  %v6369 = vmax.f32 %v6334, %v6356
  %v6370 = vmax.f32 %v6335, %v6357
  %v6371 = vmax.f32 %v6336, %v6358
  %v6372 = vmax.f32 %v6337, %v6359
  %v6373 = vmax.f32 %v6338, %v6352
  %6374 = vrot.lane.b32.xlu0 %v6188, 46
  %v6375 = vpop.permute.xlu0 %6374
  %6376 = vrot.lane.b32.xlu0 %v6189, 46
  %v6377 = vpop.permute.xlu0 %6376
  %6378 = vrot.lane.b32.xlu0 %v6190, 46
  %v6379 = vpop.permute.xlu0 %6378
  %6380 = vrot.lane.b32.xlu0 %v6191, 46
  %v6381 = vpop.permute.xlu0 %6380
  %6382 = vrot.lane.b32.xlu0 %v6192, 46
  %v6383 = vpop.permute.xlu0 %6382
  %6384 = vrot.lane.b32.xlu0 %v6193, 46
  %v6385 = vpop.permute.xlu0 %6384
  %6386 = vrot.lane.b32.xlu0 %v6194, 46
  %v6387 = vpop.permute.xlu0 %6386
  %vm6388 = vcmask 375808
  %v6389 = vsel %vm6388, %v6375, %v6377
  %v6390 = vsel %vm6388, %v6377, %v6379
  %v6391 = vsel %vm6388, %v6379, %v6381
  %v6392 = vsel %vm6388, %v6381, %v6383
  %v6393 = vsel %vm6388, %v6383, %v6385
  %v6394 = vsel %vm6388, %v6385, %v6387
  %v6402 = vmax.f32 %v6367, %v6389
  %v6403 = vmax.f32 %v6368, %v6390
  %v6404 = vmax.f32 %v6369, %v6391
  %v6405 = vmax.f32 %v6370, %v6392
  %v6406 = vmax.f32 %v6371, %v6393
  %v6407 = vmax.f32 %v6372, %v6394
  %v6408 = vmax.f32 %v6373, %v6387
  %6409 = vrot.lane.b32.xlu0 %v6188, 45
  %v6410 = vpop.permute.xlu0 %6409
  %6411 = vrot.lane.b32.xlu0 %v6189, 45
  %v6412 = vpop.permute.xlu0 %6411
  %6413 = vrot.lane.b32.xlu0 %v6190, 45
  %v6414 = vpop.permute.xlu0 %6413
  %6415 = vrot.lane.b32.xlu0 %v6191, 45
  %v6416 = vpop.permute.xlu0 %6415
  %6417 = vrot.lane.b32.xlu0 %v6192, 45
  %v6418 = vpop.permute.xlu0 %6417
  %6419 = vrot.lane.b32.xlu0 %v6193, 45
  %v6420 = vpop.permute.xlu0 %6419
  %6421 = vrot.lane.b32.xlu0 %v6194, 45
  %v6422 = vpop.permute.xlu0 %6421
  %vm6423 = vcmask 367616
  %v6424 = vsel %vm6423, %v6410, %v6412
  %v6425 = vsel %vm6423, %v6412, %v6414
  %v6426 = vsel %vm6423, %v6414, %v6416
  %v6427 = vsel %vm6423, %v6416, %v6418
  %v6428 = vsel %vm6423, %v6418, %v6420
  %v6429 = vsel %vm6423, %v6420, %v6422
  %v6437 = vmax.f32 %v6402, %v6424
  %v6438 = vmax.f32 %v6403, %v6425
  %v6439 = vmax.f32 %v6404, %v6426
  %v6440 = vmax.f32 %v6405, %v6427
  %v6441 = vmax.f32 %v6406, %v6428
  %v6442 = vmax.f32 %v6407, %v6429
  %v6443 = vmax.f32 %v6408, %v6422
  %6444 = vrot.lane.b32.xlu0 %v6188, 44
  %v6445 = vpop.permute.xlu0 %6444
  %6446 = vrot.lane.b32.xlu0 %v6189, 44
  %v6447 = vpop.permute.xlu0 %6446
  %6448 = vrot.lane.b32.xlu0 %v6190, 44
  %v6449 = vpop.permute.xlu0 %6448
  %6450 = vrot.lane.b32.xlu0 %v6191, 44
  %v6451 = vpop.permute.xlu0 %6450
  %6452 = vrot.lane.b32.xlu0 %v6192, 44
  %v6453 = vpop.permute.xlu0 %6452
  %6454 = vrot.lane.b32.xlu0 %v6193, 44
  %v6455 = vpop.permute.xlu0 %6454
  %6456 = vrot.lane.b32.xlu0 %v6194, 44
  %v6457 = vpop.permute.xlu0 %6456
  %vm6458 = vcmask 359424
  %v6459 = vsel %vm6458, %v6445, %v6447
  %v6460 = vsel %vm6458, %v6447, %v6449
  %v6461 = vsel %vm6458, %v6449, %v6451
  %v6462 = vsel %vm6458, %v6451, %v6453
  %v6463 = vsel %vm6458, %v6453, %v6455
  %v6464 = vsel %vm6458, %v6455, %v6457
  %v6472 = vmax.f32 %v6437, %v6459
  %v6473 = vmax.f32 %v6438, %v6460
  %v6474 = vmax.f32 %v6439, %v6461
  %v6475 = vmax.f32 %v6440, %v6462
  %v6476 = vmax.f32 %v6441, %v6463
  %v6477 = vmax.f32 %v6442, %v6464
  %v6478 = vmax.f32 %v6443, %v6457
  %v6479 = vld [vmem:[%s8] sm:$0xff]
  %v6480 = vld [vmem:[%s8 + $0x8] sm:$0xff]
  %v6481 = vld [vmem:[%s8 + $0x10] sm:$0xff]
  %v6482 = vld [vmem:[%s8 + $0x18] sm:$0xff]
  %v6483 = vld [vmem:[%s8 + $0x20] sm:$0xff]
  %v6484 = vld [vmem:[%s8 + $0x28] sm:$0xff]
  %v6485 = vld [vmem:[%s8 + $0x30] sm:$0xff]
  %v6486 = vld [vmem:[%s8 + $0x38] sm:$0xff]
  %v6487 = vld [vmem:[%s8 + $0x40] sm:$0xff]
  %v6488 = vld [vmem:[%s8 + $0x48] sm:$0xff]
  %v6489 = vld [vmem:[%s8 + $0x50] sm:$0xff]
  %v6490 = vld [vmem:[%s8 + $0x58] sm:$0xff]
  %v6491 = vld [vmem:[%s8 + $0x60] sm:$0xff]
  %v6492 = vld [vmem:[%s8 + $0x68] sm:$0xff]
  %v6493 = vld [vmem:[%s8 + $0x70] sm:$0xff]
  %v6494 = vld [vmem:[%s8 + $0x78] sm:$0xff]
  %v6495 = vld [vmem:[%s8 + $0x80] sm:$0xff]
  %v6496 = vld [vmem:[%s8 + $0x88] sm:$0xff]
  %v6497 = vld [vmem:[%s8 + $0x90] sm:$0xff]
  %v6498 = vld [vmem:[%s8 + $0x98] sm:$0xff]
  %v6499 = vld [vmem:[%s8 + $0xa0] sm:$0xff]
  %v6500 = vld [vmem:[%s8 + $0xa8] sm:$0xff]
  %v6501 = vld [vmem:[%s8 + $0xb0] sm:$0xff]
  %v6502 = vld [vmem:[%s8 + $0xb8] sm:$0xff]
  %v6503 = vld [vmem:[%s8 + $0xc0] sm:$0xff]
  %v6504 = vld [vmem:[%s8 + $0xc8] sm:$0xff]
  %v6505 = vld [vmem:[%s8 + $0xd0] sm:$0xff]
  %v6506 = vld [vmem:[%s8 + $0xd8] sm:$0xff]
  %v6507 = vld [vmem:[%s8 + $0xe0] sm:$0xff]
  %v6508 = vld [vmem:[%s8 + $0xe8] sm:$0xff]
  %v6509 = vld [vmem:[%s8 + $0xf0] sm:$0xff]
  %v6510 = vld [vmem:[%s8 + $0xf8] sm:$0xff]
  %v6511 = vld [vmem:[%s8 + $0x100] sm:$0xff]
  %v6512 = vld [vmem:[%s8 + $0x108] sm:$0xff]
  %v6513 = vld [vmem:[%s8 + $0x110] sm:$0xff]
  %v6514 = vld [vmem:[%s8 + $0x118] sm:$0xff]
  %v6515 = vld [vmem:[%s8 + $0x120] sm:$0xff]
  %v6516 = vld [vmem:[%s8 + $0x128] sm:$0xff]
  %v6517 = vld [vmem:[%s8 + $0x130] sm:$0xff]
  %v6518 = vld [vmem:[%s8 + $0x138] sm:$0xff]
  %v6519 = vld [vmem:[%s8 + $0x140] sm:$0xff]
  %v6520 = vld [vmem:[%s8 + $0x148] sm:$0xff]
  %v6521 = vld [vmem:[%s8 + $0x150] sm:$0xff]
  %v6522 = vld [vmem:[%s8 + $0x158] sm:$0xff]
  %v6523 = vld [vmem:[%s8 + $0x160] sm:$0xff]
  %v6524 = vld [vmem:[%s8 + $0x168] sm:$0xff]
  %v6525 = vld [vmem:[%s8 + $0x170] sm:$0xff]
  %v6526 = vld [vmem:[%s8 + $0x178] sm:$0xff]
  %v6527 = vld [vmem:[%s8 + $0x180] sm:$0xff]
  %v6528 = vld [vmem:[%s8 + $0x188] sm:$0xff]
  %v6529 = vld [vmem:[%s8 + $0x190] sm:$0xff]
  %v6530 = vld [vmem:[%s8 + $0x198] sm:$0xff]
  %v6531 = vld [vmem:[%s8 + $0x1a0] sm:$0xff]
  %v6532 = vld [vmem:[%s8 + $0x1a8] sm:$0xff]
  %v6533 = vld [vmem:[%s8 + $0x1b0] sm:$0xff]
  %v6534 = vld [vmem:[%s8 + $0x1b8] sm:$0xff]
  %v6535 = vld [vmem:[%s8 + $0x1c0] sm:$0xff]
  %v6536 = vld [vmem:[%s8 + $0x1c8] sm:$0xff]
  %v6537 = vld [vmem:[%s8 + $0x1d0] sm:$0xff]
  %v6538 = vld [vmem:[%s8 + $0x1d8] sm:$0xff]
  %v6539 = vld [vmem:[%s8 + $0x1e0] sm:$0xff]
  %v6540 = vld [vmem:[%s8 + $0x1e8] sm:$0xff]
  %v6541 = vld [vmem:[%s8 + $0x1f0] sm:$0xff]
  %v6542 = vld [vmem:[%s8 + $0x1f8] sm:$0xff]
  %v6543 = vld [vmem:[%s8 + $0x200] sm:$0xff]
  %v6544 = vld [vmem:[%s8 + $0x208] sm:$0xff]
  %v6545 = vld [vmem:[%s8 + $0x210] sm:$0xff]
  %v6546 = vld [vmem:[%s8 + $0x218] sm:$0xff]
  %v6547 = vld [vmem:[%s8 + $0x220] sm:$0xff]
  %v6548 = vld [vmem:[%s8 + $0x228] sm:$0xff]
  %v6549 = vld [vmem:[%s8 + $0x230] sm:$0xff]
  %v6550 = vld [vmem:[%s8 + $0x238] sm:$0xff]
  %v6551 = vld [vmem:[%s8 + $0x240] sm:$0xff]
  %v6552 = vld [vmem:[%s8 + $0x248] sm:$0xff]
  %v6553 = vld [vmem:[%s8 + $0x250] sm:$0xff]
  %v6554 = vld [vmem:[%s8 + $0x258] sm:$0xff]
  %v6555 = vld [vmem:[%s8 + $0x260] sm:$0xff]
  %v6556 = vld [vmem:[%s8 + $0x268] sm:$0xff]
  %v6557 = vld [vmem:[%s8 + $0x270] sm:$0xff]
  %v6558 = vld [vmem:[%s8 + $0x278] sm:$0xff]
  %v6559 = vld [vmem:[%s8 + $0x280] sm:$0xff]
  %v6560 = vld [vmem:[%s8 + $0x288] sm:$0xff]
  %v6561 = vld [vmem:[%s8 + $0x290] sm:$0xff]
  %v6562 = vld [vmem:[%s8 + $0x298] sm:$0xff]
  %v6563 = vld [vmem:[%s8 + $0x2a0] sm:$0xff]
  %v6564 = vld [vmem:[%s8 + $0x2a8] sm:$0xff]
  %v6565 = vld [vmem:[%s8 + $0x2b0] sm:$0xff]
  %v6566 = vld [vmem:[%s8 + $0x2b8] sm:$0xff]
  %v6567 = vld [vmem:[%s8 + $0x2c0] sm:$0xff]
  %v6568 = vld [vmem:[%s8 + $0x2c8] sm:$0xff]
  %v6569 = vld [vmem:[%s8 + $0x2d0] sm:$0xff]
  %v6570 = vld [vmem:[%s8 + $0x2d8] sm:$0xff]
  %v6571 = vld [vmem:[%s8 + $0x2e0] sm:$0xff]
  %v6572 = vld [vmem:[%s8 + $0x2e8] sm:$0xff]
  %v6573 = vld [vmem:[%s8 + $0x2f0] sm:$0xff]
  %v6574 = vld [vmem:[%s8 + $0x2f8] sm:$0xff]
  %v6575 = vld [vmem:[%s8 + $0x300] sm:$0xff]
  %v6576 = vld [vmem:[%s8 + $0x308] sm:$0xff]
  %v6577 = vld [vmem:[%s8 + $0x310] sm:$0xff]
  %v6578 = vld [vmem:[%s8 + $0x318] sm:$0xff]
  %vm6579 = vcmask 261120
  %v6581 = vsel %vm6579, %v6478, 0
  %6583 = vmatprep.subr.mxu0 0.0
  %6584 = vmatpush1.msra.mxu0 %v6494
  %6585 = vmatprep.subr.mxu0 0.0
  %6586 = vmatpush1.msra.mxu0 %v6493
  %6587 = vmatprep.subr.mxu0 0.0
  %6588 = vmatpush1.msra.mxu0 %v6492
  %6589 = vmatprep.subr.mxu0 0.0
  %6590 = vmatpush1.msra.mxu0 %v6491
  %6591 = vmatprep.subr.mxu0 0.0
  %6592 = vmatpush1.msra.mxu0 %v6490
  %6593 = vmatprep.subr.mxu0 0.0
  %6594 = vmatpush1.msra.mxu0 %v6489
  %6595 = vmatprep.subr.mxu0 0.0
  %6596 = vmatpush1.msra.mxu0 %v6488
  %6597 = vmatprep.subr.mxu0 0.0
  %6598 = vmatpush1.msra.mxu0 %v6487
  %6599 = vmatprep.subr.mxu0 0.0
  %6600 = vmatpush1.msra.mxu0 %v6486
  %6601 = vmatprep.subr.mxu0 0.0
  %6602 = vmatpush1.msra.mxu0 %v6485
  %6603 = vmatprep.subr.mxu0 0.0
  %6604 = vmatpush1.msra.mxu0 %v6484
  %6605 = vmatprep.subr.mxu0 0.0
  %6606 = vmatpush1.msra.mxu0 %v6483
  %6607 = vmatprep.subr.mxu0 0.0
  %6608 = vmatpush1.msra.mxu0 %v6482
  %6609 = vmatprep.subr.mxu0 0.0
  %6610 = vmatpush1.msra.mxu0 %v6481
  %6611 = vmatprep.subr.mxu0 0.0
  %6612 = vmatpush1.msra.mxu0 %v6480
  %6613 = vmatprep.subr.mxu0 0.0
  %6614 = vmatpush1.msra.mxu0 %v6479
  %6615 = vmatprep.subr.mxu0 0.0
  %6616 = vmatpush2.msra.mxu0 %v6510
  %6617 = vmatprep.subr.mxu0 0.0
  %6618 = vmatpush2.msra.mxu0 %v6509
  %6619 = vmatprep.subr.mxu0 0.0
  %6620 = vmatpush2.msra.mxu0 %v6508
  %6621 = vmatprep.subr.mxu0 0.0
  %6622 = vmatpush2.msra.mxu0 %v6507
  %6623 = vmatprep.subr.mxu0 0.0
  %6624 = vmatpush2.msra.mxu0 %v6506
  %6625 = vmatprep.subr.mxu0 0.0
  %6626 = vmatpush2.msra.mxu0 %v6505
  %6627 = vmatprep.subr.mxu0 0.0
  %6628 = vmatpush2.msra.mxu0 %v6504
  %6629 = vmatprep.subr.mxu0 0.0
  %6630 = vmatpush2.msra.mxu0 %v6503
  %6631 = vmatprep.subr.mxu0 0.0
  %6632 = vmatpush2.msra.mxu0 %v6502
  %6633 = vmatprep.subr.mxu0 0.0
  %6634 = vmatpush2.msra.mxu0 %v6501
  %6635 = vmatprep.subr.mxu0 0.0
  %6636 = vmatpush2.msra.mxu0 %v6500
  %6637 = vmatprep.subr.mxu0 0.0
  %6638 = vmatpush2.msra.mxu0 %v6499
  %6639 = vmatprep.subr.mxu0 0.0
  %6640 = vmatpush2.msra.mxu0 %v6498
  %6641 = vmatprep.subr.mxu0 0.0
  %6642 = vmatpush2.msra.mxu0 %v6497
  %6643 = vmatprep.subr.mxu0 0.0
  %6644 = vmatpush2.msra.mxu0 %v6496
  %6645 = vmatprep.subr.mxu0 0.0
  %6646 = vmatpush2.msra.mxu0 %v6495
  %6647 = vmatprep.mubr.f32.mxu0 %v6473
  %6648 = vmatmul.mubr.f32.gmra.mxu0 %v6472
  %v6649 = vpop.f32.mrf.mxu0
  %v6650 = vadd.f32 0.0, %v6649
  %v6651 = vpop.f32.mrf.mxu0
  %6652 = vdwg.mxu0
  %6653 = vmatprep.subr.mxu0 0.0
  %6654 = vmatpush1.msra.mxu0 %v6526
  %6655 = vmatprep.subr.mxu0 0.0
  %6656 = vmatpush1.msra.mxu0 %v6525
  %6657 = vmatprep.subr.mxu0 0.0
  %6658 = vmatpush1.msra.mxu0 %v6524
  %6659 = vmatprep.subr.mxu0 0.0
  %6660 = vmatpush1.msra.mxu0 %v6523
  %6661 = vmatprep.subr.mxu0 0.0
  %6662 = vmatpush1.msra.mxu0 %v6522
  %6663 = vmatprep.subr.mxu0 0.0
  %6664 = vmatpush1.msra.mxu0 %v6521
  %6665 = vmatprep.subr.mxu0 0.0
  %6666 = vmatpush1.msra.mxu0 %v6520
  %6667 = vmatprep.subr.mxu0 0.0
  %6668 = vmatpush1.msra.mxu0 %v6519
  %6669 = vmatprep.subr.mxu0 0.0
  %6670 = vmatpush1.msra.mxu0 %v6518
  %6671 = vmatprep.subr.mxu0 0.0
  %6672 = vmatpush1.msra.mxu0 %v6517
  %6673 = vmatprep.subr.mxu0 0.0
  %6674 = vmatpush1.msra.mxu0 %v6516
  %6675 = vmatprep.subr.mxu0 0.0
  %6676 = vmatpush1.msra.mxu0 %v6515
  %6677 = vmatprep.subr.mxu0 0.0
  %6678 = vmatpush1.msra.mxu0 %v6514
  %6679 = vmatprep.subr.mxu0 0.0
  %6680 = vmatpush1.msra.mxu0 %v6513
  %6681 = vmatprep.subr.mxu0 0.0
  %6682 = vmatpush1.msra.mxu0 %v6512
  %6683 = vmatprep.subr.mxu0 0.0
  %6684 = vmatpush1.msra.mxu0 %v6511
  %6685 = vmatprep.subr.mxu0 0.0
  %6686 = vmatpush2.msra.mxu0 %v6542
  %6687 = vmatprep.subr.mxu0 0.0
  %6688 = vmatpush2.msra.mxu0 %v6541
  %6689 = vmatprep.subr.mxu0 0.0
  %6690 = vmatpush2.msra.mxu0 %v6540
  %6691 = vmatprep.subr.mxu0 0.0
  %6692 = vmatpush2.msra.mxu0 %v6539
  %6693 = vmatprep.subr.mxu0 0.0
  %6694 = vmatpush2.msra.mxu0 %v6538
  %6695 = vmatprep.subr.mxu0 0.0
  %6696 = vmatpush2.msra.mxu0 %v6537
  %6697 = vmatprep.subr.mxu0 0.0
  %6698 = vmatpush2.msra.mxu0 %v6536
  %6699 = vmatprep.subr.mxu0 0.0
  %6700 = vmatpush2.msra.mxu0 %v6535
  %6701 = vmatprep.subr.mxu0 0.0
  %6702 = vmatpush2.msra.mxu0 %v6534
  %6703 = vmatprep.subr.mxu0 0.0
  %6704 = vmatpush2.msra.mxu0 %v6533
  %6705 = vmatprep.subr.mxu0 0.0
  %6706 = vmatpush2.msra.mxu0 %v6532
  %6707 = vmatprep.subr.mxu0 0.0
  %6708 = vmatpush2.msra.mxu0 %v6531
  %6709 = vmatprep.subr.mxu0 0.0
  %6710 = vmatpush2.msra.mxu0 %v6530
  %6711 = vmatprep.subr.mxu0 0.0
  %6712 = vmatpush2.msra.mxu0 %v6529
  %6713 = vmatprep.subr.mxu0 0.0
  %6714 = vmatpush2.msra.mxu0 %v6528
  %6715 = vmatprep.subr.mxu0 0.0
  %6716 = vmatpush2.msra.mxu0 %v6527
  %6717 = vmatprep.mubr.f32.mxu0 %v6475
  %6718 = vmatmul.mubr.f32.gmra.mxu0 %v6474
  %v6719 = vpop.f32.mrf.mxu0
  %v6720 = vadd.f32 %v6650, %v6719
  %v6721 = vpop.f32.mrf.mxu0
  %6722 = vdwg.mxu0
  %6723 = vmatprep.subr.mxu0 0.0
  %6724 = vmatpush1.msra.mxu0 %v6558
  %6725 = vmatprep.subr.mxu0 0.0
  %6726 = vmatpush1.msra.mxu0 %v6557
  %6727 = vmatprep.subr.mxu0 0.0
  %6728 = vmatpush1.msra.mxu0 %v6556
  %6729 = vmatprep.subr.mxu0 0.0
  %6730 = vmatpush1.msra.mxu0 %v6555
  %6731 = vmatprep.subr.mxu0 0.0
  %6732 = vmatpush1.msra.mxu0 %v6554
  %6733 = vmatprep.subr.mxu0 0.0
  %6734 = vmatpush1.msra.mxu0 %v6553
  %6735 = vmatprep.subr.mxu0 0.0
  %6736 = vmatpush1.msra.mxu0 %v6552
  %6737 = vmatprep.subr.mxu0 0.0
  %6738 = vmatpush1.msra.mxu0 %v6551
  %6739 = vmatprep.subr.mxu0 0.0
  %6740 = vmatpush1.msra.mxu0 %v6550
  %6741 = vmatprep.subr.mxu0 0.0
  %6742 = vmatpush1.msra.mxu0 %v6549
  %6743 = vmatprep.subr.mxu0 0.0
  %6744 = vmatpush1.msra.mxu0 %v6548
  %6745 = vmatprep.subr.mxu0 0.0
  %6746 = vmatpush1.msra.mxu0 %v6547
  %6747 = vmatprep.subr.mxu0 0.0
  %6748 = vmatpush1.msra.mxu0 %v6546
  %6749 = vmatprep.subr.mxu0 0.0
  %6750 = vmatpush1.msra.mxu0 %v6545
  %6751 = vmatprep.subr.mxu0 0.0
  %6752 = vmatpush1.msra.mxu0 %v6544
  %6753 = vmatprep.subr.mxu0 0.0
  %6754 = vmatpush1.msra.mxu0 %v6543
  %6755 = vmatprep.subr.mxu0 0.0
  %6756 = vmatpush2.msra.mxu0 %v6574
  %6757 = vmatprep.subr.mxu0 0.0
  %6758 = vmatpush2.msra.mxu0 %v6573
  %6759 = vmatprep.subr.mxu0 0.0
  %6760 = vmatpush2.msra.mxu0 %v6572
  %6761 = vmatprep.subr.mxu0 0.0
  %6762 = vmatpush2.msra.mxu0 %v6571
  %6763 = vmatprep.subr.mxu0 0.0
  %6764 = vmatpush2.msra.mxu0 %v6570
  %6765 = vmatprep.subr.mxu0 0.0
  %6766 = vmatpush2.msra.mxu0 %v6569
  %6767 = vmatprep.subr.mxu0 0.0
  %6768 = vmatpush2.msra.mxu0 %v6568
  %6769 = vmatprep.subr.mxu0 0.0
  %6770 = vmatpush2.msra.mxu0 %v6567
  %6771 = vmatprep.subr.mxu0 0.0
  %6772 = vmatpush2.msra.mxu0 %v6566
  %6773 = vmatprep.subr.mxu0 0.0
  %6774 = vmatpush2.msra.mxu0 %v6565
  %6775 = vmatprep.subr.mxu0 0.0
  %6776 = vmatpush2.msra.mxu0 %v6564
  %6777 = vmatprep.subr.mxu0 0.0
  %6778 = vmatpush2.msra.mxu0 %v6563
  %6779 = vmatprep.subr.mxu0 0.0
  %6780 = vmatpush2.msra.mxu0 %v6562
  %6781 = vmatprep.subr.mxu0 0.0
  %6782 = vmatpush2.msra.mxu0 %v6561
  %6783 = vmatprep.subr.mxu0 0.0
  %6784 = vmatpush2.msra.mxu0 %v6560
  %6785 = vmatprep.subr.mxu0 0.0
  %6786 = vmatpush2.msra.mxu0 %v6559
  %6787 = vmatprep.mubr.f32.mxu0 %v6477
  %6788 = vmatmul.mubr.f32.gmra.mxu0 %v6476
  %v6789 = vpop.f32.mrf.mxu0
  %v6790 = vadd.f32 %v6720, %v6789
  %v6791 = vpop.f32.mrf.mxu0
  %6792 = vdwg.mxu0
  %6793 = vmatprep.subr.mxu0 0.0
  %6794 = vmatpush1.msra.mxu0 0.0
  %6795 = vmatprep.subr.mxu0 0.0
  %6796 = vmatpush1.msra.mxu0 0.0
  %6797 = vmatprep.subr.mxu0 0.0
  %6798 = vmatpush1.msra.mxu0 0.0
  %6799 = vmatprep.subr.mxu0 0.0
  %6800 = vmatpush1.msra.mxu0 0.0
  %6801 = vmatprep.subr.mxu0 0.0
  %6802 = vmatpush1.msra.mxu0 0.0
  %6803 = vmatprep.subr.mxu0 0.0
  %6804 = vmatpush1.msra.mxu0 0.0
  %6805 = vmatprep.subr.mxu0 0.0
  %6806 = vmatpush1.msra.mxu0 0.0
  %6807 = vmatprep.subr.mxu0 0.0
  %6808 = vmatpush1.msra.mxu0 0.0
  %6809 = vmatprep.subr.mxu0 0.0
  %6810 = vmatpush1.msra.mxu0 0.0
  %6811 = vmatprep.subr.mxu0 0.0
  %6812 = vmatpush1.msra.mxu0 0.0
  %6813 = vmatprep.subr.mxu0 0.0
  %6814 = vmatpush1.msra.mxu0 0.0
  %6815 = vmatprep.subr.mxu0 0.0
  %6816 = vmatpush1.msra.mxu0 0.0
  %6817 = vmatprep.subr.mxu0 0.0
  %6818 = vmatpush1.msra.mxu0 %v6578
  %6819 = vmatprep.subr.mxu0 0.0
  %6820 = vmatpush1.msra.mxu0 %v6577
  %6821 = vmatprep.subr.mxu0 0.0
  %6822 = vmatpush1.msra.mxu0 %v6576
  %6823 = vmatprep.subr.mxu0 0.0
  %6824 = vmatpush1.msra.mxu0 %v6575
  %6825 = vmatprep.subr.mxu0 0.0
  %6826 = vmatpush2.msra.mxu0 0.0
  %6827 = vmatprep.subr.mxu0 0.0
  %6828 = vmatpush2.msra.mxu0 0.0
  %6829 = vmatprep.subr.mxu0 0.0
  %6830 = vmatpush2.msra.mxu0 0.0
  %6831 = vmatprep.subr.mxu0 0.0
  %6832 = vmatpush2.msra.mxu0 0.0
  %6833 = vmatprep.subr.mxu0 0.0
  %6834 = vmatpush2.msra.mxu0 0.0
  %6835 = vmatprep.subr.mxu0 0.0
  %6836 = vmatpush2.msra.mxu0 0.0
  %6837 = vmatprep.subr.mxu0 0.0
  %6838 = vmatpush2.msra.mxu0 0.0
  %6839 = vmatprep.subr.mxu0 0.0
  %6840 = vmatpush2.msra.mxu0 0.0
  %6841 = vmatprep.subr.mxu0 0.0
  %6842 = vmatpush2.msra.mxu0 0.0
  %6843 = vmatprep.subr.mxu0 0.0
  %6844 = vmatpush2.msra.mxu0 0.0
  %6845 = vmatprep.subr.mxu0 0.0
  %6846 = vmatpush2.msra.mxu0 0.0
  %6847 = vmatprep.subr.mxu0 0.0
  %6848 = vmatpush2.msra.mxu0 0.0
  %6849 = vmatprep.subr.mxu0 0.0
  %6850 = vmatpush2.msra.mxu0 0.0
  %6851 = vmatprep.subr.mxu0 0.0
  %6852 = vmatpush2.msra.mxu0 0.0
  %6853 = vmatprep.subr.mxu0 0.0
  %6854 = vmatpush2.msra.mxu0 0.0
  %6855 = vmatprep.subr.mxu0 0.0
  %6856 = vmatpush2.msra.mxu0 0.0
  %6857 = vmatprep.mubr.f32.mxu0 0.0
  %6858 = vmatmul.mubr.f32.gmra.mxu0 %v6581
  %v6859 = vpop.f32.mrf.mxu0
  %v6860 = vadd.f32 %v6790, %v6859
  %v6861 = vpop.f32.mrf.mxu0
  %6862 = vdwg.mxu0
  %6863 = vadd.xlane.f32.xlu0 %v6860
  %v6864 = vpop.xlane.xlu0 %6863
  %v6865 = vmul.f32 %v6864, 0.013888889
  %v6866 = vsub.f32 %v6860, %v6865
  %v6868 = vlaneseq
  %v6869 = vshrl.u32 %v6868, 7
  %v6870 = vsub.s32 0, %v6869
  %v6871 = vrot.slane %v57, %v6870
  %v6873 = vmul.f32 %v6866, %v6871
  %v6874 = vmul.f32 %v6873, %v6873
  %6875 = vadd.xlane.f32.xlu0 %v6874
  %v6876 = vpop.xlane.xlu0 %6875
  %v6877 = vmul.f32 %v6876, 0.013888889
  %v6878 = vld [vmem:[%s5] sm:$0xff]
  %v6879 = vadd.f32 %v6877, 1e-05
  %v6880 = vrsqrt.pop %v6879
  %v6881 = vmul.f32 %v6878, %v6880
  %6883 = vset.pattern.permute.xlu0 0
  %6884 = vperm.xlu0 %6883, %v6881
  %v6885 = vpop.permute.xlu0 %6884
  %v6887 = vmul.f32 %v6873, %v6885
  %v6888 = vld [vmem:[%s6] sm:$0xff]
  %6890 = vset.pattern.permute.xlu0 0
  %6891 = vperm.xlu0 %6890, %v6888
  %v6892 = vpop.permute.xlu0 %6891
  %v6894 = vadd.f32 %v6887, %v6892
  %v6895 = vmul.f32 %v6894, %v6871
  %vm6896 = vcmask 146432
  %6897 = vst.msk [vmem:[#allocation4] sm:$0xff] %vm6896, 0.0
  %vm6898 = vcmask 294032
  %6899 = vst.msk [vmem:[#allocation4 + $0x8] sm:$0xff] %vm6898, 0.0
  %6901 = vrot.lane.b32.xlu0 %v6895, 18
  %v6902 = vpop.permute.xlu0 %6901
  %vm6904 = vcmask 1047696
  %6905 = vst.msk [vmem:[#allocation4] sm:$0xff] %vm6904, %v6902
  %6906 = vst.msk [vmem:[#allocation4 + $0x8] sm:$0xff] %vm6896, %v6902
  %v6907 = vld [vmem:[%s9] sm:$0x1]
  %v6908 = vld [vmem:[%s10] sm:$0xff]
  %v6909 = vld [vmem:[%s10 + $0x8] sm:$0xff]
  %v6910 = vld [vmem:[#allocation4] sm:$0xff]
  %v6911 = vld [vmem:[#allocation4 + $0x8] sm:$0xff]
  %s6912 = scalar_lea.vmem %s10, 16
  %v6913 = vld [vmem:[%s6912] sm:$0xff]
  %v6914 = vld [vmem:[%s6912 + $0x8] sm:$0xff]
  %6917 = vrot.lane.b32.xlu0 %v6910, 118
  %v6918 = vpop.permute.xlu0 %6917
  %6919 = vrot.lane.b32.xlu0 %v6911, 118
  %v6920 = vpop.permute.xlu0 %6919
  %vm6921 = vcmask 965632
  %v6922 = vsel %vm6921, %v6918, %v6920
  %v6925 = vsel %vm3264, %v6913, 0
  %v6928 = vsel %vm3264, %v6914, 0
  %6930 = vmatprep.subr.mxu0 0.0
  %6931 = vmatpush1.msra.mxu0 0.0
  %6932 = vmatprep.subr.mxu0 0.0
  %6933 = vmatpush1.msra.mxu0 0.0
  %6934 = vmatprep.subr.mxu0 0.0
  %6935 = vmatpush1.msra.mxu0 0.0
  %6936 = vmatprep.subr.mxu0 0.0
  %6937 = vmatpush1.msra.mxu0 0.0
  %6938 = vmatprep.subr.mxu0 0.0
  %6939 = vmatpush1.msra.mxu0 0.0
  %6940 = vmatprep.subr.mxu0 0.0
  %6941 = vmatpush1.msra.mxu0 0.0
  %6942 = vmatprep.subr.mxu0 0.0
  %6943 = vmatpush1.msra.mxu0 0.0
  %6944 = vmatprep.subr.mxu0 0.0
  %6945 = vmatpush1.msra.mxu0 0.0
  %6946 = vmatprep.subr.mxu0 0.0
  %6947 = vmatpush1.msra.mxu0 0.0
  %6948 = vmatprep.subr.mxu0 0.0
  %6949 = vmatpush1.msra.mxu0 0.0
  %6950 = vmatprep.subr.mxu0 0.0
  %6951 = vmatpush1.msra.mxu0 0.0
  %6952 = vmatprep.subr.mxu0 0.0
  %6953 = vmatpush1.msra.mxu0 0.0
  %6954 = vmatprep.subr.mxu0 0.0
  %6955 = vmatpush1.msra.mxu0 0.0
  %6956 = vmatprep.subr.mxu0 0.0
  %6957 = vmatpush1.msra.mxu0 0.0
  %6958 = vmatprep.subr.mxu0 0.0
  %6959 = vmatpush1.msra.mxu0 0.0
  %6960 = vmatprep.subr.mxu0 0.0
  %6961 = vmatpush1.msra.mxu0 %v6922
  %6962 = vmatprep.subr.mxu0 0.0
  %6963 = vmatpush2.msra.mxu0 0.0
  %6964 = vmatprep.subr.mxu0 0.0
  %6965 = vmatpush2.msra.mxu0 0.0
  %6966 = vmatprep.subr.mxu0 0.0
  %6967 = vmatpush2.msra.mxu0 0.0
  %6968 = vmatprep.subr.mxu0 0.0
  %6969 = vmatpush2.msra.mxu0 0.0
  %6970 = vmatprep.subr.mxu0 0.0
  %6971 = vmatpush2.msra.mxu0 0.0
  %6972 = vmatprep.subr.mxu0 0.0
  %6973 = vmatpush2.msra.mxu0 0.0
  %6974 = vmatprep.subr.mxu0 0.0
  %6975 = vmatpush2.msra.mxu0 0.0
  %6976 = vmatprep.subr.mxu0 0.0
  %6977 = vmatpush2.msra.mxu0 0.0
  %6978 = vmatprep.subr.mxu0 0.0
  %6979 = vmatpush2.msra.mxu0 0.0
  %6980 = vmatprep.subr.mxu0 0.0
  %6981 = vmatpush2.msra.mxu0 0.0
  %6982 = vmatprep.subr.mxu0 0.0
  %6983 = vmatpush2.msra.mxu0 0.0
  %6984 = vmatprep.subr.mxu0 0.0
  %6985 = vmatpush2.msra.mxu0 0.0
  %6986 = vmatprep.subr.mxu0 0.0
  %6987 = vmatpush2.msra.mxu0 0.0
  %6988 = vmatprep.subr.mxu0 0.0
  %6989 = vmatpush2.msra.mxu0 0.0
  %6990 = vmatprep.subr.mxu0 0.0
  %6991 = vmatpush2.msra.mxu0 0.0
  %6992 = vmatprep.subr.mxu0 0.0
  %6993 = vmatpush2.msra.mxu0 0.0
  %6994 = vmatprep.mubr.f32.mxu0 0.0
  %6995 = vmatmul.mubr.f32.gmra.mxu0 %v6925
  %v6996 = vpop.f32.mrf.mxu0
  %v6997 = vadd.f32 0.0, %v6996
  %v6998 = vpop.f32.mrf.mxu0
  %6999 = vmatprep.mubr.f32.mxu0 0.0
  %7000 = vmatmul.mubr.f32.gmra.mxu0 %v6928
  %v7001 = vpop.f32.mrf.mxu0
  %v7002 = vadd.f32 0.0, %v7001
  %v7003 = vpop.f32.mrf.mxu0
  %7004 = vdwg.mxu0
  %7005 = vrot.lane.b32.xlu0 %v6910, 119
  %v7006 = vpop.permute.xlu0 %7005
  %7007 = vrot.lane.b32.xlu0 %v6911, 119
  %v7008 = vpop.permute.xlu0 %7007
  %vm7009 = vcmask 973824
  %v7010 = vsel %vm7009, %v7006, %v7008
  %v7013 = vsel %vm3264, %v6908, 0
  %v7016 = vsel %vm3264, %v6909, 0
  %7018 = vmatprep.subr.mxu0 0.0
  %7019 = vmatpush1.msra.mxu0 0.0
  %7020 = vmatprep.subr.mxu0 0.0
  %7021 = vmatpush1.msra.mxu0 0.0
  %7022 = vmatprep.subr.mxu0 0.0
  %7023 = vmatpush1.msra.mxu0 0.0
  %7024 = vmatprep.subr.mxu0 0.0
  %7025 = vmatpush1.msra.mxu0 0.0
  %7026 = vmatprep.subr.mxu0 0.0
  %7027 = vmatpush1.msra.mxu0 0.0
  %7028 = vmatprep.subr.mxu0 0.0
  %7029 = vmatpush1.msra.mxu0 0.0
  %7030 = vmatprep.subr.mxu0 0.0
  %7031 = vmatpush1.msra.mxu0 0.0
  %7032 = vmatprep.subr.mxu0 0.0
  %7033 = vmatpush1.msra.mxu0 0.0
  %7034 = vmatprep.subr.mxu0 0.0
  %7035 = vmatpush1.msra.mxu0 0.0
  %7036 = vmatprep.subr.mxu0 0.0
  %7037 = vmatpush1.msra.mxu0 0.0
  %7038 = vmatprep.subr.mxu0 0.0
  %7039 = vmatpush1.msra.mxu0 0.0
  %7040 = vmatprep.subr.mxu0 0.0
  %7041 = vmatpush1.msra.mxu0 0.0
  %7042 = vmatprep.subr.mxu0 0.0
  %7043 = vmatpush1.msra.mxu0 0.0
  %7044 = vmatprep.subr.mxu0 0.0
  %7045 = vmatpush1.msra.mxu0 0.0
  %7046 = vmatprep.subr.mxu0 0.0
  %7047 = vmatpush1.msra.mxu0 0.0
  %7048 = vmatprep.subr.mxu0 0.0
  %7049 = vmatpush1.msra.mxu0 %v7010
  %7050 = vmatprep.subr.mxu0 0.0
  %7051 = vmatpush2.msra.mxu0 0.0
  %7052 = vmatprep.subr.mxu0 0.0
  %7053 = vmatpush2.msra.mxu0 0.0
  %7054 = vmatprep.subr.mxu0 0.0
  %7055 = vmatpush2.msra.mxu0 0.0
  %7056 = vmatprep.subr.mxu0 0.0
  %7057 = vmatpush2.msra.mxu0 0.0
  %7058 = vmatprep.subr.mxu0 0.0
  %7059 = vmatpush2.msra.mxu0 0.0
  %7060 = vmatprep.subr.mxu0 0.0
  %7061 = vmatpush2.msra.mxu0 0.0
  %7062 = vmatprep.subr.mxu0 0.0
  %7063 = vmatpush2.msra.mxu0 0.0
  %7064 = vmatprep.subr.mxu0 0.0
  %7065 = vmatpush2.msra.mxu0 0.0
  %7066 = vmatprep.subr.mxu0 0.0
  %7067 = vmatpush2.msra.mxu0 0.0
  %7068 = vmatprep.subr.mxu0 0.0
  %7069 = vmatpush2.msra.mxu0 0.0
  %7070 = vmatprep.subr.mxu0 0.0
  %7071 = vmatpush2.msra.mxu0 0.0
  %7072 = vmatprep.subr.mxu0 0.0
  %7073 = vmatpush2.msra.mxu0 0.0
  %7074 = vmatprep.subr.mxu0 0.0
  %7075 = vmatpush2.msra.mxu0 0.0
  %7076 = vmatprep.subr.mxu0 0.0
  %7077 = vmatpush2.msra.mxu0 0.0
  %7078 = vmatprep.subr.mxu0 0.0
  %7079 = vmatpush2.msra.mxu0 0.0
  %7080 = vmatprep.subr.mxu0 0.0
  %7081 = vmatpush2.msra.mxu0 0.0
  %7082 = vmatprep.mubr.f32.mxu0 0.0
  %7083 = vmatmul.mubr.f32.gmra.mxu0 %v7013
  %v7084 = vpop.f32.mrf.mxu0
  %v7085 = vadd.f32 %v6997, %v7084
  %v7086 = vpop.f32.mrf.mxu0
  %7087 = vmatprep.mubr.f32.mxu0 0.0
  %7088 = vmatmul.mubr.f32.gmra.mxu0 %v7016
  %v7089 = vpop.f32.mrf.mxu0
  %v7090 = vadd.f32 %v7002, %v7089
  %v7091 = vpop.f32.mrf.mxu0
  %7092 = vdwg.mxu0
  %s7093 = scalar_lea.vmem %s10, 32
  %v7094 = vld [vmem:[%s7093] sm:$0xff]
  %v7095 = vld [vmem:[%s7093 + $0x8] sm:$0xff]
  %7096 = vrot.lane.b32.xlu0 %v6910, 117
  %v7097 = vpop.permute.xlu0 %7096
  %7098 = vrot.lane.b32.xlu0 %v6911, 117
  %v7099 = vpop.permute.xlu0 %7098
  %vm7100 = vcmask 957440
  %v7101 = vsel %vm7100, %v7097, %v7099
  %v7104 = vsel %vm3264, %v7094, 0
  %v7107 = vsel %vm3264, %v7095, 0
  %7109 = vmatprep.subr.mxu0 0.0
  %7110 = vmatpush1.msra.mxu0 0.0
  %7111 = vmatprep.subr.mxu0 0.0
  %7112 = vmatpush1.msra.mxu0 0.0
  %7113 = vmatprep.subr.mxu0 0.0
  %7114 = vmatpush1.msra.mxu0 0.0
  %7115 = vmatprep.subr.mxu0 0.0
  %7116 = vmatpush1.msra.mxu0 0.0
  %7117 = vmatprep.subr.mxu0 0.0
  %7118 = vmatpush1.msra.mxu0 0.0
  %7119 = vmatprep.subr.mxu0 0.0
  %7120 = vmatpush1.msra.mxu0 0.0
  %7121 = vmatprep.subr.mxu0 0.0
  %7122 = vmatpush1.msra.mxu0 0.0
  %7123 = vmatprep.subr.mxu0 0.0
  %7124 = vmatpush1.msra.mxu0 0.0
  %7125 = vmatprep.subr.mxu0 0.0
  %7126 = vmatpush1.msra.mxu0 0.0
  %7127 = vmatprep.subr.mxu0 0.0
  %7128 = vmatpush1.msra.mxu0 0.0
  %7129 = vmatprep.subr.mxu0 0.0
  %7130 = vmatpush1.msra.mxu0 0.0
  %7131 = vmatprep.subr.mxu0 0.0
  %7132 = vmatpush1.msra.mxu0 0.0
  %7133 = vmatprep.subr.mxu0 0.0
  %7134 = vmatpush1.msra.mxu0 0.0
  %7135 = vmatprep.subr.mxu0 0.0
  %7136 = vmatpush1.msra.mxu0 0.0
  %7137 = vmatprep.subr.mxu0 0.0
  %7138 = vmatpush1.msra.mxu0 0.0
  %7139 = vmatprep.subr.mxu0 0.0
  %7140 = vmatpush1.msra.mxu0 %v7101
  %7141 = vmatprep.subr.mxu0 0.0
  %7142 = vmatpush2.msra.mxu0 0.0
  %7143 = vmatprep.subr.mxu0 0.0
  %7144 = vmatpush2.msra.mxu0 0.0
  %7145 = vmatprep.subr.mxu0 0.0
  %7146 = vmatpush2.msra.mxu0 0.0
  %7147 = vmatprep.subr.mxu0 0.0
  %7148 = vmatpush2.msra.mxu0 0.0
  %7149 = vmatprep.subr.mxu0 0.0
  %7150 = vmatpush2.msra.mxu0 0.0
  %7151 = vmatprep.subr.mxu0 0.0
  %7152 = vmatpush2.msra.mxu0 0.0
  %7153 = vmatprep.subr.mxu0 0.0
  %7154 = vmatpush2.msra.mxu0 0.0
  %7155 = vmatprep.subr.mxu0 0.0
  %7156 = vmatpush2.msra.mxu0 0.0
  %7157 = vmatprep.subr.mxu0 0.0
  %7158 = vmatpush2.msra.mxu0 0.0
  %7159 = vmatprep.subr.mxu0 0.0
  %7160 = vmatpush2.msra.mxu0 0.0
  %7161 = vmatprep.subr.mxu0 0.0
  %7162 = vmatpush2.msra.mxu0 0.0
  %7163 = vmatprep.subr.mxu0 0.0
  %7164 = vmatpush2.msra.mxu0 0.0
  %7165 = vmatprep.subr.mxu0 0.0
  %7166 = vmatpush2.msra.mxu0 0.0
  %7167 = vmatprep.subr.mxu0 0.0
  %7168 = vmatpush2.msra.mxu0 0.0
  %7169 = vmatprep.subr.mxu0 0.0
  %7170 = vmatpush2.msra.mxu0 0.0
  %7171 = vmatprep.subr.mxu0 0.0
  %7172 = vmatpush2.msra.mxu0 0.0
  %7173 = vmatprep.mubr.f32.mxu0 0.0
  %7174 = vmatmul.mubr.f32.gmra.mxu0 %v7104
  %v7175 = vpop.f32.mrf.mxu0
  %v7176 = vadd.f32 0.0, %v7175
  %v7177 = vpop.f32.mrf.mxu0
  %7178 = vmatprep.mubr.f32.mxu0 0.0
  %7179 = vmatmul.mubr.f32.gmra.mxu0 %v7107
  %v7180 = vpop.f32.mrf.mxu0
  %v7181 = vadd.f32 0.0, %v7180
  %v7182 = vpop.f32.mrf.mxu0
  %7183 = vdwg.mxu0
  %v7184 = vadd.f32 %v7085, %v7176
  %v7185 = vadd.f32 %v7090, %v7181
  %s7186 = scalar_lea.vmem %s10, 48
  %v7187 = vld [vmem:[%s7186] sm:$0xff]
  %v7188 = vld [vmem:[%s7186 + $0x8] sm:$0xff]
  %7189 = vrot.lane.b32.xlu0 %v6910, 111
  %v7190 = vpop.permute.xlu0 %7189
  %7191 = vrot.lane.b32.xlu0 %v6911, 111
  %v7192 = vpop.permute.xlu0 %7191
  %vm7193 = vcmask 908288
  %v7194 = vsel %vm7193, %v7190, %v7192
  %v7197 = vsel %vm3264, %v7187, 0
  %v7200 = vsel %vm3264, %v7188, 0
  %7202 = vmatprep.subr.mxu0 0.0
  %7203 = vmatpush1.msra.mxu0 0.0
  %7204 = vmatprep.subr.mxu0 0.0
  %7205 = vmatpush1.msra.mxu0 0.0
  %7206 = vmatprep.subr.mxu0 0.0
  %7207 = vmatpush1.msra.mxu0 0.0
  %7208 = vmatprep.subr.mxu0 0.0
  %7209 = vmatpush1.msra.mxu0 0.0
  %7210 = vmatprep.subr.mxu0 0.0
  %7211 = vmatpush1.msra.mxu0 0.0
  %7212 = vmatprep.subr.mxu0 0.0
  %7213 = vmatpush1.msra.mxu0 0.0
  %7214 = vmatprep.subr.mxu0 0.0
  %7215 = vmatpush1.msra.mxu0 0.0
  %7216 = vmatprep.subr.mxu0 0.0
  %7217 = vmatpush1.msra.mxu0 0.0
  %7218 = vmatprep.subr.mxu0 0.0
  %7219 = vmatpush1.msra.mxu0 0.0
  %7220 = vmatprep.subr.mxu0 0.0
  %7221 = vmatpush1.msra.mxu0 0.0
  %7222 = vmatprep.subr.mxu0 0.0
  %7223 = vmatpush1.msra.mxu0 0.0
  %7224 = vmatprep.subr.mxu0 0.0
  %7225 = vmatpush1.msra.mxu0 0.0
  %7226 = vmatprep.subr.mxu0 0.0
  %7227 = vmatpush1.msra.mxu0 0.0
  %7228 = vmatprep.subr.mxu0 0.0
  %7229 = vmatpush1.msra.mxu0 0.0
  %7230 = vmatprep.subr.mxu0 0.0
  %7231 = vmatpush1.msra.mxu0 0.0
  %7232 = vmatprep.subr.mxu0 0.0
  %7233 = vmatpush1.msra.mxu0 %v7194
  %7234 = vmatprep.subr.mxu0 0.0
  %7235 = vmatpush2.msra.mxu0 0.0
  %7236 = vmatprep.subr.mxu0 0.0
  %7237 = vmatpush2.msra.mxu0 0.0
  %7238 = vmatprep.subr.mxu0 0.0
  %7239 = vmatpush2.msra.mxu0 0.0
  %7240 = vmatprep.subr.mxu0 0.0
  %7241 = vmatpush2.msra.mxu0 0.0
  %7242 = vmatprep.subr.mxu0 0.0
  %7243 = vmatpush2.msra.mxu0 0.0
  %7244 = vmatprep.subr.mxu0 0.0
  %7245 = vmatpush2.msra.mxu0 0.0
  %7246 = vmatprep.subr.mxu0 0.0
  %7247 = vmatpush2.msra.mxu0 0.0
  %7248 = vmatprep.subr.mxu0 0.0
  %7249 = vmatpush2.msra.mxu0 0.0
  %7250 = vmatprep.subr.mxu0 0.0
  %7251 = vmatpush2.msra.mxu0 0.0
  %7252 = vmatprep.subr.mxu0 0.0
  %7253 = vmatpush2.msra.mxu0 0.0
  %7254 = vmatprep.subr.mxu0 0.0
  %7255 = vmatpush2.msra.mxu0 0.0
  %7256 = vmatprep.subr.mxu0 0.0
  %7257 = vmatpush2.msra.mxu0 0.0
  %7258 = vmatprep.subr.mxu0 0.0
  %7259 = vmatpush2.msra.mxu0 0.0
  %7260 = vmatprep.subr.mxu0 0.0
  %7261 = vmatpush2.msra.mxu0 0.0
  %7262 = vmatprep.subr.mxu0 0.0
  %7263 = vmatpush2.msra.mxu0 0.0
  %7264 = vmatprep.subr.mxu0 0.0
  %7265 = vmatpush2.msra.mxu0 0.0
  %7266 = vmatprep.mubr.f32.mxu0 0.0
  %7267 = vmatmul.mubr.f32.gmra.mxu0 %v7197
  %v7268 = vpop.f32.mrf.mxu0
  %v7269 = vadd.f32 0.0, %v7268
  %v7270 = vpop.f32.mrf.mxu0
  %7271 = vmatprep.mubr.f32.mxu0 0.0
  %7272 = vmatmul.mubr.f32.gmra.mxu0 %v7200
  %v7273 = vpop.f32.mrf.mxu0
  %v7274 = vadd.f32 0.0, %v7273
  %v7275 = vpop.f32.mrf.mxu0
  %7276 = vdwg.mxu0
  %v7277 = vadd.f32 %v7184, %v7269
  %v7278 = vadd.f32 %v7185, %v7274
  %s7279 = scalar_lea.vmem %s10, 64
  %v7280 = vld [vmem:[%s7279] sm:$0xff]
  %v7281 = vld [vmem:[%s7279 + $0x8] sm:$0xff]
  %7282 = vrot.lane.b32.xlu0 %v6910, 110
  %v7283 = vpop.permute.xlu0 %7282
  %7284 = vrot.lane.b32.xlu0 %v6911, 110
  %v7285 = vpop.permute.xlu0 %7284
  %vm7286 = vcmask 900096
  %v7287 = vsel %vm7286, %v7283, %v7285
  %v7290 = vsel %vm3264, %v7280, 0
  %v7293 = vsel %vm3264, %v7281, 0
  %7295 = vmatprep.subr.mxu0 0.0
  %7296 = vmatpush1.msra.mxu0 0.0
  %7297 = vmatprep.subr.mxu0 0.0
  %7298 = vmatpush1.msra.mxu0 0.0
  %7299 = vmatprep.subr.mxu0 0.0
  %7300 = vmatpush1.msra.mxu0 0.0
  %7301 = vmatprep.subr.mxu0 0.0
  %7302 = vmatpush1.msra.mxu0 0.0
  %7303 = vmatprep.subr.mxu0 0.0
  %7304 = vmatpush1.msra.mxu0 0.0
  %7305 = vmatprep.subr.mxu0 0.0
  %7306 = vmatpush1.msra.mxu0 0.0
  %7307 = vmatprep.subr.mxu0 0.0
  %7308 = vmatpush1.msra.mxu0 0.0
  %7309 = vmatprep.subr.mxu0 0.0
  %7310 = vmatpush1.msra.mxu0 0.0
  %7311 = vmatprep.subr.mxu0 0.0
  %7312 = vmatpush1.msra.mxu0 0.0
  %7313 = vmatprep.subr.mxu0 0.0
  %7314 = vmatpush1.msra.mxu0 0.0
  %7315 = vmatprep.subr.mxu0 0.0
  %7316 = vmatpush1.msra.mxu0 0.0
  %7317 = vmatprep.subr.mxu0 0.0
  %7318 = vmatpush1.msra.mxu0 0.0
  %7319 = vmatprep.subr.mxu0 0.0
  %7320 = vmatpush1.msra.mxu0 0.0
  %7321 = vmatprep.subr.mxu0 0.0
  %7322 = vmatpush1.msra.mxu0 0.0
  %7323 = vmatprep.subr.mxu0 0.0
  %7324 = vmatpush1.msra.mxu0 0.0
  %7325 = vmatprep.subr.mxu0 0.0
  %7326 = vmatpush1.msra.mxu0 %v7287
  %7327 = vmatprep.subr.mxu0 0.0
  %7328 = vmatpush2.msra.mxu0 0.0
  %7329 = vmatprep.subr.mxu0 0.0
  %7330 = vmatpush2.msra.mxu0 0.0
  %7331 = vmatprep.subr.mxu0 0.0
  %7332 = vmatpush2.msra.mxu0 0.0
  %7333 = vmatprep.subr.mxu0 0.0
  %7334 = vmatpush2.msra.mxu0 0.0
  %7335 = vmatprep.subr.mxu0 0.0
  %7336 = vmatpush2.msra.mxu0 0.0
  %7337 = vmatprep.subr.mxu0 0.0
  %7338 = vmatpush2.msra.mxu0 0.0
  %7339 = vmatprep.subr.mxu0 0.0
  %7340 = vmatpush2.msra.mxu0 0.0
  %7341 = vmatprep.subr.mxu0 0.0
  %7342 = vmatpush2.msra.mxu0 0.0
  %7343 = vmatprep.subr.mxu0 0.0
  %7344 = vmatpush2.msra.mxu0 0.0
  %7345 = vmatprep.subr.mxu0 0.0
  %7346 = vmatpush2.msra.mxu0 0.0
  %7347 = vmatprep.subr.mxu0 0.0
  %7348 = vmatpush2.msra.mxu0 0.0
  %7349 = vmatprep.subr.mxu0 0.0
  %7350 = vmatpush2.msra.mxu0 0.0
  %7351 = vmatprep.subr.mxu0 0.0
  %7352 = vmatpush2.msra.mxu0 0.0
  %7353 = vmatprep.subr.mxu0 0.0
  %7354 = vmatpush2.msra.mxu0 0.0
  %7355 = vmatprep.subr.mxu0 0.0
  %7356 = vmatpush2.msra.mxu0 0.0
  %7357 = vmatprep.subr.mxu0 0.0
  %7358 = vmatpush2.msra.mxu0 0.0
  %7359 = vmatprep.mubr.f32.mxu0 0.0
  %7360 = vmatmul.mubr.f32.gmra.mxu0 %v7290
  %v7361 = vpop.f32.mrf.mxu0
  %v7362 = vadd.f32 0.0, %v7361
  %v7363 = vpop.f32.mrf.mxu0
  %7364 = vmatprep.mubr.f32.mxu0 0.0
  %7365 = vmatmul.mubr.f32.gmra.mxu0 %v7293
  %v7366 = vpop.f32.mrf.mxu0
  %v7367 = vadd.f32 0.0, %v7366
  %v7368 = vpop.f32.mrf.mxu0
  %7369 = vdwg.mxu0
  %v7370 = vadd.f32 %v7277, %v7362
  %v7371 = vadd.f32 %v7278, %v7367
  %s7372 = scalar_lea.vmem %s10, 80
  %v7373 = vld [vmem:[%s7372] sm:$0xff]
  %v7374 = vld [vmem:[%s7372 + $0x8] sm:$0xff]
  %7375 = vrot.lane.b32.xlu0 %v6910, 109
  %v7376 = vpop.permute.xlu0 %7375
  %7377 = vrot.lane.b32.xlu0 %v6911, 109
  %v7378 = vpop.permute.xlu0 %7377
  %vm7379 = vcmask 891904
  %v7380 = vsel %vm7379, %v7376, %v7378
  %v7383 = vsel %vm3264, %v7373, 0
  %v7386 = vsel %vm3264, %v7374, 0
  %7388 = vmatprep.subr.mxu0 0.0
  %7389 = vmatpush1.msra.mxu0 0.0
  %7390 = vmatprep.subr.mxu0 0.0
  %7391 = vmatpush1.msra.mxu0 0.0
  %7392 = vmatprep.subr.mxu0 0.0
  %7393 = vmatpush1.msra.mxu0 0.0
  %7394 = vmatprep.subr.mxu0 0.0
  %7395 = vmatpush1.msra.mxu0 0.0
  %7396 = vmatprep.subr.mxu0 0.0
  %7397 = vmatpush1.msra.mxu0 0.0
  %7398 = vmatprep.subr.mxu0 0.0
  %7399 = vmatpush1.msra.mxu0 0.0
  %7400 = vmatprep.subr.mxu0 0.0
  %7401 = vmatpush1.msra.mxu0 0.0
  %7402 = vmatprep.subr.mxu0 0.0
  %7403 = vmatpush1.msra.mxu0 0.0
  %7404 = vmatprep.subr.mxu0 0.0
  %7405 = vmatpush1.msra.mxu0 0.0
  %7406 = vmatprep.subr.mxu0 0.0
  %7407 = vmatpush1.msra.mxu0 0.0
  %7408 = vmatprep.subr.mxu0 0.0
  %7409 = vmatpush1.msra.mxu0 0.0
  %7410 = vmatprep.subr.mxu0 0.0
  %7411 = vmatpush1.msra.mxu0 0.0
  %7412 = vmatprep.subr.mxu0 0.0
  %7413 = vmatpush1.msra.mxu0 0.0
  %7414 = vmatprep.subr.mxu0 0.0
  %7415 = vmatpush1.msra.mxu0 0.0
  %7416 = vmatprep.subr.mxu0 0.0
  %7417 = vmatpush1.msra.mxu0 0.0
  %7418 = vmatprep.subr.mxu0 0.0
  %7419 = vmatpush1.msra.mxu0 %v7380
  %7420 = vmatprep.subr.mxu0 0.0
  %7421 = vmatpush2.msra.mxu0 0.0
  %7422 = vmatprep.subr.mxu0 0.0
  %7423 = vmatpush2.msra.mxu0 0.0
  %7424 = vmatprep.subr.mxu0 0.0
  %7425 = vmatpush2.msra.mxu0 0.0
  %7426 = vmatprep.subr.mxu0 0.0
  %7427 = vmatpush2.msra.mxu0 0.0
  %7428 = vmatprep.subr.mxu0 0.0
  %7429 = vmatpush2.msra.mxu0 0.0
  %7430 = vmatprep.subr.mxu0 0.0
  %7431 = vmatpush2.msra.mxu0 0.0
  %7432 = vmatprep.subr.mxu0 0.0
  %7433 = vmatpush2.msra.mxu0 0.0
  %7434 = vmatprep.subr.mxu0 0.0
  %7435 = vmatpush2.msra.mxu0 0.0
  %7436 = vmatprep.subr.mxu0 0.0
  %7437 = vmatpush2.msra.mxu0 0.0
  %7438 = vmatprep.subr.mxu0 0.0
  %7439 = vmatpush2.msra.mxu0 0.0
  %7440 = vmatprep.subr.mxu0 0.0
  %7441 = vmatpush2.msra.mxu0 0.0
  %7442 = vmatprep.subr.mxu0 0.0
  %7443 = vmatpush2.msra.mxu0 0.0
  %7444 = vmatprep.subr.mxu0 0.0
  %7445 = vmatpush2.msra.mxu0 0.0
  %7446 = vmatprep.subr.mxu0 0.0
  %7447 = vmatpush2.msra.mxu0 0.0
  %7448 = vmatprep.subr.mxu0 0.0
  %7449 = vmatpush2.msra.mxu0 0.0
  %7450 = vmatprep.subr.mxu0 0.0
  %7451 = vmatpush2.msra.mxu0 0.0
  %7452 = vmatprep.mubr.f32.mxu0 0.0
  %7453 = vmatmul.mubr.f32.gmra.mxu0 %v7383
  %v7454 = vpop.f32.mrf.mxu0
  %v7455 = vadd.f32 0.0, %v7454
  %v7456 = vpop.f32.mrf.mxu0
  %7457 = vmatprep.mubr.f32.mxu0 0.0
  %7458 = vmatmul.mubr.f32.gmra.mxu0 %v7386
  %v7459 = vpop.f32.mrf.mxu0
  %v7460 = vadd.f32 0.0, %v7459
  %v7461 = vpop.f32.mrf.mxu0
  %7462 = vdwg.mxu0
  %v7463 = vadd.f32 %v7370, %v7455
  %v7464 = vadd.f32 %v7371, %v7460
  %s7465 = scalar_lea.vmem %s10, 96
  %v7466 = vld [vmem:[%s7465] sm:$0xff]
  %v7467 = vld [vmem:[%s7465 + $0x8] sm:$0xff]
  %7468 = vrot.lane.b32.xlu0 %v6910, 103
  %v7469 = vpop.permute.xlu0 %7468
  %7470 = vrot.lane.b32.xlu0 %v6911, 103
  %v7471 = vpop.permute.xlu0 %7470
  %vm7472 = vcmask 842752
  %v7473 = vsel %vm7472, %v7469, %v7471
  %v7476 = vsel %vm3264, %v7466, 0
  %v7479 = vsel %vm3264, %v7467, 0
  %7481 = vmatprep.subr.mxu0 0.0
  %7482 = vmatpush1.msra.mxu0 0.0
  %7483 = vmatprep.subr.mxu0 0.0
  %7484 = vmatpush1.msra.mxu0 0.0
  %7485 = vmatprep.subr.mxu0 0.0
  %7486 = vmatpush1.msra.mxu0 0.0
  %7487 = vmatprep.subr.mxu0 0.0
  %7488 = vmatpush1.msra.mxu0 0.0
  %7489 = vmatprep.subr.mxu0 0.0
  %7490 = vmatpush1.msra.mxu0 0.0
  %7491 = vmatprep.subr.mxu0 0.0
  %7492 = vmatpush1.msra.mxu0 0.0
  %7493 = vmatprep.subr.mxu0 0.0
  %7494 = vmatpush1.msra.mxu0 0.0
  %7495 = vmatprep.subr.mxu0 0.0
  %7496 = vmatpush1.msra.mxu0 0.0
  %7497 = vmatprep.subr.mxu0 0.0
  %7498 = vmatpush1.msra.mxu0 0.0
  %7499 = vmatprep.subr.mxu0 0.0
  %7500 = vmatpush1.msra.mxu0 0.0
  %7501 = vmatprep.subr.mxu0 0.0
  %7502 = vmatpush1.msra.mxu0 0.0
  %7503 = vmatprep.subr.mxu0 0.0
  %7504 = vmatpush1.msra.mxu0 0.0
  %7505 = vmatprep.subr.mxu0 0.0
  %7506 = vmatpush1.msra.mxu0 0.0
  %7507 = vmatprep.subr.mxu0 0.0
  %7508 = vmatpush1.msra.mxu0 0.0
  %7509 = vmatprep.subr.mxu0 0.0
  %7510 = vmatpush1.msra.mxu0 0.0
  %7511 = vmatprep.subr.mxu0 0.0
  %7512 = vmatpush1.msra.mxu0 %v7473
  %7513 = vmatprep.subr.mxu0 0.0
  %7514 = vmatpush2.msra.mxu0 0.0
  %7515 = vmatprep.subr.mxu0 0.0
  %7516 = vmatpush2.msra.mxu0 0.0
  %7517 = vmatprep.subr.mxu0 0.0
  %7518 = vmatpush2.msra.mxu0 0.0
  %7519 = vmatprep.subr.mxu0 0.0
  %7520 = vmatpush2.msra.mxu0 0.0
  %7521 = vmatprep.subr.mxu0 0.0
  %7522 = vmatpush2.msra.mxu0 0.0
  %7523 = vmatprep.subr.mxu0 0.0
  %7524 = vmatpush2.msra.mxu0 0.0
  %7525 = vmatprep.subr.mxu0 0.0
  %7526 = vmatpush2.msra.mxu0 0.0
  %7527 = vmatprep.subr.mxu0 0.0
  %7528 = vmatpush2.msra.mxu0 0.0
  %7529 = vmatprep.subr.mxu0 0.0
  %7530 = vmatpush2.msra.mxu0 0.0
  %7531 = vmatprep.subr.mxu0 0.0
  %7532 = vmatpush2.msra.mxu0 0.0
  %7533 = vmatprep.subr.mxu0 0.0
  %7534 = vmatpush2.msra.mxu0 0.0
  %7535 = vmatprep.subr.mxu0 0.0
  %7536 = vmatpush2.msra.mxu0 0.0
  %7537 = vmatprep.subr.mxu0 0.0
  %7538 = vmatpush2.msra.mxu0 0.0
  %7539 = vmatprep.subr.mxu0 0.0
  %7540 = vmatpush2.msra.mxu0 0.0
  %7541 = vmatprep.subr.mxu0 0.0
  %7542 = vmatpush2.msra.mxu0 0.0
  %7543 = vmatprep.subr.mxu0 0.0
  %7544 = vmatpush2.msra.mxu0 0.0
  %7545 = vmatprep.mubr.f32.mxu0 0.0
  %7546 = vmatmul.mubr.f32.gmra.mxu0 %v7476
  %v7547 = vpop.f32.mrf.mxu0
  %v7548 = vadd.f32 0.0, %v7547
  %v7549 = vpop.f32.mrf.mxu0
  %7550 = vmatprep.mubr.f32.mxu0 0.0
  %7551 = vmatmul.mubr.f32.gmra.mxu0 %v7479
  %v7552 = vpop.f32.mrf.mxu0
  %v7553 = vadd.f32 0.0, %v7552
  %v7554 = vpop.f32.mrf.mxu0
  %7555 = vdwg.mxu0
  %v7556 = vadd.f32 %v7463, %v7548
  %v7557 = vadd.f32 %v7464, %v7553
  %s7558 = scalar_lea.vmem %s10, 112
  %v7559 = vld [vmem:[%s7558] sm:$0xff]
  %v7560 = vld [vmem:[%s7558 + $0x8] sm:$0xff]
  %7561 = vrot.lane.b32.xlu0 %v6910, 102
  %v7562 = vpop.permute.xlu0 %7561
  %7563 = vrot.lane.b32.xlu0 %v6911, 102
  %v7564 = vpop.permute.xlu0 %7563
  %vm7565 = vcmask 834560
  %v7566 = vsel %vm7565, %v7562, %v7564
  %v7569 = vsel %vm3264, %v7559, 0
  %v7572 = vsel %vm3264, %v7560, 0
  %7574 = vmatprep.subr.mxu0 0.0
  %7575 = vmatpush1.msra.mxu0 0.0
  %7576 = vmatprep.subr.mxu0 0.0
  %7577 = vmatpush1.msra.mxu0 0.0
  %7578 = vmatprep.subr.mxu0 0.0
  %7579 = vmatpush1.msra.mxu0 0.0
  %7580 = vmatprep.subr.mxu0 0.0
  %7581 = vmatpush1.msra.mxu0 0.0
  %7582 = vmatprep.subr.mxu0 0.0
  %7583 = vmatpush1.msra.mxu0 0.0
  %7584 = vmatprep.subr.mxu0 0.0
  %7585 = vmatpush1.msra.mxu0 0.0
  %7586 = vmatprep.subr.mxu0 0.0
  %7587 = vmatpush1.msra.mxu0 0.0
  %7588 = vmatprep.subr.mxu0 0.0
  %7589 = vmatpush1.msra.mxu0 0.0
  %7590 = vmatprep.subr.mxu0 0.0
  %7591 = vmatpush1.msra.mxu0 0.0
  %7592 = vmatprep.subr.mxu0 0.0
  %7593 = vmatpush1.msra.mxu0 0.0
  %7594 = vmatprep.subr.mxu0 0.0
  %7595 = vmatpush1.msra.mxu0 0.0
  %7596 = vmatprep.subr.mxu0 0.0
  %7597 = vmatpush1.msra.mxu0 0.0
  %7598 = vmatprep.subr.mxu0 0.0
  %7599 = vmatpush1.msra.mxu0 0.0
  %7600 = vmatprep.subr.mxu0 0.0
  %7601 = vmatpush1.msra.mxu0 0.0
  %7602 = vmatprep.subr.mxu0 0.0
  %7603 = vmatpush1.msra.mxu0 0.0
  %7604 = vmatprep.subr.mxu0 0.0
  %7605 = vmatpush1.msra.mxu0 %v7566
  %7606 = vmatprep.subr.mxu0 0.0
  %7607 = vmatpush2.msra.mxu0 0.0
  %7608 = vmatprep.subr.mxu0 0.0
  %7609 = vmatpush2.msra.mxu0 0.0
  %7610 = vmatprep.subr.mxu0 0.0
  %7611 = vmatpush2.msra.mxu0 0.0
  %7612 = vmatprep.subr.mxu0 0.0
  %7613 = vmatpush2.msra.mxu0 0.0
  %7614 = vmatprep.subr.mxu0 0.0
  %7615 = vmatpush2.msra.mxu0 0.0
  %7616 = vmatprep.subr.mxu0 0.0
  %7617 = vmatpush2.msra.mxu0 0.0
  %7618 = vmatprep.subr.mxu0 0.0
  %7619 = vmatpush2.msra.mxu0 0.0
  %7620 = vmatprep.subr.mxu0 0.0
  %7621 = vmatpush2.msra.mxu0 0.0
  %7622 = vmatprep.subr.mxu0 0.0
  %7623 = vmatpush2.msra.mxu0 0.0
  %7624 = vmatprep.subr.mxu0 0.0
  %7625 = vmatpush2.msra.mxu0 0.0
  %7626 = vmatprep.subr.mxu0 0.0
  %7627 = vmatpush2.msra.mxu0 0.0
  %7628 = vmatprep.subr.mxu0 0.0
  %7629 = vmatpush2.msra.mxu0 0.0
  %7630 = vmatprep.subr.mxu0 0.0
  %7631 = vmatpush2.msra.mxu0 0.0
  %7632 = vmatprep.subr.mxu0 0.0
  %7633 = vmatpush2.msra.mxu0 0.0
  %7634 = vmatprep.subr.mxu0 0.0
  %7635 = vmatpush2.msra.mxu0 0.0
  %7636 = vmatprep.subr.mxu0 0.0
  %7637 = vmatpush2.msra.mxu0 0.0
  %7638 = vmatprep.mubr.f32.mxu0 0.0
  %7639 = vmatmul.mubr.f32.gmra.mxu0 %v7569
  %v7640 = vpop.f32.mrf.mxu0
  %v7641 = vadd.f32 0.0, %v7640
  %v7642 = vpop.f32.mrf.mxu0
  %7643 = vmatprep.mubr.f32.mxu0 0.0
  %7644 = vmatmul.mubr.f32.gmra.mxu0 %v7572
  %v7645 = vpop.f32.mrf.mxu0
  %v7646 = vadd.f32 0.0, %v7645
  %v7647 = vpop.f32.mrf.mxu0
  %7648 = vdwg.mxu0
  %v7649 = vadd.f32 %v7556, %v7641
  %v7650 = vadd.f32 %v7557, %v7646
  %s7651 = scalar_lea.vmem %s10, 128
  %v7652 = vld [vmem:[%s7651] sm:$0xff]
  %v7653 = vld [vmem:[%s7651 + $0x8] sm:$0xff]
  %7654 = vrot.lane.b32.xlu0 %v6910, 101
  %v7655 = vpop.permute.xlu0 %7654
  %7656 = vrot.lane.b32.xlu0 %v6911, 101
  %v7657 = vpop.permute.xlu0 %7656
  %vm7658 = vcmask 826368
  %v7659 = vsel %vm7658, %v7655, %v7657
  %v7662 = vsel %vm3264, %v7652, 0
  %v7665 = vsel %vm3264, %v7653, 0
  %7667 = vmatprep.subr.mxu0 0.0
  %7668 = vmatpush1.msra.mxu0 0.0
  %7669 = vmatprep.subr.mxu0 0.0
  %7670 = vmatpush1.msra.mxu0 0.0
  %7671 = vmatprep.subr.mxu0 0.0
  %7672 = vmatpush1.msra.mxu0 0.0
  %7673 = vmatprep.subr.mxu0 0.0
  %7674 = vmatpush1.msra.mxu0 0.0
  %7675 = vmatprep.subr.mxu0 0.0
  %7676 = vmatpush1.msra.mxu0 0.0
  %7677 = vmatprep.subr.mxu0 0.0
  %7678 = vmatpush1.msra.mxu0 0.0
  %7679 = vmatprep.subr.mxu0 0.0
  %7680 = vmatpush1.msra.mxu0 0.0
  %7681 = vmatprep.subr.mxu0 0.0
  %7682 = vmatpush1.msra.mxu0 0.0
  %7683 = vmatprep.subr.mxu0 0.0
  %7684 = vmatpush1.msra.mxu0 0.0
  %7685 = vmatprep.subr.mxu0 0.0
  %7686 = vmatpush1.msra.mxu0 0.0
  %7687 = vmatprep.subr.mxu0 0.0
  %7688 = vmatpush1.msra.mxu0 0.0
  %7689 = vmatprep.subr.mxu0 0.0
  %7690 = vmatpush1.msra.mxu0 0.0
  %7691 = vmatprep.subr.mxu0 0.0
  %7692 = vmatpush1.msra.mxu0 0.0
  %7693 = vmatprep.subr.mxu0 0.0
  %7694 = vmatpush1.msra.mxu0 0.0
  %7695 = vmatprep.subr.mxu0 0.0
  %7696 = vmatpush1.msra.mxu0 0.0
  %7697 = vmatprep.subr.mxu0 0.0
  %7698 = vmatpush1.msra.mxu0 %v7659
  %7699 = vmatprep.subr.mxu0 0.0
  %7700 = vmatpush2.msra.mxu0 0.0
  %7701 = vmatprep.subr.mxu0 0.0
  %7702 = vmatpush2.msra.mxu0 0.0
  %7703 = vmatprep.subr.mxu0 0.0
  %7704 = vmatpush2.msra.mxu0 0.0
  %7705 = vmatprep.subr.mxu0 0.0
  %7706 = vmatpush2.msra.mxu0 0.0
  %7707 = vmatprep.subr.mxu0 0.0
  %7708 = vmatpush2.msra.mxu0 0.0
  %7709 = vmatprep.subr.mxu0 0.0
  %7710 = vmatpush2.msra.mxu0 0.0
  %7711 = vmatprep.subr.mxu0 0.0
  %7712 = vmatpush2.msra.mxu0 0.0
  %7713 = vmatprep.subr.mxu0 0.0
  %7714 = vmatpush2.msra.mxu0 0.0
  %7715 = vmatprep.subr.mxu0 0.0
  %7716 = vmatpush2.msra.mxu0 0.0
  %7717 = vmatprep.subr.mxu0 0.0
  %7718 = vmatpush2.msra.mxu0 0.0
  %7719 = vmatprep.subr.mxu0 0.0
  %7720 = vmatpush2.msra.mxu0 0.0
  %7721 = vmatprep.subr.mxu0 0.0
  %7722 = vmatpush2.msra.mxu0 0.0
  %7723 = vmatprep.subr.mxu0 0.0
  %7724 = vmatpush2.msra.mxu0 0.0
  %7725 = vmatprep.subr.mxu0 0.0
  %7726 = vmatpush2.msra.mxu0 0.0
  %7727 = vmatprep.subr.mxu0 0.0
  %7728 = vmatpush2.msra.mxu0 0.0
  %7729 = vmatprep.subr.mxu0 0.0
  %7730 = vmatpush2.msra.mxu0 0.0
  %7731 = vmatprep.mubr.f32.mxu0 0.0
  %7732 = vmatmul.mubr.f32.gmra.mxu0 %v7662
  %v7733 = vpop.f32.mrf.mxu0
  %v7734 = vadd.f32 0.0, %v7733
  %v7735 = vpop.f32.mrf.mxu0
  %7736 = vmatprep.mubr.f32.mxu0 0.0
  %7737 = vmatmul.mubr.f32.gmra.mxu0 %v7665
  %v7738 = vpop.f32.mrf.mxu0
  %v7739 = vadd.f32 0.0, %v7738
  %v7740 = vpop.f32.mrf.mxu0
  %7741 = vdwg.mxu0
  %v7742 = vadd.f32 %v7649, %v7734
  %v7743 = vadd.f32 %v7650, %v7739
  %v7744 = vld [vmem:[%s11] sm:$0xff]
  %v7745 = vld [vmem:[%s11 + $0x8] sm:$0xff]
  %7747 = vset.pattern.permute.xlu0 0
  %7748 = vperm.xlu0 %7747, %v7744
  %v7749 = vpop.permute.xlu0 %7748
  %7752 = vset.pattern.permute.xlu0 0
  %7753 = vperm.xlu0 %7752, %v7745
  %v7754 = vpop.permute.xlu0 %7753
  %v7756 = vadd.f32 %v7742, %v7749
  %v7757 = vadd.f32 %v7743, %v7754
  %v7758 = vmul.f32 %v7756, 0.01
  %v7759 = vmul.f32 %v7757, 0.01
  %v7760 = vmax.f32 %v7756, %v7758
  %v7761 = vmax.f32 %v7757, %v7759
  %v7763 = vlaneseq
  %v7764 = vshrl.u32 %v7763, 7
  %v7765 = vsub.s32 0, %v7764
  %v7766 = vrot.slane %v6907, %v7765
  %v7768 = vmul.f32 %v7760, %v7766
  %v7769 = vmul.f32 %v7761, %v7766
  %7770 = vst.msk [vmem:[#allocation5] sm:$0xff] %vm6896, 0.0
  %7771 = vst.msk [vmem:[#allocation5 + $0x10] sm:$0xff] %vm6896, 0.0
  %7772 = vst.msk [vmem:[#allocation5 + $0x8] sm:$0xff] %vm6898, 0.0
  %7773 = vst.msk [vmem:[#allocation5 + $0x18] sm:$0xff] %vm6898, 0.0
  %7776 = vrot.lane.b32.xlu0 %v7768, 18
  %v7777 = vpop.permute.xlu0 %7776
  %7778 = vrot.lane.b32.xlu0 %v7769, 18
  %v7779 = vpop.permute.xlu0 %7778
  %7782 = vst.msk [vmem:[#allocation5] sm:$0xff] %vm6904, %v7777
  %7783 = vst.msk [vmem:[#allocation5 + $0x8] sm:$0xff] %vm6896, %v7777
  %7784 = vst.msk [vmem:[#allocation5 + $0x10] sm:$0xff] %vm6904, %v7779
  %7785 = vst.msk [vmem:[#allocation5 + $0x18] sm:$0xff] %vm6896, %v7779
  %v7786 = vld [vmem:[%s12] sm:$0xff]
  %v7787 = vld [vmem:[%s12 + $0x8] sm:$0xff]
  %v7788 = vld [vmem:[#allocation5] sm:$0xff]
  %v7789 = vld [vmem:[#allocation5 + $0x8] sm:$0xff]
  %v7790 = vld [vmem:[#allocation5 + $0x10] sm:$0xff]
  %v7791 = vld [vmem:[#allocation5 + $0x18] sm:$0xff]
  %s7792 = scalar_lea.vmem %s12, 16
  %v7793 = vld [vmem:[%s7792] sm:$0xff]
  %v7794 = vld [vmem:[%s7792 + $0x8] sm:$0xff]
  %7799 = vrot.lane.b32.xlu0 %v7788, 118
  %v7800 = vpop.permute.xlu0 %7799
  %7801 = vrot.lane.b32.xlu0 %v7789, 118
  %v7802 = vpop.permute.xlu0 %7801
  %7803 = vrot.lane.b32.xlu0 %v7790, 118
  %v7804 = vpop.permute.xlu0 %7803
  %7805 = vrot.lane.b32.xlu0 %v7791, 118
  %v7806 = vpop.permute.xlu0 %7805
  %v7807 = vsel %vm6921, %v7800, %v7802
  %v7808 = vsel %vm6921, %v7804, %v7806
  %vm7811 = vcmask 130048
  %v7813 = vsel %vm7811, %v7793, 0
  %v7816 = vsel %vm7811, %v7794, 0
  %7818 = vmatprep.subr.mxu0 0.0
  %7819 = vmatpush1.msra.mxu0 0.0
  %7820 = vmatprep.subr.mxu0 0.0
  %7821 = vmatpush1.msra.mxu0 0.0
  %7822 = vmatprep.subr.mxu0 0.0
  %7823 = vmatpush1.msra.mxu0 0.0
  %7824 = vmatprep.subr.mxu0 0.0
  %7825 = vmatpush1.msra.mxu0 0.0
  %7826 = vmatprep.subr.mxu0 0.0
  %7827 = vmatpush1.msra.mxu0 0.0
  %7828 = vmatprep.subr.mxu0 0.0
  %7829 = vmatpush1.msra.mxu0 0.0
  %7830 = vmatprep.subr.mxu0 0.0
  %7831 = vmatpush1.msra.mxu0 0.0
  %7832 = vmatprep.subr.mxu0 0.0
  %7833 = vmatpush1.msra.mxu0 0.0
  %7834 = vmatprep.subr.mxu0 0.0
  %7835 = vmatpush1.msra.mxu0 0.0
  %7836 = vmatprep.subr.mxu0 0.0
  %7837 = vmatpush1.msra.mxu0 0.0
  %7838 = vmatprep.subr.mxu0 0.0
  %7839 = vmatpush1.msra.mxu0 0.0
  %7840 = vmatprep.subr.mxu0 0.0
  %7841 = vmatpush1.msra.mxu0 0.0
  %7842 = vmatprep.subr.mxu0 0.0
  %7843 = vmatpush1.msra.mxu0 0.0
  %7844 = vmatprep.subr.mxu0 0.0
  %7845 = vmatpush1.msra.mxu0 0.0
  %7846 = vmatprep.subr.mxu0 0.0
  %7847 = vmatpush1.msra.mxu0 %v7808
  %7848 = vmatprep.subr.mxu0 0.0
  %7849 = vmatpush1.msra.mxu0 %v7807
  %7850 = vmatprep.subr.mxu0 0.0
  %7851 = vmatpush2.msra.mxu0 0.0
  %7852 = vmatprep.subr.mxu0 0.0
  %7853 = vmatpush2.msra.mxu0 0.0
  %7854 = vmatprep.subr.mxu0 0.0
  %7855 = vmatpush2.msra.mxu0 0.0
  %7856 = vmatprep.subr.mxu0 0.0
  %7857 = vmatpush2.msra.mxu0 0.0
  %7858 = vmatprep.subr.mxu0 0.0
  %7859 = vmatpush2.msra.mxu0 0.0
  %7860 = vmatprep.subr.mxu0 0.0
  %7861 = vmatpush2.msra.mxu0 0.0
  %7862 = vmatprep.subr.mxu0 0.0
  %7863 = vmatpush2.msra.mxu0 0.0
  %7864 = vmatprep.subr.mxu0 0.0
  %7865 = vmatpush2.msra.mxu0 0.0
  %7866 = vmatprep.subr.mxu0 0.0
  %7867 = vmatpush2.msra.mxu0 0.0
  %7868 = vmatprep.subr.mxu0 0.0
  %7869 = vmatpush2.msra.mxu0 0.0
  %7870 = vmatprep.subr.mxu0 0.0
  %7871 = vmatpush2.msra.mxu0 0.0
  %7872 = vmatprep.subr.mxu0 0.0
  %7873 = vmatpush2.msra.mxu0 0.0
  %7874 = vmatprep.subr.mxu0 0.0
  %7875 = vmatpush2.msra.mxu0 0.0
  %7876 = vmatprep.subr.mxu0 0.0
  %7877 = vmatpush2.msra.mxu0 0.0
  %7878 = vmatprep.subr.mxu0 0.0
  %7879 = vmatpush2.msra.mxu0 0.0
  %7880 = vmatprep.subr.mxu0 0.0
  %7881 = vmatpush2.msra.mxu0 0.0
  %7882 = vmatprep.mubr.f32.mxu0 0.0
  %7883 = vmatmul.mubr.f32.gmra.mxu0 %v7813
  %v7884 = vpop.f32.mrf.mxu0
  %v7885 = vadd.f32 0.0, %v7884
  %v7886 = vpop.f32.mrf.mxu0
  %7887 = vmatprep.mubr.f32.mxu0 0.0
  %7888 = vmatmul.mubr.f32.gmra.mxu0 %v7816
  %v7889 = vpop.f32.mrf.mxu0
  %v7890 = vadd.f32 0.0, %v7889
  %v7891 = vpop.f32.mrf.mxu0
  %7892 = vdwg.mxu0
  %7893 = vrot.lane.b32.xlu0 %v7788, 119
  %v7894 = vpop.permute.xlu0 %7893
  %7895 = vrot.lane.b32.xlu0 %v7789, 119
  %v7896 = vpop.permute.xlu0 %7895
  %7897 = vrot.lane.b32.xlu0 %v7790, 119
  %v7898 = vpop.permute.xlu0 %7897
  %7899 = vrot.lane.b32.xlu0 %v7791, 119
  %v7900 = vpop.permute.xlu0 %7899
  %v7901 = vsel %vm7009, %v7894, %v7896
  %v7902 = vsel %vm7009, %v7898, %v7900
  %v7906 = vsel %vm7811, %v7786, 0
  %v7909 = vsel %vm7811, %v7787, 0
  %7911 = vmatprep.subr.mxu0 0.0
  %7912 = vmatpush1.msra.mxu0 0.0
  %7913 = vmatprep.subr.mxu0 0.0
  %7914 = vmatpush1.msra.mxu0 0.0
  %7915 = vmatprep.subr.mxu0 0.0
  %7916 = vmatpush1.msra.mxu0 0.0
  %7917 = vmatprep.subr.mxu0 0.0
  %7918 = vmatpush1.msra.mxu0 0.0
  %7919 = vmatprep.subr.mxu0 0.0
  %7920 = vmatpush1.msra.mxu0 0.0
  %7921 = vmatprep.subr.mxu0 0.0
  %7922 = vmatpush1.msra.mxu0 0.0
  %7923 = vmatprep.subr.mxu0 0.0
  %7924 = vmatpush1.msra.mxu0 0.0
  %7925 = vmatprep.subr.mxu0 0.0
  %7926 = vmatpush1.msra.mxu0 0.0
  %7927 = vmatprep.subr.mxu0 0.0
  %7928 = vmatpush1.msra.mxu0 0.0
  %7929 = vmatprep.subr.mxu0 0.0
  %7930 = vmatpush1.msra.mxu0 0.0
  %7931 = vmatprep.subr.mxu0 0.0
  %7932 = vmatpush1.msra.mxu0 0.0
  %7933 = vmatprep.subr.mxu0 0.0
  %7934 = vmatpush1.msra.mxu0 0.0
  %7935 = vmatprep.subr.mxu0 0.0
  %7936 = vmatpush1.msra.mxu0 0.0
  %7937 = vmatprep.subr.mxu0 0.0
  %7938 = vmatpush1.msra.mxu0 0.0
  %7939 = vmatprep.subr.mxu0 0.0
  %7940 = vmatpush1.msra.mxu0 %v7902
  %7941 = vmatprep.subr.mxu0 0.0
  %7942 = vmatpush1.msra.mxu0 %v7901
  %7943 = vmatprep.subr.mxu0 0.0
  %7944 = vmatpush2.msra.mxu0 0.0
  %7945 = vmatprep.subr.mxu0 0.0
  %7946 = vmatpush2.msra.mxu0 0.0
  %7947 = vmatprep.subr.mxu0 0.0
  %7948 = vmatpush2.msra.mxu0 0.0
  %7949 = vmatprep.subr.mxu0 0.0
  %7950 = vmatpush2.msra.mxu0 0.0
  %7951 = vmatprep.subr.mxu0 0.0
  %7952 = vmatpush2.msra.mxu0 0.0
  %7953 = vmatprep.subr.mxu0 0.0
  %7954 = vmatpush2.msra.mxu0 0.0
  %7955 = vmatprep.subr.mxu0 0.0
  %7956 = vmatpush2.msra.mxu0 0.0
  %7957 = vmatprep.subr.mxu0 0.0
  %7958 = vmatpush2.msra.mxu0 0.0
  %7959 = vmatprep.subr.mxu0 0.0
  %7960 = vmatpush2.msra.mxu0 0.0
  %7961 = vmatprep.subr.mxu0 0.0
  %7962 = vmatpush2.msra.mxu0 0.0
  %7963 = vmatprep.subr.mxu0 0.0
  %7964 = vmatpush2.msra.mxu0 0.0
  %7965 = vmatprep.subr.mxu0 0.0
  %7966 = vmatpush2.msra.mxu0 0.0
  %7967 = vmatprep.subr.mxu0 0.0
  %7968 = vmatpush2.msra.mxu0 0.0
  %7969 = vmatprep.subr.mxu0 0.0
  %7970 = vmatpush2.msra.mxu0 0.0
  %7971 = vmatprep.subr.mxu0 0.0
  %7972 = vmatpush2.msra.mxu0 0.0
  %7973 = vmatprep.subr.mxu0 0.0
  %7974 = vmatpush2.msra.mxu0 0.0
  %7975 = vmatprep.mubr.f32.mxu0 0.0
  %7976 = vmatmul.mubr.f32.gmra.mxu0 %v7906
  %v7977 = vpop.f32.mrf.mxu0
  %v7978 = vadd.f32 %v7885, %v7977
  %v7979 = vpop.f32.mrf.mxu0
  %7980 = vmatprep.mubr.f32.mxu0 0.0
  %7981 = vmatmul.mubr.f32.gmra.mxu0 %v7909
  %v7982 = vpop.f32.mrf.mxu0
  %v7983 = vadd.f32 %v7890, %v7982
  %v7984 = vpop.f32.mrf.mxu0
  %7985 = vdwg.mxu0
  %s7986 = scalar_lea.vmem %s12, 32
  %v7987 = vld [vmem:[%s7986] sm:$0xff]
  %v7988 = vld [vmem:[%s7986 + $0x8] sm:$0xff]
  %7989 = vrot.lane.b32.xlu0 %v7788, 117
  %v7990 = vpop.permute.xlu0 %7989
  %7991 = vrot.lane.b32.xlu0 %v7789, 117
  %v7992 = vpop.permute.xlu0 %7991
  %7993 = vrot.lane.b32.xlu0 %v7790, 117
  %v7994 = vpop.permute.xlu0 %7993
  %7995 = vrot.lane.b32.xlu0 %v7791, 117
  %v7996 = vpop.permute.xlu0 %7995
  %v7997 = vsel %vm7100, %v7990, %v7992
  %v7998 = vsel %vm7100, %v7994, %v7996
  %v8002 = vsel %vm7811, %v7987, 0
  %v8005 = vsel %vm7811, %v7988, 0
  %8007 = vmatprep.subr.mxu0 0.0
  %8008 = vmatpush1.msra.mxu0 0.0
  %8009 = vmatprep.subr.mxu0 0.0
  %8010 = vmatpush1.msra.mxu0 0.0
  %8011 = vmatprep.subr.mxu0 0.0
  %8012 = vmatpush1.msra.mxu0 0.0
  %8013 = vmatprep.subr.mxu0 0.0
  %8014 = vmatpush1.msra.mxu0 0.0
  %8015 = vmatprep.subr.mxu0 0.0
  %8016 = vmatpush1.msra.mxu0 0.0
  %8017 = vmatprep.subr.mxu0 0.0
  %8018 = vmatpush1.msra.mxu0 0.0
  %8019 = vmatprep.subr.mxu0 0.0
  %8020 = vmatpush1.msra.mxu0 0.0
  %8021 = vmatprep.subr.mxu0 0.0
  %8022 = vmatpush1.msra.mxu0 0.0
  %8023 = vmatprep.subr.mxu0 0.0
  %8024 = vmatpush1.msra.mxu0 0.0
  %8025 = vmatprep.subr.mxu0 0.0
  %8026 = vmatpush1.msra.mxu0 0.0
  %8027 = vmatprep.subr.mxu0 0.0
  %8028 = vmatpush1.msra.mxu0 0.0
  %8029 = vmatprep.subr.mxu0 0.0
  %8030 = vmatpush1.msra.mxu0 0.0
  %8031 = vmatprep.subr.mxu0 0.0
  %8032 = vmatpush1.msra.mxu0 0.0
  %8033 = vmatprep.subr.mxu0 0.0
  %8034 = vmatpush1.msra.mxu0 0.0
  %8035 = vmatprep.subr.mxu0 0.0
  %8036 = vmatpush1.msra.mxu0 %v7998
  %8037 = vmatprep.subr.mxu0 0.0
  %8038 = vmatpush1.msra.mxu0 %v7997
  %8039 = vmatprep.subr.mxu0 0.0
  %8040 = vmatpush2.msra.mxu0 0.0
  %8041 = vmatprep.subr.mxu0 0.0
  %8042 = vmatpush2.msra.mxu0 0.0
  %8043 = vmatprep.subr.mxu0 0.0
  %8044 = vmatpush2.msra.mxu0 0.0
  %8045 = vmatprep.subr.mxu0 0.0
  %8046 = vmatpush2.msra.mxu0 0.0
  %8047 = vmatprep.subr.mxu0 0.0
  %8048 = vmatpush2.msra.mxu0 0.0
  %8049 = vmatprep.subr.mxu0 0.0
  %8050 = vmatpush2.msra.mxu0 0.0
  %8051 = vmatprep.subr.mxu0 0.0
  %8052 = vmatpush2.msra.mxu0 0.0
  %8053 = vmatprep.subr.mxu0 0.0
  %8054 = vmatpush2.msra.mxu0 0.0
  %8055 = vmatprep.subr.mxu0 0.0
  %8056 = vmatpush2.msra.mxu0 0.0
  %8057 = vmatprep.subr.mxu0 0.0
  %8058 = vmatpush2.msra.mxu0 0.0
  %8059 = vmatprep.subr.mxu0 0.0
  %8060 = vmatpush2.msra.mxu0 0.0
  %8061 = vmatprep.subr.mxu0 0.0
  %8062 = vmatpush2.msra.mxu0 0.0
  %8063 = vmatprep.subr.mxu0 0.0
  %8064 = vmatpush2.msra.mxu0 0.0
  %8065 = vmatprep.subr.mxu0 0.0
  %8066 = vmatpush2.msra.mxu0 0.0
  %8067 = vmatprep.subr.mxu0 0.0
  %8068 = vmatpush2.msra.mxu0 0.0
  %8069 = vmatprep.subr.mxu0 0.0
  %8070 = vmatpush2.msra.mxu0 0.0
  %8071 = vmatprep.mubr.f32.mxu0 0.0
  %8072 = vmatmul.mubr.f32.gmra.mxu0 %v8002
  %v8073 = vpop.f32.mrf.mxu0
  %v8074 = vadd.f32 0.0, %v8073
  %v8075 = vpop.f32.mrf.mxu0
  %8076 = vmatprep.mubr.f32.mxu0 0.0
  %8077 = vmatmul.mubr.f32.gmra.mxu0 %v8005
  %v8078 = vpop.f32.mrf.mxu0
  %v8079 = vadd.f32 0.0, %v8078
  %v8080 = vpop.f32.mrf.mxu0
  %8081 = vdwg.mxu0
  %v8082 = vadd.f32 %v7978, %v8074
  %v8083 = vadd.f32 %v7983, %v8079
  %s8084 = scalar_lea.vmem %s12, 48
  %v8085 = vld [vmem:[%s8084] sm:$0xff]
  %v8086 = vld [vmem:[%s8084 + $0x8] sm:$0xff]
  %8087 = vrot.lane.b32.xlu0 %v7788, 111
  %v8088 = vpop.permute.xlu0 %8087
  %8089 = vrot.lane.b32.xlu0 %v7789, 111
  %v8090 = vpop.permute.xlu0 %8089
  %8091 = vrot.lane.b32.xlu0 %v7790, 111
  %v8092 = vpop.permute.xlu0 %8091
  %8093 = vrot.lane.b32.xlu0 %v7791, 111
  %v8094 = vpop.permute.xlu0 %8093
  %v8095 = vsel %vm7193, %v8088, %v8090
  %v8096 = vsel %vm7193, %v8092, %v8094
  %v8100 = vsel %vm7811, %v8085, 0
  %v8103 = vsel %vm7811, %v8086, 0
  %8105 = vmatprep.subr.mxu0 0.0
  %8106 = vmatpush1.msra.mxu0 0.0
  %8107 = vmatprep.subr.mxu0 0.0
  %8108 = vmatpush1.msra.mxu0 0.0
  %8109 = vmatprep.subr.mxu0 0.0
  %8110 = vmatpush1.msra.mxu0 0.0
  %8111 = vmatprep.subr.mxu0 0.0
  %8112 = vmatpush1.msra.mxu0 0.0
  %8113 = vmatprep.subr.mxu0 0.0
  %8114 = vmatpush1.msra.mxu0 0.0
  %8115 = vmatprep.subr.mxu0 0.0
  %8116 = vmatpush1.msra.mxu0 0.0
  %8117 = vmatprep.subr.mxu0 0.0
  %8118 = vmatpush1.msra.mxu0 0.0
  %8119 = vmatprep.subr.mxu0 0.0
  %8120 = vmatpush1.msra.mxu0 0.0
  %8121 = vmatprep.subr.mxu0 0.0
  %8122 = vmatpush1.msra.mxu0 0.0
  %8123 = vmatprep.subr.mxu0 0.0
  %8124 = vmatpush1.msra.mxu0 0.0
  %8125 = vmatprep.subr.mxu0 0.0
  %8126 = vmatpush1.msra.mxu0 0.0
  %8127 = vmatprep.subr.mxu0 0.0
  %8128 = vmatpush1.msra.mxu0 0.0
  %8129 = vmatprep.subr.mxu0 0.0
  %8130 = vmatpush1.msra.mxu0 0.0
  %8131 = vmatprep.subr.mxu0 0.0
  %8132 = vmatpush1.msra.mxu0 0.0
  %8133 = vmatprep.subr.mxu0 0.0
  %8134 = vmatpush1.msra.mxu0 %v8096
  %8135 = vmatprep.subr.mxu0 0.0
  %8136 = vmatpush1.msra.mxu0 %v8095
  %8137 = vmatprep.subr.mxu0 0.0
  %8138 = vmatpush2.msra.mxu0 0.0
  %8139 = vmatprep.subr.mxu0 0.0
  %8140 = vmatpush2.msra.mxu0 0.0
  %8141 = vmatprep.subr.mxu0 0.0
  %8142 = vmatpush2.msra.mxu0 0.0
  %8143 = vmatprep.subr.mxu0 0.0
  %8144 = vmatpush2.msra.mxu0 0.0
  %8145 = vmatprep.subr.mxu0 0.0
  %8146 = vmatpush2.msra.mxu0 0.0
  %8147 = vmatprep.subr.mxu0 0.0
  %8148 = vmatpush2.msra.mxu0 0.0
  %8149 = vmatprep.subr.mxu0 0.0
  %8150 = vmatpush2.msra.mxu0 0.0
  %8151 = vmatprep.subr.mxu0 0.0
  %8152 = vmatpush2.msra.mxu0 0.0
  %8153 = vmatprep.subr.mxu0 0.0
  %8154 = vmatpush2.msra.mxu0 0.0
  %8155 = vmatprep.subr.mxu0 0.0
  %8156 = vmatpush2.msra.mxu0 0.0
  %8157 = vmatprep.subr.mxu0 0.0
  %8158 = vmatpush2.msra.mxu0 0.0
  %8159 = vmatprep.subr.mxu0 0.0
  %8160 = vmatpush2.msra.mxu0 0.0
  %8161 = vmatprep.subr.mxu0 0.0
  %8162 = vmatpush2.msra.mxu0 0.0
  %8163 = vmatprep.subr.mxu0 0.0
  %8164 = vmatpush2.msra.mxu0 0.0
  %8165 = vmatprep.subr.mxu0 0.0
  %8166 = vmatpush2.msra.mxu0 0.0
  %8167 = vmatprep.subr.mxu0 0.0
  %8168 = vmatpush2.msra.mxu0 0.0
  %8169 = vmatprep.mubr.f32.mxu0 0.0
  %8170 = vmatmul.mubr.f32.gmra.mxu0 %v8100
  %v8171 = vpop.f32.mrf.mxu0
  %v8172 = vadd.f32 0.0, %v8171
  %v8173 = vpop.f32.mrf.mxu0
  %8174 = vmatprep.mubr.f32.mxu0 0.0
  %8175 = vmatmul.mubr.f32.gmra.mxu0 %v8103
  %v8176 = vpop.f32.mrf.mxu0
  %v8177 = vadd.f32 0.0, %v8176
  %v8178 = vpop.f32.mrf.mxu0
  %8179 = vdwg.mxu0
  %v8180 = vadd.f32 %v8082, %v8172
  %v8181 = vadd.f32 %v8083, %v8177
  %s8182 = scalar_lea.vmem %s12, 64
  %v8183 = vld [vmem:[%s8182] sm:$0xff]
  %v8184 = vld [vmem:[%s8182 + $0x8] sm:$0xff]
  %8185 = vrot.lane.b32.xlu0 %v7788, 110
  %v8186 = vpop.permute.xlu0 %8185
  %8187 = vrot.lane.b32.xlu0 %v7789, 110
  %v8188 = vpop.permute.xlu0 %8187
  %8189 = vrot.lane.b32.xlu0 %v7790, 110
  %v8190 = vpop.permute.xlu0 %8189
  %8191 = vrot.lane.b32.xlu0 %v7791, 110
  %v8192 = vpop.permute.xlu0 %8191
  %v8193 = vsel %vm7286, %v8186, %v8188
  %v8194 = vsel %vm7286, %v8190, %v8192
  %v8198 = vsel %vm7811, %v8183, 0
  %v8201 = vsel %vm7811, %v8184, 0
  %8203 = vmatprep.subr.mxu0 0.0
  %8204 = vmatpush1.msra.mxu0 0.0
  %8205 = vmatprep.subr.mxu0 0.0
  %8206 = vmatpush1.msra.mxu0 0.0
  %8207 = vmatprep.subr.mxu0 0.0
  %8208 = vmatpush1.msra.mxu0 0.0
  %8209 = vmatprep.subr.mxu0 0.0
  %8210 = vmatpush1.msra.mxu0 0.0
  %8211 = vmatprep.subr.mxu0 0.0
  %8212 = vmatpush1.msra.mxu0 0.0
  %8213 = vmatprep.subr.mxu0 0.0
  %8214 = vmatpush1.msra.mxu0 0.0
  %8215 = vmatprep.subr.mxu0 0.0
  %8216 = vmatpush1.msra.mxu0 0.0
  %8217 = vmatprep.subr.mxu0 0.0
  %8218 = vmatpush1.msra.mxu0 0.0
  %8219 = vmatprep.subr.mxu0 0.0
  %8220 = vmatpush1.msra.mxu0 0.0
  %8221 = vmatprep.subr.mxu0 0.0
  %8222 = vmatpush1.msra.mxu0 0.0
  %8223 = vmatprep.subr.mxu0 0.0
  %8224 = vmatpush1.msra.mxu0 0.0
  %8225 = vmatprep.subr.mxu0 0.0
  %8226 = vmatpush1.msra.mxu0 0.0
  %8227 = vmatprep.subr.mxu0 0.0
  %8228 = vmatpush1.msra.mxu0 0.0
  %8229 = vmatprep.subr.mxu0 0.0
  %8230 = vmatpush1.msra.mxu0 0.0
  %8231 = vmatprep.subr.mxu0 0.0
  %8232 = vmatpush1.msra.mxu0 %v8194
  %8233 = vmatprep.subr.mxu0 0.0
  %8234 = vmatpush1.msra.mxu0 %v8193
  %8235 = vmatprep.subr.mxu0 0.0
  %8236 = vmatpush2.msra.mxu0 0.0
  %8237 = vmatprep.subr.mxu0 0.0
  %8238 = vmatpush2.msra.mxu0 0.0
  %8239 = vmatprep.subr.mxu0 0.0
  %8240 = vmatpush2.msra.mxu0 0.0
  %8241 = vmatprep.subr.mxu0 0.0
  %8242 = vmatpush2.msra.mxu0 0.0
  %8243 = vmatprep.subr.mxu0 0.0
  %8244 = vmatpush2.msra.mxu0 0.0
  %8245 = vmatprep.subr.mxu0 0.0
  %8246 = vmatpush2.msra.mxu0 0.0
  %8247 = vmatprep.subr.mxu0 0.0
  %8248 = vmatpush2.msra.mxu0 0.0
  %8249 = vmatprep.subr.mxu0 0.0
  %8250 = vmatpush2.msra.mxu0 0.0
  %8251 = vmatprep.subr.mxu0 0.0
  %8252 = vmatpush2.msra.mxu0 0.0
  %8253 = vmatprep.subr.mxu0 0.0
  %8254 = vmatpush2.msra.mxu0 0.0
  %8255 = vmatprep.subr.mxu0 0.0
  %8256 = vmatpush2.msra.mxu0 0.0
  %8257 = vmatprep.subr.mxu0 0.0
  %8258 = vmatpush2.msra.mxu0 0.0
  %8259 = vmatprep.subr.mxu0 0.0
  %8260 = vmatpush2.msra.mxu0 0.0
  %8261 = vmatprep.subr.mxu0 0.0
  %8262 = vmatpush2.msra.mxu0 0.0
  %8263 = vmatprep.subr.mxu0 0.0
  %8264 = vmatpush2.msra.mxu0 0.0
  %8265 = vmatprep.subr.mxu0 0.0
  %8266 = vmatpush2.msra.mxu0 0.0
  %8267 = vmatprep.mubr.f32.mxu0 0.0
  %8268 = vmatmul.mubr.f32.gmra.mxu0 %v8198
  %v8269 = vpop.f32.mrf.mxu0
  %v8270 = vadd.f32 0.0, %v8269
  %v8271 = vpop.f32.mrf.mxu0
  %8272 = vmatprep.mubr.f32.mxu0 0.0
  %8273 = vmatmul.mubr.f32.gmra.mxu0 %v8201
  %v8274 = vpop.f32.mrf.mxu0
  %v8275 = vadd.f32 0.0, %v8274
  %v8276 = vpop.f32.mrf.mxu0
  %8277 = vdwg.mxu0
  %v8278 = vadd.f32 %v8180, %v8270
  %v8279 = vadd.f32 %v8181, %v8275
  %s8280 = scalar_lea.vmem %s12, 80
  %v8281 = vld [vmem:[%s8280] sm:$0xff]
  %v8282 = vld [vmem:[%s8280 + $0x8] sm:$0xff]
  %8283 = vrot.lane.b32.xlu0 %v7788, 109
  %v8284 = vpop.permute.xlu0 %8283
  %8285 = vrot.lane.b32.xlu0 %v7789, 109
  %v8286 = vpop.permute.xlu0 %8285
  %8287 = vrot.lane.b32.xlu0 %v7790, 109
  %v8288 = vpop.permute.xlu0 %8287
  %8289 = vrot.lane.b32.xlu0 %v7791, 109
  %v8290 = vpop.permute.xlu0 %8289
  %v8291 = vsel %vm7379, %v8284, %v8286
  %v8292 = vsel %vm7379, %v8288, %v8290
  %v8296 = vsel %vm7811, %v8281, 0
  %v8299 = vsel %vm7811, %v8282, 0
  %8301 = vmatprep.subr.mxu0 0.0
  %8302 = vmatpush1.msra.mxu0 0.0
  %8303 = vmatprep.subr.mxu0 0.0
  %8304 = vmatpush1.msra.mxu0 0.0
  %8305 = vmatprep.subr.mxu0 0.0
  %8306 = vmatpush1.msra.mxu0 0.0
  %8307 = vmatprep.subr.mxu0 0.0
  %8308 = vmatpush1.msra.mxu0 0.0
  %8309 = vmatprep.subr.mxu0 0.0
  %8310 = vmatpush1.msra.mxu0 0.0
  %8311 = vmatprep.subr.mxu0 0.0
  %8312 = vmatpush1.msra.mxu0 0.0
  %8313 = vmatprep.subr.mxu0 0.0
  %8314 = vmatpush1.msra.mxu0 0.0
  %8315 = vmatprep.subr.mxu0 0.0
  %8316 = vmatpush1.msra.mxu0 0.0
  %8317 = vmatprep.subr.mxu0 0.0
  %8318 = vmatpush1.msra.mxu0 0.0
  %8319 = vmatprep.subr.mxu0 0.0
  %8320 = vmatpush1.msra.mxu0 0.0
  %8321 = vmatprep.subr.mxu0 0.0
  %8322 = vmatpush1.msra.mxu0 0.0
  %8323 = vmatprep.subr.mxu0 0.0
  %8324 = vmatpush1.msra.mxu0 0.0
  %8325 = vmatprep.subr.mxu0 0.0
  %8326 = vmatpush1.msra.mxu0 0.0
  %8327 = vmatprep.subr.mxu0 0.0
  %8328 = vmatpush1.msra.mxu0 0.0
  %8329 = vmatprep.subr.mxu0 0.0
  %8330 = vmatpush1.msra.mxu0 %v8292
  %8331 = vmatprep.subr.mxu0 0.0
  %8332 = vmatpush1.msra.mxu0 %v8291
  %8333 = vmatprep.subr.mxu0 0.0
  %8334 = vmatpush2.msra.mxu0 0.0
  %8335 = vmatprep.subr.mxu0 0.0
  %8336 = vmatpush2.msra.mxu0 0.0
  %8337 = vmatprep.subr.mxu0 0.0
  %8338 = vmatpush2.msra.mxu0 0.0
  %8339 = vmatprep.subr.mxu0 0.0
  %8340 = vmatpush2.msra.mxu0 0.0
  %8341 = vmatprep.subr.mxu0 0.0
  %8342 = vmatpush2.msra.mxu0 0.0
  %8343 = vmatprep.subr.mxu0 0.0
  %8344 = vmatpush2.msra.mxu0 0.0
  %8345 = vmatprep.subr.mxu0 0.0
  %8346 = vmatpush2.msra.mxu0 0.0
  %8347 = vmatprep.subr.mxu0 0.0
  %8348 = vmatpush2.msra.mxu0 0.0
  %8349 = vmatprep.subr.mxu0 0.0
  %8350 = vmatpush2.msra.mxu0 0.0
  %8351 = vmatprep.subr.mxu0 0.0
  %8352 = vmatpush2.msra.mxu0 0.0
  %8353 = vmatprep.subr.mxu0 0.0
  %8354 = vmatpush2.msra.mxu0 0.0
  %8355 = vmatprep.subr.mxu0 0.0
  %8356 = vmatpush2.msra.mxu0 0.0
  %8357 = vmatprep.subr.mxu0 0.0
  %8358 = vmatpush2.msra.mxu0 0.0
  %8359 = vmatprep.subr.mxu0 0.0
  %8360 = vmatpush2.msra.mxu0 0.0
  %8361 = vmatprep.subr.mxu0 0.0
  %8362 = vmatpush2.msra.mxu0 0.0
  %8363 = vmatprep.subr.mxu0 0.0
  %8364 = vmatpush2.msra.mxu0 0.0
  %8365 = vmatprep.mubr.f32.mxu0 0.0
  %8366 = vmatmul.mubr.f32.gmra.mxu0 %v8296
  %v8367 = vpop.f32.mrf.mxu0
  %v8368 = vadd.f32 0.0, %v8367
  %v8369 = vpop.f32.mrf.mxu0
  %8370 = vmatprep.mubr.f32.mxu0 0.0
  %8371 = vmatmul.mubr.f32.gmra.mxu0 %v8299
  %v8372 = vpop.f32.mrf.mxu0
  %v8373 = vadd.f32 0.0, %v8372
  %v8374 = vpop.f32.mrf.mxu0
  %8375 = vdwg.mxu0
  %v8376 = vadd.f32 %v8278, %v8368
  %v8377 = vadd.f32 %v8279, %v8373
  %s8378 = scalar_lea.vmem %s12, 96
  %v8379 = vld [vmem:[%s8378] sm:$0xff]
  %v8380 = vld [vmem:[%s8378 + $0x8] sm:$0xff]
  %8381 = vrot.lane.b32.xlu0 %v7788, 103
  %v8382 = vpop.permute.xlu0 %8381
  %8383 = vrot.lane.b32.xlu0 %v7789, 103
  %v8384 = vpop.permute.xlu0 %8383
  %8385 = vrot.lane.b32.xlu0 %v7790, 103
  %v8386 = vpop.permute.xlu0 %8385
  %8387 = vrot.lane.b32.xlu0 %v7791, 103
  %v8388 = vpop.permute.xlu0 %8387
  %v8389 = vsel %vm7472, %v8382, %v8384
  %v8390 = vsel %vm7472, %v8386, %v8388
  %v8394 = vsel %vm7811, %v8379, 0
  %v8397 = vsel %vm7811, %v8380, 0
  %8399 = vmatprep.subr.mxu0 0.0
  %8400 = vmatpush1.msra.mxu0 0.0
  %8401 = vmatprep.subr.mxu0 0.0
  %8402 = vmatpush1.msra.mxu0 0.0
  %8403 = vmatprep.subr.mxu0 0.0
  %8404 = vmatpush1.msra.mxu0 0.0
  %8405 = vmatprep.subr.mxu0 0.0
  %8406 = vmatpush1.msra.mxu0 0.0
  %8407 = vmatprep.subr.mxu0 0.0
  %8408 = vmatpush1.msra.mxu0 0.0
  %8409 = vmatprep.subr.mxu0 0.0
  %8410 = vmatpush1.msra.mxu0 0.0
  %8411 = vmatprep.subr.mxu0 0.0
  %8412 = vmatpush1.msra.mxu0 0.0
  %8413 = vmatprep.subr.mxu0 0.0
  %8414 = vmatpush1.msra.mxu0 0.0
  %8415 = vmatprep.subr.mxu0 0.0
  %8416 = vmatpush1.msra.mxu0 0.0
  %8417 = vmatprep.subr.mxu0 0.0
  %8418 = vmatpush1.msra.mxu0 0.0
  %8419 = vmatprep.subr.mxu0 0.0
  %8420 = vmatpush1.msra.mxu0 0.0
  %8421 = vmatprep.subr.mxu0 0.0
  %8422 = vmatpush1.msra.mxu0 0.0
  %8423 = vmatprep.subr.mxu0 0.0
  %8424 = vmatpush1.msra.mxu0 0.0
  %8425 = vmatprep.subr.mxu0 0.0
  %8426 = vmatpush1.msra.mxu0 0.0
  %8427 = vmatprep.subr.mxu0 0.0
  %8428 = vmatpush1.msra.mxu0 %v8390
  %8429 = vmatprep.subr.mxu0 0.0
  %8430 = vmatpush1.msra.mxu0 %v8389
  %8431 = vmatprep.subr.mxu0 0.0
  %8432 = vmatpush2.msra.mxu0 0.0
  %8433 = vmatprep.subr.mxu0 0.0
  %8434 = vmatpush2.msra.mxu0 0.0
  %8435 = vmatprep.subr.mxu0 0.0
  %8436 = vmatpush2.msra.mxu0 0.0
  %8437 = vmatprep.subr.mxu0 0.0
  %8438 = vmatpush2.msra.mxu0 0.0
  %8439 = vmatprep.subr.mxu0 0.0
  %8440 = vmatpush2.msra.mxu0 0.0
  %8441 = vmatprep.subr.mxu0 0.0
  %8442 = vmatpush2.msra.mxu0 0.0
  %8443 = vmatprep.subr.mxu0 0.0
  %8444 = vmatpush2.msra.mxu0 0.0
  %8445 = vmatprep.subr.mxu0 0.0
  %8446 = vmatpush2.msra.mxu0 0.0
  %8447 = vmatprep.subr.mxu0 0.0
  %8448 = vmatpush2.msra.mxu0 0.0
  %8449 = vmatprep.subr.mxu0 0.0
  %8450 = vmatpush2.msra.mxu0 0.0
  %8451 = vmatprep.subr.mxu0 0.0
  %8452 = vmatpush2.msra.mxu0 0.0
  %8453 = vmatprep.subr.mxu0 0.0
  %8454 = vmatpush2.msra.mxu0 0.0
  %8455 = vmatprep.subr.mxu0 0.0
  %8456 = vmatpush2.msra.mxu0 0.0
  %8457 = vmatprep.subr.mxu0 0.0
  %8458 = vmatpush2.msra.mxu0 0.0
  %8459 = vmatprep.subr.mxu0 0.0
  %8460 = vmatpush2.msra.mxu0 0.0
  %8461 = vmatprep.subr.mxu0 0.0
  %8462 = vmatpush2.msra.mxu0 0.0
  %8463 = vmatprep.mubr.f32.mxu0 0.0
  %8464 = vmatmul.mubr.f32.gmra.mxu0 %v8394
  %v8465 = vpop.f32.mrf.mxu0
  %v8466 = vadd.f32 0.0, %v8465
  %v8467 = vpop.f32.mrf.mxu0
  %8468 = vmatprep.mubr.f32.mxu0 0.0
  %8469 = vmatmul.mubr.f32.gmra.mxu0 %v8397
  %v8470 = vpop.f32.mrf.mxu0
  %v8471 = vadd.f32 0.0, %v8470
  %v8472 = vpop.f32.mrf.mxu0
  %8473 = vdwg.mxu0
  %v8474 = vadd.f32 %v8376, %v8466
  %v8475 = vadd.f32 %v8377, %v8471
  %s8476 = scalar_lea.vmem %s12, 112
  %v8477 = vld [vmem:[%s8476] sm:$0xff]
  %v8478 = vld [vmem:[%s8476 + $0x8] sm:$0xff]
  %8479 = vrot.lane.b32.xlu0 %v7788, 102
  %v8480 = vpop.permute.xlu0 %8479
  %8481 = vrot.lane.b32.xlu0 %v7789, 102
  %v8482 = vpop.permute.xlu0 %8481
  %8483 = vrot.lane.b32.xlu0 %v7790, 102
  %v8484 = vpop.permute.xlu0 %8483
  %8485 = vrot.lane.b32.xlu0 %v7791, 102
  %v8486 = vpop.permute.xlu0 %8485
  %v8487 = vsel %vm7565, %v8480, %v8482
  %v8488 = vsel %vm7565, %v8484, %v8486
  %v8492 = vsel %vm7811, %v8477, 0
  %v8495 = vsel %vm7811, %v8478, 0
  %8497 = vmatprep.subr.mxu0 0.0
  %8498 = vmatpush1.msra.mxu0 0.0
  %8499 = vmatprep.subr.mxu0 0.0
  %8500 = vmatpush1.msra.mxu0 0.0
  %8501 = vmatprep.subr.mxu0 0.0
  %8502 = vmatpush1.msra.mxu0 0.0
  %8503 = vmatprep.subr.mxu0 0.0
  %8504 = vmatpush1.msra.mxu0 0.0
  %8505 = vmatprep.subr.mxu0 0.0
  %8506 = vmatpush1.msra.mxu0 0.0
  %8507 = vmatprep.subr.mxu0 0.0
  %8508 = vmatpush1.msra.mxu0 0.0
  %8509 = vmatprep.subr.mxu0 0.0
  %8510 = vmatpush1.msra.mxu0 0.0
  %8511 = vmatprep.subr.mxu0 0.0
  %8512 = vmatpush1.msra.mxu0 0.0
  %8513 = vmatprep.subr.mxu0 0.0
  %8514 = vmatpush1.msra.mxu0 0.0
  %8515 = vmatprep.subr.mxu0 0.0
  %8516 = vmatpush1.msra.mxu0 0.0
  %8517 = vmatprep.subr.mxu0 0.0
  %8518 = vmatpush1.msra.mxu0 0.0
  %8519 = vmatprep.subr.mxu0 0.0
  %8520 = vmatpush1.msra.mxu0 0.0
  %8521 = vmatprep.subr.mxu0 0.0
  %8522 = vmatpush1.msra.mxu0 0.0
  %8523 = vmatprep.subr.mxu0 0.0
  %8524 = vmatpush1.msra.mxu0 0.0
  %8525 = vmatprep.subr.mxu0 0.0
  %8526 = vmatpush1.msra.mxu0 %v8488
  %8527 = vmatprep.subr.mxu0 0.0
  %8528 = vmatpush1.msra.mxu0 %v8487
  %8529 = vmatprep.subr.mxu0 0.0
  %8530 = vmatpush2.msra.mxu0 0.0
  %8531 = vmatprep.subr.mxu0 0.0
  %8532 = vmatpush2.msra.mxu0 0.0
  %8533 = vmatprep.subr.mxu0 0.0
  %8534 = vmatpush2.msra.mxu0 0.0
  %8535 = vmatprep.subr.mxu0 0.0
  %8536 = vmatpush2.msra.mxu0 0.0
  %8537 = vmatprep.subr.mxu0 0.0
  %8538 = vmatpush2.msra.mxu0 0.0
  %8539 = vmatprep.subr.mxu0 0.0
  %8540 = vmatpush2.msra.mxu0 0.0
  %8541 = vmatprep.subr.mxu0 0.0
  %8542 = vmatpush2.msra.mxu0 0.0
  %8543 = vmatprep.subr.mxu0 0.0
  %8544 = vmatpush2.msra.mxu0 0.0
  %8545 = vmatprep.subr.mxu0 0.0
  %8546 = vmatpush2.msra.mxu0 0.0
  %8547 = vmatprep.subr.mxu0 0.0
  %8548 = vmatpush2.msra.mxu0 0.0
  %8549 = vmatprep.subr.mxu0 0.0
  %8550 = vmatpush2.msra.mxu0 0.0
  %8551 = vmatprep.subr.mxu0 0.0
  %8552 = vmatpush2.msra.mxu0 0.0
  %8553 = vmatprep.subr.mxu0 0.0
  %8554 = vmatpush2.msra.mxu0 0.0
  %8555 = vmatprep.subr.mxu0 0.0
  %8556 = vmatpush2.msra.mxu0 0.0
  %8557 = vmatprep.subr.mxu0 0.0
  %8558 = vmatpush2.msra.mxu0 0.0
  %8559 = vmatprep.subr.mxu0 0.0
  %8560 = vmatpush2.msra.mxu0 0.0
  %8561 = vmatprep.mubr.f32.mxu0 0.0
  %8562 = vmatmul.mubr.f32.gmra.mxu0 %v8492
  %v8563 = vpop.f32.mrf.mxu0
  %v8564 = vadd.f32 0.0, %v8563
  %v8565 = vpop.f32.mrf.mxu0
  %8566 = vmatprep.mubr.f32.mxu0 0.0
  %8567 = vmatmul.mubr.f32.gmra.mxu0 %v8495
  %v8568 = vpop.f32.mrf.mxu0
  %v8569 = vadd.f32 0.0, %v8568
  %v8570 = vpop.f32.mrf.mxu0
  %8571 = vdwg.mxu0
  %v8572 = vadd.f32 %v8474, %v8564
  %v8573 = vadd.f32 %v8475, %v8569
  %s8574 = scalar_lea.vmem %s12, 128
  %v8575 = vld [vmem:[%s8574] sm:$0xff]
  %v8576 = vld [vmem:[%s8574 + $0x8] sm:$0xff]
  %8577 = vrot.lane.b32.xlu0 %v7788, 101
  %v8578 = vpop.permute.xlu0 %8577
  %8579 = vrot.lane.b32.xlu0 %v7789, 101
  %v8580 = vpop.permute.xlu0 %8579
  %8581 = vrot.lane.b32.xlu0 %v7790, 101
  %v8582 = vpop.permute.xlu0 %8581
  %8583 = vrot.lane.b32.xlu0 %v7791, 101
  %v8584 = vpop.permute.xlu0 %8583
  %v8585 = vsel %vm7658, %v8578, %v8580
  %v8586 = vsel %vm7658, %v8582, %v8584
  %v8590 = vsel %vm7811, %v8575, 0
  %v8593 = vsel %vm7811, %v8576, 0
  %8595 = vmatprep.subr.mxu0 0.0
  %8596 = vmatpush1.msra.mxu0 0.0
  %8597 = vmatprep.subr.mxu0 0.0
  %8598 = vmatpush1.msra.mxu0 0.0
  %8599 = vmatprep.subr.mxu0 0.0
  %8600 = vmatpush1.msra.mxu0 0.0
  %8601 = vmatprep.subr.mxu0 0.0
  %8602 = vmatpush1.msra.mxu0 0.0
  %8603 = vmatprep.subr.mxu0 0.0
  %8604 = vmatpush1.msra.mxu0 0.0
  %8605 = vmatprep.subr.mxu0 0.0
  %8606 = vmatpush1.msra.mxu0 0.0
  %8607 = vmatprep.subr.mxu0 0.0
  %8608 = vmatpush1.msra.mxu0 0.0
  %8609 = vmatprep.subr.mxu0 0.0
  %8610 = vmatpush1.msra.mxu0 0.0
  %8611 = vmatprep.subr.mxu0 0.0
  %8612 = vmatpush1.msra.mxu0 0.0
  %8613 = vmatprep.subr.mxu0 0.0
  %8614 = vmatpush1.msra.mxu0 0.0
  %8615 = vmatprep.subr.mxu0 0.0
  %8616 = vmatpush1.msra.mxu0 0.0
  %8617 = vmatprep.subr.mxu0 0.0
  %8618 = vmatpush1.msra.mxu0 0.0
  %8619 = vmatprep.subr.mxu0 0.0
  %8620 = vmatpush1.msra.mxu0 0.0
  %8621 = vmatprep.subr.mxu0 0.0
  %8622 = vmatpush1.msra.mxu0 0.0
  %8623 = vmatprep.subr.mxu0 0.0
  %8624 = vmatpush1.msra.mxu0 %v8586
  %8625 = vmatprep.subr.mxu0 0.0
  %8626 = vmatpush1.msra.mxu0 %v8585
  %8627 = vmatprep.subr.mxu0 0.0
  %8628 = vmatpush2.msra.mxu0 0.0
  %8629 = vmatprep.subr.mxu0 0.0
  %8630 = vmatpush2.msra.mxu0 0.0
  %8631 = vmatprep.subr.mxu0 0.0
  %8632 = vmatpush2.msra.mxu0 0.0
  %8633 = vmatprep.subr.mxu0 0.0
  %8634 = vmatpush2.msra.mxu0 0.0
  %8635 = vmatprep.subr.mxu0 0.0
  %8636 = vmatpush2.msra.mxu0 0.0
  %8637 = vmatprep.subr.mxu0 0.0
  %8638 = vmatpush2.msra.mxu0 0.0
  %8639 = vmatprep.subr.mxu0 0.0
  %8640 = vmatpush2.msra.mxu0 0.0
  %8641 = vmatprep.subr.mxu0 0.0
  %8642 = vmatpush2.msra.mxu0 0.0
  %8643 = vmatprep.subr.mxu0 0.0
  %8644 = vmatpush2.msra.mxu0 0.0
  %8645 = vmatprep.subr.mxu0 0.0
  %8646 = vmatpush2.msra.mxu0 0.0
  %8647 = vmatprep.subr.mxu0 0.0
  %8648 = vmatpush2.msra.mxu0 0.0
  %8649 = vmatprep.subr.mxu0 0.0
  %8650 = vmatpush2.msra.mxu0 0.0
  %8651 = vmatprep.subr.mxu0 0.0
  %8652 = vmatpush2.msra.mxu0 0.0
  %8653 = vmatprep.subr.mxu0 0.0
  %8654 = vmatpush2.msra.mxu0 0.0
  %8655 = vmatprep.subr.mxu0 0.0
  %8656 = vmatpush2.msra.mxu0 0.0
  %8657 = vmatprep.subr.mxu0 0.0
  %8658 = vmatpush2.msra.mxu0 0.0
  %8659 = vmatprep.mubr.f32.mxu0 0.0
  %8660 = vmatmul.mubr.f32.gmra.mxu0 %v8590
  %v8661 = vpop.f32.mrf.mxu0
  %v8662 = vadd.f32 0.0, %v8661
  %v8663 = vpop.f32.mrf.mxu0
  %8664 = vmatprep.mubr.f32.mxu0 0.0
  %8665 = vmatmul.mubr.f32.gmra.mxu0 %v8593
  %v8666 = vpop.f32.mrf.mxu0
  %v8667 = vadd.f32 0.0, %v8666
  %v8668 = vpop.f32.mrf.mxu0
  %8669 = vdwg.mxu0
  %v8670 = vadd.f32 %v8572, %v8662
  %v8671 = vadd.f32 %v8573, %v8667
  %v8672 = vld [vmem:[%s13] sm:$0xff]
  %v8673 = vld [vmem:[%s13 + $0x8] sm:$0xff]
  %8675 = vset.pattern.permute.xlu0 0
  %8676 = vperm.xlu0 %8675, %v8672
  %v8677 = vpop.permute.xlu0 %8676
  %8680 = vset.pattern.permute.xlu0 0
  %8681 = vperm.xlu0 %8680, %v8673
  %v8682 = vpop.permute.xlu0 %8681
  %v8684 = vadd.f32 %v8670, %v8677
  %v8685 = vadd.f32 %v8671, %v8682
  %v8686 = vmul.f32 %v8684, 0.01
  %v8687 = vmul.f32 %v8685, 0.01
  %v8688 = vmax.f32 %v8684, %v8686
  %v8689 = vmax.f32 %v8685, %v8687
  %8690 = vst.msk [vmem:[#allocation6] sm:$0xff] %vm6896, 0.0
  %8691 = vst.msk [vmem:[#allocation6 + $0x10] sm:$0xff] %vm6896, 0.0
  %8692 = vst.msk [vmem:[#allocation6 + $0x8] sm:$0xff] %vm6898, 0.0
  %8693 = vst.msk [vmem:[#allocation6 + $0x18] sm:$0xff] %vm6898, 0.0
  %8696 = vrot.lane.b32.xlu0 %v8688, 18
  %v8697 = vpop.permute.xlu0 %8696
  %8698 = vrot.lane.b32.xlu0 %v8689, 18
  %v8699 = vpop.permute.xlu0 %8698
  %8702 = vst.msk [vmem:[#allocation6] sm:$0xff] %vm6904, %v8697
  %8703 = vst.msk [vmem:[#allocation6 + $0x8] sm:$0xff] %vm6896, %v8697
  %8704 = vst.msk [vmem:[#allocation6 + $0x10] sm:$0xff] %vm6904, %v8699
  %8705 = vst.msk [vmem:[#allocation6 + $0x18] sm:$0xff] %vm6896, %v8699
  %v8706 = vld [vmem:[#allocation6] sm:$0xff]
  %v8707 = vld [vmem:[#allocation6 + $0x8] sm:$0xff]
  %v8708 = vld [vmem:[#allocation6 + $0x10] sm:$0xff]
  %v8709 = vld [vmem:[#allocation6 + $0x18] sm:$0xff]
  %8714 = vrot.lane.b32.xlu0 %v8706, 109
  %v8715 = vpop.permute.xlu0 %8714
  %8716 = vrot.lane.b32.xlu0 %v8707, 109
  %v8717 = vpop.permute.xlu0 %8716
  %8718 = vrot.lane.b32.xlu0 %v8708, 109
  %v8719 = vpop.permute.xlu0 %8718
  %8720 = vrot.lane.b32.xlu0 %v8709, 109
  %v8721 = vpop.permute.xlu0 %8720
  %v8722 = vsel %vm7379, %v8715, %v8717
  %v8723 = vsel %vm7379, %v8719, %v8721
  %v8726 = vmax.f32 %v8688, %v8722
  %v8727 = vmax.f32 %v8689, %v8723
  %8728 = vrot.lane.b32.xlu0 %v8706, 108
  %v8729 = vpop.permute.xlu0 %8728
  %8730 = vrot.lane.b32.xlu0 %v8707, 108
  %v8731 = vpop.permute.xlu0 %8730
  %8732 = vrot.lane.b32.xlu0 %v8708, 108
  %v8733 = vpop.permute.xlu0 %8732
  %8734 = vrot.lane.b32.xlu0 %v8709, 108
  %v8735 = vpop.permute.xlu0 %8734
  %vm8736 = vcmask 883712
  %v8737 = vsel %vm8736, %v8729, %v8731
  %v8738 = vsel %vm8736, %v8733, %v8735
  %v8741 = vmax.f32 %v8726, %v8737
  %v8742 = vmax.f32 %v8727, %v8738
  %8743 = vrot.lane.b32.xlu0 %v8706, 102
  %v8744 = vpop.permute.xlu0 %8743
  %8745 = vrot.lane.b32.xlu0 %v8707, 102
  %v8746 = vpop.permute.xlu0 %8745
  %8747 = vrot.lane.b32.xlu0 %v8708, 102
  %v8748 = vpop.permute.xlu0 %8747
  %8749 = vrot.lane.b32.xlu0 %v8709, 102
  %v8750 = vpop.permute.xlu0 %8749
  %v8751 = vsel %vm7565, %v8744, %v8746
  %v8752 = vsel %vm7565, %v8748, %v8750
  %v8755 = vmax.f32 %v8741, %v8751
  %v8756 = vmax.f32 %v8742, %v8752
  %8757 = vrot.lane.b32.xlu0 %v8706, 101
  %v8758 = vpop.permute.xlu0 %8757
  %8759 = vrot.lane.b32.xlu0 %v8707, 101
  %v8760 = vpop.permute.xlu0 %8759
  %8761 = vrot.lane.b32.xlu0 %v8708, 101
  %v8762 = vpop.permute.xlu0 %8761
  %8763 = vrot.lane.b32.xlu0 %v8709, 101
  %v8764 = vpop.permute.xlu0 %8763
  %v8765 = vsel %vm7658, %v8758, %v8760
  %v8766 = vsel %vm7658, %v8762, %v8764
  %v8769 = vmax.f32 %v8755, %v8765
  %v8770 = vmax.f32 %v8756, %v8766
  %8771 = vrot.lane.b32.xlu0 %v8706, 100
  %v8772 = vpop.permute.xlu0 %8771
  %8773 = vrot.lane.b32.xlu0 %v8707, 100
  %v8774 = vpop.permute.xlu0 %8773
  %8775 = vrot.lane.b32.xlu0 %v8708, 100
  %v8776 = vpop.permute.xlu0 %8775
  %8777 = vrot.lane.b32.xlu0 %v8709, 100
  %v8778 = vpop.permute.xlu0 %8777
  %vm8779 = vcmask 818176
  %v8780 = vsel %vm8779, %v8772, %v8774
  %v8781 = vsel %vm8779, %v8776, %v8778
  %v8784 = vmax.f32 %v8769, %v8780
  %v8785 = vmax.f32 %v8770, %v8781
  %8786 = vrot.lane.b32.xlu0 %v8706, 94
  %v8787 = vpop.permute.xlu0 %8786
  %8788 = vrot.lane.b32.xlu0 %v8707, 94
  %v8789 = vpop.permute.xlu0 %8788
  %8790 = vrot.lane.b32.xlu0 %v8708, 94
  %v8791 = vpop.permute.xlu0 %8790
  %8792 = vrot.lane.b32.xlu0 %v8709, 94
  %v8793 = vpop.permute.xlu0 %8792
  %vm8794 = vcmask 769024
  %v8795 = vsel %vm8794, %v8787, %v8789
  %v8796 = vsel %vm8794, %v8791, %v8793
  %v8799 = vmax.f32 %v8784, %v8795
  %v8800 = vmax.f32 %v8785, %v8796
  %8801 = vrot.lane.b32.xlu0 %v8706, 93
  %v8802 = vpop.permute.xlu0 %8801
  %8803 = vrot.lane.b32.xlu0 %v8707, 93
  %v8804 = vpop.permute.xlu0 %8803
  %8805 = vrot.lane.b32.xlu0 %v8708, 93
  %v8806 = vpop.permute.xlu0 %8805
  %8807 = vrot.lane.b32.xlu0 %v8709, 93
  %v8808 = vpop.permute.xlu0 %8807
  %vm8809 = vcmask 760832
  %v8810 = vsel %vm8809, %v8802, %v8804
  %v8811 = vsel %vm8809, %v8806, %v8808
  %v8814 = vmax.f32 %v8799, %v8810
  %v8815 = vmax.f32 %v8800, %v8811
  %8816 = vrot.lane.b32.xlu0 %v8706, 92
  %v8817 = vpop.permute.xlu0 %8816
  %8818 = vrot.lane.b32.xlu0 %v8707, 92
  %v8819 = vpop.permute.xlu0 %8818
  %8820 = vrot.lane.b32.xlu0 %v8708, 92
  %v8821 = vpop.permute.xlu0 %8820
  %8822 = vrot.lane.b32.xlu0 %v8709, 92
  %v8823 = vpop.permute.xlu0 %8822
  %vm8824 = vcmask 752640
  %v8825 = vsel %vm8824, %v8817, %v8819
  %v8826 = vsel %vm8824, %v8821, %v8823
  %v8829 = vmax.f32 %v8814, %v8825
  %v8830 = vmax.f32 %v8815, %v8826
  %v8831 = vld [vmem:[%s16] sm:$0xff]
  %v8832 = vld [vmem:[%s16 + $0x8] sm:$0xff]
  %v8833 = vld [vmem:[%s16 + $0x10] sm:$0xff]
  %v8834 = vld [vmem:[%s16 + $0x18] sm:$0xff]
  %v8835 = vld [vmem:[%s16 + $0x20] sm:$0xff]
  %v8836 = vld [vmem:[%s16 + $0x28] sm:$0xff]
  %v8837 = vld [vmem:[%s16 + $0x30] sm:$0xff]
  %v8838 = vld [vmem:[%s16 + $0x38] sm:$0xff]
  %v8839 = vld [vmem:[%s16 + $0x40] sm:$0xff]
  %v8840 = vld [vmem:[%s16 + $0x48] sm:$0xff]
  %v8841 = vld [vmem:[%s16 + $0x50] sm:$0xff]
  %v8842 = vld [vmem:[%s16 + $0x58] sm:$0xff]
  %v8843 = vld [vmem:[%s16 + $0x60] sm:$0xff]
  %v8844 = vld [vmem:[%s16 + $0x68] sm:$0xff]
  %v8845 = vld [vmem:[%s16 + $0x70] sm:$0xff]
  %v8846 = vld [vmem:[%s16 + $0x78] sm:$0xff]
  %8847 = vmatprep.subr.mxu0 0.0
  %8848 = vmatpush1.msra.mxu0 %v8846
  %8849 = vmatprep.subr.mxu0 0.0
  %8850 = vmatpush1.msra.mxu0 %v8845
  %8851 = vmatprep.subr.mxu0 0.0
  %8852 = vmatpush1.msra.mxu0 %v8844
  %8853 = vmatprep.subr.mxu0 0.0
  %8854 = vmatpush1.msra.mxu0 %v8843
  %8855 = vmatprep.subr.mxu0 0.0
  %8856 = vmatpush1.msra.mxu0 %v8842
  %8857 = vmatprep.subr.mxu0 0.0
  %8858 = vmatpush1.msra.mxu0 %v8841
  %8859 = vmatprep.subr.mxu0 0.0
  %8860 = vmatpush1.msra.mxu0 %v8840
  %8861 = vmatprep.subr.mxu0 0.0
  %8862 = vmatpush1.msra.mxu0 %v8839
  %8863 = vmatprep.subr.mxu0 0.0
  %8864 = vmatpush1.msra.mxu0 %v8838
  %8865 = vmatprep.subr.mxu0 0.0
  %8866 = vmatpush1.msra.mxu0 %v8837
  %8867 = vmatprep.subr.mxu0 0.0
  %8868 = vmatpush1.msra.mxu0 %v8836
  %8869 = vmatprep.subr.mxu0 0.0
  %8870 = vmatpush1.msra.mxu0 %v8835
  %8871 = vmatprep.subr.mxu0 0.0
  %8872 = vmatpush1.msra.mxu0 %v8834
  %8873 = vmatprep.subr.mxu0 0.0
  %8874 = vmatpush1.msra.mxu0 %v8833
  %8875 = vmatprep.subr.mxu0 0.0
  %8876 = vmatpush1.msra.mxu0 %v8832
  %8877 = vmatprep.subr.mxu0 0.0
  %8878 = vmatpush1.msra.mxu0 %v8831
  %8879 = vmatprep.subr.mxu0 0.0
  %8880 = vmatpush2.msra.mxu0 0.0
  %8881 = vmatprep.subr.mxu0 0.0
  %8882 = vmatpush2.msra.mxu0 0.0
  %8883 = vmatprep.subr.mxu0 0.0
  %8884 = vmatpush2.msra.mxu0 0.0
  %8885 = vmatprep.subr.mxu0 0.0
  %8886 = vmatpush2.msra.mxu0 0.0
  %8887 = vmatprep.subr.mxu0 0.0
  %8888 = vmatpush2.msra.mxu0 0.0
  %8889 = vmatprep.subr.mxu0 0.0
  %8890 = vmatpush2.msra.mxu0 0.0
  %8891 = vmatprep.subr.mxu0 0.0
  %8892 = vmatpush2.msra.mxu0 0.0
  %8893 = vmatprep.subr.mxu0 0.0
  %8894 = vmatpush2.msra.mxu0 0.0
  %8895 = vmatprep.subr.mxu0 0.0
  %8896 = vmatpush2.msra.mxu0 0.0
  %8897 = vmatprep.subr.mxu0 0.0
  %8898 = vmatpush2.msra.mxu0 0.0
  %8899 = vmatprep.subr.mxu0 0.0
  %8900 = vmatpush2.msra.mxu0 0.0
  %8901 = vmatprep.subr.mxu0 0.0
  %8902 = vmatpush2.msra.mxu0 0.0
  %8903 = vmatprep.subr.mxu0 0.0
  %8904 = vmatpush2.msra.mxu0 0.0
  %8905 = vmatprep.subr.mxu0 0.0
  %8906 = vmatpush2.msra.mxu0 0.0
  %8907 = vmatprep.subr.mxu0 0.0
  %8908 = vmatpush2.msra.mxu0 0.0
  %8909 = vmatprep.subr.mxu0 0.0
  %8910 = vmatpush2.msra.mxu0 0.0
  %8911 = vmatprep.mubr.f32.mxu0 0.0
  %8912 = vmatmul.mubr.f32.gmra.mxu0 %v8829
  %v8913 = vpop.f32.mrf.mxu0
  %v8914 = vadd.f32 0.0, %v8913
  %v8915 = vpop.f32.mrf.mxu0
  %8916 = vmatprep.mubr.f32.mxu0 0.0
  %8917 = vmatmul.mubr.f32.gmra.mxu0 %v8830
  %v8918 = vpop.f32.mrf.mxu0
  %v8919 = vadd.f32 0.0, %v8918
  %v8920 = vpop.f32.mrf.mxu0
  %8921 = vdwg.mxu0
  %v8922 = vsel %vm3264, %v8914, 0.0
  %8923 = vadd.xlane.f32.xlu0 %v8922
  %v8924 = vpop.xlane.xlu0 %8923
  %v8925 = vsel %vm3264, %v8919, 0.0
  %8926 = vadd.xlane.f32.xlu0 %v8925
  %v8927 = vpop.xlane.xlu0 %8926
  %v8928 = vmul.f32 %v8924, 0.125
  %v8929 = vmul.f32 %v8927, 0.125
  %v8930 = vsub.f32 %v8914, %v8928
  %v8931 = vsub.f32 %v8919, %v8929
  %v8932 = vmul.f32 %v8930, %v8930
  %v8933 = vmul.f32 %v8931, %v8931
  %v8934 = vsel %vm3264, %v8932, 0.0
  %8935 = vadd.xlane.f32.xlu0 %v8934
  %v8936 = vpop.xlane.xlu0 %8935
  %v8937 = vsel %vm3264, %v8933, 0.0
  %8938 = vadd.xlane.f32.xlu0 %v8937
  %v8939 = vpop.xlane.xlu0 %8938
  %v8940 = vmul.f32 %v8936, 0.125
  %v8941 = vmul.f32 %v8939, 0.125
  %v8942 = vld [vmem:[%s14] sm:$0xff]
  %v8943 = vld [vmem:[%s14 + $0x8] sm:$0xff]
  %v8944 = vadd.f32 %v8940, 1e-05
  %v8945 = vadd.f32 %v8941, 1e-05
  %v8946 = vrsqrt.pop %v8944
  %v8947 = vrsqrt.pop %v8945
  %v8948 = vmul.f32 %v8942, %v8946
  %v8949 = vmul.f32 %v8943, %v8947
  %8951 = vset.pattern.permute.xlu0 0
  %8952 = vperm.xlu0 %8951, %v8948
  %v8953 = vpop.permute.xlu0 %8952
  %8956 = vset.pattern.permute.xlu0 0
  %8957 = vperm.xlu0 %8956, %v8949
  %v8958 = vpop.permute.xlu0 %8957
  %v8960 = vmul.f32 %v8930, %v8953
  %v8961 = vmul.f32 %v8931, %v8958
  %v8962 = vld [vmem:[%s15] sm:$0xff]
  %v8963 = vld [vmem:[%s15 + $0x8] sm:$0xff]
  %8965 = vset.pattern.permute.xlu0 0
  %8966 = vperm.xlu0 %8965, %v8962
  %v8967 = vpop.permute.xlu0 %8966
  %8970 = vset.pattern.permute.xlu0 0
  %8971 = vperm.xlu0 %8970, %v8963
  %v8972 = vpop.permute.xlu0 %8971
  %v8974 = vadd.f32 %v8960, %v8967
  %v8975 = vadd.f32 %v8961, %v8972
  %v8976 = vxor.u32 %v8974, 2147483648
  %v8977 = vxor.u32 %v8975, 2147483648
  %v8978 = vmul.f32 %v8976, 1.442695
  %v8979 = vpow.pop %v8978
  %v8980 = vmul.f32 %v8977, 1.442695
  %v8981 = vpow.pop %v8980
  %v8982 = vadd.f32 %v8979, 1.0
  %v8983 = vadd.f32 %v8981, 1.0
  %v8984 = vrcp.pop %v8982
  %v8985 = vmul.f32 1.0, %v8984
  %v8986 = vrcp.pop %v8983
  %v8987 = vmul.f32 1.0, %v8986
  %8988 = vst.msk [vmem:[%s17] sm:$0xff] %vm3264, %v8985
  %8989 = vst.msk [vmem:[%s17 + $0x8] sm:$0xff] %vm3264, %v8987
  // Predicated region
  $region70: #{conv_model.1} parent=0 // pred_check
    _
  $region71: #{conv_model.1} parent=0 // pred_check_branch
    %8991 = sbr.rel (0) target = $region73
  $region72: #{conv_model.1} parent=0 // pred_region
    _
  $region73: #{conv_model.1} parent=0 // pred_fallthru
    _
  // Predicated region
  $region74: #{conv_model.1} parent=0 // pred_check
    _
  $region75: #{conv_model.1} parent=0 // pred_check_branch
    %8993 = sbr.rel (0) target = $region77
  $region76: #{conv_model.1} parent=0 // pred_region
    _
  $region77: #{conv_model.1} parent=0 // pred_fallthru
    _

</llo_original>
